<compile_context>
chip_gen: v7x
topology: tpu7x:2x2x1
jax: 0.10.0
libtpu: 0.0.40
codegen_flags: <defaults>
</compile_context>

<pallas_src>
import jax
import jax.numpy as jnp
from jax import lax
from jax.experimental import pallas as pl
from jax.experimental.pallas import tpu as pltpu

HIDDEN = 128
N_LAYERS = 2


def rnn_kernel(x_ref, h0_ref,
               wih0_ref, whh0_ref, bih0_ref, bhh0n_ref,
               wih1_ref, whh1_ref, bih1_ref, bhh1n_ref,
               wout_ref, bout_ref,
               y_ref, hout_ref,
               gi0_ref, h1hist_ref):
    """Whole 2-layer GRU recurrence + Linear head inside one kernel call.

    x_ref      (T, Bp, 1)  f32
    h0_ref     (2, Bp, H)  f32
    wih0_ref   (1, 1, 3H)  f32   layer-0 input weights (input_size == 1)
    whh0_ref   (H, 3H)     bf16  pre-transposed
    bih0_ref   (1, 1, 3H)  f32   ih bias + folded hh r/z bias
    bhh0n_ref  (1, H)      f32   hh n-gate bias (stays inside r*(...))
    wih1_ref   (H, 3H)     bf16  pre-transposed
    whh1_ref   (H, 3H)     bf16  pre-transposed
    bih1_ref   (1, 3H)     f32   ih bias + folded hh r/z bias
    bhh1n_ref  (1, H)      f32
    wout_ref   (1, 1, H)   f32   Linear head row
    bout_ref   (1,)        f32   Linear head bias (SMEM scalar)
    Outputs: y_ref (T, Bp) f32 lane-dense, hout_ref (2, Bp, H) f32.
    Scratch: gi0_ref (T, Bp, 3H) f32, h1hist_ref (T, Bp, H) f32.
    """
    T = x_ref.shape[0]
    Bp = x_ref.shape[1]
    H = whh0_ref.shape[0]
    f32 = jnp.float32
    bf16 = jnp.bfloat16

    # --- (1) Hoisted layer-0 input projection: one vectorized VPU sweep. ---
    # input_size == 1 -> outer product; r/z hh-bias already folded into bih0.
    gi0_ref[...] = x_ref[...] * wih0_ref[...] + bih0_ref[...]        # (T,Bp,3H)

    # --- (2) Hoist per-step bias broadcasts out of the time loop (JAX does
    #     not CSE broadcast_in_dim -> one copy instead of one per step). ---
    bih1_b = jnp.broadcast_to(bih1_ref[...], (Bp, 3 * H))
    bhh0n_b = jnp.broadcast_to(bhh0n_ref[...], (Bp, H))
    bhh1n_b = jnp.broadcast_to(bhh1n_ref[...], (Bp, H))

    def _cell(gi, gh, bhh_n_b, h_prev):
        # PyTorch GRU cell, gate order [r, z, n]; r/z hh-bias pre-folded in gi.
        r = jax.nn.sigmoid(gi[:, 0:H] + gh[:, 0:H])
        z = jax.nn.sigmoid(gi[:, H:2 * H] + gh[:, H:2 * H])
        n = jnp.tanh(gi[:, 2 * H:3 * H] + r * (gh[:, 2 * H:3 * H] + bhh_n_b))
        return (1.0 - z) * n + z * h_prev

    # --- (3) Serial recurrence: only carry-dependent work stays in the loop.
    # bf16 operands keep the MXU on the single-pass path; f32 accumulation;
    # the carries themselves stay f32 across steps for accuracy.
    # TODO(synk): keep the three loop-invariant RHS weights resident in the MXU
    #   across steps (pltpu.matmul_push_rhs once, matmul_acc_lhs/matmul_pop per
    #   step; one weight per mxu_index on v5e) if the bundle shows Mosaic does
    #   not already hoist the weight push across the unrolled loop.
    # TODO(synk): on v6e/v7x fuse layer-1's r/z matmuls into one native K=256
    #   pass over the concatenated [h0 | h1] carry (skip on v5e's 128x128 MXU).
    def step(t, carry):
        h0, h1 = carry                                               # f32 (Bp,H)
        gi0 = gi0_ref[t]                                             # (Bp, 3H)
        gh0 = jnp.dot(h0.astype(bf16), whh0_ref[...],
                      preferred_element_type=f32)                    # (Bp, 3H)
        h0n = _cell(gi0, gh0, bhh0n_b, h0)
        # TODO(synk): dropout(p=0.2) between GRU layers is train-mode only;
        # this kernel implements the eval-mode forward.
        gi1 = jnp.dot(h0n.astype(bf16), wih1_ref[...],
                      preferred_element_type=f32) + bih1_b
        gh1 = jnp.dot(h1.astype(bf16), whh1_ref[...],
                      preferred_element_type=f32)
        h1n = _cell(gi1, gh1, bhh1n_b, h1)
        h1hist_ref[t] = h1n                                          # lane-dense
        return (h0n, h1n)

    # Full unroll for small static T (LLO cross-step visibility); modest unroll
    # otherwise to bound vreg pressure / spill traffic.
    unroll = True if T <= 16 else 4
    h0_fin, h1_fin = lax.fori_loop(0, T, step, (h0_ref[0], h0_ref[1]),
                                   unroll=unroll)
    hout_ref[0] = h0_fin
    hout_ref[1] = h1_fin

    # --- (4) Output head hoisted out of the loop. N == 1, so use VPU multiply
    #     + XLU lane-reduce instead of an MXU matmul, and store y as a
    #     lane-dense (T, Bp) slab (no masked (T*Bp,1) 1/128-lane stores). ---
    y_ref[...] = (jnp.sum(h1hist_ref[...] * wout_ref[...], axis=-1)
                  + bout_ref[0])


@jax.jit
def rnn_forward(x, h_state, params):
    """x: (B, T, 1) batch-first, h_state: (2, B, 128). Returns (y, h_out)."""
    B, T, _ = x.shape
    H = HIDDEN
    (wih0, whh0, bih0, bhh0, wih1, whh1, bih1, bhh1, wout, bout) = params

    # Pad batch to a full f32 sublane tile (>= 8).
    Bp = max(8, ((B + 7) // 8) * 8)
    pad = Bp - B

    x_tm = jnp.transpose(x, (1, 0, 2)).astype(jnp.float32)           # (T, B, 1)
    h0 = h_state.astype(jnp.float32)
    if pad:
        x_tm = jnp.pad(x_tm, ((0, 0), (0, pad), (0, 0)))
        h0 = jnp.pad(h0, ((0, 0), (0, pad), (0, 0)))
    # TODO(synk): for long T pass x lane-dense as (T, Bp) instead of (T, Bp, 1).

    # Fold the hh-bias of the r,z gates into the ih-bias; the n-gate hh-bias
    # stays separate (it is multiplied by r inside the cell).
    def fold(bih, bhh):
        b = bih.astype(jnp.float32)
        b = b.at[:2 * H].add(bhh[:2 * H].astype(jnp.float32))
        return b, bhh[2 * H:].astype(jnp.float32).reshape(1, H)

    bih0f, bhh0n = fold(bih0, bhh0)
    bih1f, bhh1n = fold(bih1, bhh1)

    bf16 = jnp.bfloat16
    args = (
        x_tm, h0,
        wih0.astype(jnp.float32).reshape(1, 1, 3 * H),               # (3H,1)->row
        whh0.T.astype(bf16),                                         # (H, 3H)
        bih0f.reshape(1, 1, 3 * H), bhh0n,
        wih1.T.astype(bf16), whh1.T.astype(bf16),                    # (H, 3H)
        bih1f.reshape(1, 3 * H), bhh1n,
        wout.astype(jnp.float32).reshape(1, 1, H),                   # head row
        bout.astype(jnp.float32).reshape(1,),                        # SMEM scalar
    )

    vmem = pl.BlockSpec(memory_space=pltpu.MemorySpace.VMEM)
    smem = pl.BlockSpec(memory_space=pltpu.MemorySpace.SMEM)
    in_specs = [vmem] * (len(args) - 1) + [smem]

    # Deliberate VMEM budget: scratches + IO + weights with 4x headroom,
    # clamped to limits that are safe on v5e/v6e/v7x scoped defaults.
    scratch_bytes = 4 * T * Bp * (3 * H + H)
    io_bytes = (4 * (T * Bp + 4 * Bp * H + T * Bp)     # x, h0, hout, y
                + 2 * 3 * H * 3 * H                    # bf16 recurrence weights
                + 4 * 8 * H)                           # small f32 rows/biases
    vmem_limit = int(min(32 << 20, max(16 << 20, 4 * (scratch_bytes + io_bytes))))

    # TODO(synk): for long T chunk gi0/h1hist + the head over a T grid; for
    #   large B on v7x add a batch-parallel grid axis / core_map over both TCs.
    y_tb, h_out = pl.pallas_call(
        rnn_kernel,
        out_shape=(jax.ShapeDtypeStruct((T, Bp), jnp.float32),
                   jax.ShapeDtypeStruct((N_LAYERS, Bp, H), jnp.float32)),
        in_specs=in_specs,
        out_specs=(vmem, vmem),
        scratch_shapes=[pltpu.VMEM((T, Bp, 3 * H), jnp.float32),     # gi0 history
                        pltpu.VMEM((T, Bp, H), jnp.float32)],        # h1 history
        compiler_params=pltpu.CompilerParams(vmem_limit_bytes=vmem_limit),
    )(*args)

    y = jnp.transpose(y_tb[:, :B], (1, 0))[:, :, None]               # (B, T, 1)
    return y, h_out[:, :B]


def init_params(key):
    """Deterministic init matching PyTorch shapes: U(-1/sqrt(H), 1/sqrt(H))."""
    H = HIDDEN
    bound = 1.0 / float(H) ** 0.5
    keys = jax.random.split(key, 10)
    u = lambda kk, shape: jax.random.uniform(kk, shape, jnp.float32, -bound, bound)
    wih0 = u(keys[0], (3 * H, 1))    # weight_ih_l0
    whh0 = u(keys[1], (3 * H, H))    # weight_hh_l0
    bih0 = u(keys[2], (3 * H,))
    bhh0 = u(keys[3], (3 * H,))
    wih1 = u(keys[4], (3 * H, H))    # weight_ih_l1
    whh1 = u(keys[5], (3 * H, H))    # weight_hh_l1
    bih1 = u(keys[6], (3 * H,))
    bhh1 = u(keys[7], (3 * H,))
    wout = u(keys[8], (1, H))        # self.out.weight
    bout = u(keys[9], (1,))          # self.out.bias
    return (wih0, whh0, bih0, bhh0, wih1, whh1, bih1, bhh1, wout, bout)


def rnn_forward_ref(x, h_state, params):
    """Pure-JAX f32 reference of the PyTorch forward (eval mode)."""
    H = HIDDEN
    (wih0, whh0, bih0, bhh0, wih1, whh1, bih1, bhh1, wout, bout) = params

    def cell(inp, h, wih, whh, bih, bhh):
        gi = inp @ wih.T + bih
        gh = h @ whh.T + bhh
        r = jax.nn.sigmoid(gi[:, :H] + gh[:, :H])
        z = jax.nn.sigmoid(gi[:, H:2 * H] + gh[:, H:2 * H])
        n = jnp.tanh(gi[:, 2 * H:] + r * gh[:, 2 * H:])
        return (1.0 - z) * n + z * h

    def step(carry, x_t):
        h0, h1 = carry
        h0n = cell(x_t, h0, wih0, whh0, bih0, bhh0)
        h1n = cell(h0n, h1, wih1, whh1, bih1, bhh1)
        y_t = h1n @ wout.T + bout
        return (h0n, h1n), y_t

    (h0f, h1f), ys = lax.scan(step, (h_state[0], h_state[1]),
                              jnp.transpose(x, (1, 0, 2)))
    return jnp.transpose(ys, (1, 0, 2)), jnp.stack([h0f, h1f])


if __name__ == "__main__":
    key = jax.random.PRNGKey(0)
    pkey, xkey = jax.random.split(key)
    params = init_params(pkey)

    B, T = 2, 8
    x = jax.random.normal(xkey, (B, T, 1), jnp.float32)       # batch-first, input_size=1
    h0 = jnp.zeros((N_LAYERS, B, HIDDEN), jnp.float32)        # init_hidden()

    y, h_out = rnn_forward(x, h0, params)
    jax.block_until_ready((y, h_out))

    y_ref, h_ref = rnn_forward_ref(x, h0, params)
    assert y.shape == (B, T, 1) and h_out.shape == (N_LAYERS, B, HIDDEN)
    # Tolerance loosened vs the f32 reference because the recurrence matmuls
    # run with bf16 operands (single-pass MXU) per the performance review.
    assert jnp.allclose(y, y_ref, atol=2e-2, rtol=2e-2), "output mismatch vs reference"
    assert jnp.allclose(h_out, h_ref, atol=2e-2, rtol=2e-2), "hidden mismatch vs reference"
    print("KERNEL_OK")
</pallas_src>

<mosaic_0001>
module attributes {stable_mosaic.version = 11 : i64} {
  func.func @rnn_kernel(%arg0: memref<8x8x1xf32, #tpu.memory_space<vmem>>, %arg1: memref<2x8x128xf32, #tpu.memory_space<vmem>>, %arg2: memref<1x1x384xf32, #tpu.memory_space<vmem>>, %arg3: memref<128x384xbf16, #tpu.memory_space<vmem>>, %arg4: memref<1x1x384xf32, #tpu.memory_space<vmem>>, %arg5: memref<1x128xf32, #tpu.memory_space<vmem>>, %arg6: memref<128x384xbf16, #tpu.memory_space<vmem>>, %arg7: memref<128x384xbf16, #tpu.memory_space<vmem>>, %arg8: memref<1x384xf32, #tpu.memory_space<vmem>>, %arg9: memref<1x128xf32, #tpu.memory_space<vmem>>, %arg10: memref<1x1x128xf32, #tpu.memory_space<vmem>>, %arg11: memref<1xf32, #tpu.memory_space<smem>>, %arg12: memref<8x8xf32, #tpu.memory_space<vmem>>, %arg13: memref<2x8x128xf32, #tpu.memory_space<vmem>>, %arg14: memref<8x8x384xf32, #tpu.memory_space<vmem>>, %arg15: memref<8x8x128xf32, #tpu.memory_space<vmem>>) attributes {dimension_semantics = [], scalar_prefetch = 0 : i64, scratch_operands = 2 : i64, tpu.core_type = #tpu.core_type<tc>} {
    %c0 = arith.constant 0 : index
    %c0_0 = arith.constant 0 : index
    %c0_1 = arith.constant 0 : index
    %0 = vector.load %arg0[%c0, %c0_0, %c0_1] : memref<8x8x1xf32, #tpu.memory_space<vmem>>, vector<8x8x1xf32>
    %c0_2 = arith.constant 0 : index
    %c0_3 = arith.constant 0 : index
    %c0_4 = arith.constant 0 : index
    %1 = vector.load %arg2[%c0_2, %c0_3, %c0_4] : memref<1x1x384xf32, #tpu.memory_space<vmem>>, vector<1x1x384xf32>
    %2 = vector.broadcast %0 : vector<8x8x1xf32> to vector<8x8x384xf32>
    %3 = vector.broadcast %1 : vector<1x1x384xf32> to vector<8x8x384xf32>
    %4 = arith.mulf %2, %3 : vector<8x8x384xf32>
    %c0_5 = arith.constant 0 : index
    %c0_6 = arith.constant 0 : index
    %c0_7 = arith.constant 0 : index
    %5 = vector.load %arg4[%c0_5, %c0_6, %c0_7] : memref<1x1x384xf32, #tpu.memory_space<vmem>>, vector<1x1x384xf32>
    %6 = vector.broadcast %5 : vector<1x1x384xf32> to vector<8x8x384xf32>
    %7 = arith.addf %4, %6 : vector<8x8x384xf32>
    %c0_8 = arith.constant 0 : index
    %c0_9 = arith.constant 0 : index
    %c0_10 = arith.constant 0 : index
    %8 = vector.load %arg14[%c0_8, %c0_9, %c0_10] : memref<8x8x384xf32, #tpu.memory_space<vmem>>, vector<8x8x384xf32>
    tpu.vector_store %arg14[%c0_8, %c0_9, %c0_10], %7 {strides = array<i32>} : memref<8x8x384xf32, #tpu.memory_space<vmem>>, vector<8x8x384xf32>,
    %c0_11 = arith.constant 0 : index
    %c0_12 = arith.constant 0 : index
    %9 = vector.load %arg8[%c0_11, %c0_12] : memref<1x384xf32, #tpu.memory_space<vmem>>, vector<1x384xf32>
    %10 = vector.shape_cast %9 : vector<1x384xf32> to vector<1x384xf32>
    %11 = vector.broadcast %10 : vector<1x384xf32> to vector<8x384xf32>
    %c0_13 = arith.constant 0 : index
    %c0_14 = arith.constant 0 : index
    %12 = vector.load %arg5[%c0_13, %c0_14] : memref<1x128xf32, #tpu.memory_space<vmem>>, vector<1x128xf32>
    %13 = vector.shape_cast %12 : vector<1x128xf32> to vector<1x128xf32>
    %14 = vector.broadcast %13 : vector<1x128xf32> to vector<8x128xf32>
    %c0_15 = arith.constant 0 : index
    %c0_16 = arith.constant 0 : index
    %15 = vector.load %arg9[%c0_15, %c0_16] : memref<1x128xf32, #tpu.memory_space<vmem>>, vector<1x128xf32>
    %16 = vector.shape_cast %15 : vector<1x128xf32> to vector<1x128xf32>
    %17 = vector.broadcast %16 : vector<1x128xf32> to vector<8x128xf32>
    %c0_17 = arith.constant 0 : index
    %c0_18 = arith.constant 0 : index
    %c0_19 = arith.constant 0 : index
    %18 = vector.load %arg1[%c0_17, %c0_18, %c0_19] : memref<2x8x128xf32, #tpu.memory_space<vmem>>, vector<1x8x128xf32>
    %19 = vector.shape_cast %18 : vector<1x8x128xf32> to vector<8x128xf32>
    %c1 = arith.constant 1 : index
    %c0_20 = arith.constant 0 : index
    %c0_21 = arith.constant 0 : index
    %20 = vector.load %arg1[%c1, %c0_20, %c0_21] : memref<2x8x128xf32, #tpu.memory_space<vmem>>, vector<1x8x128xf32>
    %21 = vector.shape_cast %20 : vector<1x8x128xf32> to vector<8x128xf32>
    %c0_i32 = arith.constant 0 : i32
    %22 = arith.index_cast %c0_i32 : i32 to index
    %c0_22 = arith.constant 0 : index
    %c0_23 = arith.constant 0 : index
    %23 = vector.load %arg14[%22, %c0_22, %c0_23] : memref<8x8x384xf32, #tpu.memory_space<vmem>>, vector<1x8x384xf32>
    %24 = vector.shape_cast %23 : vector<1x8x384xf32> to vector<8x384xf32>
    %25 = arith.truncf %19 : vector<8x128xf32> to vector<8x128xbf16>
    %c0_24 = arith.constant 0 : index
    %c0_25 = arith.constant 0 : index
    %26 = vector.load %arg3[%c0_24, %c0_25] : memref<128x384xbf16, #tpu.memory_space<vmem>>, vector<128x384xbf16>
    %cst = arith.constant dense<0.000000e+00> : vector<8x384xf32>
    %27 = tpu.matmul %25, %26, %cst {dimension_numbers = #tpu.dot_dimension_numbers<[1], [0], [0], [1], [0, 0, 1, 1], [], []>} : vector<8x128xbf16>, vector<128x384xbf16>, vector<8x384xf32> -> vector<8x384xf32>
    %28 = vector.extract_strided_slice %24 {offsets = [0, 0], sizes = [8, 128], strides = [1, 1]} : vector<8x384xf32> to vector<8x128xf32>
    %29 = vector.extract_strided_slice %27 {offsets = [0, 0], sizes = [8, 128], strides = [1, 1]} : vector<8x384xf32> to vector<8x128xf32>
    %30 = arith.addf %28, %29 : vector<8x128xf32>
    %31 = arith.negf %30 : vector<8x128xf32>
    %32 = math.exp %31 : vector<8x128xf32>
    %cst_26 = arith.constant 1.000000e+00 : f32
    %33 = vector.broadcast %cst_26 : f32 to vector<8x128xf32>
    %34 = arith.addf %33, %32 : vector<8x128xf32>
    %35 = arith.divf %33, %34 : vector<8x128xf32>
    %36 = vector.extract_strided_slice %24 {offsets = [0, 128], sizes = [8, 128], strides = [1, 1]} : vector<8x384xf32> to vector<8x128xf32>
    %37 = vector.extract_strided_slice %27 {offsets = [0, 128], sizes = [8, 128], strides = [1, 1]} : vector<8x384xf32> to vector<8x128xf32>
    %38 = arith.addf %36, %37 : vector<8x128xf32>
    %39 = arith.negf %38 : vector<8x128xf32>
    %40 = math.exp %39 : vector<8x128xf32>
    %cst_27 = arith.constant 1.000000e+00 : f32
    %41 = vector.broadcast %cst_27 : f32 to vector<8x128xf32>
    %42 = arith.addf %41, %40 : vector<8x128xf32>
    %43 = arith.divf %41, %42 : vector<8x128xf32>
    %44 = vector.extract_strided_slice %24 {offsets = [0, 256], sizes = [8, 128], strides = [1, 1]} : vector<8x384xf32> to vector<8x128xf32>
    %45 = vector.extract_strided_slice %27 {offsets = [0, 256], sizes = [8, 128], strides = [1, 1]} : vector<8x384xf32> to vector<8x128xf32>
    %46 = arith.addf %45, %14 : vector<8x128xf32>
    %47 = arith.mulf %35, %46 : vector<8x128xf32>
    %48 = arith.addf %44, %47 : vector<8x128xf32>
    %49 = math.tanh %48 : vector<8x128xf32>
    %cst_28 = arith.constant 1.000000e+00 : f32
    %50 = vector.broadcast %cst_28 : f32 to vector<8x128xf32>
    %51 = arith.subf %50, %43 : vector<8x128xf32>
    %52 = arith.mulf %51, %49 : vector<8x128xf32>
    %53 = arith.mulf %43, %19 : vector<8x128xf32>
    %54 = arith.addf %52, %53 : vector<8x128xf32>
    %55 = arith.truncf %54 : vector<8x128xf32> to vector<8x128xbf16>
    %c0_29 = arith.constant 0 : index
    %c0_30 = arith.constant 0 : index
    %56 = vector.load %arg6[%c0_29, %c0_30] : memref<128x384xbf16, #tpu.memory_space<vmem>>, vector<128x384xbf16>
    %cst_31 = arith.constant dense<0.000000e+00> : vector<8x384xf32>
    %57 = tpu.matmul %55, %56, %cst_31 {dimension_numbers = #tpu.dot_dimension_numbers<[1], [0], [0], [1], [0, 0, 1, 1], [], []>} : vector<8x128xbf16>, vector<128x384xbf16>, vector<8x384xf32> -> vector<8x384xf32>
    %58 = arith.addf %57, %11 : vector<8x384xf32>
    %59 = arith.truncf %21 : vector<8x128xf32> to vector<8x128xbf16>
    %c0_32 = arith.constant 0 : index
    %c0_33 = arith.constant 0 : index
    %60 = vector.load %arg7[%c0_32, %c0_33] : memref<128x384xbf16, #tpu.memory_space<vmem>>, vector<128x384xbf16>
    %cst_34 = arith.constant dense<0.000000e+00> : vector<8x384xf32>
    %61 = tpu.matmul %59, %60, %cst_34 {dimension_numbers = #tpu.dot_dimension_numbers<[1], [0], [0], [1], [0, 0, 1, 1], [], []>} : vector<8x128xbf16>, vector<128x384xbf16>, vector<8x384xf32> -> vector<8x384xf32>
    %62 = vector.extract_strided_slice %58 {offsets = [0, 0], sizes = [8, 128], strides = [1, 1]} : vector<8x384xf32> to vector<8x128xf32>
    %63 = vector.extract_strided_slice %61 {offsets = [0, 0], sizes = [8, 128], strides = [1, 1]} : vector<8x384xf32> to vector<8x128xf32>
    %64 = arith.addf %62, %63 : vector<8x128xf32>
    %65 = arith.negf %64 : vector<8x128xf32>
    %66 = math.exp %65 : vector<8x128xf32>
    %cst_35 = arith.constant 1.000000e+00 : f32
    %67 = vector.broadcast %cst_35 : f32 to vector<8x128xf32>
    %68 = arith.addf %67, %66 : vector<8x128xf32>
    %69 = arith.divf %67, %68 : vector<8x128xf32>
    %70 = vector.extract_strided_slice %58 {offsets = [0, 128], sizes = [8, 128], strides = [1, 1]} : vector<8x384xf32> to vector<8x128xf32>
    %71 = vector.extract_strided_slice %61 {offsets = [0, 128], sizes = [8, 128], strides = [1, 1]} : vector<8x384xf32> to vector<8x128xf32>
    %72 = arith.addf %70, %71 : vector<8x128xf32>
    %73 = arith.negf %72 : vector<8x128xf32>
    %74 = math.exp %73 : vector<8x128xf32>
    %cst_36 = arith.constant 1.000000e+00 : f32
    %75 = vector.broadcast %cst_36 : f32 to vector<8x128xf32>
    %76 = arith.addf %75, %74 : vector<8x128xf32>
    %77 = arith.divf %75, %76 : vector<8x128xf32>
    %78 = vector.extract_strided_slice %58 {offsets = [0, 256], sizes = [8, 128], strides = [1, 1]} : vector<8x384xf32> to vector<8x128xf32>
    %79 = vector.extract_strided_slice %61 {offsets = [0, 256], sizes = [8, 128], strides = [1, 1]} : vector<8x384xf32> to vector<8x128xf32>
    %80 = arith.addf %79, %17 : vector<8x128xf32>
    %81 = arith.mulf %69, %80 : vector<8x128xf32>
    %82 = arith.addf %78, %81 : vector<8x128xf32>
    %83 = math.tanh %82 : vector<8x128xf32>
    %cst_37 = arith.constant 1.000000e+00 : f32
    %84 = vector.broadcast %cst_37 : f32 to vector<8x128xf32>
    %85 = arith.subf %84, %77 : vector<8x128xf32>
    %86 = arith.mulf %85, %83 : vector<8x128xf32>
    %87 = arith.mulf %77, %21 : vector<8x128xf32>
    %88 = arith.addf %86, %87 : vector<8x128xf32>
    %89 = arith.index_cast %c0_i32 : i32 to index
    %c0_38 = arith.constant 0 : index
    %c0_39 = arith.constant 0 : index
    %90 = vector.load %arg15[%89, %c0_38, %c0_39] : memref<8x8x128xf32, #tpu.memory_space<vmem>>, vector<1x8x128xf32>
    %91 = vector.shape_cast %90 : vector<1x8x128xf32> to vector<8x128xf32>
    %92 = vector.shape_cast %88 : vector<8x128xf32> to vector<1x8x128xf32>
    tpu.vector_store %arg15[%89, %c0_38, %c0_39], %92 {strides = array<i32>} : memref<8x8x128xf32, #tpu.memory_space<vmem>>, vector<1x8x128xf32>,
    %c1_i32 = arith.constant 1 : i32
    %93 = arith.index_cast %c1_i32 : i32 to index
    %c0_40 = arith.constant 0 : index
    %c0_41 = arith.constant 0 : index
    %94 = vector.load %arg14[%93, %c0_40, %c0_41] : memref<8x8x384xf32, #tpu.memory_space<vmem>>, vector<1x8x384xf32>
    %95 = vector.shape_cast %94 : vector<1x8x384xf32> to vector<8x384xf32>
    %96 = arith.truncf %54 : vector<8x128xf32> to vector<8x128xbf16>
    %c0_42 = arith.constant 0 : index
    %c0_43 = arith.constant 0 : index
    %97 = vector.load %arg3[%c0_42, %c0_43] : memref<128x384xbf16, #tpu.memory_space<vmem>>, vector<128x384xbf16>
    %cst_44 = arith.constant dense<0.000000e+00> : vector<8x384xf32>
    %98 = tpu.matmul %96, %97, %cst_44 {dimension_numbers = #tpu.dot_dimension_numbers<[1], [0], [0], [1], [0, 0, 1, 1], [], []>} : vector<8x128xbf16>, vector<128x384xbf16>, vector<8x384xf32> -> vector<8x384xf32>
    %99 = vector.extract_strided_slice %95 {offsets = [0, 0], sizes = [8, 128], strides = [1, 1]} : vector<8x384xf32> to vector<8x128xf32>
    %100 = vector.extract_strided_slice %98 {offsets = [0, 0], sizes = [8, 128], strides = [1, 1]} : vector<8x384xf32> to vector<8x128xf32>
    %101 = arith.addf %99, %100 : vector<8x128xf32>
    %102 = arith.negf %101 : vector<8x128xf32>
    %103 = math.exp %102 : vector<8x128xf32>
    %cst_45 = arith.constant 1.000000e+00 : f32
    %104 = vector.broadcast %cst_45 : f32 to vector<8x128xf32>
    %105 = arith.addf %104, %103 : vector<8x128xf32>
    %106 = arith.divf %104, %105 : vector<8x128xf32>
    %107 = vector.extract_strided_slice %95 {offsets = [0, 128], sizes = [8, 128], strides = [1, 1]} : vector<8x384xf32> to vector<8x128xf32>
    %108 = vector.extract_strided_slice %98 {offsets = [0, 128], sizes = [8, 128], strides = [1, 1]} : vector<8x384xf32> to vector<8x128xf32>
    %109 = arith.addf %107, %108 : vector<8x128xf32>
    %110 = arith.negf %109 : vector<8x128xf32>
    %111 = math.exp %110 : vector<8x128xf32>
    %cst_46 = arith.constant 1.000000e+00 : f32
    %112 = vector.broadcast %cst_46 : f32 to vector<8x128xf32>
    %113 = arith.addf %112, %111 : vector<8x128xf32>
    %114 = arith.divf %112, %113 : vector<8x128xf32>
    %115 = vector.extract_strided_slice %95 {offsets = [0, 256], sizes = [8, 128], strides = [1, 1]} : vector<8x384xf32> to vector<8x128xf32>
    %116 = vector.extract_strided_slice %98 {offsets = [0, 256], sizes = [8, 128], strides = [1, 1]} : vector<8x384xf32> to vector<8x128xf32>
    %117 = arith.addf %116, %14 : vector<8x128xf32>
    %118 = arith.mulf %106, %117 : vector<8x128xf32>
    %119 = arith.addf %115, %118 : vector<8x128xf32>
    %120 = math.tanh %119 : vector<8x128xf32>
    %cst_47 = arith.constant 1.000000e+00 : f32
    %121 = vector.broadcast %cst_47 : f32 to vector<8x128xf32>
    %122 = arith.subf %121, %114 : vector<8x128xf32>
    %123 = arith.mulf %122, %120 : vector<8x128xf32>
    %124 = arith.mulf %114, %54 : vector<8x128xf32>
    %125 = arith.addf %123, %124 : vector<8x128xf32>
    %126 = arith.truncf %125 : vector<8x128xf32> to vector<8x128xbf16>
    %c0_48 = arith.constant 0 : index
    %c0_49 = arith.constant 0 : index
    %127 = vector.load %arg6[%c0_48, %c0_49] : memref<128x384xbf16, #tpu.memory_space<vmem>>, vector<128x384xbf16>
    %cst_50 = arith.constant dense<0.000000e+00> : vector<8x384xf32>
    %128 = tpu.matmul %126, %127, %cst_50 {dimension_numbers = #tpu.dot_dimension_numbers<[1], [0], [0], [1], [0, 0, 1, 1], [], []>} : vector<8x128xbf16>, vector<128x384xbf16>, vector<8x384xf32> -> vector<8x384xf32>
    %129 = arith.addf %128, %11 : vector<8x384xf32>
    %130 = arith.truncf %88 : vector<8x128xf32> to vector<8x128xbf16>
    %c0_51 = arith.constant 0 : index
    %c0_52 = arith.constant 0 : index
    %131 = vector.load %arg7[%c0_51, %c0_52] : memref<128x384xbf16, #tpu.memory_space<vmem>>, vector<128x384xbf16>
    %cst_53 = arith.constant dense<0.000000e+00> : vector<8x384xf32>
    %132 = tpu.matmul %130, %131, %cst_53 {dimension_numbers = #tpu.dot_dimension_numbers<[1], [0], [0], [1], [0, 0, 1, 1], [], []>} : vector<8x128xbf16>, vector<128x384xbf16>, vector<8x384xf32> -> vector<8x384xf32>
    %133 = vector.extract_strided_slice %129 {offsets = [0, 0], sizes = [8, 128], strides = [1, 1]} : vector<8x384xf32> to vector<8x128xf32>
    %134 = vector.extract_strided_slice %132 {offsets = [0, 0], sizes = [8, 128], strides = [1, 1]} : vector<8x384xf32> to vector<8x128xf32>
    %135 = arith.addf %133, %134 : vector<8x128xf32>
    %136 = arith.negf %135 : vector<8x128xf32>
    %137 = math.exp %136 : vector<8x128xf32>
    %cst_54 = arith.constant 1.000000e+00 : f32
    %138 = vector.broadcast %cst_54 : f32 to vector<8x128xf32>
    %139 = arith.addf %138, %137 : vector<8x128xf32>
    %140 = arith.divf %138, %139 : vector<8x128xf32>
    %141 = vector.extract_strided_slice %129 {offsets = [0, 128], sizes = [8, 128], strides = [1, 1]} : vector<8x384xf32> to vector<8x128xf32>
    %142 = vector.extract_strided_slice %132 {offsets = [0, 128], sizes = [8, 128], strides = [1, 1]} : vector<8x384xf32> to vector<8x128xf32>
    %143 = arith.addf %141, %142 : vector<8x128xf32>
    %144 = arith.negf %143 : vector<8x128xf32>
    %145 = math.exp %144 : vector<8x128xf32>
    %cst_55 = arith.constant 1.000000e+00 : f32
    %146 = vector.broadcast %cst_55 : f32 to vector<8x128xf32>
    %147 = arith.addf %146, %145 : vector<8x128xf32>
    %148 = arith.divf %146, %147 : vector<8x128xf32>
    %149 = vector.extract_strided_slice %129 {offsets = [0, 256], sizes = [8, 128], strides = [1, 1]} : vector<8x384xf32> to vector<8x128xf32>
    %150 = vector.extract_strided_slice %132 {offsets = [0, 256], sizes = [8, 128], strides = [1, 1]} : vector<8x384xf32> to vector<8x128xf32>
    %151 = arith.addf %150, %17 : vector<8x128xf32>
    %152 = arith.mulf %140, %151 : vector<8x128xf32>
    %153 = arith.addf %149, %152 : vector<8x128xf32>
    %154 = math.tanh %153 : vector<8x128xf32>
    %cst_56 = arith.constant 1.000000e+00 : f32
    %155 = vector.broadcast %cst_56 : f32 to vector<8x128xf32>
    %156 = arith.subf %155, %148 : vector<8x128xf32>
    %157 = arith.mulf %156, %154 : vector<8x128xf32>
    %158 = arith.mulf %148, %88 : vector<8x128xf32>
    %159 = arith.addf %157, %158 : vector<8x128xf32>
    %160 = arith.index_cast %c1_i32 : i32 to index
    %c0_57 = arith.constant 0 : index
    %c0_58 = arith.constant 0 : index
    %161 = vector.load %arg15[%160, %c0_57, %c0_58] : memref<8x8x128xf32, #tpu.memory_space<vmem>>, vector<1x8x128xf32>
    %162 = vector.shape_cast %161 : vector<1x8x128xf32> to vector<8x128xf32>
    %163 = vector.shape_cast %159 : vector<8x128xf32> to vector<1x8x128xf32>
    tpu.vector_store %arg15[%160, %c0_57, %c0_58], %163 {strides = array<i32>} : memref<8x8x128xf32, #tpu.memory_space<vmem>>, vector<1x8x128xf32>,
    %c2_i32 = arith.constant 2 : i32
    %164 = arith.index_cast %c2_i32 : i32 to index
    %c0_59 = arith.constant 0 : index
    %c0_60 = arith.constant 0 : index
    %165 = vector.load %arg14[%164, %c0_59, %c0_60] : memref<8x8x384xf32, #tpu.memory_space<vmem>>, vector<1x8x384xf32>
    %166 = vector.shape_cast %165 : vector<1x8x384xf32> to vector<8x384xf32>
    %167 = arith.truncf %125 : vector<8x128xf32> to vector<8x128xbf16>
    %c0_61 = arith.constant 0 : index
    %c0_62 = arith.constant 0 : index
    %168 = vector.load %arg3[%c0_61, %c0_62] : memref<128x384xbf16, #tpu.memory_space<vmem>>, vector<128x384xbf16>
    %cst_63 = arith.constant dense<0.000000e+00> : vector<8x384xf32>
    %169 = tpu.matmul %167, %168, %cst_63 {dimension_numbers = #tpu.dot_dimension_numbers<[1], [0], [0], [1], [0, 0, 1, 1], [], []>} : vector<8x128xbf16>, vector<128x384xbf16>, vector<8x384xf32> -> vector<8x384xf32>
    %170 = vector.extract_strided_slice %166 {offsets = [0, 0], sizes = [8, 128], strides = [1, 1]} : vector<8x384xf32> to vector<8x128xf32>
    %171 = vector.extract_strided_slice %169 {offsets = [0, 0], sizes = [8, 128], strides = [1, 1]} : vector<8x384xf32> to vector<8x128xf32>
    %172 = arith.addf %170, %171 : vector<8x128xf32>
    %173 = arith.negf %172 : vector<8x128xf32>
    %174 = math.exp %173 : vector<8x128xf32>
    %cst_64 = arith.constant 1.000000e+00 : f32
    %175 = vector.broadcast %cst_64 : f32 to vector<8x128xf32>
    %176 = arith.addf %175, %174 : vector<8x128xf32>
    %177 = arith.divf %175, %176 : vector<8x128xf32>
    %178 = vector.extract_strided_slice %166 {offsets = [0, 128], sizes = [8, 128], strides = [1, 1]} : vector<8x384xf32> to vector<8x128xf32>
    %179 = vector.extract_strided_slice %169 {offsets = [0, 128], sizes = [8, 128], strides = [1, 1]} : vector<8x384xf32> to vector<8x128xf32>
    %180 = arith.addf %178, %179 : vector<8x128xf32>
    %181 = arith.negf %180 : vector<8x128xf32>
    %182 = math.exp %181 : vector<8x128xf32>
    %cst_65 = arith.constant 1.000000e+00 : f32
    %183 = vector.broadcast %cst_65 : f32 to vector<8x128xf32>
    %184 = arith.addf %183, %182 : vector<8x128xf32>
    %185 = arith.divf %183, %184 : vector<8x128xf32>
    %186 = vector.extract_strided_slice %166 {offsets = [0, 256], sizes = [8, 128], strides = [1, 1]} : vector<8x384xf32> to vector<8x128xf32>
    %187 = vector.extract_strided_slice %169 {offsets = [0, 256], sizes = [8, 128], strides = [1, 1]} : vector<8x384xf32> to vector<8x128xf32>
    %188 = arith.addf %187, %14 : vector<8x128xf32>
    %189 = arith.mulf %177, %188 : vector<8x128xf32>
    %190 = arith.addf %186, %189 : vector<8x128xf32>
    %191 = math.tanh %190 : vector<8x128xf32>
    %cst_66 = arith.constant 1.000000e+00 : f32
    %192 = vector.broadcast %cst_66 : f32 to vector<8x128xf32>
    %193 = arith.subf %192, %185 : vector<8x128xf32>
    %194 = arith.mulf %193, %191 : vector<8x128xf32>
    %195 = arith.mulf %185, %125 : vector<8x128xf32>
    %196 = arith.addf %194, %195 : vector<8x128xf32>
    %197 = arith.truncf %196 : vector<8x128xf32> to vector<8x128xbf16>
    %c0_67 = arith.constant 0 : index
    %c0_68 = arith.constant 0 : index
    %198 = vector.load %arg6[%c0_67, %c0_68] : memref<128x384xbf16, #tpu.memory_space<vmem>>, vector<128x384xbf16>
    %cst_69 = arith.constant dense<0.000000e+00> : vector<8x384xf32>
    %199 = tpu.matmul %197, %198, %cst_69 {dimension_numbers = #tpu.dot_dimension_numbers<[1], [0], [0], [1], [0, 0, 1, 1], [], []>} : vector<8x128xbf16>, vector<128x384xbf16>, vector<8x384xf32> -> vector<8x384xf32>
    %200 = arith.addf %199, %11 : vector<8x384xf32>
    %201 = arith.truncf %159 : vector<8x128xf32> to vector<8x128xbf16>
    %c0_70 = arith.constant 0 : index
    %c0_71 = arith.constant 0 : index
    %202 = vector.load %arg7[%c0_70, %c0_71] : memref<128x384xbf16, #tpu.memory_space<vmem>>, vector<128x384xbf16>
    %cst_72 = arith.constant dense<0.000000e+00> : vector<8x384xf32>
    %203 = tpu.matmul %201, %202, %cst_72 {dimension_numbers = #tpu.dot_dimension_numbers<[1], [0], [0], [1], [0, 0, 1, 1], [], []>} : vector<8x128xbf16>, vector<128x384xbf16>, vector<8x384xf32> -> vector<8x384xf32>
    %204 = vector.extract_strided_slice %200 {offsets = [0, 0], sizes = [8, 128], strides = [1, 1]} : vector<8x384xf32> to vector<8x128xf32>
    %205 = vector.extract_strided_slice %203 {offsets = [0, 0], sizes = [8, 128], strides = [1, 1]} : vector<8x384xf32> to vector<8x128xf32>
    %206 = arith.addf %204, %205 : vector<8x128xf32>
    %207 = arith.negf %206 : vector<8x128xf32>
    %208 = math.exp %207 : vector<8x128xf32>
    %cst_73 = arith.constant 1.000000e+00 : f32
    %209 = vector.broadcast %cst_73 : f32 to vector<8x128xf32>
    %210 = arith.addf %209, %208 : vector<8x128xf32>
    %211 = arith.divf %209, %210 : vector<8x128xf32>
    %212 = vector.extract_strided_slice %200 {offsets = [0, 128], sizes = [8, 128], strides = [1, 1]} : vector<8x384xf32> to vector<8x128xf32>
    %213 = vector.extract_strided_slice %203 {offsets = [0, 128], sizes = [8, 128], strides = [1, 1]} : vector<8x384xf32> to vector<8x128xf32>
    %214 = arith.addf %212, %213 : vector<8x128xf32>
    %215 = arith.negf %214 : vector<8x128xf32>
    %216 = math.exp %215 : vector<8x128xf32>
    %cst_74 = arith.constant 1.000000e+00 : f32
    %217 = vector.broadcast %cst_74 : f32 to vector<8x128xf32>
    %218 = arith.addf %217, %216 : vector<8x128xf32>
    %219 = arith.divf %217, %218 : vector<8x128xf32>
    %220 = vector.extract_strided_slice %200 {offsets = [0, 256], sizes = [8, 128], strides = [1, 1]} : vector<8x384xf32> to vector<8x128xf32>
    %221 = vector.extract_strided_slice %203 {offsets = [0, 256], sizes = [8, 128], strides = [1, 1]} : vector<8x384xf32> to vector<8x128xf32>
    %222 = arith.addf %221, %17 : vector<8x128xf32>
    %223 = arith.mulf %211, %222 : vector<8x128xf32>
    %224 = arith.addf %220, %223 : vector<8x128xf32>
    %225 = math.tanh %224 : vector<8x128xf32>
    %cst_75 = arith.constant 1.000000e+00 : f32
    %226 = vector.broadcast %cst_75 : f32 to vector<8x128xf32>
    %227 = arith.subf %226, %219 : vector<8x128xf32>
    %228 = arith.mulf %227, %225 : vector<8x128xf32>
    %229 = arith.mulf %219, %159 : vector<8x128xf32>
    %230 = arith.addf %228, %229 : vector<8x128xf32>
    %231 = arith.index_cast %c2_i32 : i32 to index
    %c0_76 = arith.constant 0 : index
    %c0_77 = arith.constant 0 : index
    %232 = vector.load %arg15[%231, %c0_76, %c0_77] : memref<8x8x128xf32, #tpu.memory_space<vmem>>, vector<1x8x128xf32>
    %233 = vector.shape_cast %232 : vector<1x8x128xf32> to vector<8x128xf32>
    %234 = vector.shape_cast %230 : vector<8x128xf32> to vector<1x8x128xf32>
    tpu.vector_store %arg15[%231, %c0_76, %c0_77], %234 {strides = array<i32>} : memref<8x8x128xf32, #tpu.memory_space<vmem>>, vector<1x8x128xf32>,
    %c3_i32 = arith.constant 3 : i32
    %235 = arith.index_cast %c3_i32 : i32 to index
    %c0_78 = arith.constant 0 : index
    %c0_79 = arith.constant 0 : index
    %236 = vector.load %arg14[%235, %c0_78, %c0_79] : memref<8x8x384xf32, #tpu.memory_space<vmem>>, vector<1x8x384xf32>
    %237 = vector.shape_cast %236 : vector<1x8x384xf32> to vector<8x384xf32>
    %238 = arith.truncf %196 : vector<8x128xf32> to vector<8x128xbf16>
    %c0_80 = arith.constant 0 : index
    %c0_81 = arith.constant 0 : index
    %239 = vector.load %arg3[%c0_80, %c0_81] : memref<128x384xbf16, #tpu.memory_space<vmem>>, vector<128x384xbf16>
    %cst_82 = arith.constant dense<0.000000e+00> : vector<8x384xf32>
    %240 = tpu.matmul %238, %239, %cst_82 {dimension_numbers = #tpu.dot_dimension_numbers<[1], [0], [0], [1], [0, 0, 1, 1], [], []>} : vector<8x128xbf16>, vector<128x384xbf16>, vector<8x384xf32> -> vector<8x384xf32>
    %241 = vector.extract_strided_slice %237 {offsets = [0, 0], sizes = [8, 128], strides = [1, 1]} : vector<8x384xf32> to vector<8x128xf32>
    %242 = vector.extract_strided_slice %240 {offsets = [0, 0], sizes = [8, 128], strides = [1, 1]} : vector<8x384xf32> to vector<8x128xf32>
    %243 = arith.addf %241, %242 : vector<8x128xf32>
    %244 = arith.negf %243 : vector<8x128xf32>
    %245 = math.exp %244 : vector<8x128xf32>
    %cst_83 = arith.constant 1.000000e+00 : f32
    %246 = vector.broadcast %cst_83 : f32 to vector<8x128xf32>
    %247 = arith.addf %246, %245 : vector<8x128xf32>
    %248 = arith.divf %246, %247 : vector<8x128xf32>
    %249 = vector.extract_strided_slice %237 {offsets = [0, 128], sizes = [8, 128], strides = [1, 1]} : vector<8x384xf32> to vector<8x128xf32>
    %250 = vector.extract_strided_slice %240 {offsets = [0, 128], sizes = [8, 128], strides = [1, 1]} : vector<8x384xf32> to vector<8x128xf32>
    %251 = arith.addf %249, %250 : vector<8x128xf32>
    %252 = arith.negf %251 : vector<8x128xf32>
    %253 = math.exp %252 : vector<8x128xf32>
    %cst_84 = arith.constant 1.000000e+00 : f32
    %254 = vector.broadcast %cst_84 : f32 to vector<8x128xf32>
    %255 = arith.addf %254, %253 : vector<8x128xf32>
    %256 = arith.divf %254, %255 : vector<8x128xf32>
    %257 = vector.extract_strided_slice %237 {offsets = [0, 256], sizes = [8, 128], strides = [1, 1]} : vector<8x384xf32> to vector<8x128xf32>
    %258 = vector.extract_strided_slice %240 {offsets = [0, 256], sizes = [8, 128], strides = [1, 1]} : vector<8x384xf32> to vector<8x128xf32>
    %259 = arith.addf %258, %14 : vector<8x128xf32>
    %260 = arith.mulf %248, %259 : vector<8x128xf32>
    %261 = arith.addf %257, %260 : vector<8x128xf32>
    %262 = math.tanh %261 : vector<8x128xf32>
    %cst_85 = arith.constant 1.000000e+00 : f32
    %263 = vector.broadcast %cst_85 : f32 to vector<8x128xf32>
    %264 = arith.subf %263, %256 : vector<8x128xf32>
    %265 = arith.mulf %264, %262 : vector<8x128xf32>
    %266 = arith.mulf %256, %196 : vector<8x128xf32>
    %267 = arith.addf %265, %266 : vector<8x128xf32>
    %268 = arith.truncf %267 : vector<8x128xf32> to vector<8x128xbf16>
    %c0_86 = arith.constant 0 : index
    %c0_87 = arith.constant 0 : index
    %269 = vector.load %arg6[%c0_86, %c0_87] : memref<128x384xbf16, #tpu.memory_space<vmem>>, vector<128x384xbf16>
    %cst_88 = arith.constant dense<0.000000e+00> : vector<8x384xf32>
    %270 = tpu.matmul %268, %269, %cst_88 {dimension_numbers = #tpu.dot_dimension_numbers<[1], [0], [0], [1], [0, 0, 1, 1], [], []>} : vector<8x128xbf16>, vector<128x384xbf16>, vector<8x384xf32> -> vector<8x384xf32>
    %271 = arith.addf %270, %11 : vector<8x384xf32>
    %272 = arith.truncf %230 : vector<8x128xf32> to vector<8x128xbf16>
    %c0_89 = arith.constant 0 : index
    %c0_90 = arith.constant 0 : index
    %273 = vector.load %arg7[%c0_89, %c0_90] : memref<128x384xbf16, #tpu.memory_space<vmem>>, vector<128x384xbf16>
    %cst_91 = arith.constant dense<0.000000e+00> : vector<8x384xf32>
    %274 = tpu.matmul %272, %273, %cst_91 {dimension_numbers = #tpu.dot_dimension_numbers<[1], [0], [0], [1], [0, 0, 1, 1], [], []>} : vector<8x128xbf16>, vector<128x384xbf16>, vector<8x384xf32> -> vector<8x384xf32>
    %275 = vector.extract_strided_slice %271 {offsets = [0, 0], sizes = [8, 128], strides = [1, 1]} : vector<8x384xf32> to vector<8x128xf32>
    %276 = vector.extract_strided_slice %274 {offsets = [0, 0], sizes = [8, 128], strides = [1, 1]} : vector<8x384xf32> to vector<8x128xf32>
    %277 = arith.addf %275, %276 : vector<8x128xf32>
    %278 = arith.negf %277 : vector<8x128xf32>
    %279 = math.exp %278 : vector<8x128xf32>
    %cst_92 = arith.constant 1.000000e+00 : f32
    %280 = vector.broadcast %cst_92 : f32 to vector<8x128xf32>
    %281 = arith.addf %280, %279 : vector<8x128xf32>
    %282 = arith.divf %280, %281 : vector<8x128xf32>
    %283 = vector.extract_strided_slice %271 {offsets = [0, 128], sizes = [8, 128], strides = [1, 1]} : vector<8x384xf32> to vector<8x128xf32>
    %284 = vector.extract_strided_slice %274 {offsets = [0, 128], sizes = [8, 128], strides = [1, 1]} : vector<8x384xf32> to vector<8x128xf32>
    %285 = arith.addf %283, %284 : vector<8x128xf32>
    %286 = arith.negf %285 : vector<8x128xf32>
    %287 = math.exp %286 : vector<8x128xf32>
    %cst_93 = arith.constant 1.000000e+00 : f32
    %288 = vector.broadcast %cst_93 : f32 to vector<8x128xf32>
    %289 = arith.addf %288, %287 : vector<8x128xf32>
    %290 = arith.divf %288, %289 : vector<8x128xf32>
    %291 = vector.extract_strided_slice %271 {offsets = [0, 256], sizes = [8, 128], strides = [1, 1]} : vector<8x384xf32> to vector<8x128xf32>
    %292 = vector.extract_strided_slice %274 {offsets = [0, 256], sizes = [8, 128], strides = [1, 1]} : vector<8x384xf32> to vector<8x128xf32>
    %293 = arith.addf %292, %17 : vector<8x128xf32>
    %294 = arith.mulf %282, %293 : vector<8x128xf32>
    %295 = arith.addf %291, %294 : vector<8x128xf32>
    %296 = math.tanh %295 : vector<8x128xf32>
    %cst_94 = arith.constant 1.000000e+00 : f32
    %297 = vector.broadcast %cst_94 : f32 to vector<8x128xf32>
    %298 = arith.subf %297, %290 : vector<8x128xf32>
    %299 = arith.mulf %298, %296 : vector<8x128xf32>
    %300 = arith.mulf %290, %230 : vector<8x128xf32>
    %301 = arith.addf %299, %300 : vector<8x128xf32>
    %302 = arith.index_cast %c3_i32 : i32 to index
    %c0_95 = arith.constant 0 : index
    %c0_96 = arith.constant 0 : index
    %303 = vector.load %arg15[%302, %c0_95, %c0_96] : memref<8x8x128xf32, #tpu.memory_space<vmem>>, vector<1x8x128xf32>
    %304 = vector.shape_cast %303 : vector<1x8x128xf32> to vector<8x128xf32>
    %305 = vector.shape_cast %301 : vector<8x128xf32> to vector<1x8x128xf32>
    tpu.vector_store %arg15[%302, %c0_95, %c0_96], %305 {strides = array<i32>} : memref<8x8x128xf32, #tpu.memory_space<vmem>>, vector<1x8x128xf32>,
    %c4_i32 = arith.constant 4 : i32
    %306 = arith.index_cast %c4_i32 : i32 to index
    %c0_97 = arith.constant 0 : index
    %c0_98 = arith.constant 0 : index
    %307 = vector.load %arg14[%306, %c0_97, %c0_98] : memref<8x8x384xf32, #tpu.memory_space<vmem>>, vector<1x8x384xf32>
    %308 = vector.shape_cast %307 : vector<1x8x384xf32> to vector<8x384xf32>
    %309 = arith.truncf %267 : vector<8x128xf32> to vector<8x128xbf16>
    %c0_99 = arith.constant 0 : index
    %c0_100 = arith.constant 0 : index
    %310 = vector.load %arg3[%c0_99, %c0_100] : memref<128x384xbf16, #tpu.memory_space<vmem>>, vector<128x384xbf16>
    %cst_101 = arith.constant dense<0.000000e+00> : vector<8x384xf32>
    %311 = tpu.matmul %309, %310, %cst_101 {dimension_numbers = #tpu.dot_dimension_numbers<[1], [0], [0], [1], [0, 0, 1, 1], [], []>} : vector<8x128xbf16>, vector<128x384xbf16>, vector<8x384xf32> -> vector<8x384xf32>
    %312 = vector.extract_strided_slice %308 {offsets = [0, 0], sizes = [8, 128], strides = [1, 1]} : vector<8x384xf32> to vector<8x128xf32>
    %313 = vector.extract_strided_slice %311 {offsets = [0, 0], sizes = [8, 128], strides = [1, 1]} : vector<8x384xf32> to vector<8x128xf32>
    %314 = arith.addf %312, %313 : vector<8x128xf32>
    %315 = arith.negf %314 : vector<8x128xf32>
    %316 = math.exp %315 : vector<8x128xf32>
    %cst_102 = arith.constant 1.000000e+00 : f32
    %317 = vector.broadcast %cst_102 : f32 to vector<8x128xf32>
    %318 = arith.addf %317, %316 : vector<8x128xf32>
    %319 = arith.divf %317, %318 : vector<8x128xf32>
    %320 = vector.extract_strided_slice %308 {offsets = [0, 128], sizes = [8, 128], strides = [1, 1]} : vector<8x384xf32> to vector<8x128xf32>
    %321 = vector.extract_strided_slice %311 {offsets = [0, 128], sizes = [8, 128], strides = [1, 1]} : vector<8x384xf32> to vector<8x128xf32>
    %322 = arith.addf %320, %321 : vector<8x128xf32>
    %323 = arith.negf %322 : vector<8x128xf32>
    %324 = math.exp %323 : vector<8x128xf32>
    %cst_103 = arith.constant 1.000000e+00 : f32
    %325 = vector.broadcast %cst_103 : f32 to vector<8x128xf32>
    %326 = arith.addf %325, %324 : vector<8x128xf32>
    %327 = arith.divf %325, %326 : vector<8x128xf32>
    %328 = vector.extract_strided_slice %308 {offsets = [0, 256], sizes = [8, 128], strides = [1, 1]} : vector<8x384xf32> to vector<8x128xf32>
    %329 = vector.extract_strided_slice %311 {offsets = [0, 256], sizes = [8, 128], strides = [1, 1]} : vector<8x384xf32> to vector<8x128xf32>
    %330 = arith.addf %329, %14 : vector<8x128xf32>
    %331 = arith.mulf %319, %330 : vector<8x128xf32>
    %332 = arith.addf %328, %331 : vector<8x128xf32>
    %333 = math.tanh %332 : vector<8x128xf32>
    %cst_104 = arith.constant 1.000000e+00 : f32
    %334 = vector.broadcast %cst_104 : f32 to vector<8x128xf32>
    %335 = arith.subf %334, %327 : vector<8x128xf32>
    %336 = arith.mulf %335, %333 : vector<8x128xf32>
    %337 = arith.mulf %327, %267 : vector<8x128xf32>
    %338 = arith.addf %336, %337 : vector<8x128xf32>
    %339 = arith.truncf %338 : vector<8x128xf32> to vector<8x128xbf16>
    %c0_105 = arith.constant 0 : index
    %c0_106 = arith.constant 0 : index
    %340 = vector.load %arg6[%c0_105, %c0_106] : memref<128x384xbf16, #tpu.memory_space<vmem>>, vector<128x384xbf16>
    %cst_107 = arith.constant dense<0.000000e+00> : vector<8x384xf32>
    %341 = tpu.matmul %339, %340, %cst_107 {dimension_numbers = #tpu.dot_dimension_numbers<[1], [0], [0], [1], [0, 0, 1, 1], [], []>} : vector<8x128xbf16>, vector<128x384xbf16>, vector<8x384xf32> -> vector<8x384xf32>
    %342 = arith.addf %341, %11 : vector<8x384xf32>
    %343 = arith.truncf %301 : vector<8x128xf32> to vector<8x128xbf16>
    %c0_108 = arith.constant 0 : index
    %c0_109 = arith.constant 0 : index
    %344 = vector.load %arg7[%c0_108, %c0_109] : memref<128x384xbf16, #tpu.memory_space<vmem>>, vector<128x384xbf16>
    %cst_110 = arith.constant dense<0.000000e+00> : vector<8x384xf32>
    %345 = tpu.matmul %343, %344, %cst_110 {dimension_numbers = #tpu.dot_dimension_numbers<[1], [0], [0], [1], [0, 0, 1, 1], [], []>} : vector<8x128xbf16>, vector<128x384xbf16>, vector<8x384xf32> -> vector<8x384xf32>
    %346 = vector.extract_strided_slice %342 {offsets = [0, 0], sizes = [8, 128], strides = [1, 1]} : vector<8x384xf32> to vector<8x128xf32>
    %347 = vector.extract_strided_slice %345 {offsets = [0, 0], sizes = [8, 128], strides = [1, 1]} : vector<8x384xf32> to vector<8x128xf32>
    %348 = arith.addf %346, %347 : vector<8x128xf32>
    %349 = arith.negf %348 : vector<8x128xf32>
    %350 = math.exp %349 : vector<8x128xf32>
    %cst_111 = arith.constant 1.000000e+00 : f32
    %351 = vector.broadcast %cst_111 : f32 to vector<8x128xf32>
    %352 = arith.addf %351, %350 : vector<8x128xf32>
    %353 = arith.divf %351, %352 : vector<8x128xf32>
    %354 = vector.extract_strided_slice %342 {offsets = [0, 128], sizes = [8, 128], strides = [1, 1]} : vector<8x384xf32> to vector<8x128xf32>
    %355 = vector.extract_strided_slice %345 {offsets = [0, 128], sizes = [8, 128], strides = [1, 1]} : vector<8x384xf32> to vector<8x128xf32>
    %356 = arith.addf %354, %355 : vector<8x128xf32>
    %357 = arith.negf %356 : vector<8x128xf32>
    %358 = math.exp %357 : vector<8x128xf32>
    %cst_112 = arith.constant 1.000000e+00 : f32
    %359 = vector.broadcast %cst_112 : f32 to vector<8x128xf32>
    %360 = arith.addf %359, %358 : vector<8x128xf32>
    %361 = arith.divf %359, %360 : vector<8x128xf32>
    %362 = vector.extract_strided_slice %342 {offsets = [0, 256], sizes = [8, 128], strides = [1, 1]} : vector<8x384xf32> to vector<8x128xf32>
    %363 = vector.extract_strided_slice %345 {offsets = [0, 256], sizes = [8, 128], strides = [1, 1]} : vector<8x384xf32> to vector<8x128xf32>
    %364 = arith.addf %363, %17 : vector<8x128xf32>
    %365 = arith.mulf %353, %364 : vector<8x128xf32>
    %366 = arith.addf %362, %365 : vector<8x128xf32>
    %367 = math.tanh %366 : vector<8x128xf32>
    %cst_113 = arith.constant 1.000000e+00 : f32
    %368 = vector.broadcast %cst_113 : f32 to vector<8x128xf32>
    %369 = arith.subf %368, %361 : vector<8x128xf32>
    %370 = arith.mulf %369, %367 : vector<8x128xf32>
    %371 = arith.mulf %361, %301 : vector<8x128xf32>
    %372 = arith.addf %370, %371 : vector<8x128xf32>
    %373 = arith.index_cast %c4_i32 : i32 to index
    %c0_114 = arith.constant 0 : index
    %c0_115 = arith.constant 0 : index
    %374 = vector.load %arg15[%373, %c0_114, %c0_115] : memref<8x8x128xf32, #tpu.memory_space<vmem>>, vector<1x8x128xf32>
    %375 = vector.shape_cast %374 : vector<1x8x128xf32> to vector<8x128xf32>
    %376 = vector.shape_cast %372 : vector<8x128xf32> to vector<1x8x128xf32>
    tpu.vector_store %arg15[%373, %c0_114, %c0_115], %376 {strides = array<i32>} : memref<8x8x128xf32, #tpu.memory_space<vmem>>, vector<1x8x128xf32>,
    %c5_i32 = arith.constant 5 : i32
    %377 = arith.index_cast %c5_i32 : i32 to index
    %c0_116 = arith.constant 0 : index
    %c0_117 = arith.constant 0 : index
    %378 = vector.load %arg14[%377, %c0_116, %c0_117] : memref<8x8x384xf32, #tpu.memory_space<vmem>>, vector<1x8x384xf32>
    %379 = vector.shape_cast %378 : vector<1x8x384xf32> to vector<8x384xf32>
    %380 = arith.truncf %338 : vector<8x128xf32> to vector<8x128xbf16>
    %c0_118 = arith.constant 0 : index
    %c0_119 = arith.constant 0 : index
    %381 = vector.load %arg3[%c0_118, %c0_119] : memref<128x384xbf16, #tpu.memory_space<vmem>>, vector<128x384xbf16>
    %cst_120 = arith.constant dense<0.000000e+00> : vector<8x384xf32>
    %382 = tpu.matmul %380, %381, %cst_120 {dimension_numbers = #tpu.dot_dimension_numbers<[1], [0], [0], [1], [0, 0, 1, 1], [], []>} : vector<8x128xbf16>, vector<128x384xbf16>, vector<8x384xf32> -> vector<8x384xf32>
    %383 = vector.extract_strided_slice %379 {offsets = [0, 0], sizes = [8, 128], strides = [1, 1]} : vector<8x384xf32> to vector<8x128xf32>
    %384 = vector.extract_strided_slice %382 {offsets = [0, 0], sizes = [8, 128], strides = [1, 1]} : vector<8x384xf32> to vector<8x128xf32>
    %385 = arith.addf %383, %384 : vector<8x128xf32>
    %386 = arith.negf %385 : vector<8x128xf32>
    %387 = math.exp %386 : vector<8x128xf32>
    %cst_121 = arith.constant 1.000000e+00 : f32
    %388 = vector.broadcast %cst_121 : f32 to vector<8x128xf32>
    %389 = arith.addf %388, %387 : vector<8x128xf32>
    %390 = arith.divf %388, %389 : vector<8x128xf32>
    %391 = vector.extract_strided_slice %379 {offsets = [0, 128], sizes = [8, 128], strides = [1, 1]} : vector<8x384xf32> to vector<8x128xf32>
    %392 = vector.extract_strided_slice %382 {offsets = [0, 128], sizes = [8, 128], strides = [1, 1]} : vector<8x384xf32> to vector<8x128xf32>
    %393 = arith.addf %391, %392 : vector<8x128xf32>
    %394 = arith.negf %393 : vector<8x128xf32>
    %395 = math.exp %394 : vector<8x128xf32>
    %cst_122 = arith.constant 1.000000e+00 : f32
    %396 = vector.broadcast %cst_122 : f32 to vector<8x128xf32>
    %397 = arith.addf %396, %395 : vector<8x128xf32>
    %398 = arith.divf %396, %397 : vector<8x128xf32>
    %399 = vector.extract_strided_slice %379 {offsets = [0, 256], sizes = [8, 128], strides = [1, 1]} : vector<8x384xf32> to vector<8x128xf32>
    %400 = vector.extract_strided_slice %382 {offsets = [0, 256], sizes = [8, 128], strides = [1, 1]} : vector<8x384xf32> to vector<8x128xf32>
    %401 = arith.addf %400, %14 : vector<8x128xf32>
    %402 = arith.mulf %390, %401 : vector<8x128xf32>
    %403 = arith.addf %399, %402 : vector<8x128xf32>
    %404 = math.tanh %403 : vector<8x128xf32>
    %cst_123 = arith.constant 1.000000e+00 : f32
    %405 = vector.broadcast %cst_123 : f32 to vector<8x128xf32>
    %406 = arith.subf %405, %398 : vector<8x128xf32>
    %407 = arith.mulf %406, %404 : vector<8x128xf32>
    %408 = arith.mulf %398, %338 : vector<8x128xf32>
    %409 = arith.addf %407, %408 : vector<8x128xf32>
    %410 = arith.truncf %409 : vector<8x128xf32> to vector<8x128xbf16>
    %c0_124 = arith.constant 0 : index
    %c0_125 = arith.constant 0 : index
    %411 = vector.load %arg6[%c0_124, %c0_125] : memref<128x384xbf16, #tpu.memory_space<vmem>>, vector<128x384xbf16>
    %cst_126 = arith.constant dense<0.000000e+00> : vector<8x384xf32>
    %412 = tpu.matmul %410, %411, %cst_126 {dimension_numbers = #tpu.dot_dimension_numbers<[1], [0], [0], [1], [0, 0, 1, 1], [], []>} : vector<8x128xbf16>, vector<128x384xbf16>, vector<8x384xf32> -> vector<8x384xf32>
    %413 = arith.addf %412, %11 : vector<8x384xf32>
    %414 = arith.truncf %372 : vector<8x128xf32> to vector<8x128xbf16>
    %c0_127 = arith.constant 0 : index
    %c0_128 = arith.constant 0 : index
    %415 = vector.load %arg7[%c0_127, %c0_128] : memref<128x384xbf16, #tpu.memory_space<vmem>>, vector<128x384xbf16>
    %cst_129 = arith.constant dense<0.000000e+00> : vector<8x384xf32>
    %416 = tpu.matmul %414, %415, %cst_129 {dimension_numbers = #tpu.dot_dimension_numbers<[1], [0], [0], [1], [0, 0, 1, 1], [], []>} : vector<8x128xbf16>, vector<128x384xbf16>, vector<8x384xf32> -> vector<8x384xf32>
    %417 = vector.extract_strided_slice %413 {offsets = [0, 0], sizes = [8, 128], strides = [1, 1]} : vector<8x384xf32> to vector<8x128xf32>
    %418 = vector.extract_strided_slice %416 {offsets = [0, 0], sizes = [8, 128], strides = [1, 1]} : vector<8x384xf32> to vector<8x128xf32>
    %419 = arith.addf %417, %418 : vector<8x128xf32>
    %420 = arith.negf %419 : vector<8x128xf32>
    %421 = math.exp %420 : vector<8x128xf32>
    %cst_130 = arith.constant 1.000000e+00 : f32
    %422 = vector.broadcast %cst_130 : f32 to vector<8x128xf32>
    %423 = arith.addf %422, %421 : vector<8x128xf32>
    %424 = arith.divf %422, %423 : vector<8x128xf32>
    %425 = vector.extract_strided_slice %413 {offsets = [0, 128], sizes = [8, 128], strides = [1, 1]} : vector<8x384xf32> to vector<8x128xf32>
    %426 = vector.extract_strided_slice %416 {offsets = [0, 128], sizes = [8, 128], strides = [1, 1]} : vector<8x384xf32> to vector<8x128xf32>
    %427 = arith.addf %425, %426 : vector<8x128xf32>
    %428 = arith.negf %427 : vector<8x128xf32>
    %429 = math.exp %428 : vector<8x128xf32>
    %cst_131 = arith.constant 1.000000e+00 : f32
    %430 = vector.broadcast %cst_131 : f32 to vector<8x128xf32>
    %431 = arith.addf %430, %429 : vector<8x128xf32>
    %432 = arith.divf %430, %431 : vector<8x128xf32>
    %433 = vector.extract_strided_slice %413 {offsets = [0, 256], sizes = [8, 128], strides = [1, 1]} : vector<8x384xf32> to vector<8x128xf32>
    %434 = vector.extract_strided_slice %416 {offsets = [0, 256], sizes = [8, 128], strides = [1, 1]} : vector<8x384xf32> to vector<8x128xf32>
    %435 = arith.addf %434, %17 : vector<8x128xf32>
    %436 = arith.mulf %424, %435 : vector<8x128xf32>
    %437 = arith.addf %433, %436 : vector<8x128xf32>
    %438 = math.tanh %437 : vector<8x128xf32>
    %cst_132 = arith.constant 1.000000e+00 : f32
    %439 = vector.broadcast %cst_132 : f32 to vector<8x128xf32>
    %440 = arith.subf %439, %432 : vector<8x128xf32>
    %441 = arith.mulf %440, %438 : vector<8x128xf32>
    %442 = arith.mulf %432, %372 : vector<8x128xf32>
    %443 = arith.addf %441, %442 : vector<8x128xf32>
    %444 = arith.index_cast %c5_i32 : i32 to index
    %c0_133 = arith.constant 0 : index
    %c0_134 = arith.constant 0 : index
    %445 = vector.load %arg15[%444, %c0_133, %c0_134] : memref<8x8x128xf32, #tpu.memory_space<vmem>>, vector<1x8x128xf32>
    %446 = vector.shape_cast %445 : vector<1x8x128xf32> to vector<8x128xf32>
    %447 = vector.shape_cast %443 : vector<8x128xf32> to vector<1x8x128xf32>
    tpu.vector_store %arg15[%444, %c0_133, %c0_134], %447 {strides = array<i32>} : memref<8x8x128xf32, #tpu.memory_space<vmem>>, vector<1x8x128xf32>,
    %c6_i32 = arith.constant 6 : i32
    %448 = arith.index_cast %c6_i32 : i32 to index
    %c0_135 = arith.constant 0 : index
    %c0_136 = arith.constant 0 : index
    %449 = vector.load %arg14[%448, %c0_135, %c0_136] : memref<8x8x384xf32, #tpu.memory_space<vmem>>, vector<1x8x384xf32>
    %450 = vector.shape_cast %449 : vector<1x8x384xf32> to vector<8x384xf32>
    %451 = arith.truncf %409 : vector<8x128xf32> to vector<8x128xbf16>
    %c0_137 = arith.constant 0 : index
    %c0_138 = arith.constant 0 : index
    %452 = vector.load %arg3[%c0_137, %c0_138] : memref<128x384xbf16, #tpu.memory_space<vmem>>, vector<128x384xbf16>
    %cst_139 = arith.constant dense<0.000000e+00> : vector<8x384xf32>
    %453 = tpu.matmul %451, %452, %cst_139 {dimension_numbers = #tpu.dot_dimension_numbers<[1], [0], [0], [1], [0, 0, 1, 1], [], []>} : vector<8x128xbf16>, vector<128x384xbf16>, vector<8x384xf32> -> vector<8x384xf32>
    %454 = vector.extract_strided_slice %450 {offsets = [0, 0], sizes = [8, 128], strides = [1, 1]} : vector<8x384xf32> to vector<8x128xf32>
    %455 = vector.extract_strided_slice %453 {offsets = [0, 0], sizes = [8, 128], strides = [1, 1]} : vector<8x384xf32> to vector<8x128xf32>
    %456 = arith.addf %454, %455 : vector<8x128xf32>
    %457 = arith.negf %456 : vector<8x128xf32>
    %458 = math.exp %457 : vector<8x128xf32>
    %cst_140 = arith.constant 1.000000e+00 : f32
    %459 = vector.broadcast %cst_140 : f32 to vector<8x128xf32>
    %460 = arith.addf %459, %458 : vector<8x128xf32>
    %461 = arith.divf %459, %460 : vector<8x128xf32>
    %462 = vector.extract_strided_slice %450 {offsets = [0, 128], sizes = [8, 128], strides = [1, 1]} : vector<8x384xf32> to vector<8x128xf32>
    %463 = vector.extract_strided_slice %453 {offsets = [0, 128], sizes = [8, 128], strides = [1, 1]} : vector<8x384xf32> to vector<8x128xf32>
    %464 = arith.addf %462, %463 : vector<8x128xf32>
    %465 = arith.negf %464 : vector<8x128xf32>
    %466 = math.exp %465 : vector<8x128xf32>
    %cst_141 = arith.constant 1.000000e+00 : f32
    %467 = vector.broadcast %cst_141 : f32 to vector<8x128xf32>
    %468 = arith.addf %467, %466 : vector<8x128xf32>
    %469 = arith.divf %467, %468 : vector<8x128xf32>
    %470 = vector.extract_strided_slice %450 {offsets = [0, 256], sizes = [8, 128], strides = [1, 1]} : vector<8x384xf32> to vector<8x128xf32>
    %471 = vector.extract_strided_slice %453 {offsets = [0, 256], sizes = [8, 128], strides = [1, 1]} : vector<8x384xf32> to vector<8x128xf32>
    %472 = arith.addf %471, %14 : vector<8x128xf32>
    %473 = arith.mulf %461, %472 : vector<8x128xf32>
    %474 = arith.addf %470, %473 : vector<8x128xf32>
    %475 = math.tanh %474 : vector<8x128xf32>
    %cst_142 = arith.constant 1.000000e+00 : f32
    %476 = vector.broadcast %cst_142 : f32 to vector<8x128xf32>
    %477 = arith.subf %476, %469 : vector<8x128xf32>
    %478 = arith.mulf %477, %475 : vector<8x128xf32>
    %479 = arith.mulf %469, %409 : vector<8x128xf32>
    %480 = arith.addf %478, %479 : vector<8x128xf32>
    %481 = arith.truncf %480 : vector<8x128xf32> to vector<8x128xbf16>
    %c0_143 = arith.constant 0 : index
    %c0_144 = arith.constant 0 : index
    %482 = vector.load %arg6[%c0_143, %c0_144] : memref<128x384xbf16, #tpu.memory_space<vmem>>, vector<128x384xbf16>
    %cst_145 = arith.constant dense<0.000000e+00> : vector<8x384xf32>
    %483 = tpu.matmul %481, %482, %cst_145 {dimension_numbers = #tpu.dot_dimension_numbers<[1], [0], [0], [1], [0, 0, 1, 1], [], []>} : vector<8x128xbf16>, vector<128x384xbf16>, vector<8x384xf32> -> vector<8x384xf32>
    %484 = arith.addf %483, %11 : vector<8x384xf32>
    %485 = arith.truncf %443 : vector<8x128xf32> to vector<8x128xbf16>
    %c0_146 = arith.constant 0 : index
    %c0_147 = arith.constant 0 : index
    %486 = vector.load %arg7[%c0_146, %c0_147] : memref<128x384xbf16, #tpu.memory_space<vmem>>, vector<128x384xbf16>
    %cst_148 = arith.constant dense<0.000000e+00> : vector<8x384xf32>
    %487 = tpu.matmul %485, %486, %cst_148 {dimension_numbers = #tpu.dot_dimension_numbers<[1], [0], [0], [1], [0, 0, 1, 1], [], []>} : vector<8x128xbf16>, vector<128x384xbf16>, vector<8x384xf32> -> vector<8x384xf32>
    %488 = vector.extract_strided_slice %484 {offsets = [0, 0], sizes = [8, 128], strides = [1, 1]} : vector<8x384xf32> to vector<8x128xf32>
    %489 = vector.extract_strided_slice %487 {offsets = [0, 0], sizes = [8, 128], strides = [1, 1]} : vector<8x384xf32> to vector<8x128xf32>
    %490 = arith.addf %488, %489 : vector<8x128xf32>
    %491 = arith.negf %490 : vector<8x128xf32>
    %492 = math.exp %491 : vector<8x128xf32>
    %cst_149 = arith.constant 1.000000e+00 : f32
    %493 = vector.broadcast %cst_149 : f32 to vector<8x128xf32>
    %494 = arith.addf %493, %492 : vector<8x128xf32>
    %495 = arith.divf %493, %494 : vector<8x128xf32>
    %496 = vector.extract_strided_slice %484 {offsets = [0, 128], sizes = [8, 128], strides = [1, 1]} : vector<8x384xf32> to vector<8x128xf32>
    %497 = vector.extract_strided_slice %487 {offsets = [0, 128], sizes = [8, 128], strides = [1, 1]} : vector<8x384xf32> to vector<8x128xf32>
    %498 = arith.addf %496, %497 : vector<8x128xf32>
    %499 = arith.negf %498 : vector<8x128xf32>
    %500 = math.exp %499 : vector<8x128xf32>
    %cst_150 = arith.constant 1.000000e+00 : f32
    %501 = vector.broadcast %cst_150 : f32 to vector<8x128xf32>
    %502 = arith.addf %501, %500 : vector<8x128xf32>
    %503 = arith.divf %501, %502 : vector<8x128xf32>
    %504 = vector.extract_strided_slice %484 {offsets = [0, 256], sizes = [8, 128], strides = [1, 1]} : vector<8x384xf32> to vector<8x128xf32>
    %505 = vector.extract_strided_slice %487 {offsets = [0, 256], sizes = [8, 128], strides = [1, 1]} : vector<8x384xf32> to vector<8x128xf32>
    %506 = arith.addf %505, %17 : vector<8x128xf32>
    %507 = arith.mulf %495, %506 : vector<8x128xf32>
    %508 = arith.addf %504, %507 : vector<8x128xf32>
    %509 = math.tanh %508 : vector<8x128xf32>
    %cst_151 = arith.constant 1.000000e+00 : f32
    %510 = vector.broadcast %cst_151 : f32 to vector<8x128xf32>
    %511 = arith.subf %510, %503 : vector<8x128xf32>
    %512 = arith.mulf %511, %509 : vector<8x128xf32>
    %513 = arith.mulf %503, %443 : vector<8x128xf32>
    %514 = arith.addf %512, %513 : vector<8x128xf32>
    %515 = arith.index_cast %c6_i32 : i32 to index
    %c0_152 = arith.constant 0 : index
    %c0_153 = arith.constant 0 : index
    %516 = vector.load %arg15[%515, %c0_152, %c0_153] : memref<8x8x128xf32, #tpu.memory_space<vmem>>, vector<1x8x128xf32>
    %517 = vector.shape_cast %516 : vector<1x8x128xf32> to vector<8x128xf32>
    %518 = vector.shape_cast %514 : vector<8x128xf32> to vector<1x8x128xf32>
    tpu.vector_store %arg15[%515, %c0_152, %c0_153], %518 {strides = array<i32>} : memref<8x8x128xf32, #tpu.memory_space<vmem>>, vector<1x8x128xf32>,
    %c7_i32 = arith.constant 7 : i32
    %519 = arith.index_cast %c7_i32 : i32 to index
    %c0_154 = arith.constant 0 : index
    %c0_155 = arith.constant 0 : index
    %520 = vector.load %arg14[%519, %c0_154, %c0_155] : memref<8x8x384xf32, #tpu.memory_space<vmem>>, vector<1x8x384xf32>
    %521 = vector.shape_cast %520 : vector<1x8x384xf32> to vector<8x384xf32>
    %522 = arith.truncf %480 : vector<8x128xf32> to vector<8x128xbf16>
    %c0_156 = arith.constant 0 : index
    %c0_157 = arith.constant 0 : index
    %523 = vector.load %arg3[%c0_156, %c0_157] : memref<128x384xbf16, #tpu.memory_space<vmem>>, vector<128x384xbf16>
    %cst_158 = arith.constant dense<0.000000e+00> : vector<8x384xf32>
    %524 = tpu.matmul %522, %523, %cst_158 {dimension_numbers = #tpu.dot_dimension_numbers<[1], [0], [0], [1], [0, 0, 1, 1], [], []>} : vector<8x128xbf16>, vector<128x384xbf16>, vector<8x384xf32> -> vector<8x384xf32>
    %525 = vector.extract_strided_slice %521 {offsets = [0, 0], sizes = [8, 128], strides = [1, 1]} : vector<8x384xf32> to vector<8x128xf32>
    %526 = vector.extract_strided_slice %524 {offsets = [0, 0], sizes = [8, 128], strides = [1, 1]} : vector<8x384xf32> to vector<8x128xf32>
    %527 = arith.addf %525, %526 : vector<8x128xf32>
    %528 = arith.negf %527 : vector<8x128xf32>
    %529 = math.exp %528 : vector<8x128xf32>
    %cst_159 = arith.constant 1.000000e+00 : f32
    %530 = vector.broadcast %cst_159 : f32 to vector<8x128xf32>
    %531 = arith.addf %530, %529 : vector<8x128xf32>
    %532 = arith.divf %530, %531 : vector<8x128xf32>
    %533 = vector.extract_strided_slice %521 {offsets = [0, 128], sizes = [8, 128], strides = [1, 1]} : vector<8x384xf32> to vector<8x128xf32>
    %534 = vector.extract_strided_slice %524 {offsets = [0, 128], sizes = [8, 128], strides = [1, 1]} : vector<8x384xf32> to vector<8x128xf32>
    %535 = arith.addf %533, %534 : vector<8x128xf32>
    %536 = arith.negf %535 : vector<8x128xf32>
    %537 = math.exp %536 : vector<8x128xf32>
    %cst_160 = arith.constant 1.000000e+00 : f32
    %538 = vector.broadcast %cst_160 : f32 to vector<8x128xf32>
    %539 = arith.addf %538, %537 : vector<8x128xf32>
    %540 = arith.divf %538, %539 : vector<8x128xf32>
    %541 = vector.extract_strided_slice %521 {offsets = [0, 256], sizes = [8, 128], strides = [1, 1]} : vector<8x384xf32> to vector<8x128xf32>
    %542 = vector.extract_strided_slice %524 {offsets = [0, 256], sizes = [8, 128], strides = [1, 1]} : vector<8x384xf32> to vector<8x128xf32>
    %543 = arith.addf %542, %14 : vector<8x128xf32>
    %544 = arith.mulf %532, %543 : vector<8x128xf32>
    %545 = arith.addf %541, %544 : vector<8x128xf32>
    %546 = math.tanh %545 : vector<8x128xf32>
    %cst_161 = arith.constant 1.000000e+00 : f32
    %547 = vector.broadcast %cst_161 : f32 to vector<8x128xf32>
    %548 = arith.subf %547, %540 : vector<8x128xf32>
    %549 = arith.mulf %548, %546 : vector<8x128xf32>
    %550 = arith.mulf %540, %480 : vector<8x128xf32>
    %551 = arith.addf %549, %550 : vector<8x128xf32>
    %552 = arith.truncf %551 : vector<8x128xf32> to vector<8x128xbf16>
    %c0_162 = arith.constant 0 : index
    %c0_163 = arith.constant 0 : index
    %553 = vector.load %arg6[%c0_162, %c0_163] : memref<128x384xbf16, #tpu.memory_space<vmem>>, vector<128x384xbf16>
    %cst_164 = arith.constant dense<0.000000e+00> : vector<8x384xf32>
    %554 = tpu.matmul %552, %553, %cst_164 {dimension_numbers = #tpu.dot_dimension_numbers<[1], [0], [0], [1], [0, 0, 1, 1], [], []>} : vector<8x128xbf16>, vector<128x384xbf16>, vector<8x384xf32> -> vector<8x384xf32>
    %555 = arith.addf %554, %11 : vector<8x384xf32>
    %556 = arith.truncf %514 : vector<8x128xf32> to vector<8x128xbf16>
    %c0_165 = arith.constant 0 : index
    %c0_166 = arith.constant 0 : index
    %557 = vector.load %arg7[%c0_165, %c0_166] : memref<128x384xbf16, #tpu.memory_space<vmem>>, vector<128x384xbf16>
    %cst_167 = arith.constant dense<0.000000e+00> : vector<8x384xf32>
    %558 = tpu.matmul %556, %557, %cst_167 {dimension_numbers = #tpu.dot_dimension_numbers<[1], [0], [0], [1], [0, 0, 1, 1], [], []>} : vector<8x128xbf16>, vector<128x384xbf16>, vector<8x384xf32> -> vector<8x384xf32>
    %559 = vector.extract_strided_slice %555 {offsets = [0, 0], sizes = [8, 128], strides = [1, 1]} : vector<8x384xf32> to vector<8x128xf32>
    %560 = vector.extract_strided_slice %558 {offsets = [0, 0], sizes = [8, 128], strides = [1, 1]} : vector<8x384xf32> to vector<8x128xf32>
    %561 = arith.addf %559, %560 : vector<8x128xf32>
    %562 = arith.negf %561 : vector<8x128xf32>
    %563 = math.exp %562 : vector<8x128xf32>
    %cst_168 = arith.constant 1.000000e+00 : f32
    %564 = vector.broadcast %cst_168 : f32 to vector<8x128xf32>
    %565 = arith.addf %564, %563 : vector<8x128xf32>
    %566 = arith.divf %564, %565 : vector<8x128xf32>
    %567 = vector.extract_strided_slice %555 {offsets = [0, 128], sizes = [8, 128], strides = [1, 1]} : vector<8x384xf32> to vector<8x128xf32>
    %568 = vector.extract_strided_slice %558 {offsets = [0, 128], sizes = [8, 128], strides = [1, 1]} : vector<8x384xf32> to vector<8x128xf32>
    %569 = arith.addf %567, %568 : vector<8x128xf32>
    %570 = arith.negf %569 : vector<8x128xf32>
    %571 = math.exp %570 : vector<8x128xf32>
    %cst_169 = arith.constant 1.000000e+00 : f32
    %572 = vector.broadcast %cst_169 : f32 to vector<8x128xf32>
    %573 = arith.addf %572, %571 : vector<8x128xf32>
    %574 = arith.divf %572, %573 : vector<8x128xf32>
    %575 = vector.extract_strided_slice %555 {offsets = [0, 256], sizes = [8, 128], strides = [1, 1]} : vector<8x384xf32> to vector<8x128xf32>
    %576 = vector.extract_strided_slice %558 {offsets = [0, 256], sizes = [8, 128], strides = [1, 1]} : vector<8x384xf32> to vector<8x128xf32>
    %577 = arith.addf %576, %17 : vector<8x128xf32>
    %578 = arith.mulf %566, %577 : vector<8x128xf32>
    %579 = arith.addf %575, %578 : vector<8x128xf32>
    %580 = math.tanh %579 : vector<8x128xf32>
    %cst_170 = arith.constant 1.000000e+00 : f32
    %581 = vector.broadcast %cst_170 : f32 to vector<8x128xf32>
    %582 = arith.subf %581, %574 : vector<8x128xf32>
    %583 = arith.mulf %582, %580 : vector<8x128xf32>
    %584 = arith.mulf %574, %514 : vector<8x128xf32>
    %585 = arith.addf %583, %584 : vector<8x128xf32>
    %586 = arith.index_cast %c7_i32 : i32 to index
    %c0_171 = arith.constant 0 : index
    %c0_172 = arith.constant 0 : index
    %587 = vector.load %arg15[%586, %c0_171, %c0_172] : memref<8x8x128xf32, #tpu.memory_space<vmem>>, vector<1x8x128xf32>
    %588 = vector.shape_cast %587 : vector<1x8x128xf32> to vector<8x128xf32>
    %589 = vector.shape_cast %585 : vector<8x128xf32> to vector<1x8x128xf32>
    tpu.vector_store %arg15[%586, %c0_171, %c0_172], %589 {strides = array<i32>} : memref<8x8x128xf32, #tpu.memory_space<vmem>>, vector<1x8x128xf32>,
    %c8_i32 = arith.constant 8 : i32
    %c0_173 = arith.constant 0 : index
    %c0_174 = arith.constant 0 : index
    %c0_175 = arith.constant 0 : index
    %590 = vector.load %arg13[%c0_173, %c0_174, %c0_175] : memref<2x8x128xf32, #tpu.memory_space<vmem>>, vector<1x8x128xf32>
    %591 = vector.shape_cast %590 : vector<1x8x128xf32> to vector<8x128xf32>
    %592 = vector.shape_cast %551 : vector<8x128xf32> to vector<1x8x128xf32>
    tpu.vector_store %arg13[%c0_173, %c0_174, %c0_175], %592 {strides = array<i32>} : memref<2x8x128xf32, #tpu.memory_space<vmem>>, vector<1x8x128xf32>,
    %c1_176 = arith.constant 1 : index
    %c0_177 = arith.constant 0 : index
    %c0_178 = arith.constant 0 : index
    %593 = vector.load %arg13[%c1_176, %c0_177, %c0_178] : memref<2x8x128xf32, #tpu.memory_space<vmem>>, vector<1x8x128xf32>
    %594 = vector.shape_cast %593 : vector<1x8x128xf32> to vector<8x128xf32>
    %595 = vector.shape_cast %585 : vector<8x128xf32> to vector<1x8x128xf32>
    tpu.vector_store %arg13[%c1_176, %c0_177, %c0_178], %595 {strides = array<i32>} : memref<2x8x128xf32, #tpu.memory_space<vmem>>, vector<1x8x128xf32>,
    %c0_179 = arith.constant 0 : index
    %c0_180 = arith.constant 0 : index
    %c0_181 = arith.constant 0 : index
    %596 = vector.load %arg15[%c0_179, %c0_180, %c0_181] : memref<8x8x128xf32, #tpu.memory_space<vmem>>, vector<8x8x128xf32>
    %c0_182 = arith.constant 0 : index
    %c0_183 = arith.constant 0 : index
    %c0_184 = arith.constant 0 : index
    %597 = vector.load %arg10[%c0_182, %c0_183, %c0_184] : memref<1x1x128xf32, #tpu.memory_space<vmem>>, vector<1x1x128xf32>
    %598 = vector.broadcast %597 : vector<1x1x128xf32> to vector<8x8x128xf32>
    %599 = arith.mulf %596, %598 : vector<8x8x128xf32>
    %cst_185 = arith.constant dense<0.000000e+00> : vector<8x8xf32>
    %600 = vector.multi_reduction <add>, %599, %cst_185 [2] : vector<8x8x128xf32> to vector<8x8xf32>
    %c0_186 = arith.constant 0 : index
    %601 = memref.load %arg11[%c0_186] : memref<1xf32, #tpu.memory_space<smem>>
    %602 = vector.broadcast %601 : f32 to vector<8x8xf32>
    %603 = arith.addf %600, %602 : vector<8x8xf32>
    %c0_187 = arith.constant 0 : index
    %c0_188 = arith.constant 0 : index
    %604 = vector.load %arg12[%c0_187, %c0_188] : memref<8x8xf32, #tpu.memory_space<vmem>>, vector<8x8xf32>
    tpu.vector_store %arg12[%c0_187, %c0_188], %603 {strides = array<i32>} : memref<8x8xf32, #tpu.memory_space<vmem>>, vector<8x8xf32>,
    return
  }
}

</mosaic_0001>

<llo_original>
// kernel: rnn_forward.1
$region0: #{rnn_forward.1}
  #allocation0 [shape = 'u32[]', space=smem, size = 0x4, offset = 0x4, fixed_abs, tag = 'smem constant byte address 0x4 - core index']
  #allocation1 [shape = 'u32[144,128]{1,0:T(1,128)}', space=vmem, size = 0x12000, scoped, tag = 'internal scratch']
  #allocation2 [shape = 'f32[8,8,384]{2,1,0:T(8,128)}', space=vmem, size = 0x18000, scoped, tag = 'scratch operand']
  #allocation3 [shape = 'f32[8,8,128]{2,1,0:T(8,128)}', space=vmem, size = 0x8000, scoped, tag = 'scratch operand']
  #allocation4 [shape = 'f32[1]{0:T(128)S(6)}', space=smem, size = 0x200, scoped, tag = 'scoped memory for rnn_forward.1']
  %s0 = inlined_call_operand.vmem [shape: f32[8,8,1], index: 0, kind: input, shape index: {}]
  %s1 = inlined_call_operand.vmem [shape: f32[2,8,128], index: 1, kind: input, shape index: {}]
  %s2 = inlined_call_operand.vmem [shape: f32[1,1,384], index: 2, kind: input, shape index: {}]
  %s3 = inlined_call_operand.vmem [shape: bf16[128,384], index: 3, kind: input, shape index: {}]
  %s4 = inlined_call_operand.vmem [shape: f32[1,1,384], index: 4, kind: input, shape index: {}]
  %s5 = inlined_call_operand.vmem [shape: f32[1,128], index: 5, kind: input, shape index: {}]
  %s6 = inlined_call_operand.vmem [shape: bf16[128,384], index: 6, kind: input, shape index: {}]
  %s7 = inlined_call_operand.vmem [shape: bf16[128,384], index: 7, kind: input, shape index: {}]
  %s8 = inlined_call_operand.vmem [shape: f32[1,384], index: 8, kind: input, shape index: {}]
  %s9 = inlined_call_operand.vmem [shape: f32[1,128], index: 9, kind: input, shape index: {}]
  %s10 = inlined_call_operand.vmem [shape: f32[1,1,128], index: 10, kind: input, shape index: {}]
  %s11 = inlined_call_operand.<no memory space> [shape: f32[1], index: 11, kind: input, shape index: {}]
  %s12 = inlined_call_operand.vmem [shape: f32[8,8], index: 12, kind: output, shape index: {0}]
  %s13 = inlined_call_operand.vmem [shape: f32[2,8,128], index: 13, kind: output, shape index: {1}]
  %14 = xla_tuple %s12, %s13
  %s15 = sld [smem:[#allocation0]]
  $region66: #{rnn_forward.1} parent=0
    _
  %s17 = ssub.s32 1, %s15
  %s18 = scalar_select 0, %s17, %s15
  %19 = sst [smem:[#allocation4]] %s11
  // Predicated region
  $region2: #{rnn_forward.1} parent=0 // pred_check
    _
  $region3: #{rnn_forward.1} parent=0 // pred_check_branch
    %21 = sbr.rel (0) target = $region5
  $region4: #{rnn_forward.1} parent=0 // pred_region
    _
  $region5: #{rnn_forward.1} parent=0 // pred_fallthru
    _
  // Predicated region
  $region6: #{rnn_forward.1} parent=0 // pred_check
    _
  $region7: #{rnn_forward.1} parent=0 // pred_check_branch
    %23 = sbr.rel (0) target = $region9
  $region8: #{rnn_forward.1} parent=0 // pred_region
    _
  $region9: #{rnn_forward.1} parent=0 // pred_fallthru
    _
  // Predicated region
  $region10: #{rnn_forward.1} parent=0 // pred_check
    _
  $region11: #{rnn_forward.1} parent=0 // pred_check_branch
    %25 = sbr.rel (0) target = $region13
  $region12: #{rnn_forward.1} parent=0 // pred_region
    _
  $region13: #{rnn_forward.1} parent=0 // pred_fallthru
    _
  // Predicated region
  $region14: #{rnn_forward.1} parent=0 // pred_check
    _
  $region15: #{rnn_forward.1} parent=0 // pred_check_branch
    %27 = sbr.rel (0) target = $region17
  $region16: #{rnn_forward.1} parent=0 // pred_region
    _
  $region17: #{rnn_forward.1} parent=0 // pred_fallthru
    _
  // Predicated region
  $region18: #{rnn_forward.1} parent=0 // pred_check
    _
  $region19: #{rnn_forward.1} parent=0 // pred_check_branch
    %29 = sbr.rel (0) target = $region21
  $region20: #{rnn_forward.1} parent=0 // pred_region
    _
  $region21: #{rnn_forward.1} parent=0 // pred_fallthru
    _
  // Predicated region
  $region22: #{rnn_forward.1} parent=0 // pred_check
    _
  $region23: #{rnn_forward.1} parent=0 // pred_check_branch
    %31 = sbr.rel (0) target = $region25
  $region24: #{rnn_forward.1} parent=0 // pred_region
    _
  $region25: #{rnn_forward.1} parent=0 // pred_fallthru
    _
  // Predicated region
  $region26: #{rnn_forward.1} parent=0 // pred_check
    _
  $region27: #{rnn_forward.1} parent=0 // pred_check_branch
    %33 = sbr.rel (0) target = $region29
  $region28: #{rnn_forward.1} parent=0 // pred_region
    _
  $region29: #{rnn_forward.1} parent=0 // pred_fallthru
    _
  // Predicated region
  $region30: #{rnn_forward.1} parent=0 // pred_check
    _
  $region31: #{rnn_forward.1} parent=0 // pred_check_branch
    %35 = sbr.rel (0) target = $region33
  $region32: #{rnn_forward.1} parent=0 // pred_region
    _
  $region33: #{rnn_forward.1} parent=0 // pred_fallthru
    _
  // Predicated region
  $region34: #{rnn_forward.1} parent=0 // pred_check
    _
  $region35: #{rnn_forward.1} parent=0 // pred_check_branch
    %37 = sbr.rel (0) target = $region37
  $region36: #{rnn_forward.1} parent=0 // pred_region
    _
  $region37: #{rnn_forward.1} parent=0 // pred_fallthru
    _
  // Predicated region
  $region38: #{rnn_forward.1} parent=0 // pred_check
    _
  $region39: #{rnn_forward.1} parent=0 // pred_check_branch
    %39 = sbr.rel (0) target = $region41
  $region40: #{rnn_forward.1} parent=0 // pred_region
    _
  $region41: #{rnn_forward.1} parent=0 // pred_fallthru
    _
  // Predicated region
  $region42: #{rnn_forward.1} parent=0 // pred_check
    _
  $region43: #{rnn_forward.1} parent=0 // pred_check_branch
    %41 = sbr.rel (0) target = $region45
  $region44: #{rnn_forward.1} parent=0 // pred_region
    _
  $region45: #{rnn_forward.1} parent=0 // pred_fallthru
    _
  // Predicated region
  $region46: #{rnn_forward.1} parent=0 // pred_check
    _
  $region47: #{rnn_forward.1} parent=0 // pred_check_branch
    %43 = sbr.rel (0) target = $region49
  $region48: #{rnn_forward.1} parent=0 // pred_region
    _
  $region49: #{rnn_forward.1} parent=0 // pred_fallthru
    _
  %v45 = vld [vmem:[%s0] sm:$0xff]
  %v46 = vld [vmem:[%s0 + $0x8] sm:$0xff]
  %v47 = vld [vmem:[%s0 + $0x10] sm:$0xff]
  %v48 = vld [vmem:[%s0 + $0x18] sm:$0xff]
  %v49 = vld [vmem:[%s0 + $0x20] sm:$0xff]
  %v50 = vld [vmem:[%s0 + $0x28] sm:$0xff]
  %v51 = vld [vmem:[%s0 + $0x30] sm:$0xff]
  %v52 = vld [vmem:[%s0 + $0x38] sm:$0xff]
  %v53 = vld [vmem:[%s2] sm:$0x7]
  %55 = vset.pattern.permute.xlu0 0
  %56 = vperm.xlu0 %55, %v45
  %v57 = vpop.permute.xlu0 %56
  %60 = vset.pattern.permute.xlu0 0
  %61 = vperm.xlu0 %60, %v46
  %v62 = vpop.permute.xlu0 %61
  %65 = vset.pattern.permute.xlu0 0
  %66 = vperm.xlu0 %65, %v47
  %v67 = vpop.permute.xlu0 %66
  %70 = vset.pattern.permute.xlu0 0
  %71 = vperm.xlu0 %70, %v48
  %v72 = vpop.permute.xlu0 %71
  %75 = vset.pattern.permute.xlu0 0
  %76 = vperm.xlu0 %75, %v49
  %v77 = vpop.permute.xlu0 %76
  %80 = vset.pattern.permute.xlu0 0
  %81 = vperm.xlu0 %80, %v50
  %v82 = vpop.permute.xlu0 %81
  %85 = vset.pattern.permute.xlu0 0
  %86 = vperm.xlu0 %85, %v51
  %v87 = vpop.permute.xlu0 %86
  %90 = vset.pattern.permute.xlu0 0
  %91 = vperm.xlu0 %90, %v52
  %v92 = vpop.permute.xlu0 %91
  %v95 = vlaneseq
  %v96 = vshrl.u32 %v95, 7
  %v97 = vsub.s32 0, %v96
  %v98 = vrot.slane %v53, %v97
  %v99 = vlaneseq
  %v100 = vshrl.u32 %v99, 7
  %v101 = vsub.s32 1, %v100
  %v102 = vrot.slane %v53, %v101
  %v103 = vlaneseq
  %v104 = vshrl.u32 %v103, 7
  %v105 = vsub.s32 2, %v104
  %v106 = vrot.slane %v53, %v105
  %v110 = vmul.f32 %v57, %v98
  %v111 = vmul.f32 %v57, %v102
  %v112 = vmul.f32 %v57, %v106
  %v113 = vmul.f32 %v62, %v98
  %v114 = vmul.f32 %v62, %v102
  %v115 = vmul.f32 %v62, %v106
  %v116 = vmul.f32 %v67, %v98
  %v117 = vmul.f32 %v67, %v102
  %v118 = vmul.f32 %v67, %v106
  %v119 = vmul.f32 %v72, %v98
  %v120 = vmul.f32 %v72, %v102
  %v121 = vmul.f32 %v72, %v106
  %v122 = vmul.f32 %v77, %v98
  %v123 = vmul.f32 %v77, %v102
  %v124 = vmul.f32 %v77, %v106
  %v125 = vmul.f32 %v82, %v98
  %v126 = vmul.f32 %v82, %v102
  %v127 = vmul.f32 %v82, %v106
  %v128 = vmul.f32 %v87, %v98
  %v129 = vmul.f32 %v87, %v102
  %v130 = vmul.f32 %v87, %v106
  %v131 = vmul.f32 %v92, %v98
  %v132 = vmul.f32 %v92, %v102
  %v133 = vmul.f32 %v92, %v106
  %v134 = vld [vmem:[%s4] sm:$0x7]
  %v136 = vlaneseq
  %v137 = vshrl.u32 %v136, 7
  %v138 = vsub.s32 0, %v137
  %v139 = vrot.slane %v134, %v138
  %v140 = vlaneseq
  %v141 = vshrl.u32 %v140, 7
  %v142 = vsub.s32 1, %v141
  %v143 = vrot.slane %v134, %v142
  %v144 = vlaneseq
  %v145 = vshrl.u32 %v144, 7
  %v146 = vsub.s32 2, %v145
  %v147 = vrot.slane %v134, %v146
  %v151 = vadd.f32 %v110, %v139
  %v152 = vadd.f32 %v111, %v143
  %v153 = vadd.f32 %v112, %v147
  %v154 = vadd.f32 %v113, %v139
  %v155 = vadd.f32 %v114, %v143
  %v156 = vadd.f32 %v115, %v147
  %v157 = vadd.f32 %v116, %v139
  %v158 = vadd.f32 %v117, %v143
  %v159 = vadd.f32 %v118, %v147
  %v160 = vadd.f32 %v119, %v139
  %v161 = vadd.f32 %v120, %v143
  %v162 = vadd.f32 %v121, %v147
  %v163 = vadd.f32 %v122, %v139
  %v164 = vadd.f32 %v123, %v143
  %v165 = vadd.f32 %v124, %v147
  %v166 = vadd.f32 %v125, %v139
  %v167 = vadd.f32 %v126, %v143
  %v168 = vadd.f32 %v127, %v147
  %v169 = vadd.f32 %v128, %v139
  %v170 = vadd.f32 %v129, %v143
  %v171 = vadd.f32 %v130, %v147
  %v172 = vadd.f32 %v131, %v139
  %v173 = vadd.f32 %v132, %v143
  %v174 = vadd.f32 %v133, %v147
  %175 = vst [vmem:[#allocation2] sm:$0xff] %v151
  %176 = vst [vmem:[#allocation2 + $0x8] sm:$0xff] %v152
  %177 = vst [vmem:[#allocation2 + $0x10] sm:$0xff] %v153
  %178 = vst [vmem:[#allocation2 + $0x18] sm:$0xff] %v154
  %179 = vst [vmem:[#allocation2 + $0x20] sm:$0xff] %v155
  %180 = vst [vmem:[#allocation2 + $0x28] sm:$0xff] %v156
  %181 = vst [vmem:[#allocation2 + $0x30] sm:$0xff] %v157
  %182 = vst [vmem:[#allocation2 + $0x38] sm:$0xff] %v158
  %183 = vst [vmem:[#allocation2 + $0x40] sm:$0xff] %v159
  %184 = vst [vmem:[#allocation2 + $0x48] sm:$0xff] %v160
  %185 = vst [vmem:[#allocation2 + $0x50] sm:$0xff] %v161
  %186 = vst [vmem:[#allocation2 + $0x58] sm:$0xff] %v162
  %187 = vst [vmem:[#allocation2 + $0x60] sm:$0xff] %v163
  %188 = vst [vmem:[#allocation2 + $0x68] sm:$0xff] %v164
  %189 = vst [vmem:[#allocation2 + $0x70] sm:$0xff] %v165
  %190 = vst [vmem:[#allocation2 + $0x78] sm:$0xff] %v166
  %191 = vst [vmem:[#allocation2 + $0x80] sm:$0xff] %v167
  %192 = vst [vmem:[#allocation2 + $0x88] sm:$0xff] %v168
  %193 = vst [vmem:[#allocation2 + $0x90] sm:$0xff] %v169
  %194 = vst [vmem:[#allocation2 + $0x98] sm:$0xff] %v170
  %195 = vst [vmem:[#allocation2 + $0xa0] sm:$0xff] %v171
  %196 = vst [vmem:[#allocation2 + $0xa8] sm:$0xff] %v172
  %197 = vst [vmem:[#allocation2 + $0xb0] sm:$0xff] %v173
  %198 = vst [vmem:[#allocation2 + $0xb8] sm:$0xff] %v174
  %v199 = vld [vmem:[%s8] sm:$0x7]
  %v201 = vlaneseq
  %v202 = vshrl.u32 %v201, 7
  %v203 = vsub.s32 0, %v202
  %v204 = vrot.slane %v199, %v203
  %v205 = vlaneseq
  %v206 = vshrl.u32 %v205, 7
  %v207 = vsub.s32 1, %v206
  %v208 = vrot.slane %v199, %v207
  %v209 = vlaneseq
  %v210 = vshrl.u32 %v209, 7
  %v211 = vsub.s32 2, %v210
  %v212 = vrot.slane %v199, %v211
  %v216 = vld [vmem:[%s5] sm:$0x1]
  %v218 = vlaneseq
  %v219 = vshrl.u32 %v218, 7
  %v220 = vsub.s32 0, %v219
  %v221 = vrot.slane %v216, %v220
  %v223 = vld [vmem:[%s9] sm:$0x1]
  %v225 = vlaneseq
  %v226 = vshrl.u32 %v225, 7
  %v227 = vsub.s32 0, %v226
  %v228 = vrot.slane %v223, %v227
  %v230 = vld [vmem:[%s1] sm:$0xff]
  %s231 = scalar_lea.vmem %s1, 8
  %v232 = vld [vmem:[%s231] sm:$0xff]
  %v233 = vld [vmem:[#allocation2] sm:$0xff]
  %v234 = vld [vmem:[#allocation2 + $0x8] sm:$0xff]
  %v235 = vld [vmem:[#allocation2 + $0x10] sm:$0xff]
  %v236 = vpack.c.bf16 %v230, %v230
  %v237 = vld [vmem:[%s3] sm:$0xff]
  %v238 = vld [vmem:[%s3 + $0x8] sm:$0xf]
  %v239 = vld [vmem:[%s3 + $0xc] sm:$0xff]
  %v240 = vld [vmem:[%s3 + $0x14] sm:$0xf]
  %v241 = vld [vmem:[%s3 + $0x18] sm:$0xff]
  %v242 = vld [vmem:[%s3 + $0x20] sm:$0xf]
  %v243 = vld [vmem:[%s3 + $0x24] sm:$0xff]
  %v244 = vld [vmem:[%s3 + $0x2c] sm:$0xf]
  %v245 = vld [vmem:[%s3 + $0x30] sm:$0xff]
  %v246 = vld [vmem:[%s3 + $0x38] sm:$0xf]
  %v247 = vld [vmem:[%s3 + $0x3c] sm:$0xff]
  %v248 = vld [vmem:[%s3 + $0x44] sm:$0xf]
  %v249 = vld [vmem:[%s3 + $0x48] sm:$0xff]
  %v250 = vld [vmem:[%s3 + $0x50] sm:$0xf]
  %v251 = vld [vmem:[%s3 + $0x54] sm:$0xff]
  %v252 = vld [vmem:[%s3 + $0x5c] sm:$0xf]
  %v253 = vld [vmem:[%s3 + $0x60] sm:$0xff]
  %v254 = vld [vmem:[%s3 + $0x68] sm:$0xf]
  %v255 = vld [vmem:[%s3 + $0x6c] sm:$0xff]
  %v256 = vld [vmem:[%s3 + $0x74] sm:$0xf]
  %v257 = vld [vmem:[%s3 + $0x78] sm:$0xff]
  %v258 = vld [vmem:[%s3 + $0x80] sm:$0xf]
  %v259 = vld [vmem:[%s3 + $0x84] sm:$0xff]
  %v260 = vld [vmem:[%s3 + $0x8c] sm:$0xf]
  %v261 = vld [vmem:[%s3 + $0x90] sm:$0xff]
  %v262 = vld [vmem:[%s3 + $0x98] sm:$0xf]
  %v263 = vld [vmem:[%s3 + $0x9c] sm:$0xff]
  %v264 = vld [vmem:[%s3 + $0xa4] sm:$0xf]
  %v265 = vld [vmem:[%s3 + $0xa8] sm:$0xff]
  %v266 = vld [vmem:[%s3 + $0xb0] sm:$0xf]
  %v267 = vld [vmem:[%s3 + $0xb4] sm:$0xff]
  %v268 = vld [vmem:[%s3 + $0xbc] sm:$0xf]
  %v301 = vunpack.c.l.b16 %v237
  %v302 = vunpack.c.h.b16 %v237
  %v303 = vunpack.c.l.b16 %v238
  %v304 = vunpack.c.l.b16 %v239
  %v305 = vunpack.c.h.b16 %v239
  %v306 = vunpack.c.l.b16 %v240
  %v307 = vunpack.c.l.b16 %v241
  %v308 = vunpack.c.h.b16 %v241
  %v309 = vunpack.c.l.b16 %v242
  %v310 = vunpack.c.l.b16 %v243
  %v311 = vunpack.c.h.b16 %v243
  %v312 = vunpack.c.l.b16 %v244
  %v313 = vunpack.c.l.b16 %v245
  %v314 = vunpack.c.h.b16 %v245
  %v315 = vunpack.c.l.b16 %v246
  %v316 = vunpack.c.l.b16 %v247
  %v317 = vunpack.c.h.b16 %v247
  %v318 = vunpack.c.l.b16 %v248
  %v319 = vunpack.c.l.b16 %v249
  %v320 = vunpack.c.h.b16 %v249
  %v321 = vunpack.c.l.b16 %v250
  %v322 = vunpack.c.l.b16 %v251
  %v323 = vunpack.c.h.b16 %v251
  %v324 = vunpack.c.l.b16 %v252
  %v325 = vunpack.c.l.b16 %v253
  %v326 = vunpack.c.h.b16 %v253
  %v327 = vunpack.c.l.b16 %v254
  %v328 = vunpack.c.l.b16 %v255
  %v329 = vunpack.c.h.b16 %v255
  %v330 = vunpack.c.l.b16 %v256
  %v331 = vunpack.c.l.b16 %v257
  %v332 = vunpack.c.h.b16 %v257
  %v333 = vunpack.c.l.b16 %v258
  %v334 = vunpack.c.l.b16 %v259
  %v335 = vunpack.c.h.b16 %v259
  %v336 = vunpack.c.l.b16 %v260
  %v337 = vunpack.c.l.b16 %v261
  %v338 = vunpack.c.h.b16 %v261
  %v339 = vunpack.c.l.b16 %v262
  %v340 = vunpack.c.l.b16 %v263
  %v341 = vunpack.c.h.b16 %v263
  %v342 = vunpack.c.l.b16 %v264
  %v343 = vunpack.c.l.b16 %v265
  %v344 = vunpack.c.h.b16 %v265
  %v345 = vunpack.c.l.b16 %v266
  %v346 = vunpack.c.l.b16 %v267
  %v347 = vunpack.c.h.b16 %v267
  %v348 = vunpack.c.l.b16 %v268
  %v349 = vpack.c.b16 %v304, %v301
  %v350 = vpack.c.b16 %v305, %v302
  %v351 = vpack.c.b16 %v306, %v303
  %v352 = vpack.c.b16 %v310, %v307
  %v353 = vpack.c.b16 %v311, %v308
  %v354 = vpack.c.b16 %v312, %v309
  %v355 = vpack.c.b16 %v316, %v313
  %v356 = vpack.c.b16 %v317, %v314
  %v357 = vpack.c.b16 %v318, %v315
  %v358 = vpack.c.b16 %v322, %v319
  %v359 = vpack.c.b16 %v323, %v320
  %v360 = vpack.c.b16 %v324, %v321
  %v361 = vpack.c.b16 %v328, %v325
  %v362 = vpack.c.b16 %v329, %v326
  %v363 = vpack.c.b16 %v330, %v327
  %v364 = vpack.c.b16 %v334, %v331
  %v365 = vpack.c.b16 %v335, %v332
  %v366 = vpack.c.b16 %v336, %v333
  %v367 = vpack.c.b16 %v340, %v337
  %v368 = vpack.c.b16 %v341, %v338
  %v369 = vpack.c.b16 %v342, %v339
  %v370 = vpack.c.b16 %v346, %v343
  %v371 = vpack.c.b16 %v347, %v344
  %v372 = vpack.c.b16 %v348, %v345
  %397 = vmatprep.subr.bf16.mxu0 %v350
  %398 = vmatpush1.bf16.msra.mxu0 %v349
  %399 = vmatprep.subr.bf16.mxu0 %v353
  %400 = vmatpush1.bf16.msra.mxu0 %v352
  %401 = vmatprep.subr.bf16.mxu0 %v356
  %402 = vmatpush1.bf16.msra.mxu0 %v355
  %403 = vmatprep.subr.bf16.mxu0 %v359
  %404 = vmatpush1.bf16.msra.mxu0 %v358
  %405 = vmatprep.subr.bf16.mxu0 %v362
  %406 = vmatpush1.bf16.msra.mxu0 %v361
  %407 = vmatprep.subr.bf16.mxu0 %v365
  %408 = vmatpush1.bf16.msra.mxu0 %v364
  %409 = vmatprep.subr.bf16.mxu0 %v368
  %410 = vmatpush1.bf16.msra.mxu0 %v367
  %411 = vmatprep.subr.bf16.mxu0 %v371
  %412 = vmatpush1.bf16.msra.mxu0 %v370
  %413 = vmatprep.subr.bf16.mxu0 0
  %414 = vmatpush1.bf16.msra.mxu0 0
  %415 = vmatprep.subr.bf16.mxu0 0
  %416 = vmatpush1.bf16.msra.mxu0 0
  %417 = vmatprep.subr.bf16.mxu0 0
  %418 = vmatpush1.bf16.msra.mxu0 0
  %419 = vmatprep.subr.bf16.mxu0 0
  %420 = vmatpush1.bf16.msra.mxu0 0
  %421 = vmatprep.subr.bf16.mxu0 0
  %422 = vmatpush1.bf16.msra.mxu0 0
  %423 = vmatprep.subr.bf16.mxu0 0
  %424 = vmatpush1.bf16.msra.mxu0 0
  %425 = vmatprep.subr.bf16.mxu0 0
  %426 = vmatpush1.bf16.msra.mxu0 0
  %427 = vmatprep.subr.bf16.mxu0 0
  %428 = vmatpush1.bf16.msra.mxu0 0
  %429 = vmatprep.mubr.bf16.mxu0 0
  %430 = vmatmul.mubr.bf16.gmra.mrb[0].mxu0 %v236
  %v431 = vpop.f32.mrb[0].mxu0
  %v432 = vadd.f32 0.0, %v431
  %v433 = vpop.f32.mrb[0].mxu0
  %v434 = vadd.f32 0.0, %v433
  %v435 = vpop.f32.mrb[0].mxu0
  %v436 = vpop.f32.mrb[0].mxu0
  %437 = vdwg.mxu0
  %438 = vmatprep.subr.bf16.mxu0 0
  %439 = vmatpush1.bf16.msra.mxu0 %v351
  %440 = vmatprep.subr.bf16.mxu0 0
  %441 = vmatpush1.bf16.msra.mxu0 %v354
  %442 = vmatprep.subr.bf16.mxu0 0
  %443 = vmatpush1.bf16.msra.mxu0 %v357
  %444 = vmatprep.subr.bf16.mxu0 0
  %445 = vmatpush1.bf16.msra.mxu0 %v360
  %446 = vmatprep.subr.bf16.mxu0 0
  %447 = vmatpush1.bf16.msra.mxu0 %v363
  %448 = vmatprep.subr.bf16.mxu0 0
  %449 = vmatpush1.bf16.msra.mxu0 %v366
  %450 = vmatprep.subr.bf16.mxu0 0
  %451 = vmatpush1.bf16.msra.mxu0 %v369
  %452 = vmatprep.subr.bf16.mxu0 0
  %453 = vmatpush1.bf16.msra.mxu0 %v372
  %454 = vmatprep.subr.bf16.mxu0 0
  %455 = vmatpush1.bf16.msra.mxu0 0
  %456 = vmatprep.subr.bf16.mxu0 0
  %457 = vmatpush1.bf16.msra.mxu0 0
  %458 = vmatprep.subr.bf16.mxu0 0
  %459 = vmatpush1.bf16.msra.mxu0 0
  %460 = vmatprep.subr.bf16.mxu0 0
  %461 = vmatpush1.bf16.msra.mxu0 0
  %462 = vmatprep.subr.bf16.mxu0 0
  %463 = vmatpush1.bf16.msra.mxu0 0
  %464 = vmatprep.subr.bf16.mxu0 0
  %465 = vmatpush1.bf16.msra.mxu0 0
  %466 = vmatprep.subr.bf16.mxu0 0
  %467 = vmatpush1.bf16.msra.mxu0 0
  %468 = vmatprep.subr.bf16.mxu0 0
  %469 = vmatpush1.bf16.msra.mxu0 0
  %470 = vmatprep.mubr.bf16.mxu0 0
  %471 = vmatmul.mubr.bf16.gmra.mrb[0].mxu0 %v236
  %v472 = vpop.f32.mrb[0].mxu0
  %v473 = vadd.f32 0.0, %v472
  %v474 = vpop.f32.mrb[0].mxu0
  %v475 = vpop.f32.mrb[0].mxu0
  %v476 = vpop.f32.mrb[0].mxu0
  %477 = vdwg.mxu0
  %v478 = vadd.f32 %v233, %v432
  %v479 = vxor.u32 %v478, 2147483648
  %v480 = vmul.f32 %v479, 1.442695
  %v481 = vpow.pop %v480
  %v482 = vadd.f32 %v481, 1.0
  %v483 = vrcp.pop %v482
  %v484 = vmul.f32 1.0, %v483
  %v485 = vadd.f32 %v234, %v434
  %v486 = vxor.u32 %v485, 2147483648
  %v487 = vmul.f32 %v486, 1.442695
  %v488 = vpow.pop %v487
  %v489 = vadd.f32 %v488, 1.0
  %v490 = vrcp.pop %v489
  %v491 = vmul.f32 1.0, %v490
  %v492 = vadd.f32 %v473, %v221
  %v493 = vmul.f32 %v484, %v492
  %v494 = vadd.f32 %v235, %v493
  %v495 = vtanh.pop %v494
  %v496 = vsub.f32 1.0, %v491
  %v497 = vmul.f32 %v496, %v495
  %v498 = vmul.f32 %v491, %v230
  %v499 = vadd.f32 %v497, %v498
  %v500 = vpack.c.bf16 %v499, %v499
  %v501 = vld [vmem:[%s6] sm:$0xff]
  %v502 = vld [vmem:[%s6 + $0x8] sm:$0xf]
  %v503 = vld [vmem:[%s6 + $0xc] sm:$0xff]
  %v504 = vld [vmem:[%s6 + $0x14] sm:$0xf]
  %v505 = vld [vmem:[%s6 + $0x18] sm:$0xff]
  %v506 = vld [vmem:[%s6 + $0x20] sm:$0xf]
  %v507 = vld [vmem:[%s6 + $0x24] sm:$0xff]
  %v508 = vld [vmem:[%s6 + $0x2c] sm:$0xf]
  %v509 = vld [vmem:[%s6 + $0x30] sm:$0xff]
  %v510 = vld [vmem:[%s6 + $0x38] sm:$0xf]
  %v511 = vld [vmem:[%s6 + $0x3c] sm:$0xff]
  %v512 = vld [vmem:[%s6 + $0x44] sm:$0xf]
  %v513 = vld [vmem:[%s6 + $0x48] sm:$0xff]
  %v514 = vld [vmem:[%s6 + $0x50] sm:$0xf]
  %v515 = vld [vmem:[%s6 + $0x54] sm:$0xff]
  %v516 = vld [vmem:[%s6 + $0x5c] sm:$0xf]
  %v517 = vld [vmem:[%s6 + $0x60] sm:$0xff]
  %v518 = vld [vmem:[%s6 + $0x68] sm:$0xf]
  %v519 = vld [vmem:[%s6 + $0x6c] sm:$0xff]
  %v520 = vld [vmem:[%s6 + $0x74] sm:$0xf]
  %v521 = vld [vmem:[%s6 + $0x78] sm:$0xff]
  %v522 = vld [vmem:[%s6 + $0x80] sm:$0xf]
  %v523 = vld [vmem:[%s6 + $0x84] sm:$0xff]
  %v524 = vld [vmem:[%s6 + $0x8c] sm:$0xf]
  %v525 = vld [vmem:[%s6 + $0x90] sm:$0xff]
  %v526 = vld [vmem:[%s6 + $0x98] sm:$0xf]
  %v527 = vld [vmem:[%s6 + $0x9c] sm:$0xff]
  %v528 = vld [vmem:[%s6 + $0xa4] sm:$0xf]
  %v529 = vld [vmem:[%s6 + $0xa8] sm:$0xff]
  %v530 = vld [vmem:[%s6 + $0xb0] sm:$0xf]
  %v531 = vld [vmem:[%s6 + $0xb4] sm:$0xff]
  %v532 = vld [vmem:[%s6 + $0xbc] sm:$0xf]
  %v565 = vunpack.c.l.b16 %v501
  %v566 = vunpack.c.h.b16 %v501
  %v567 = vunpack.c.l.b16 %v502
  %v568 = vunpack.c.l.b16 %v503
  %v569 = vunpack.c.h.b16 %v503
  %v570 = vunpack.c.l.b16 %v504
  %v571 = vunpack.c.l.b16 %v505
  %v572 = vunpack.c.h.b16 %v505
  %v573 = vunpack.c.l.b16 %v506
  %v574 = vunpack.c.l.b16 %v507
  %v575 = vunpack.c.h.b16 %v507
  %v576 = vunpack.c.l.b16 %v508
  %v577 = vunpack.c.l.b16 %v509
  %v578 = vunpack.c.h.b16 %v509
  %v579 = vunpack.c.l.b16 %v510
  %v580 = vunpack.c.l.b16 %v511
  %v581 = vunpack.c.h.b16 %v511
  %v582 = vunpack.c.l.b16 %v512
  %v583 = vunpack.c.l.b16 %v513
  %v584 = vunpack.c.h.b16 %v513
  %v585 = vunpack.c.l.b16 %v514
  %v586 = vunpack.c.l.b16 %v515
  %v587 = vunpack.c.h.b16 %v515
  %v588 = vunpack.c.l.b16 %v516
  %v589 = vunpack.c.l.b16 %v517
  %v590 = vunpack.c.h.b16 %v517
  %v591 = vunpack.c.l.b16 %v518
  %v592 = vunpack.c.l.b16 %v519
  %v593 = vunpack.c.h.b16 %v519
  %v594 = vunpack.c.l.b16 %v520
  %v595 = vunpack.c.l.b16 %v521
  %v596 = vunpack.c.h.b16 %v521
  %v597 = vunpack.c.l.b16 %v522
  %v598 = vunpack.c.l.b16 %v523
  %v599 = vunpack.c.h.b16 %v523
  %v600 = vunpack.c.l.b16 %v524
  %v601 = vunpack.c.l.b16 %v525
  %v602 = vunpack.c.h.b16 %v525
  %v603 = vunpack.c.l.b16 %v526
  %v604 = vunpack.c.l.b16 %v527
  %v605 = vunpack.c.h.b16 %v527
  %v606 = vunpack.c.l.b16 %v528
  %v607 = vunpack.c.l.b16 %v529
  %v608 = vunpack.c.h.b16 %v529
  %v609 = vunpack.c.l.b16 %v530
  %v610 = vunpack.c.l.b16 %v531
  %v611 = vunpack.c.h.b16 %v531
  %v612 = vunpack.c.l.b16 %v532
  %v613 = vpack.c.b16 %v568, %v565
  %v614 = vpack.c.b16 %v569, %v566
  %v615 = vpack.c.b16 %v570, %v567
  %v616 = vpack.c.b16 %v574, %v571
  %v617 = vpack.c.b16 %v575, %v572
  %v618 = vpack.c.b16 %v576, %v573
  %v619 = vpack.c.b16 %v580, %v577
  %v620 = vpack.c.b16 %v581, %v578
  %v621 = vpack.c.b16 %v582, %v579
  %v622 = vpack.c.b16 %v586, %v583
  %v623 = vpack.c.b16 %v587, %v584
  %v624 = vpack.c.b16 %v588, %v585
  %v625 = vpack.c.b16 %v592, %v589
  %v626 = vpack.c.b16 %v593, %v590
  %v627 = vpack.c.b16 %v594, %v591
  %v628 = vpack.c.b16 %v598, %v595
  %v629 = vpack.c.b16 %v599, %v596
  %v630 = vpack.c.b16 %v600, %v597
  %v631 = vpack.c.b16 %v604, %v601
  %v632 = vpack.c.b16 %v605, %v602
  %v633 = vpack.c.b16 %v606, %v603
  %v634 = vpack.c.b16 %v610, %v607
  %v635 = vpack.c.b16 %v611, %v608
  %v636 = vpack.c.b16 %v612, %v609
  %661 = vmatprep.subr.bf16.mxu0 %v614
  %662 = vmatpush1.bf16.msra.mxu0 %v613
  %663 = vmatprep.subr.bf16.mxu0 %v617
  %664 = vmatpush1.bf16.msra.mxu0 %v616
  %665 = vmatprep.subr.bf16.mxu0 %v620
  %666 = vmatpush1.bf16.msra.mxu0 %v619
  %667 = vmatprep.subr.bf16.mxu0 %v623
  %668 = vmatpush1.bf16.msra.mxu0 %v622
  %669 = vmatprep.subr.bf16.mxu0 %v626
  %670 = vmatpush1.bf16.msra.mxu0 %v625
  %671 = vmatprep.subr.bf16.mxu0 %v629
  %672 = vmatpush1.bf16.msra.mxu0 %v628
  %673 = vmatprep.subr.bf16.mxu0 %v632
  %674 = vmatpush1.bf16.msra.mxu0 %v631
  %675 = vmatprep.subr.bf16.mxu0 %v635
  %676 = vmatpush1.bf16.msra.mxu0 %v634
  %677 = vmatprep.subr.bf16.mxu0 0
  %678 = vmatpush1.bf16.msra.mxu0 0
  %679 = vmatprep.subr.bf16.mxu0 0
  %680 = vmatpush1.bf16.msra.mxu0 0
  %681 = vmatprep.subr.bf16.mxu0 0
  %682 = vmatpush1.bf16.msra.mxu0 0
  %683 = vmatprep.subr.bf16.mxu0 0
  %684 = vmatpush1.bf16.msra.mxu0 0
  %685 = vmatprep.subr.bf16.mxu0 0
  %686 = vmatpush1.bf16.msra.mxu0 0
  %687 = vmatprep.subr.bf16.mxu0 0
  %688 = vmatpush1.bf16.msra.mxu0 0
  %689 = vmatprep.subr.bf16.mxu0 0
  %690 = vmatpush1.bf16.msra.mxu0 0
  %691 = vmatprep.subr.bf16.mxu0 0
  %692 = vmatpush1.bf16.msra.mxu0 0
  %693 = vmatprep.mubr.bf16.mxu0 0
  %694 = vmatmul.mubr.bf16.gmra.mrb[0].mxu0 %v500
  %v695 = vpop.f32.mrb[0].mxu0
  %v696 = vadd.f32 %v204, %v695
  %v697 = vpop.f32.mrb[0].mxu0
  %v698 = vadd.f32 %v208, %v697
  %v699 = vpop.f32.mrb[0].mxu0
  %v700 = vpop.f32.mrb[0].mxu0
  %701 = vdwg.mxu0
  %702 = vmatprep.subr.bf16.mxu0 0
  %703 = vmatpush1.bf16.msra.mxu0 %v615
  %704 = vmatprep.subr.bf16.mxu0 0
  %705 = vmatpush1.bf16.msra.mxu0 %v618
  %706 = vmatprep.subr.bf16.mxu0 0
  %707 = vmatpush1.bf16.msra.mxu0 %v621
  %708 = vmatprep.subr.bf16.mxu0 0
  %709 = vmatpush1.bf16.msra.mxu0 %v624
  %710 = vmatprep.subr.bf16.mxu0 0
  %711 = vmatpush1.bf16.msra.mxu0 %v627
  %712 = vmatprep.subr.bf16.mxu0 0
  %713 = vmatpush1.bf16.msra.mxu0 %v630
  %714 = vmatprep.subr.bf16.mxu0 0
  %715 = vmatpush1.bf16.msra.mxu0 %v633
  %716 = vmatprep.subr.bf16.mxu0 0
  %717 = vmatpush1.bf16.msra.mxu0 %v636
  %718 = vmatprep.subr.bf16.mxu0 0
  %719 = vmatpush1.bf16.msra.mxu0 0
  %720 = vmatprep.subr.bf16.mxu0 0
  %721 = vmatpush1.bf16.msra.mxu0 0
  %722 = vmatprep.subr.bf16.mxu0 0
  %723 = vmatpush1.bf16.msra.mxu0 0
  %724 = vmatprep.subr.bf16.mxu0 0
  %725 = vmatpush1.bf16.msra.mxu0 0
  %726 = vmatprep.subr.bf16.mxu0 0
  %727 = vmatpush1.bf16.msra.mxu0 0
  %728 = vmatprep.subr.bf16.mxu0 0
  %729 = vmatpush1.bf16.msra.mxu0 0
  %730 = vmatprep.subr.bf16.mxu0 0
  %731 = vmatpush1.bf16.msra.mxu0 0
  %732 = vmatprep.subr.bf16.mxu0 0
  %733 = vmatpush1.bf16.msra.mxu0 0
  %734 = vmatprep.mubr.bf16.mxu0 0
  %735 = vmatmul.mubr.bf16.gmra.mrb[0].mxu0 %v500
  %v736 = vpop.f32.mrb[0].mxu0
  %v737 = vadd.f32 %v212, %v736
  %v738 = vpop.f32.mrb[0].mxu0
  %v739 = vpop.f32.mrb[0].mxu0
  %v740 = vpop.f32.mrb[0].mxu0
  %741 = vdwg.mxu0
  %v742 = vpack.c.bf16 %v232, %v232
  %v743 = vld [vmem:[%s7] sm:$0xff]
  %v744 = vld [vmem:[%s7 + $0x8] sm:$0xf]
  %v745 = vld [vmem:[%s7 + $0xc] sm:$0xff]
  %v746 = vld [vmem:[%s7 + $0x14] sm:$0xf]
  %v747 = vld [vmem:[%s7 + $0x18] sm:$0xff]
  %v748 = vld [vmem:[%s7 + $0x20] sm:$0xf]
  %v749 = vld [vmem:[%s7 + $0x24] sm:$0xff]
  %v750 = vld [vmem:[%s7 + $0x2c] sm:$0xf]
  %v751 = vld [vmem:[%s7 + $0x30] sm:$0xff]
  %v752 = vld [vmem:[%s7 + $0x38] sm:$0xf]
  %v753 = vld [vmem:[%s7 + $0x3c] sm:$0xff]
  %v754 = vld [vmem:[%s7 + $0x44] sm:$0xf]
  %v755 = vld [vmem:[%s7 + $0x48] sm:$0xff]
  %v756 = vld [vmem:[%s7 + $0x50] sm:$0xf]
  %v757 = vld [vmem:[%s7 + $0x54] sm:$0xff]
  %v758 = vld [vmem:[%s7 + $0x5c] sm:$0xf]
  %v759 = vld [vmem:[%s7 + $0x60] sm:$0xff]
  %v760 = vld [vmem:[%s7 + $0x68] sm:$0xf]
  %v761 = vld [vmem:[%s7 + $0x6c] sm:$0xff]
  %v762 = vld [vmem:[%s7 + $0x74] sm:$0xf]
  %v763 = vld [vmem:[%s7 + $0x78] sm:$0xff]
  %v764 = vld [vmem:[%s7 + $0x80] sm:$0xf]
  %v765 = vld [vmem:[%s7 + $0x84] sm:$0xff]
  %v766 = vld [vmem:[%s7 + $0x8c] sm:$0xf]
  %v767 = vld [vmem:[%s7 + $0x90] sm:$0xff]
  %v768 = vld [vmem:[%s7 + $0x98] sm:$0xf]
  %v769 = vld [vmem:[%s7 + $0x9c] sm:$0xff]
  %v770 = vld [vmem:[%s7 + $0xa4] sm:$0xf]
  %v771 = vld [vmem:[%s7 + $0xa8] sm:$0xff]
  %v772 = vld [vmem:[%s7 + $0xb0] sm:$0xf]
  %v773 = vld [vmem:[%s7 + $0xb4] sm:$0xff]
  %v774 = vld [vmem:[%s7 + $0xbc] sm:$0xf]
  %v807 = vunpack.c.l.b16 %v743
  %v808 = vunpack.c.h.b16 %v743
  %v809 = vunpack.c.l.b16 %v744
  %v810 = vunpack.c.l.b16 %v745
  %v811 = vunpack.c.h.b16 %v745
  %v812 = vunpack.c.l.b16 %v746
  %v813 = vunpack.c.l.b16 %v747
  %v814 = vunpack.c.h.b16 %v747
  %v815 = vunpack.c.l.b16 %v748
  %v816 = vunpack.c.l.b16 %v749
  %v817 = vunpack.c.h.b16 %v749
  %v818 = vunpack.c.l.b16 %v750
  %v819 = vunpack.c.l.b16 %v751
  %v820 = vunpack.c.h.b16 %v751
  %v821 = vunpack.c.l.b16 %v752
  %v822 = vunpack.c.l.b16 %v753
  %v823 = vunpack.c.h.b16 %v753
  %v824 = vunpack.c.l.b16 %v754
  %v825 = vunpack.c.l.b16 %v755
  %v826 = vunpack.c.h.b16 %v755
  %v827 = vunpack.c.l.b16 %v756
  %v828 = vunpack.c.l.b16 %v757
  %v829 = vunpack.c.h.b16 %v757
  %v830 = vunpack.c.l.b16 %v758
  %v831 = vunpack.c.l.b16 %v759
  %v832 = vunpack.c.h.b16 %v759
  %v833 = vunpack.c.l.b16 %v760
  %v834 = vunpack.c.l.b16 %v761
  %v835 = vunpack.c.h.b16 %v761
  %v836 = vunpack.c.l.b16 %v762
  %v837 = vunpack.c.l.b16 %v763
  %v838 = vunpack.c.h.b16 %v763
  %v839 = vunpack.c.l.b16 %v764
  %v840 = vunpack.c.l.b16 %v765
  %v841 = vunpack.c.h.b16 %v765
  %v842 = vunpack.c.l.b16 %v766
  %v843 = vunpack.c.l.b16 %v767
  %v844 = vunpack.c.h.b16 %v767
  %v845 = vunpack.c.l.b16 %v768
  %v846 = vunpack.c.l.b16 %v769
  %v847 = vunpack.c.h.b16 %v769
  %v848 = vunpack.c.l.b16 %v770
  %v849 = vunpack.c.l.b16 %v771
  %v850 = vunpack.c.h.b16 %v771
  %v851 = vunpack.c.l.b16 %v772
  %v852 = vunpack.c.l.b16 %v773
  %v853 = vunpack.c.h.b16 %v773
  %v854 = vunpack.c.l.b16 %v774
  %v855 = vpack.c.b16 %v810, %v807
  %v856 = vpack.c.b16 %v811, %v808
  %v857 = vpack.c.b16 %v812, %v809
  %v858 = vpack.c.b16 %v816, %v813
  %v859 = vpack.c.b16 %v817, %v814
  %v860 = vpack.c.b16 %v818, %v815
  %v861 = vpack.c.b16 %v822, %v819
  %v862 = vpack.c.b16 %v823, %v820
  %v863 = vpack.c.b16 %v824, %v821
  %v864 = vpack.c.b16 %v828, %v825
  %v865 = vpack.c.b16 %v829, %v826
  %v866 = vpack.c.b16 %v830, %v827
  %v867 = vpack.c.b16 %v834, %v831
  %v868 = vpack.c.b16 %v835, %v832
  %v869 = vpack.c.b16 %v836, %v833
  %v870 = vpack.c.b16 %v840, %v837
  %v871 = vpack.c.b16 %v841, %v838
  %v872 = vpack.c.b16 %v842, %v839
  %v873 = vpack.c.b16 %v846, %v843
  %v874 = vpack.c.b16 %v847, %v844
  %v875 = vpack.c.b16 %v848, %v845
  %v876 = vpack.c.b16 %v852, %v849
  %v877 = vpack.c.b16 %v853, %v850
  %v878 = vpack.c.b16 %v854, %v851
  %903 = vmatprep.subr.bf16.mxu0 %v856
  %904 = vmatpush1.bf16.msra.mxu0 %v855
  %905 = vmatprep.subr.bf16.mxu0 %v859
  %906 = vmatpush1.bf16.msra.mxu0 %v858
  %907 = vmatprep.subr.bf16.mxu0 %v862
  %908 = vmatpush1.bf16.msra.mxu0 %v861
  %909 = vmatprep.subr.bf16.mxu0 %v865
  %910 = vmatpush1.bf16.msra.mxu0 %v864
  %911 = vmatprep.subr.bf16.mxu0 %v868
  %912 = vmatpush1.bf16.msra.mxu0 %v867
  %913 = vmatprep.subr.bf16.mxu0 %v871
  %914 = vmatpush1.bf16.msra.mxu0 %v870
  %915 = vmatprep.subr.bf16.mxu0 %v874
  %916 = vmatpush1.bf16.msra.mxu0 %v873
  %917 = vmatprep.subr.bf16.mxu0 %v877
  %918 = vmatpush1.bf16.msra.mxu0 %v876
  %919 = vmatprep.subr.bf16.mxu0 0
  %920 = vmatpush1.bf16.msra.mxu0 0
  %921 = vmatprep.subr.bf16.mxu0 0
  %922 = vmatpush1.bf16.msra.mxu0 0
  %923 = vmatprep.subr.bf16.mxu0 0
  %924 = vmatpush1.bf16.msra.mxu0 0
  %925 = vmatprep.subr.bf16.mxu0 0
  %926 = vmatpush1.bf16.msra.mxu0 0
  %927 = vmatprep.subr.bf16.mxu0 0
  %928 = vmatpush1.bf16.msra.mxu0 0
  %929 = vmatprep.subr.bf16.mxu0 0
  %930 = vmatpush1.bf16.msra.mxu0 0
  %931 = vmatprep.subr.bf16.mxu0 0
  %932 = vmatpush1.bf16.msra.mxu0 0
  %933 = vmatprep.subr.bf16.mxu0 0
  %934 = vmatpush1.bf16.msra.mxu0 0
  %935 = vmatprep.mubr.bf16.mxu0 0
  %936 = vmatmul.mubr.bf16.gmra.mrb[0].mxu0 %v742
  %v937 = vpop.f32.mrb[0].mxu0
  %v938 = vadd.f32 0.0, %v937
  %v939 = vpop.f32.mrb[0].mxu0
  %v940 = vadd.f32 0.0, %v939
  %v941 = vpop.f32.mrb[0].mxu0
  %v942 = vpop.f32.mrb[0].mxu0
  %943 = vdwg.mxu0
  %944 = vmatprep.subr.bf16.mxu0 0
  %945 = vmatpush1.bf16.msra.mxu0 %v857
  %946 = vmatprep.subr.bf16.mxu0 0
  %947 = vmatpush1.bf16.msra.mxu0 %v860
  %948 = vmatprep.subr.bf16.mxu0 0
  %949 = vmatpush1.bf16.msra.mxu0 %v863
  %950 = vmatprep.subr.bf16.mxu0 0
  %951 = vmatpush1.bf16.msra.mxu0 %v866
  %952 = vmatprep.subr.bf16.mxu0 0
  %953 = vmatpush1.bf16.msra.mxu0 %v869
  %954 = vmatprep.subr.bf16.mxu0 0
  %955 = vmatpush1.bf16.msra.mxu0 %v872
  %956 = vmatprep.subr.bf16.mxu0 0
  %957 = vmatpush1.bf16.msra.mxu0 %v875
  %958 = vmatprep.subr.bf16.mxu0 0
  %959 = vmatpush1.bf16.msra.mxu0 %v878
  %960 = vmatprep.subr.bf16.mxu0 0
  %961 = vmatpush1.bf16.msra.mxu0 0
  %962 = vmatprep.subr.bf16.mxu0 0
  %963 = vmatpush1.bf16.msra.mxu0 0
  %964 = vmatprep.subr.bf16.mxu0 0
  %965 = vmatpush1.bf16.msra.mxu0 0
  %966 = vmatprep.subr.bf16.mxu0 0
  %967 = vmatpush1.bf16.msra.mxu0 0
  %968 = vmatprep.subr.bf16.mxu0 0
  %969 = vmatpush1.bf16.msra.mxu0 0
  %970 = vmatprep.subr.bf16.mxu0 0
  %971 = vmatpush1.bf16.msra.mxu0 0
  %972 = vmatprep.subr.bf16.mxu0 0
  %973 = vmatpush1.bf16.msra.mxu0 0
  %974 = vmatprep.subr.bf16.mxu0 0
  %975 = vmatpush1.bf16.msra.mxu0 0
  %976 = vmatprep.mubr.bf16.mxu0 0
  %977 = vmatmul.mubr.bf16.gmra.mrb[0].mxu0 %v742
  %v978 = vpop.f32.mrb[0].mxu0
  %v979 = vadd.f32 0.0, %v978
  %v980 = vpop.f32.mrb[0].mxu0
  %v981 = vpop.f32.mrb[0].mxu0
  %v982 = vpop.f32.mrb[0].mxu0
  %983 = vdwg.mxu0
  %v984 = vadd.f32 %v696, %v938
  %v985 = vxor.u32 %v984, 2147483648
  %v986 = vmul.f32 %v985, 1.442695
  %v987 = vpow.pop %v986
  %v988 = vadd.f32 %v987, 1.0
  %v989 = vrcp.pop %v988
  %v990 = vmul.f32 1.0, %v989
  %v991 = vadd.f32 %v698, %v940
  %v992 = vxor.u32 %v991, 2147483648
  %v993 = vmul.f32 %v992, 1.442695
  %v994 = vpow.pop %v993
  %v995 = vadd.f32 %v994, 1.0
  %v996 = vrcp.pop %v995
  %v997 = vmul.f32 1.0, %v996
  %v998 = vadd.f32 %v979, %v228
  %v999 = vmul.f32 %v990, %v998
  %v1000 = vadd.f32 %v737, %v999
  %v1001 = vtanh.pop %v1000
  %v1002 = vsub.f32 1.0, %v997
  %v1003 = vmul.f32 %v1002, %v1001
  %v1004 = vmul.f32 %v997, %v232
  %v1005 = vadd.f32 %v1003, %v1004
  %1006 = vst [vmem:[#allocation3] sm:$0xff] %v1005
  %s1007 = scalar_lea.vmem [#allocation2], 24
  %v1008 = vld [vmem:[%s1007] sm:$0xff]
  %v1009 = vld [vmem:[%s1007 + $0x8] sm:$0xff]
  %v1010 = vld [vmem:[%s1007 + $0x10] sm:$0xff]
  %v1011 = vld [vmem:[%s3] sm:$0xff]
  %v1012 = vld [vmem:[%s3 + $0x8] sm:$0xf]
  %v1013 = vld [vmem:[%s3 + $0xc] sm:$0xff]
  %v1014 = vld [vmem:[%s3 + $0x14] sm:$0xf]
  %v1015 = vld [vmem:[%s3 + $0x18] sm:$0xff]
  %v1016 = vld [vmem:[%s3 + $0x20] sm:$0xf]
  %v1017 = vld [vmem:[%s3 + $0x24] sm:$0xff]
  %v1018 = vld [vmem:[%s3 + $0x2c] sm:$0xf]
  %v1019 = vld [vmem:[%s3 + $0x30] sm:$0xff]
  %v1020 = vld [vmem:[%s3 + $0x38] sm:$0xf]
  %v1021 = vld [vmem:[%s3 + $0x3c] sm:$0xff]
  %v1022 = vld [vmem:[%s3 + $0x44] sm:$0xf]
  %v1023 = vld [vmem:[%s3 + $0x48] sm:$0xff]
  %v1024 = vld [vmem:[%s3 + $0x50] sm:$0xf]
  %v1025 = vld [vmem:[%s3 + $0x54] sm:$0xff]
  %v1026 = vld [vmem:[%s3 + $0x5c] sm:$0xf]
  %v1027 = vld [vmem:[%s3 + $0x60] sm:$0xff]
  %v1028 = vld [vmem:[%s3 + $0x68] sm:$0xf]
  %v1029 = vld [vmem:[%s3 + $0x6c] sm:$0xff]
  %v1030 = vld [vmem:[%s3 + $0x74] sm:$0xf]
  %v1031 = vld [vmem:[%s3 + $0x78] sm:$0xff]
  %v1032 = vld [vmem:[%s3 + $0x80] sm:$0xf]
  %v1033 = vld [vmem:[%s3 + $0x84] sm:$0xff]
  %v1034 = vld [vmem:[%s3 + $0x8c] sm:$0xf]
  %v1035 = vld [vmem:[%s3 + $0x90] sm:$0xff]
  %v1036 = vld [vmem:[%s3 + $0x98] sm:$0xf]
  %v1037 = vld [vmem:[%s3 + $0x9c] sm:$0xff]
  %v1038 = vld [vmem:[%s3 + $0xa4] sm:$0xf]
  %v1039 = vld [vmem:[%s3 + $0xa8] sm:$0xff]
  %v1040 = vld [vmem:[%s3 + $0xb0] sm:$0xf]
  %v1041 = vld [vmem:[%s3 + $0xb4] sm:$0xff]
  %v1042 = vld [vmem:[%s3 + $0xbc] sm:$0xf]
  %v1075 = vunpack.c.l.b16 %v1011
  %v1076 = vunpack.c.h.b16 %v1011
  %v1077 = vunpack.c.l.b16 %v1012
  %v1078 = vunpack.c.l.b16 %v1013
  %v1079 = vunpack.c.h.b16 %v1013
  %v1080 = vunpack.c.l.b16 %v1014
  %v1081 = vunpack.c.l.b16 %v1015
  %v1082 = vunpack.c.h.b16 %v1015
  %v1083 = vunpack.c.l.b16 %v1016
  %v1084 = vunpack.c.l.b16 %v1017
  %v1085 = vunpack.c.h.b16 %v1017
  %v1086 = vunpack.c.l.b16 %v1018
  %v1087 = vunpack.c.l.b16 %v1019
  %v1088 = vunpack.c.h.b16 %v1019
  %v1089 = vunpack.c.l.b16 %v1020
  %v1090 = vunpack.c.l.b16 %v1021
  %v1091 = vunpack.c.h.b16 %v1021
  %v1092 = vunpack.c.l.b16 %v1022
  %v1093 = vunpack.c.l.b16 %v1023
  %v1094 = vunpack.c.h.b16 %v1023
  %v1095 = vunpack.c.l.b16 %v1024
  %v1096 = vunpack.c.l.b16 %v1025
  %v1097 = vunpack.c.h.b16 %v1025
  %v1098 = vunpack.c.l.b16 %v1026
  %v1099 = vunpack.c.l.b16 %v1027
  %v1100 = vunpack.c.h.b16 %v1027
  %v1101 = vunpack.c.l.b16 %v1028
  %v1102 = vunpack.c.l.b16 %v1029
  %v1103 = vunpack.c.h.b16 %v1029
  %v1104 = vunpack.c.l.b16 %v1030
  %v1105 = vunpack.c.l.b16 %v1031
  %v1106 = vunpack.c.h.b16 %v1031
  %v1107 = vunpack.c.l.b16 %v1032
  %v1108 = vunpack.c.l.b16 %v1033
  %v1109 = vunpack.c.h.b16 %v1033
  %v1110 = vunpack.c.l.b16 %v1034
  %v1111 = vunpack.c.l.b16 %v1035
  %v1112 = vunpack.c.h.b16 %v1035
  %v1113 = vunpack.c.l.b16 %v1036
  %v1114 = vunpack.c.l.b16 %v1037
  %v1115 = vunpack.c.h.b16 %v1037
  %v1116 = vunpack.c.l.b16 %v1038
  %v1117 = vunpack.c.l.b16 %v1039
  %v1118 = vunpack.c.h.b16 %v1039
  %v1119 = vunpack.c.l.b16 %v1040
  %v1120 = vunpack.c.l.b16 %v1041
  %v1121 = vunpack.c.h.b16 %v1041
  %v1122 = vunpack.c.l.b16 %v1042
  %v1123 = vpack.c.b16 %v1078, %v1075
  %v1124 = vpack.c.b16 %v1079, %v1076
  %v1125 = vpack.c.b16 %v1080, %v1077
  %v1126 = vpack.c.b16 %v1084, %v1081
  %v1127 = vpack.c.b16 %v1085, %v1082
  %v1128 = vpack.c.b16 %v1086, %v1083
  %v1129 = vpack.c.b16 %v1090, %v1087
  %v1130 = vpack.c.b16 %v1091, %v1088
  %v1131 = vpack.c.b16 %v1092, %v1089
  %v1132 = vpack.c.b16 %v1096, %v1093
  %v1133 = vpack.c.b16 %v1097, %v1094
  %v1134 = vpack.c.b16 %v1098, %v1095
  %v1135 = vpack.c.b16 %v1102, %v1099
  %v1136 = vpack.c.b16 %v1103, %v1100
  %v1137 = vpack.c.b16 %v1104, %v1101
  %v1138 = vpack.c.b16 %v1108, %v1105
  %v1139 = vpack.c.b16 %v1109, %v1106
  %v1140 = vpack.c.b16 %v1110, %v1107
  %v1141 = vpack.c.b16 %v1114, %v1111
  %v1142 = vpack.c.b16 %v1115, %v1112
  %v1143 = vpack.c.b16 %v1116, %v1113
  %v1144 = vpack.c.b16 %v1120, %v1117
  %v1145 = vpack.c.b16 %v1121, %v1118
  %v1146 = vpack.c.b16 %v1122, %v1119
  %1171 = vmatprep.subr.bf16.mxu0 %v1124
  %1172 = vmatpush1.bf16.msra.mxu0 %v1123
  %1173 = vmatprep.subr.bf16.mxu0 %v1127
  %1174 = vmatpush1.bf16.msra.mxu0 %v1126
  %1175 = vmatprep.subr.bf16.mxu0 %v1130
  %1176 = vmatpush1.bf16.msra.mxu0 %v1129
  %1177 = vmatprep.subr.bf16.mxu0 %v1133
  %1178 = vmatpush1.bf16.msra.mxu0 %v1132
  %1179 = vmatprep.subr.bf16.mxu0 %v1136
  %1180 = vmatpush1.bf16.msra.mxu0 %v1135
  %1181 = vmatprep.subr.bf16.mxu0 %v1139
  %1182 = vmatpush1.bf16.msra.mxu0 %v1138
  %1183 = vmatprep.subr.bf16.mxu0 %v1142
  %1184 = vmatpush1.bf16.msra.mxu0 %v1141
  %1185 = vmatprep.subr.bf16.mxu0 %v1145
  %1186 = vmatpush1.bf16.msra.mxu0 %v1144
  %1187 = vmatprep.subr.bf16.mxu0 0
  %1188 = vmatpush1.bf16.msra.mxu0 0
  %1189 = vmatprep.subr.bf16.mxu0 0
  %1190 = vmatpush1.bf16.msra.mxu0 0
  %1191 = vmatprep.subr.bf16.mxu0 0
  %1192 = vmatpush1.bf16.msra.mxu0 0
  %1193 = vmatprep.subr.bf16.mxu0 0
  %1194 = vmatpush1.bf16.msra.mxu0 0
  %1195 = vmatprep.subr.bf16.mxu0 0
  %1196 = vmatpush1.bf16.msra.mxu0 0
  %1197 = vmatprep.subr.bf16.mxu0 0
  %1198 = vmatpush1.bf16.msra.mxu0 0
  %1199 = vmatprep.subr.bf16.mxu0 0
  %1200 = vmatpush1.bf16.msra.mxu0 0
  %1201 = vmatprep.subr.bf16.mxu0 0
  %1202 = vmatpush1.bf16.msra.mxu0 0
  %1203 = vmatprep.mubr.bf16.mxu0 0
  %1204 = vmatmul.mubr.bf16.gmra.mrb[0].mxu0 %v500
  %v1205 = vpop.f32.mrb[0].mxu0
  %v1206 = vadd.f32 0.0, %v1205
  %v1207 = vpop.f32.mrb[0].mxu0
  %v1208 = vadd.f32 0.0, %v1207
  %v1209 = vpop.f32.mrb[0].mxu0
  %v1210 = vpop.f32.mrb[0].mxu0
  %1211 = vdwg.mxu0
  %1212 = vmatprep.subr.bf16.mxu0 0
  %1213 = vmatpush1.bf16.msra.mxu0 %v1125
  %1214 = vmatprep.subr.bf16.mxu0 0
  %1215 = vmatpush1.bf16.msra.mxu0 %v1128
  %1216 = vmatprep.subr.bf16.mxu0 0
  %1217 = vmatpush1.bf16.msra.mxu0 %v1131
  %1218 = vmatprep.subr.bf16.mxu0 0
  %1219 = vmatpush1.bf16.msra.mxu0 %v1134
  %1220 = vmatprep.subr.bf16.mxu0 0
  %1221 = vmatpush1.bf16.msra.mxu0 %v1137
  %1222 = vmatprep.subr.bf16.mxu0 0
  %1223 = vmatpush1.bf16.msra.mxu0 %v1140
  %1224 = vmatprep.subr.bf16.mxu0 0
  %1225 = vmatpush1.bf16.msra.mxu0 %v1143
  %1226 = vmatprep.subr.bf16.mxu0 0
  %1227 = vmatpush1.bf16.msra.mxu0 %v1146
  %1228 = vmatprep.subr.bf16.mxu0 0
  %1229 = vmatpush1.bf16.msra.mxu0 0
  %1230 = vmatprep.subr.bf16.mxu0 0
  %1231 = vmatpush1.bf16.msra.mxu0 0
  %1232 = vmatprep.subr.bf16.mxu0 0
  %1233 = vmatpush1.bf16.msra.mxu0 0
  %1234 = vmatprep.subr.bf16.mxu0 0
  %1235 = vmatpush1.bf16.msra.mxu0 0
  %1236 = vmatprep.subr.bf16.mxu0 0
  %1237 = vmatpush1.bf16.msra.mxu0 0
  %1238 = vmatprep.subr.bf16.mxu0 0
  %1239 = vmatpush1.bf16.msra.mxu0 0
  %1240 = vmatprep.subr.bf16.mxu0 0
  %1241 = vmatpush1.bf16.msra.mxu0 0
  %1242 = vmatprep.subr.bf16.mxu0 0
  %1243 = vmatpush1.bf16.msra.mxu0 0
  %1244 = vmatprep.mubr.bf16.mxu0 0
  %1245 = vmatmul.mubr.bf16.gmra.mrb[0].mxu0 %v500
  %v1246 = vpop.f32.mrb[0].mxu0
  %v1247 = vadd.f32 0.0, %v1246
  %v1248 = vpop.f32.mrb[0].mxu0
  %v1249 = vpop.f32.mrb[0].mxu0
  %v1250 = vpop.f32.mrb[0].mxu0
  %1251 = vdwg.mxu0
  %v1252 = vadd.f32 %v1008, %v1206
  %v1253 = vxor.u32 %v1252, 2147483648
  %v1254 = vmul.f32 %v1253, 1.442695
  %v1255 = vpow.pop %v1254
  %v1256 = vadd.f32 %v1255, 1.0
  %v1257 = vrcp.pop %v1256
  %v1258 = vmul.f32 1.0, %v1257
  %v1259 = vadd.f32 %v1009, %v1208
  %v1260 = vxor.u32 %v1259, 2147483648
  %v1261 = vmul.f32 %v1260, 1.442695
  %v1262 = vpow.pop %v1261
  %v1263 = vadd.f32 %v1262, 1.0
  %v1264 = vrcp.pop %v1263
  %v1265 = vmul.f32 1.0, %v1264
  %v1266 = vadd.f32 %v1247, %v221
  %v1267 = vmul.f32 %v1258, %v1266
  %v1268 = vadd.f32 %v1010, %v1267
  %v1269 = vtanh.pop %v1268
  %v1270 = vsub.f32 1.0, %v1265
  %v1271 = vmul.f32 %v1270, %v1269
  %v1272 = vmul.f32 %v1265, %v499
  %v1273 = vadd.f32 %v1271, %v1272
  %v1274 = vpack.c.bf16 %v1273, %v1273
  %v1275 = vld [vmem:[%s6] sm:$0xff]
  %v1276 = vld [vmem:[%s6 + $0x8] sm:$0xf]
  %v1277 = vld [vmem:[%s6 + $0xc] sm:$0xff]
  %v1278 = vld [vmem:[%s6 + $0x14] sm:$0xf]
  %v1279 = vld [vmem:[%s6 + $0x18] sm:$0xff]
  %v1280 = vld [vmem:[%s6 + $0x20] sm:$0xf]
  %v1281 = vld [vmem:[%s6 + $0x24] sm:$0xff]
  %v1282 = vld [vmem:[%s6 + $0x2c] sm:$0xf]
  %v1283 = vld [vmem:[%s6 + $0x30] sm:$0xff]
  %v1284 = vld [vmem:[%s6 + $0x38] sm:$0xf]
  %v1285 = vld [vmem:[%s6 + $0x3c] sm:$0xff]
  %v1286 = vld [vmem:[%s6 + $0x44] sm:$0xf]
  %v1287 = vld [vmem:[%s6 + $0x48] sm:$0xff]
  %v1288 = vld [vmem:[%s6 + $0x50] sm:$0xf]
  %v1289 = vld [vmem:[%s6 + $0x54] sm:$0xff]
  %v1290 = vld [vmem:[%s6 + $0x5c] sm:$0xf]
  %v1291 = vld [vmem:[%s6 + $0x60] sm:$0xff]
  %v1292 = vld [vmem:[%s6 + $0x68] sm:$0xf]
  %v1293 = vld [vmem:[%s6 + $0x6c] sm:$0xff]
  %v1294 = vld [vmem:[%s6 + $0x74] sm:$0xf]
  %v1295 = vld [vmem:[%s6 + $0x78] sm:$0xff]
  %v1296 = vld [vmem:[%s6 + $0x80] sm:$0xf]
  %v1297 = vld [vmem:[%s6 + $0x84] sm:$0xff]
  %v1298 = vld [vmem:[%s6 + $0x8c] sm:$0xf]
  %v1299 = vld [vmem:[%s6 + $0x90] sm:$0xff]
  %v1300 = vld [vmem:[%s6 + $0x98] sm:$0xf]
  %v1301 = vld [vmem:[%s6 + $0x9c] sm:$0xff]
  %v1302 = vld [vmem:[%s6 + $0xa4] sm:$0xf]
  %v1303 = vld [vmem:[%s6 + $0xa8] sm:$0xff]
  %v1304 = vld [vmem:[%s6 + $0xb0] sm:$0xf]
  %v1305 = vld [vmem:[%s6 + $0xb4] sm:$0xff]
  %v1306 = vld [vmem:[%s6 + $0xbc] sm:$0xf]
  %v1339 = vunpack.c.l.b16 %v1275
  %v1340 = vunpack.c.h.b16 %v1275
  %v1341 = vunpack.c.l.b16 %v1276
  %v1342 = vunpack.c.l.b16 %v1277
  %v1343 = vunpack.c.h.b16 %v1277
  %v1344 = vunpack.c.l.b16 %v1278
  %v1345 = vunpack.c.l.b16 %v1279
  %v1346 = vunpack.c.h.b16 %v1279
  %v1347 = vunpack.c.l.b16 %v1280
  %v1348 = vunpack.c.l.b16 %v1281
  %v1349 = vunpack.c.h.b16 %v1281
  %v1350 = vunpack.c.l.b16 %v1282
  %v1351 = vunpack.c.l.b16 %v1283
  %v1352 = vunpack.c.h.b16 %v1283
  %v1353 = vunpack.c.l.b16 %v1284
  %v1354 = vunpack.c.l.b16 %v1285
  %v1355 = vunpack.c.h.b16 %v1285
  %v1356 = vunpack.c.l.b16 %v1286
  %v1357 = vunpack.c.l.b16 %v1287
  %v1358 = vunpack.c.h.b16 %v1287
  %v1359 = vunpack.c.l.b16 %v1288
  %v1360 = vunpack.c.l.b16 %v1289
  %v1361 = vunpack.c.h.b16 %v1289
  %v1362 = vunpack.c.l.b16 %v1290
  %v1363 = vunpack.c.l.b16 %v1291
  %v1364 = vunpack.c.h.b16 %v1291
  %v1365 = vunpack.c.l.b16 %v1292
  %v1366 = vunpack.c.l.b16 %v1293
  %v1367 = vunpack.c.h.b16 %v1293
  %v1368 = vunpack.c.l.b16 %v1294
  %v1369 = vunpack.c.l.b16 %v1295
  %v1370 = vunpack.c.h.b16 %v1295
  %v1371 = vunpack.c.l.b16 %v1296
  %v1372 = vunpack.c.l.b16 %v1297
  %v1373 = vunpack.c.h.b16 %v1297
  %v1374 = vunpack.c.l.b16 %v1298
  %v1375 = vunpack.c.l.b16 %v1299
  %v1376 = vunpack.c.h.b16 %v1299
  %v1377 = vunpack.c.l.b16 %v1300
  %v1378 = vunpack.c.l.b16 %v1301
  %v1379 = vunpack.c.h.b16 %v1301
  %v1380 = vunpack.c.l.b16 %v1302
  %v1381 = vunpack.c.l.b16 %v1303
  %v1382 = vunpack.c.h.b16 %v1303
  %v1383 = vunpack.c.l.b16 %v1304
  %v1384 = vunpack.c.l.b16 %v1305
  %v1385 = vunpack.c.h.b16 %v1305
  %v1386 = vunpack.c.l.b16 %v1306
  %v1387 = vpack.c.b16 %v1342, %v1339
  %v1388 = vpack.c.b16 %v1343, %v1340
  %v1389 = vpack.c.b16 %v1344, %v1341
  %v1390 = vpack.c.b16 %v1348, %v1345
  %v1391 = vpack.c.b16 %v1349, %v1346
  %v1392 = vpack.c.b16 %v1350, %v1347
  %v1393 = vpack.c.b16 %v1354, %v1351
  %v1394 = vpack.c.b16 %v1355, %v1352
  %v1395 = vpack.c.b16 %v1356, %v1353
  %v1396 = vpack.c.b16 %v1360, %v1357
  %v1397 = vpack.c.b16 %v1361, %v1358
  %v1398 = vpack.c.b16 %v1362, %v1359
  %v1399 = vpack.c.b16 %v1366, %v1363
  %v1400 = vpack.c.b16 %v1367, %v1364
  %v1401 = vpack.c.b16 %v1368, %v1365
  %v1402 = vpack.c.b16 %v1372, %v1369
  %v1403 = vpack.c.b16 %v1373, %v1370
  %v1404 = vpack.c.b16 %v1374, %v1371
  %v1405 = vpack.c.b16 %v1378, %v1375
  %v1406 = vpack.c.b16 %v1379, %v1376
  %v1407 = vpack.c.b16 %v1380, %v1377
  %v1408 = vpack.c.b16 %v1384, %v1381
  %v1409 = vpack.c.b16 %v1385, %v1382
  %v1410 = vpack.c.b16 %v1386, %v1383
  %1435 = vmatprep.subr.bf16.mxu0 %v1388
  %1436 = vmatpush1.bf16.msra.mxu0 %v1387
  %1437 = vmatprep.subr.bf16.mxu0 %v1391
  %1438 = vmatpush1.bf16.msra.mxu0 %v1390
  %1439 = vmatprep.subr.bf16.mxu0 %v1394
  %1440 = vmatpush1.bf16.msra.mxu0 %v1393
  %1441 = vmatprep.subr.bf16.mxu0 %v1397
  %1442 = vmatpush1.bf16.msra.mxu0 %v1396
  %1443 = vmatprep.subr.bf16.mxu0 %v1400
  %1444 = vmatpush1.bf16.msra.mxu0 %v1399
  %1445 = vmatprep.subr.bf16.mxu0 %v1403
  %1446 = vmatpush1.bf16.msra.mxu0 %v1402
  %1447 = vmatprep.subr.bf16.mxu0 %v1406
  %1448 = vmatpush1.bf16.msra.mxu0 %v1405
  %1449 = vmatprep.subr.bf16.mxu0 %v1409
  %1450 = vmatpush1.bf16.msra.mxu0 %v1408
  %1451 = vmatprep.subr.bf16.mxu0 0
  %1452 = vmatpush1.bf16.msra.mxu0 0
  %1453 = vmatprep.subr.bf16.mxu0 0
  %1454 = vmatpush1.bf16.msra.mxu0 0
  %1455 = vmatprep.subr.bf16.mxu0 0
  %1456 = vmatpush1.bf16.msra.mxu0 0
  %1457 = vmatprep.subr.bf16.mxu0 0
  %1458 = vmatpush1.bf16.msra.mxu0 0
  %1459 = vmatprep.subr.bf16.mxu0 0
  %1460 = vmatpush1.bf16.msra.mxu0 0
  %1461 = vmatprep.subr.bf16.mxu0 0
  %1462 = vmatpush1.bf16.msra.mxu0 0
  %1463 = vmatprep.subr.bf16.mxu0 0
  %1464 = vmatpush1.bf16.msra.mxu0 0
  %1465 = vmatprep.subr.bf16.mxu0 0
  %1466 = vmatpush1.bf16.msra.mxu0 0
  %1467 = vmatprep.mubr.bf16.mxu0 0
  %1468 = vmatmul.mubr.bf16.gmra.mrb[0].mxu0 %v1274
  %v1469 = vpop.f32.mrb[0].mxu0
  %v1470 = vadd.f32 %v204, %v1469
  %v1471 = vpop.f32.mrb[0].mxu0
  %v1472 = vadd.f32 %v208, %v1471
  %v1473 = vpop.f32.mrb[0].mxu0
  %v1474 = vpop.f32.mrb[0].mxu0
  %1475 = vdwg.mxu0
  %1476 = vmatprep.subr.bf16.mxu0 0
  %1477 = vmatpush1.bf16.msra.mxu0 %v1389
  %1478 = vmatprep.subr.bf16.mxu0 0
  %1479 = vmatpush1.bf16.msra.mxu0 %v1392
  %1480 = vmatprep.subr.bf16.mxu0 0
  %1481 = vmatpush1.bf16.msra.mxu0 %v1395
  %1482 = vmatprep.subr.bf16.mxu0 0
  %1483 = vmatpush1.bf16.msra.mxu0 %v1398
  %1484 = vmatprep.subr.bf16.mxu0 0
  %1485 = vmatpush1.bf16.msra.mxu0 %v1401
  %1486 = vmatprep.subr.bf16.mxu0 0
  %1487 = vmatpush1.bf16.msra.mxu0 %v1404
  %1488 = vmatprep.subr.bf16.mxu0 0
  %1489 = vmatpush1.bf16.msra.mxu0 %v1407
  %1490 = vmatprep.subr.bf16.mxu0 0
  %1491 = vmatpush1.bf16.msra.mxu0 %v1410
  %1492 = vmatprep.subr.bf16.mxu0 0
  %1493 = vmatpush1.bf16.msra.mxu0 0
  %1494 = vmatprep.subr.bf16.mxu0 0
  %1495 = vmatpush1.bf16.msra.mxu0 0
  %1496 = vmatprep.subr.bf16.mxu0 0
  %1497 = vmatpush1.bf16.msra.mxu0 0
  %1498 = vmatprep.subr.bf16.mxu0 0
  %1499 = vmatpush1.bf16.msra.mxu0 0
  %1500 = vmatprep.subr.bf16.mxu0 0
  %1501 = vmatpush1.bf16.msra.mxu0 0
  %1502 = vmatprep.subr.bf16.mxu0 0
  %1503 = vmatpush1.bf16.msra.mxu0 0
  %1504 = vmatprep.subr.bf16.mxu0 0
  %1505 = vmatpush1.bf16.msra.mxu0 0
  %1506 = vmatprep.subr.bf16.mxu0 0
  %1507 = vmatpush1.bf16.msra.mxu0 0
  %1508 = vmatprep.mubr.bf16.mxu0 0
  %1509 = vmatmul.mubr.bf16.gmra.mrb[0].mxu0 %v1274
  %v1510 = vpop.f32.mrb[0].mxu0
  %v1511 = vadd.f32 %v212, %v1510
  %v1512 = vpop.f32.mrb[0].mxu0
  %v1513 = vpop.f32.mrb[0].mxu0
  %v1514 = vpop.f32.mrb[0].mxu0
  %1515 = vdwg.mxu0
  %v1516 = vpack.c.bf16 %v1005, %v1005
  %v1517 = vld [vmem:[%s7] sm:$0xff]
  %v1518 = vld [vmem:[%s7 + $0x8] sm:$0xf]
  %v1519 = vld [vmem:[%s7 + $0xc] sm:$0xff]
  %v1520 = vld [vmem:[%s7 + $0x14] sm:$0xf]
  %v1521 = vld [vmem:[%s7 + $0x18] sm:$0xff]
  %v1522 = vld [vmem:[%s7 + $0x20] sm:$0xf]
  %v1523 = vld [vmem:[%s7 + $0x24] sm:$0xff]
  %v1524 = vld [vmem:[%s7 + $0x2c] sm:$0xf]
  %v1525 = vld [vmem:[%s7 + $0x30] sm:$0xff]
  %v1526 = vld [vmem:[%s7 + $0x38] sm:$0xf]
  %v1527 = vld [vmem:[%s7 + $0x3c] sm:$0xff]
  %v1528 = vld [vmem:[%s7 + $0x44] sm:$0xf]
  %v1529 = vld [vmem:[%s7 + $0x48] sm:$0xff]
  %v1530 = vld [vmem:[%s7 + $0x50] sm:$0xf]
  %v1531 = vld [vmem:[%s7 + $0x54] sm:$0xff]
  %v1532 = vld [vmem:[%s7 + $0x5c] sm:$0xf]
  %v1533 = vld [vmem:[%s7 + $0x60] sm:$0xff]
  %v1534 = vld [vmem:[%s7 + $0x68] sm:$0xf]
  %v1535 = vld [vmem:[%s7 + $0x6c] sm:$0xff]
  %v1536 = vld [vmem:[%s7 + $0x74] sm:$0xf]
  %v1537 = vld [vmem:[%s7 + $0x78] sm:$0xff]
  %v1538 = vld [vmem:[%s7 + $0x80] sm:$0xf]
  %v1539 = vld [vmem:[%s7 + $0x84] sm:$0xff]
  %v1540 = vld [vmem:[%s7 + $0x8c] sm:$0xf]
  %v1541 = vld [vmem:[%s7 + $0x90] sm:$0xff]
  %v1542 = vld [vmem:[%s7 + $0x98] sm:$0xf]
  %v1543 = vld [vmem:[%s7 + $0x9c] sm:$0xff]
  %v1544 = vld [vmem:[%s7 + $0xa4] sm:$0xf]
  %v1545 = vld [vmem:[%s7 + $0xa8] sm:$0xff]
  %v1546 = vld [vmem:[%s7 + $0xb0] sm:$0xf]
  %v1547 = vld [vmem:[%s7 + $0xb4] sm:$0xff]
  %v1548 = vld [vmem:[%s7 + $0xbc] sm:$0xf]
  %v1581 = vunpack.c.l.b16 %v1517
  %v1582 = vunpack.c.h.b16 %v1517
  %v1583 = vunpack.c.l.b16 %v1518
  %v1584 = vunpack.c.l.b16 %v1519
  %v1585 = vunpack.c.h.b16 %v1519
  %v1586 = vunpack.c.l.b16 %v1520
  %v1587 = vunpack.c.l.b16 %v1521
  %v1588 = vunpack.c.h.b16 %v1521
  %v1589 = vunpack.c.l.b16 %v1522
  %v1590 = vunpack.c.l.b16 %v1523
  %v1591 = vunpack.c.h.b16 %v1523
  %v1592 = vunpack.c.l.b16 %v1524
  %v1593 = vunpack.c.l.b16 %v1525
  %v1594 = vunpack.c.h.b16 %v1525
  %v1595 = vunpack.c.l.b16 %v1526
  %v1596 = vunpack.c.l.b16 %v1527
  %v1597 = vunpack.c.h.b16 %v1527
  %v1598 = vunpack.c.l.b16 %v1528
  %v1599 = vunpack.c.l.b16 %v1529
  %v1600 = vunpack.c.h.b16 %v1529
  %v1601 = vunpack.c.l.b16 %v1530
  %v1602 = vunpack.c.l.b16 %v1531
  %v1603 = vunpack.c.h.b16 %v1531
  %v1604 = vunpack.c.l.b16 %v1532
  %v1605 = vunpack.c.l.b16 %v1533
  %v1606 = vunpack.c.h.b16 %v1533
  %v1607 = vunpack.c.l.b16 %v1534
  %v1608 = vunpack.c.l.b16 %v1535
  %v1609 = vunpack.c.h.b16 %v1535
  %v1610 = vunpack.c.l.b16 %v1536
  %v1611 = vunpack.c.l.b16 %v1537
  %v1612 = vunpack.c.h.b16 %v1537
  %v1613 = vunpack.c.l.b16 %v1538
  %v1614 = vunpack.c.l.b16 %v1539
  %v1615 = vunpack.c.h.b16 %v1539
  %v1616 = vunpack.c.l.b16 %v1540
  %v1617 = vunpack.c.l.b16 %v1541
  %v1618 = vunpack.c.h.b16 %v1541
  %v1619 = vunpack.c.l.b16 %v1542
  %v1620 = vunpack.c.l.b16 %v1543
  %v1621 = vunpack.c.h.b16 %v1543
  %v1622 = vunpack.c.l.b16 %v1544
  %v1623 = vunpack.c.l.b16 %v1545
  %v1624 = vunpack.c.h.b16 %v1545
  %v1625 = vunpack.c.l.b16 %v1546
  %v1626 = vunpack.c.l.b16 %v1547
  %v1627 = vunpack.c.h.b16 %v1547
  %v1628 = vunpack.c.l.b16 %v1548
  %v1629 = vpack.c.b16 %v1584, %v1581
  %v1630 = vpack.c.b16 %v1585, %v1582
  %v1631 = vpack.c.b16 %v1586, %v1583
  %v1632 = vpack.c.b16 %v1590, %v1587
  %v1633 = vpack.c.b16 %v1591, %v1588
  %v1634 = vpack.c.b16 %v1592, %v1589
  %v1635 = vpack.c.b16 %v1596, %v1593
  %v1636 = vpack.c.b16 %v1597, %v1594
  %v1637 = vpack.c.b16 %v1598, %v1595
  %v1638 = vpack.c.b16 %v1602, %v1599
  %v1639 = vpack.c.b16 %v1603, %v1600
  %v1640 = vpack.c.b16 %v1604, %v1601
  %v1641 = vpack.c.b16 %v1608, %v1605
  %v1642 = vpack.c.b16 %v1609, %v1606
  %v1643 = vpack.c.b16 %v1610, %v1607
  %v1644 = vpack.c.b16 %v1614, %v1611
  %v1645 = vpack.c.b16 %v1615, %v1612
  %v1646 = vpack.c.b16 %v1616, %v1613
  %v1647 = vpack.c.b16 %v1620, %v1617
  %v1648 = vpack.c.b16 %v1621, %v1618
  %v1649 = vpack.c.b16 %v1622, %v1619
  %v1650 = vpack.c.b16 %v1626, %v1623
  %v1651 = vpack.c.b16 %v1627, %v1624
  %v1652 = vpack.c.b16 %v1628, %v1625
  %1677 = vmatprep.subr.bf16.mxu0 %v1630
  %1678 = vmatpush1.bf16.msra.mxu0 %v1629
  %1679 = vmatprep.subr.bf16.mxu0 %v1633
  %1680 = vmatpush1.bf16.msra.mxu0 %v1632
  %1681 = vmatprep.subr.bf16.mxu0 %v1636
  %1682 = vmatpush1.bf16.msra.mxu0 %v1635
  %1683 = vmatprep.subr.bf16.mxu0 %v1639
  %1684 = vmatpush1.bf16.msra.mxu0 %v1638
  %1685 = vmatprep.subr.bf16.mxu0 %v1642
  %1686 = vmatpush1.bf16.msra.mxu0 %v1641
  %1687 = vmatprep.subr.bf16.mxu0 %v1645
  %1688 = vmatpush1.bf16.msra.mxu0 %v1644
  %1689 = vmatprep.subr.bf16.mxu0 %v1648
  %1690 = vmatpush1.bf16.msra.mxu0 %v1647
  %1691 = vmatprep.subr.bf16.mxu0 %v1651
  %1692 = vmatpush1.bf16.msra.mxu0 %v1650
  %1693 = vmatprep.subr.bf16.mxu0 0
  %1694 = vmatpush1.bf16.msra.mxu0 0
  %1695 = vmatprep.subr.bf16.mxu0 0
  %1696 = vmatpush1.bf16.msra.mxu0 0
  %1697 = vmatprep.subr.bf16.mxu0 0
  %1698 = vmatpush1.bf16.msra.mxu0 0
  %1699 = vmatprep.subr.bf16.mxu0 0
  %1700 = vmatpush1.bf16.msra.mxu0 0
  %1701 = vmatprep.subr.bf16.mxu0 0
  %1702 = vmatpush1.bf16.msra.mxu0 0
  %1703 = vmatprep.subr.bf16.mxu0 0
  %1704 = vmatpush1.bf16.msra.mxu0 0
  %1705 = vmatprep.subr.bf16.mxu0 0
  %1706 = vmatpush1.bf16.msra.mxu0 0
  %1707 = vmatprep.subr.bf16.mxu0 0
  %1708 = vmatpush1.bf16.msra.mxu0 0
  %1709 = vmatprep.mubr.bf16.mxu0 0
  %1710 = vmatmul.mubr.bf16.gmra.mrb[0].mxu0 %v1516
  %v1711 = vpop.f32.mrb[0].mxu0
  %v1712 = vadd.f32 0.0, %v1711
  %v1713 = vpop.f32.mrb[0].mxu0
  %v1714 = vadd.f32 0.0, %v1713
  %v1715 = vpop.f32.mrb[0].mxu0
  %v1716 = vpop.f32.mrb[0].mxu0
  %1717 = vdwg.mxu0
  %1718 = vmatprep.subr.bf16.mxu0 0
  %1719 = vmatpush1.bf16.msra.mxu0 %v1631
  %1720 = vmatprep.subr.bf16.mxu0 0
  %1721 = vmatpush1.bf16.msra.mxu0 %v1634
  %1722 = vmatprep.subr.bf16.mxu0 0
  %1723 = vmatpush1.bf16.msra.mxu0 %v1637
  %1724 = vmatprep.subr.bf16.mxu0 0
  %1725 = vmatpush1.bf16.msra.mxu0 %v1640
  %1726 = vmatprep.subr.bf16.mxu0 0
  %1727 = vmatpush1.bf16.msra.mxu0 %v1643
  %1728 = vmatprep.subr.bf16.mxu0 0
  %1729 = vmatpush1.bf16.msra.mxu0 %v1646
  %1730 = vmatprep.subr.bf16.mxu0 0
  %1731 = vmatpush1.bf16.msra.mxu0 %v1649
  %1732 = vmatprep.subr.bf16.mxu0 0
  %1733 = vmatpush1.bf16.msra.mxu0 %v1652
  %1734 = vmatprep.subr.bf16.mxu0 0
  %1735 = vmatpush1.bf16.msra.mxu0 0
  %1736 = vmatprep.subr.bf16.mxu0 0
  %1737 = vmatpush1.bf16.msra.mxu0 0
  %1738 = vmatprep.subr.bf16.mxu0 0
  %1739 = vmatpush1.bf16.msra.mxu0 0
  %1740 = vmatprep.subr.bf16.mxu0 0
  %1741 = vmatpush1.bf16.msra.mxu0 0
  %1742 = vmatprep.subr.bf16.mxu0 0
  %1743 = vmatpush1.bf16.msra.mxu0 0
  %1744 = vmatprep.subr.bf16.mxu0 0
  %1745 = vmatpush1.bf16.msra.mxu0 0
  %1746 = vmatprep.subr.bf16.mxu0 0
  %1747 = vmatpush1.bf16.msra.mxu0 0
  %1748 = vmatprep.subr.bf16.mxu0 0
  %1749 = vmatpush1.bf16.msra.mxu0 0
  %1750 = vmatprep.mubr.bf16.mxu0 0
  %1751 = vmatmul.mubr.bf16.gmra.mrb[0].mxu0 %v1516
  %v1752 = vpop.f32.mrb[0].mxu0
  %v1753 = vadd.f32 0.0, %v1752
  %v1754 = vpop.f32.mrb[0].mxu0
  %v1755 = vpop.f32.mrb[0].mxu0
  %v1756 = vpop.f32.mrb[0].mxu0
  %1757 = vdwg.mxu0
  %v1758 = vadd.f32 %v1470, %v1712
  %v1759 = vxor.u32 %v1758, 2147483648
  %v1760 = vmul.f32 %v1759, 1.442695
  %v1761 = vpow.pop %v1760
  %v1762 = vadd.f32 %v1761, 1.0
  %v1763 = vrcp.pop %v1762
  %v1764 = vmul.f32 1.0, %v1763
  %v1765 = vadd.f32 %v1472, %v1714
  %v1766 = vxor.u32 %v1765, 2147483648
  %v1767 = vmul.f32 %v1766, 1.442695
  %v1768 = vpow.pop %v1767
  %v1769 = vadd.f32 %v1768, 1.0
  %v1770 = vrcp.pop %v1769
  %v1771 = vmul.f32 1.0, %v1770
  %v1772 = vadd.f32 %v1753, %v228
  %v1773 = vmul.f32 %v1764, %v1772
  %v1774 = vadd.f32 %v1511, %v1773
  %v1775 = vtanh.pop %v1774
  %v1776 = vsub.f32 1.0, %v1771
  %v1777 = vmul.f32 %v1776, %v1775
  %v1778 = vmul.f32 %v1771, %v1005
  %v1779 = vadd.f32 %v1777, %v1778
  %s1780 = scalar_lea.vmem [#allocation3], 8
  %1781 = vst [vmem:[%s1780] sm:$0xff] %v1779
  %s1782 = scalar_lea.vmem [#allocation2], 48
  %v1783 = vld [vmem:[%s1782] sm:$0xff]
  %v1784 = vld [vmem:[%s1782 + $0x8] sm:$0xff]
  %v1785 = vld [vmem:[%s1782 + $0x10] sm:$0xff]
  %v1786 = vld [vmem:[%s3] sm:$0xff]
  %v1787 = vld [vmem:[%s3 + $0x8] sm:$0xf]
  %v1788 = vld [vmem:[%s3 + $0xc] sm:$0xff]
  %v1789 = vld [vmem:[%s3 + $0x14] sm:$0xf]
  %v1790 = vld [vmem:[%s3 + $0x18] sm:$0xff]
  %v1791 = vld [vmem:[%s3 + $0x20] sm:$0xf]
  %v1792 = vld [vmem:[%s3 + $0x24] sm:$0xff]
  %v1793 = vld [vmem:[%s3 + $0x2c] sm:$0xf]
  %v1794 = vld [vmem:[%s3 + $0x30] sm:$0xff]
  %v1795 = vld [vmem:[%s3 + $0x38] sm:$0xf]
  %v1796 = vld [vmem:[%s3 + $0x3c] sm:$0xff]
  %v1797 = vld [vmem:[%s3 + $0x44] sm:$0xf]
  %v1798 = vld [vmem:[%s3 + $0x48] sm:$0xff]
  %v1799 = vld [vmem:[%s3 + $0x50] sm:$0xf]
  %v1800 = vld [vmem:[%s3 + $0x54] sm:$0xff]
  %v1801 = vld [vmem:[%s3 + $0x5c] sm:$0xf]
  %v1802 = vld [vmem:[%s3 + $0x60] sm:$0xff]
  %v1803 = vld [vmem:[%s3 + $0x68] sm:$0xf]
  %v1804 = vld [vmem:[%s3 + $0x6c] sm:$0xff]
  %v1805 = vld [vmem:[%s3 + $0x74] sm:$0xf]
  %v1806 = vld [vmem:[%s3 + $0x78] sm:$0xff]
  %v1807 = vld [vmem:[%s3 + $0x80] sm:$0xf]
  %v1808 = vld [vmem:[%s3 + $0x84] sm:$0xff]
  %v1809 = vld [vmem:[%s3 + $0x8c] sm:$0xf]
  %v1810 = vld [vmem:[%s3 + $0x90] sm:$0xff]
  %v1811 = vld [vmem:[%s3 + $0x98] sm:$0xf]
  %v1812 = vld [vmem:[%s3 + $0x9c] sm:$0xff]
  %v1813 = vld [vmem:[%s3 + $0xa4] sm:$0xf]
  %v1814 = vld [vmem:[%s3 + $0xa8] sm:$0xff]
  %v1815 = vld [vmem:[%s3 + $0xb0] sm:$0xf]
  %v1816 = vld [vmem:[%s3 + $0xb4] sm:$0xff]
  %v1817 = vld [vmem:[%s3 + $0xbc] sm:$0xf]
  %v1850 = vunpack.c.l.b16 %v1786
  %v1851 = vunpack.c.h.b16 %v1786
  %v1852 = vunpack.c.l.b16 %v1787
  %v1853 = vunpack.c.l.b16 %v1788
  %v1854 = vunpack.c.h.b16 %v1788
  %v1855 = vunpack.c.l.b16 %v1789
  %v1856 = vunpack.c.l.b16 %v1790
  %v1857 = vunpack.c.h.b16 %v1790
  %v1858 = vunpack.c.l.b16 %v1791
  %v1859 = vunpack.c.l.b16 %v1792
  %v1860 = vunpack.c.h.b16 %v1792
  %v1861 = vunpack.c.l.b16 %v1793
  %v1862 = vunpack.c.l.b16 %v1794
  %v1863 = vunpack.c.h.b16 %v1794
  %v1864 = vunpack.c.l.b16 %v1795
  %v1865 = vunpack.c.l.b16 %v1796
  %v1866 = vunpack.c.h.b16 %v1796
  %v1867 = vunpack.c.l.b16 %v1797
  %v1868 = vunpack.c.l.b16 %v1798
  %v1869 = vunpack.c.h.b16 %v1798
  %v1870 = vunpack.c.l.b16 %v1799
  %v1871 = vunpack.c.l.b16 %v1800
  %v1872 = vunpack.c.h.b16 %v1800
  %v1873 = vunpack.c.l.b16 %v1801
  %v1874 = vunpack.c.l.b16 %v1802
  %v1875 = vunpack.c.h.b16 %v1802
  %v1876 = vunpack.c.l.b16 %v1803
  %v1877 = vunpack.c.l.b16 %v1804
  %v1878 = vunpack.c.h.b16 %v1804
  %v1879 = vunpack.c.l.b16 %v1805
  %v1880 = vunpack.c.l.b16 %v1806
  %v1881 = vunpack.c.h.b16 %v1806
  %v1882 = vunpack.c.l.b16 %v1807
  %v1883 = vunpack.c.l.b16 %v1808
  %v1884 = vunpack.c.h.b16 %v1808
  %v1885 = vunpack.c.l.b16 %v1809
  %v1886 = vunpack.c.l.b16 %v1810
  %v1887 = vunpack.c.h.b16 %v1810
  %v1888 = vunpack.c.l.b16 %v1811
  %v1889 = vunpack.c.l.b16 %v1812
  %v1890 = vunpack.c.h.b16 %v1812
  %v1891 = vunpack.c.l.b16 %v1813
  %v1892 = vunpack.c.l.b16 %v1814
  %v1893 = vunpack.c.h.b16 %v1814
  %v1894 = vunpack.c.l.b16 %v1815
  %v1895 = vunpack.c.l.b16 %v1816
  %v1896 = vunpack.c.h.b16 %v1816
  %v1897 = vunpack.c.l.b16 %v1817
  %v1898 = vpack.c.b16 %v1853, %v1850
  %v1899 = vpack.c.b16 %v1854, %v1851
  %v1900 = vpack.c.b16 %v1855, %v1852
  %v1901 = vpack.c.b16 %v1859, %v1856
  %v1902 = vpack.c.b16 %v1860, %v1857
  %v1903 = vpack.c.b16 %v1861, %v1858
  %v1904 = vpack.c.b16 %v1865, %v1862
  %v1905 = vpack.c.b16 %v1866, %v1863
  %v1906 = vpack.c.b16 %v1867, %v1864
  %v1907 = vpack.c.b16 %v1871, %v1868
  %v1908 = vpack.c.b16 %v1872, %v1869
  %v1909 = vpack.c.b16 %v1873, %v1870
  %v1910 = vpack.c.b16 %v1877, %v1874
  %v1911 = vpack.c.b16 %v1878, %v1875
  %v1912 = vpack.c.b16 %v1879, %v1876
  %v1913 = vpack.c.b16 %v1883, %v1880
  %v1914 = vpack.c.b16 %v1884, %v1881
  %v1915 = vpack.c.b16 %v1885, %v1882
  %v1916 = vpack.c.b16 %v1889, %v1886
  %v1917 = vpack.c.b16 %v1890, %v1887
  %v1918 = vpack.c.b16 %v1891, %v1888
  %v1919 = vpack.c.b16 %v1895, %v1892
  %v1920 = vpack.c.b16 %v1896, %v1893
  %v1921 = vpack.c.b16 %v1897, %v1894
  %1946 = vmatprep.subr.bf16.mxu0 %v1899
  %1947 = vmatpush1.bf16.msra.mxu0 %v1898
  %1948 = vmatprep.subr.bf16.mxu0 %v1902
  %1949 = vmatpush1.bf16.msra.mxu0 %v1901
  %1950 = vmatprep.subr.bf16.mxu0 %v1905
  %1951 = vmatpush1.bf16.msra.mxu0 %v1904
  %1952 = vmatprep.subr.bf16.mxu0 %v1908
  %1953 = vmatpush1.bf16.msra.mxu0 %v1907
  %1954 = vmatprep.subr.bf16.mxu0 %v1911
  %1955 = vmatpush1.bf16.msra.mxu0 %v1910
  %1956 = vmatprep.subr.bf16.mxu0 %v1914
  %1957 = vmatpush1.bf16.msra.mxu0 %v1913
  %1958 = vmatprep.subr.bf16.mxu0 %v1917
  %1959 = vmatpush1.bf16.msra.mxu0 %v1916
  %1960 = vmatprep.subr.bf16.mxu0 %v1920
  %1961 = vmatpush1.bf16.msra.mxu0 %v1919
  %1962 = vmatprep.subr.bf16.mxu0 0
  %1963 = vmatpush1.bf16.msra.mxu0 0
  %1964 = vmatprep.subr.bf16.mxu0 0
  %1965 = vmatpush1.bf16.msra.mxu0 0
  %1966 = vmatprep.subr.bf16.mxu0 0
  %1967 = vmatpush1.bf16.msra.mxu0 0
  %1968 = vmatprep.subr.bf16.mxu0 0
  %1969 = vmatpush1.bf16.msra.mxu0 0
  %1970 = vmatprep.subr.bf16.mxu0 0
  %1971 = vmatpush1.bf16.msra.mxu0 0
  %1972 = vmatprep.subr.bf16.mxu0 0
  %1973 = vmatpush1.bf16.msra.mxu0 0
  %1974 = vmatprep.subr.bf16.mxu0 0
  %1975 = vmatpush1.bf16.msra.mxu0 0
  %1976 = vmatprep.subr.bf16.mxu0 0
  %1977 = vmatpush1.bf16.msra.mxu0 0
  %1978 = vmatprep.mubr.bf16.mxu0 0
  %1979 = vmatmul.mubr.bf16.gmra.mrb[0].mxu0 %v1274
  %v1980 = vpop.f32.mrb[0].mxu0
  %v1981 = vadd.f32 0.0, %v1980
  %v1982 = vpop.f32.mrb[0].mxu0
  %v1983 = vadd.f32 0.0, %v1982
  %v1984 = vpop.f32.mrb[0].mxu0
  %v1985 = vpop.f32.mrb[0].mxu0
  %1986 = vdwg.mxu0
  %1987 = vmatprep.subr.bf16.mxu0 0
  %1988 = vmatpush1.bf16.msra.mxu0 %v1900
  %1989 = vmatprep.subr.bf16.mxu0 0
  %1990 = vmatpush1.bf16.msra.mxu0 %v1903
  %1991 = vmatprep.subr.bf16.mxu0 0
  %1992 = vmatpush1.bf16.msra.mxu0 %v1906
  %1993 = vmatprep.subr.bf16.mxu0 0
  %1994 = vmatpush1.bf16.msra.mxu0 %v1909
  %1995 = vmatprep.subr.bf16.mxu0 0
  %1996 = vmatpush1.bf16.msra.mxu0 %v1912
  %1997 = vmatprep.subr.bf16.mxu0 0
  %1998 = vmatpush1.bf16.msra.mxu0 %v1915
  %1999 = vmatprep.subr.bf16.mxu0 0
  %2000 = vmatpush1.bf16.msra.mxu0 %v1918
  %2001 = vmatprep.subr.bf16.mxu0 0
  %2002 = vmatpush1.bf16.msra.mxu0 %v1921
  %2003 = vmatprep.subr.bf16.mxu0 0
  %2004 = vmatpush1.bf16.msra.mxu0 0
  %2005 = vmatprep.subr.bf16.mxu0 0
  %2006 = vmatpush1.bf16.msra.mxu0 0
  %2007 = vmatprep.subr.bf16.mxu0 0
  %2008 = vmatpush1.bf16.msra.mxu0 0
  %2009 = vmatprep.subr.bf16.mxu0 0
  %2010 = vmatpush1.bf16.msra.mxu0 0
  %2011 = vmatprep.subr.bf16.mxu0 0
  %2012 = vmatpush1.bf16.msra.mxu0 0
  %2013 = vmatprep.subr.bf16.mxu0 0
  %2014 = vmatpush1.bf16.msra.mxu0 0
  %2015 = vmatprep.subr.bf16.mxu0 0
  %2016 = vmatpush1.bf16.msra.mxu0 0
  %2017 = vmatprep.subr.bf16.mxu0 0
  %2018 = vmatpush1.bf16.msra.mxu0 0
  %2019 = vmatprep.mubr.bf16.mxu0 0
  %2020 = vmatmul.mubr.bf16.gmra.mrb[0].mxu0 %v1274
  %v2021 = vpop.f32.mrb[0].mxu0
  %v2022 = vadd.f32 0.0, %v2021
  %v2023 = vpop.f32.mrb[0].mxu0
  %v2024 = vpop.f32.mrb[0].mxu0
  %v2025 = vpop.f32.mrb[0].mxu0
  %2026 = vdwg.mxu0
  %v2027 = vadd.f32 %v1783, %v1981
  %v2028 = vxor.u32 %v2027, 2147483648
  %v2029 = vmul.f32 %v2028, 1.442695
  %v2030 = vpow.pop %v2029
  %v2031 = vadd.f32 %v2030, 1.0
  %v2032 = vrcp.pop %v2031
  %v2033 = vmul.f32 1.0, %v2032
  %v2034 = vadd.f32 %v1784, %v1983
  %v2035 = vxor.u32 %v2034, 2147483648
  %v2036 = vmul.f32 %v2035, 1.442695
  %v2037 = vpow.pop %v2036
  %v2038 = vadd.f32 %v2037, 1.0
  %v2039 = vrcp.pop %v2038
  %v2040 = vmul.f32 1.0, %v2039
  %v2041 = vadd.f32 %v2022, %v221
  %v2042 = vmul.f32 %v2033, %v2041
  %v2043 = vadd.f32 %v1785, %v2042
  %v2044 = vtanh.pop %v2043
  %v2045 = vsub.f32 1.0, %v2040
  %v2046 = vmul.f32 %v2045, %v2044
  %v2047 = vmul.f32 %v2040, %v1273
  %v2048 = vadd.f32 %v2046, %v2047
  %v2049 = vpack.c.bf16 %v2048, %v2048
  %v2050 = vld [vmem:[%s6] sm:$0xff]
  %v2051 = vld [vmem:[%s6 + $0x8] sm:$0xf]
  %v2052 = vld [vmem:[%s6 + $0xc] sm:$0xff]
  %v2053 = vld [vmem:[%s6 + $0x14] sm:$0xf]
  %v2054 = vld [vmem:[%s6 + $0x18] sm:$0xff]
  %v2055 = vld [vmem:[%s6 + $0x20] sm:$0xf]
  %v2056 = vld [vmem:[%s6 + $0x24] sm:$0xff]
  %v2057 = vld [vmem:[%s6 + $0x2c] sm:$0xf]
  %v2058 = vld [vmem:[%s6 + $0x30] sm:$0xff]
  %v2059 = vld [vmem:[%s6 + $0x38] sm:$0xf]
  %v2060 = vld [vmem:[%s6 + $0x3c] sm:$0xff]
  %v2061 = vld [vmem:[%s6 + $0x44] sm:$0xf]
  %v2062 = vld [vmem:[%s6 + $0x48] sm:$0xff]
  %v2063 = vld [vmem:[%s6 + $0x50] sm:$0xf]
  %v2064 = vld [vmem:[%s6 + $0x54] sm:$0xff]
  %v2065 = vld [vmem:[%s6 + $0x5c] sm:$0xf]
  %v2066 = vld [vmem:[%s6 + $0x60] sm:$0xff]
  %v2067 = vld [vmem:[%s6 + $0x68] sm:$0xf]
  %v2068 = vld [vmem:[%s6 + $0x6c] sm:$0xff]
  %v2069 = vld [vmem:[%s6 + $0x74] sm:$0xf]
  %v2070 = vld [vmem:[%s6 + $0x78] sm:$0xff]
  %v2071 = vld [vmem:[%s6 + $0x80] sm:$0xf]
  %v2072 = vld [vmem:[%s6 + $0x84] sm:$0xff]
  %v2073 = vld [vmem:[%s6 + $0x8c] sm:$0xf]
  %v2074 = vld [vmem:[%s6 + $0x90] sm:$0xff]
  %v2075 = vld [vmem:[%s6 + $0x98] sm:$0xf]
  %v2076 = vld [vmem:[%s6 + $0x9c] sm:$0xff]
  %v2077 = vld [vmem:[%s6 + $0xa4] sm:$0xf]
  %v2078 = vld [vmem:[%s6 + $0xa8] sm:$0xff]
  %v2079 = vld [vmem:[%s6 + $0xb0] sm:$0xf]
  %v2080 = vld [vmem:[%s6 + $0xb4] sm:$0xff]
  %v2081 = vld [vmem:[%s6 + $0xbc] sm:$0xf]
  %v2114 = vunpack.c.l.b16 %v2050
  %v2115 = vunpack.c.h.b16 %v2050
  %v2116 = vunpack.c.l.b16 %v2051
  %v2117 = vunpack.c.l.b16 %v2052
  %v2118 = vunpack.c.h.b16 %v2052
  %v2119 = vunpack.c.l.b16 %v2053
  %v2120 = vunpack.c.l.b16 %v2054
  %v2121 = vunpack.c.h.b16 %v2054
  %v2122 = vunpack.c.l.b16 %v2055
  %v2123 = vunpack.c.l.b16 %v2056
  %v2124 = vunpack.c.h.b16 %v2056
  %v2125 = vunpack.c.l.b16 %v2057
  %v2126 = vunpack.c.l.b16 %v2058
  %v2127 = vunpack.c.h.b16 %v2058
  %v2128 = vunpack.c.l.b16 %v2059
  %v2129 = vunpack.c.l.b16 %v2060
  %v2130 = vunpack.c.h.b16 %v2060
  %v2131 = vunpack.c.l.b16 %v2061
  %v2132 = vunpack.c.l.b16 %v2062
  %v2133 = vunpack.c.h.b16 %v2062
  %v2134 = vunpack.c.l.b16 %v2063
  %v2135 = vunpack.c.l.b16 %v2064
  %v2136 = vunpack.c.h.b16 %v2064
  %v2137 = vunpack.c.l.b16 %v2065
  %v2138 = vunpack.c.l.b16 %v2066
  %v2139 = vunpack.c.h.b16 %v2066
  %v2140 = vunpack.c.l.b16 %v2067
  %v2141 = vunpack.c.l.b16 %v2068
  %v2142 = vunpack.c.h.b16 %v2068
  %v2143 = vunpack.c.l.b16 %v2069
  %v2144 = vunpack.c.l.b16 %v2070
  %v2145 = vunpack.c.h.b16 %v2070
  %v2146 = vunpack.c.l.b16 %v2071
  %v2147 = vunpack.c.l.b16 %v2072
  %v2148 = vunpack.c.h.b16 %v2072
  %v2149 = vunpack.c.l.b16 %v2073
  %v2150 = vunpack.c.l.b16 %v2074
  %v2151 = vunpack.c.h.b16 %v2074
  %v2152 = vunpack.c.l.b16 %v2075
  %v2153 = vunpack.c.l.b16 %v2076
  %v2154 = vunpack.c.h.b16 %v2076
  %v2155 = vunpack.c.l.b16 %v2077
  %v2156 = vunpack.c.l.b16 %v2078
  %v2157 = vunpack.c.h.b16 %v2078
  %v2158 = vunpack.c.l.b16 %v2079
  %v2159 = vunpack.c.l.b16 %v2080
  %v2160 = vunpack.c.h.b16 %v2080
  %v2161 = vunpack.c.l.b16 %v2081
  %v2162 = vpack.c.b16 %v2117, %v2114
  %v2163 = vpack.c.b16 %v2118, %v2115
  %v2164 = vpack.c.b16 %v2119, %v2116
  %v2165 = vpack.c.b16 %v2123, %v2120
  %v2166 = vpack.c.b16 %v2124, %v2121
  %v2167 = vpack.c.b16 %v2125, %v2122
  %v2168 = vpack.c.b16 %v2129, %v2126
  %v2169 = vpack.c.b16 %v2130, %v2127
  %v2170 = vpack.c.b16 %v2131, %v2128
  %v2171 = vpack.c.b16 %v2135, %v2132
  %v2172 = vpack.c.b16 %v2136, %v2133
  %v2173 = vpack.c.b16 %v2137, %v2134
  %v2174 = vpack.c.b16 %v2141, %v2138
  %v2175 = vpack.c.b16 %v2142, %v2139
  %v2176 = vpack.c.b16 %v2143, %v2140
  %v2177 = vpack.c.b16 %v2147, %v2144
  %v2178 = vpack.c.b16 %v2148, %v2145
  %v2179 = vpack.c.b16 %v2149, %v2146
  %v2180 = vpack.c.b16 %v2153, %v2150
  %v2181 = vpack.c.b16 %v2154, %v2151
  %v2182 = vpack.c.b16 %v2155, %v2152
  %v2183 = vpack.c.b16 %v2159, %v2156
  %v2184 = vpack.c.b16 %v2160, %v2157
  %v2185 = vpack.c.b16 %v2161, %v2158
  %2210 = vmatprep.subr.bf16.mxu0 %v2163
  %2211 = vmatpush1.bf16.msra.mxu0 %v2162
  %2212 = vmatprep.subr.bf16.mxu0 %v2166
  %2213 = vmatpush1.bf16.msra.mxu0 %v2165
  %2214 = vmatprep.subr.bf16.mxu0 %v2169
  %2215 = vmatpush1.bf16.msra.mxu0 %v2168
  %2216 = vmatprep.subr.bf16.mxu0 %v2172
  %2217 = vmatpush1.bf16.msra.mxu0 %v2171
  %2218 = vmatprep.subr.bf16.mxu0 %v2175
  %2219 = vmatpush1.bf16.msra.mxu0 %v2174
  %2220 = vmatprep.subr.bf16.mxu0 %v2178
  %2221 = vmatpush1.bf16.msra.mxu0 %v2177
  %2222 = vmatprep.subr.bf16.mxu0 %v2181
  %2223 = vmatpush1.bf16.msra.mxu0 %v2180
  %2224 = vmatprep.subr.bf16.mxu0 %v2184
  %2225 = vmatpush1.bf16.msra.mxu0 %v2183
  %2226 = vmatprep.subr.bf16.mxu0 0
  %2227 = vmatpush1.bf16.msra.mxu0 0
  %2228 = vmatprep.subr.bf16.mxu0 0
  %2229 = vmatpush1.bf16.msra.mxu0 0
  %2230 = vmatprep.subr.bf16.mxu0 0
  %2231 = vmatpush1.bf16.msra.mxu0 0
  %2232 = vmatprep.subr.bf16.mxu0 0
  %2233 = vmatpush1.bf16.msra.mxu0 0
  %2234 = vmatprep.subr.bf16.mxu0 0
  %2235 = vmatpush1.bf16.msra.mxu0 0
  %2236 = vmatprep.subr.bf16.mxu0 0
  %2237 = vmatpush1.bf16.msra.mxu0 0
  %2238 = vmatprep.subr.bf16.mxu0 0
  %2239 = vmatpush1.bf16.msra.mxu0 0
  %2240 = vmatprep.subr.bf16.mxu0 0
  %2241 = vmatpush1.bf16.msra.mxu0 0
  %2242 = vmatprep.mubr.bf16.mxu0 0
  %2243 = vmatmul.mubr.bf16.gmra.mrb[0].mxu0 %v2049
  %v2244 = vpop.f32.mrb[0].mxu0
  %v2245 = vadd.f32 %v204, %v2244
  %v2246 = vpop.f32.mrb[0].mxu0
  %v2247 = vadd.f32 %v208, %v2246
  %v2248 = vpop.f32.mrb[0].mxu0
  %v2249 = vpop.f32.mrb[0].mxu0
  %2250 = vdwg.mxu0
  %2251 = vmatprep.subr.bf16.mxu0 0
  %2252 = vmatpush1.bf16.msra.mxu0 %v2164
  %2253 = vmatprep.subr.bf16.mxu0 0
  %2254 = vmatpush1.bf16.msra.mxu0 %v2167
  %2255 = vmatprep.subr.bf16.mxu0 0
  %2256 = vmatpush1.bf16.msra.mxu0 %v2170
  %2257 = vmatprep.subr.bf16.mxu0 0
  %2258 = vmatpush1.bf16.msra.mxu0 %v2173
  %2259 = vmatprep.subr.bf16.mxu0 0
  %2260 = vmatpush1.bf16.msra.mxu0 %v2176
  %2261 = vmatprep.subr.bf16.mxu0 0
  %2262 = vmatpush1.bf16.msra.mxu0 %v2179
  %2263 = vmatprep.subr.bf16.mxu0 0
  %2264 = vmatpush1.bf16.msra.mxu0 %v2182
  %2265 = vmatprep.subr.bf16.mxu0 0
  %2266 = vmatpush1.bf16.msra.mxu0 %v2185
  %2267 = vmatprep.subr.bf16.mxu0 0
  %2268 = vmatpush1.bf16.msra.mxu0 0
  %2269 = vmatprep.subr.bf16.mxu0 0
  %2270 = vmatpush1.bf16.msra.mxu0 0
  %2271 = vmatprep.subr.bf16.mxu0 0
  %2272 = vmatpush1.bf16.msra.mxu0 0
  %2273 = vmatprep.subr.bf16.mxu0 0
  %2274 = vmatpush1.bf16.msra.mxu0 0
  %2275 = vmatprep.subr.bf16.mxu0 0
  %2276 = vmatpush1.bf16.msra.mxu0 0
  %2277 = vmatprep.subr.bf16.mxu0 0
  %2278 = vmatpush1.bf16.msra.mxu0 0
  %2279 = vmatprep.subr.bf16.mxu0 0
  %2280 = vmatpush1.bf16.msra.mxu0 0
  %2281 = vmatprep.subr.bf16.mxu0 0
  %2282 = vmatpush1.bf16.msra.mxu0 0
  %2283 = vmatprep.mubr.bf16.mxu0 0
  %2284 = vmatmul.mubr.bf16.gmra.mrb[0].mxu0 %v2049
  %v2285 = vpop.f32.mrb[0].mxu0
  %v2286 = vadd.f32 %v212, %v2285
  %v2287 = vpop.f32.mrb[0].mxu0
  %v2288 = vpop.f32.mrb[0].mxu0
  %v2289 = vpop.f32.mrb[0].mxu0
  %2290 = vdwg.mxu0
  %v2291 = vpack.c.bf16 %v1779, %v1779
  %v2292 = vld [vmem:[%s7] sm:$0xff]
  %v2293 = vld [vmem:[%s7 + $0x8] sm:$0xf]
  %v2294 = vld [vmem:[%s7 + $0xc] sm:$0xff]
  %v2295 = vld [vmem:[%s7 + $0x14] sm:$0xf]
  %v2296 = vld [vmem:[%s7 + $0x18] sm:$0xff]
  %v2297 = vld [vmem:[%s7 + $0x20] sm:$0xf]
  %v2298 = vld [vmem:[%s7 + $0x24] sm:$0xff]
  %v2299 = vld [vmem:[%s7 + $0x2c] sm:$0xf]
  %v2300 = vld [vmem:[%s7 + $0x30] sm:$0xff]
  %v2301 = vld [vmem:[%s7 + $0x38] sm:$0xf]
  %v2302 = vld [vmem:[%s7 + $0x3c] sm:$0xff]
  %v2303 = vld [vmem:[%s7 + $0x44] sm:$0xf]
  %v2304 = vld [vmem:[%s7 + $0x48] sm:$0xff]
  %v2305 = vld [vmem:[%s7 + $0x50] sm:$0xf]
  %v2306 = vld [vmem:[%s7 + $0x54] sm:$0xff]
  %v2307 = vld [vmem:[%s7 + $0x5c] sm:$0xf]
  %v2308 = vld [vmem:[%s7 + $0x60] sm:$0xff]
  %v2309 = vld [vmem:[%s7 + $0x68] sm:$0xf]
  %v2310 = vld [vmem:[%s7 + $0x6c] sm:$0xff]
  %v2311 = vld [vmem:[%s7 + $0x74] sm:$0xf]
  %v2312 = vld [vmem:[%s7 + $0x78] sm:$0xff]
  %v2313 = vld [vmem:[%s7 + $0x80] sm:$0xf]
  %v2314 = vld [vmem:[%s7 + $0x84] sm:$0xff]
  %v2315 = vld [vmem:[%s7 + $0x8c] sm:$0xf]
  %v2316 = vld [vmem:[%s7 + $0x90] sm:$0xff]
  %v2317 = vld [vmem:[%s7 + $0x98] sm:$0xf]
  %v2318 = vld [vmem:[%s7 + $0x9c] sm:$0xff]
  %v2319 = vld [vmem:[%s7 + $0xa4] sm:$0xf]
  %v2320 = vld [vmem:[%s7 + $0xa8] sm:$0xff]
  %v2321 = vld [vmem:[%s7 + $0xb0] sm:$0xf]
  %v2322 = vld [vmem:[%s7 + $0xb4] sm:$0xff]
  %v2323 = vld [vmem:[%s7 + $0xbc] sm:$0xf]
  %v2356 = vunpack.c.l.b16 %v2292
  %v2357 = vunpack.c.h.b16 %v2292
  %v2358 = vunpack.c.l.b16 %v2293
  %v2359 = vunpack.c.l.b16 %v2294
  %v2360 = vunpack.c.h.b16 %v2294
  %v2361 = vunpack.c.l.b16 %v2295
  %v2362 = vunpack.c.l.b16 %v2296
  %v2363 = vunpack.c.h.b16 %v2296
  %v2364 = vunpack.c.l.b16 %v2297
  %v2365 = vunpack.c.l.b16 %v2298
  %v2366 = vunpack.c.h.b16 %v2298
  %v2367 = vunpack.c.l.b16 %v2299
  %v2368 = vunpack.c.l.b16 %v2300
  %v2369 = vunpack.c.h.b16 %v2300
  %v2370 = vunpack.c.l.b16 %v2301
  %v2371 = vunpack.c.l.b16 %v2302
  %v2372 = vunpack.c.h.b16 %v2302
  %v2373 = vunpack.c.l.b16 %v2303
  %v2374 = vunpack.c.l.b16 %v2304
  %v2375 = vunpack.c.h.b16 %v2304
  %v2376 = vunpack.c.l.b16 %v2305
  %v2377 = vunpack.c.l.b16 %v2306
  %v2378 = vunpack.c.h.b16 %v2306
  %v2379 = vunpack.c.l.b16 %v2307
  %v2380 = vunpack.c.l.b16 %v2308
  %v2381 = vunpack.c.h.b16 %v2308
  %v2382 = vunpack.c.l.b16 %v2309
  %v2383 = vunpack.c.l.b16 %v2310
  %v2384 = vunpack.c.h.b16 %v2310
  %v2385 = vunpack.c.l.b16 %v2311
  %v2386 = vunpack.c.l.b16 %v2312
  %v2387 = vunpack.c.h.b16 %v2312
  %v2388 = vunpack.c.l.b16 %v2313
  %v2389 = vunpack.c.l.b16 %v2314
  %v2390 = vunpack.c.h.b16 %v2314
  %v2391 = vunpack.c.l.b16 %v2315
  %v2392 = vunpack.c.l.b16 %v2316
  %v2393 = vunpack.c.h.b16 %v2316
  %v2394 = vunpack.c.l.b16 %v2317
  %v2395 = vunpack.c.l.b16 %v2318
  %v2396 = vunpack.c.h.b16 %v2318
  %v2397 = vunpack.c.l.b16 %v2319
  %v2398 = vunpack.c.l.b16 %v2320
  %v2399 = vunpack.c.h.b16 %v2320
  %v2400 = vunpack.c.l.b16 %v2321
  %v2401 = vunpack.c.l.b16 %v2322
  %v2402 = vunpack.c.h.b16 %v2322
  %v2403 = vunpack.c.l.b16 %v2323
  %v2404 = vpack.c.b16 %v2359, %v2356
  %v2405 = vpack.c.b16 %v2360, %v2357
  %v2406 = vpack.c.b16 %v2361, %v2358
  %v2407 = vpack.c.b16 %v2365, %v2362
  %v2408 = vpack.c.b16 %v2366, %v2363
  %v2409 = vpack.c.b16 %v2367, %v2364
  %v2410 = vpack.c.b16 %v2371, %v2368
  %v2411 = vpack.c.b16 %v2372, %v2369
  %v2412 = vpack.c.b16 %v2373, %v2370
  %v2413 = vpack.c.b16 %v2377, %v2374
  %v2414 = vpack.c.b16 %v2378, %v2375
  %v2415 = vpack.c.b16 %v2379, %v2376
  %v2416 = vpack.c.b16 %v2383, %v2380
  %v2417 = vpack.c.b16 %v2384, %v2381
  %v2418 = vpack.c.b16 %v2385, %v2382
  %v2419 = vpack.c.b16 %v2389, %v2386
  %v2420 = vpack.c.b16 %v2390, %v2387
  %v2421 = vpack.c.b16 %v2391, %v2388
  %v2422 = vpack.c.b16 %v2395, %v2392
  %v2423 = vpack.c.b16 %v2396, %v2393
  %v2424 = vpack.c.b16 %v2397, %v2394
  %v2425 = vpack.c.b16 %v2401, %v2398
  %v2426 = vpack.c.b16 %v2402, %v2399
  %v2427 = vpack.c.b16 %v2403, %v2400
  %2452 = vmatprep.subr.bf16.mxu0 %v2405
  %2453 = vmatpush1.bf16.msra.mxu0 %v2404
  %2454 = vmatprep.subr.bf16.mxu0 %v2408
  %2455 = vmatpush1.bf16.msra.mxu0 %v2407
  %2456 = vmatprep.subr.bf16.mxu0 %v2411
  %2457 = vmatpush1.bf16.msra.mxu0 %v2410
  %2458 = vmatprep.subr.bf16.mxu0 %v2414
  %2459 = vmatpush1.bf16.msra.mxu0 %v2413
  %2460 = vmatprep.subr.bf16.mxu0 %v2417
  %2461 = vmatpush1.bf16.msra.mxu0 %v2416
  %2462 = vmatprep.subr.bf16.mxu0 %v2420
  %2463 = vmatpush1.bf16.msra.mxu0 %v2419
  %2464 = vmatprep.subr.bf16.mxu0 %v2423
  %2465 = vmatpush1.bf16.msra.mxu0 %v2422
  %2466 = vmatprep.subr.bf16.mxu0 %v2426
  %2467 = vmatpush1.bf16.msra.mxu0 %v2425
  %2468 = vmatprep.subr.bf16.mxu0 0
  %2469 = vmatpush1.bf16.msra.mxu0 0
  %2470 = vmatprep.subr.bf16.mxu0 0
  %2471 = vmatpush1.bf16.msra.mxu0 0
  %2472 = vmatprep.subr.bf16.mxu0 0
  %2473 = vmatpush1.bf16.msra.mxu0 0
  %2474 = vmatprep.subr.bf16.mxu0 0
  %2475 = vmatpush1.bf16.msra.mxu0 0
  %2476 = vmatprep.subr.bf16.mxu0 0
  %2477 = vmatpush1.bf16.msra.mxu0 0
  %2478 = vmatprep.subr.bf16.mxu0 0
  %2479 = vmatpush1.bf16.msra.mxu0 0
  %2480 = vmatprep.subr.bf16.mxu0 0
  %2481 = vmatpush1.bf16.msra.mxu0 0
  %2482 = vmatprep.subr.bf16.mxu0 0
  %2483 = vmatpush1.bf16.msra.mxu0 0
  %2484 = vmatprep.mubr.bf16.mxu0 0
  %2485 = vmatmul.mubr.bf16.gmra.mrb[0].mxu0 %v2291
  %v2486 = vpop.f32.mrb[0].mxu0
  %v2487 = vadd.f32 0.0, %v2486
  %v2488 = vpop.f32.mrb[0].mxu0
  %v2489 = vadd.f32 0.0, %v2488
  %v2490 = vpop.f32.mrb[0].mxu0
  %v2491 = vpop.f32.mrb[0].mxu0
  %2492 = vdwg.mxu0
  %2493 = vmatprep.subr.bf16.mxu0 0
  %2494 = vmatpush1.bf16.msra.mxu0 %v2406
  %2495 = vmatprep.subr.bf16.mxu0 0
  %2496 = vmatpush1.bf16.msra.mxu0 %v2409
  %2497 = vmatprep.subr.bf16.mxu0 0
  %2498 = vmatpush1.bf16.msra.mxu0 %v2412
  %2499 = vmatprep.subr.bf16.mxu0 0
  %2500 = vmatpush1.bf16.msra.mxu0 %v2415
  %2501 = vmatprep.subr.bf16.mxu0 0
  %2502 = vmatpush1.bf16.msra.mxu0 %v2418
  %2503 = vmatprep.subr.bf16.mxu0 0
  %2504 = vmatpush1.bf16.msra.mxu0 %v2421
  %2505 = vmatprep.subr.bf16.mxu0 0
  %2506 = vmatpush1.bf16.msra.mxu0 %v2424
  %2507 = vmatprep.subr.bf16.mxu0 0
  %2508 = vmatpush1.bf16.msra.mxu0 %v2427
  %2509 = vmatprep.subr.bf16.mxu0 0
  %2510 = vmatpush1.bf16.msra.mxu0 0
  %2511 = vmatprep.subr.bf16.mxu0 0
  %2512 = vmatpush1.bf16.msra.mxu0 0
  %2513 = vmatprep.subr.bf16.mxu0 0
  %2514 = vmatpush1.bf16.msra.mxu0 0
  %2515 = vmatprep.subr.bf16.mxu0 0
  %2516 = vmatpush1.bf16.msra.mxu0 0
  %2517 = vmatprep.subr.bf16.mxu0 0
  %2518 = vmatpush1.bf16.msra.mxu0 0
  %2519 = vmatprep.subr.bf16.mxu0 0
  %2520 = vmatpush1.bf16.msra.mxu0 0
  %2521 = vmatprep.subr.bf16.mxu0 0
  %2522 = vmatpush1.bf16.msra.mxu0 0
  %2523 = vmatprep.subr.bf16.mxu0 0
  %2524 = vmatpush1.bf16.msra.mxu0 0
  %2525 = vmatprep.mubr.bf16.mxu0 0
  %2526 = vmatmul.mubr.bf16.gmra.mrb[0].mxu0 %v2291
  %v2527 = vpop.f32.mrb[0].mxu0
  %v2528 = vadd.f32 0.0, %v2527
  %v2529 = vpop.f32.mrb[0].mxu0
  %v2530 = vpop.f32.mrb[0].mxu0
  %v2531 = vpop.f32.mrb[0].mxu0
  %2532 = vdwg.mxu0
  %v2533 = vadd.f32 %v2245, %v2487
  %v2534 = vxor.u32 %v2533, 2147483648
  %v2535 = vmul.f32 %v2534, 1.442695
  %v2536 = vpow.pop %v2535
  %v2537 = vadd.f32 %v2536, 1.0
  %v2538 = vrcp.pop %v2537
  %v2539 = vmul.f32 1.0, %v2538
  %v2540 = vadd.f32 %v2247, %v2489
  %v2541 = vxor.u32 %v2540, 2147483648
  %v2542 = vmul.f32 %v2541, 1.442695
  %v2543 = vpow.pop %v2542
  %v2544 = vadd.f32 %v2543, 1.0
  %v2545 = vrcp.pop %v2544
  %v2546 = vmul.f32 1.0, %v2545
  %v2547 = vadd.f32 %v2528, %v228
  %v2548 = vmul.f32 %v2539, %v2547
  %v2549 = vadd.f32 %v2286, %v2548
  %v2550 = vtanh.pop %v2549
  %v2551 = vsub.f32 1.0, %v2546
  %v2552 = vmul.f32 %v2551, %v2550
  %v2553 = vmul.f32 %v2546, %v1779
  %v2554 = vadd.f32 %v2552, %v2553
  %s2555 = scalar_lea.vmem [#allocation3], 16
  %2556 = vst [vmem:[%s2555] sm:$0xff] %v2554
  %s2557 = scalar_lea.vmem [#allocation2], 72
  %v2558 = vld [vmem:[%s2557] sm:$0xff]
  %v2559 = vld [vmem:[%s2557 + $0x8] sm:$0xff]
  %v2560 = vld [vmem:[%s2557 + $0x10] sm:$0xff]
  %v2561 = vld [vmem:[%s3] sm:$0xff]
  %v2562 = vld [vmem:[%s3 + $0x8] sm:$0xf]
  %v2563 = vld [vmem:[%s3 + $0xc] sm:$0xff]
  %v2564 = vld [vmem:[%s3 + $0x14] sm:$0xf]
  %v2565 = vld [vmem:[%s3 + $0x18] sm:$0xff]
  %v2566 = vld [vmem:[%s3 + $0x20] sm:$0xf]
  %v2567 = vld [vmem:[%s3 + $0x24] sm:$0xff]
  %v2568 = vld [vmem:[%s3 + $0x2c] sm:$0xf]
  %v2569 = vld [vmem:[%s3 + $0x30] sm:$0xff]
  %v2570 = vld [vmem:[%s3 + $0x38] sm:$0xf]
  %v2571 = vld [vmem:[%s3 + $0x3c] sm:$0xff]
  %v2572 = vld [vmem:[%s3 + $0x44] sm:$0xf]
  %v2573 = vld [vmem:[%s3 + $0x48] sm:$0xff]
  %v2574 = vld [vmem:[%s3 + $0x50] sm:$0xf]
  %v2575 = vld [vmem:[%s3 + $0x54] sm:$0xff]
  %v2576 = vld [vmem:[%s3 + $0x5c] sm:$0xf]
  %v2577 = vld [vmem:[%s3 + $0x60] sm:$0xff]
  %v2578 = vld [vmem:[%s3 + $0x68] sm:$0xf]
  %v2579 = vld [vmem:[%s3 + $0x6c] sm:$0xff]
  %v2580 = vld [vmem:[%s3 + $0x74] sm:$0xf]
  %v2581 = vld [vmem:[%s3 + $0x78] sm:$0xff]
  %v2582 = vld [vmem:[%s3 + $0x80] sm:$0xf]
  %v2583 = vld [vmem:[%s3 + $0x84] sm:$0xff]
  %v2584 = vld [vmem:[%s3 + $0x8c] sm:$0xf]
  %v2585 = vld [vmem:[%s3 + $0x90] sm:$0xff]
  %v2586 = vld [vmem:[%s3 + $0x98] sm:$0xf]
  %v2587 = vld [vmem:[%s3 + $0x9c] sm:$0xff]
  %v2588 = vld [vmem:[%s3 + $0xa4] sm:$0xf]
  %v2589 = vld [vmem:[%s3 + $0xa8] sm:$0xff]
  %v2590 = vld [vmem:[%s3 + $0xb0] sm:$0xf]
  %v2591 = vld [vmem:[%s3 + $0xb4] sm:$0xff]
  %v2592 = vld [vmem:[%s3 + $0xbc] sm:$0xf]
  %v2625 = vunpack.c.l.b16 %v2561
  %v2626 = vunpack.c.h.b16 %v2561
  %v2627 = vunpack.c.l.b16 %v2562
  %v2628 = vunpack.c.l.b16 %v2563
  %v2629 = vunpack.c.h.b16 %v2563
  %v2630 = vunpack.c.l.b16 %v2564
  %v2631 = vunpack.c.l.b16 %v2565
  %v2632 = vunpack.c.h.b16 %v2565
  %v2633 = vunpack.c.l.b16 %v2566
  %v2634 = vunpack.c.l.b16 %v2567
  %v2635 = vunpack.c.h.b16 %v2567
  %v2636 = vunpack.c.l.b16 %v2568
  %v2637 = vunpack.c.l.b16 %v2569
  %v2638 = vunpack.c.h.b16 %v2569
  %v2639 = vunpack.c.l.b16 %v2570
  %v2640 = vunpack.c.l.b16 %v2571
  %v2641 = vunpack.c.h.b16 %v2571
  %v2642 = vunpack.c.l.b16 %v2572
  %v2643 = vunpack.c.l.b16 %v2573
  %v2644 = vunpack.c.h.b16 %v2573
  %v2645 = vunpack.c.l.b16 %v2574
  %v2646 = vunpack.c.l.b16 %v2575
  %v2647 = vunpack.c.h.b16 %v2575
  %v2648 = vunpack.c.l.b16 %v2576
  %v2649 = vunpack.c.l.b16 %v2577
  %v2650 = vunpack.c.h.b16 %v2577
  %v2651 = vunpack.c.l.b16 %v2578
  %v2652 = vunpack.c.l.b16 %v2579
  %v2653 = vunpack.c.h.b16 %v2579
  %v2654 = vunpack.c.l.b16 %v2580
  %v2655 = vunpack.c.l.b16 %v2581
  %v2656 = vunpack.c.h.b16 %v2581
  %v2657 = vunpack.c.l.b16 %v2582
  %v2658 = vunpack.c.l.b16 %v2583
  %v2659 = vunpack.c.h.b16 %v2583
  %v2660 = vunpack.c.l.b16 %v2584
  %v2661 = vunpack.c.l.b16 %v2585
  %v2662 = vunpack.c.h.b16 %v2585
  %v2663 = vunpack.c.l.b16 %v2586
  %v2664 = vunpack.c.l.b16 %v2587
  %v2665 = vunpack.c.h.b16 %v2587
  %v2666 = vunpack.c.l.b16 %v2588
  %v2667 = vunpack.c.l.b16 %v2589
  %v2668 = vunpack.c.h.b16 %v2589
  %v2669 = vunpack.c.l.b16 %v2590
  %v2670 = vunpack.c.l.b16 %v2591
  %v2671 = vunpack.c.h.b16 %v2591
  %v2672 = vunpack.c.l.b16 %v2592
  %v2673 = vpack.c.b16 %v2628, %v2625
  %v2674 = vpack.c.b16 %v2629, %v2626
  %v2675 = vpack.c.b16 %v2630, %v2627
  %v2676 = vpack.c.b16 %v2634, %v2631
  %v2677 = vpack.c.b16 %v2635, %v2632
  %v2678 = vpack.c.b16 %v2636, %v2633
  %v2679 = vpack.c.b16 %v2640, %v2637
  %v2680 = vpack.c.b16 %v2641, %v2638
  %v2681 = vpack.c.b16 %v2642, %v2639
  %v2682 = vpack.c.b16 %v2646, %v2643
  %v2683 = vpack.c.b16 %v2647, %v2644
  %v2684 = vpack.c.b16 %v2648, %v2645
  %v2685 = vpack.c.b16 %v2652, %v2649
  %v2686 = vpack.c.b16 %v2653, %v2650
  %v2687 = vpack.c.b16 %v2654, %v2651
  %v2688 = vpack.c.b16 %v2658, %v2655
  %v2689 = vpack.c.b16 %v2659, %v2656
  %v2690 = vpack.c.b16 %v2660, %v2657
  %v2691 = vpack.c.b16 %v2664, %v2661
  %v2692 = vpack.c.b16 %v2665, %v2662
  %v2693 = vpack.c.b16 %v2666, %v2663
  %v2694 = vpack.c.b16 %v2670, %v2667
  %v2695 = vpack.c.b16 %v2671, %v2668
  %v2696 = vpack.c.b16 %v2672, %v2669
  %2721 = vmatprep.subr.bf16.mxu0 %v2674
  %2722 = vmatpush1.bf16.msra.mxu0 %v2673
  %2723 = vmatprep.subr.bf16.mxu0 %v2677
  %2724 = vmatpush1.bf16.msra.mxu0 %v2676
  %2725 = vmatprep.subr.bf16.mxu0 %v2680
  %2726 = vmatpush1.bf16.msra.mxu0 %v2679
  %2727 = vmatprep.subr.bf16.mxu0 %v2683
  %2728 = vmatpush1.bf16.msra.mxu0 %v2682
  %2729 = vmatprep.subr.bf16.mxu0 %v2686
  %2730 = vmatpush1.bf16.msra.mxu0 %v2685
  %2731 = vmatprep.subr.bf16.mxu0 %v2689
  %2732 = vmatpush1.bf16.msra.mxu0 %v2688
  %2733 = vmatprep.subr.bf16.mxu0 %v2692
  %2734 = vmatpush1.bf16.msra.mxu0 %v2691
  %2735 = vmatprep.subr.bf16.mxu0 %v2695
  %2736 = vmatpush1.bf16.msra.mxu0 %v2694
  %2737 = vmatprep.subr.bf16.mxu0 0
  %2738 = vmatpush1.bf16.msra.mxu0 0
  %2739 = vmatprep.subr.bf16.mxu0 0
  %2740 = vmatpush1.bf16.msra.mxu0 0
  %2741 = vmatprep.subr.bf16.mxu0 0
  %2742 = vmatpush1.bf16.msra.mxu0 0
  %2743 = vmatprep.subr.bf16.mxu0 0
  %2744 = vmatpush1.bf16.msra.mxu0 0
  %2745 = vmatprep.subr.bf16.mxu0 0
  %2746 = vmatpush1.bf16.msra.mxu0 0
  %2747 = vmatprep.subr.bf16.mxu0 0
  %2748 = vmatpush1.bf16.msra.mxu0 0
  %2749 = vmatprep.subr.bf16.mxu0 0
  %2750 = vmatpush1.bf16.msra.mxu0 0
  %2751 = vmatprep.subr.bf16.mxu0 0
  %2752 = vmatpush1.bf16.msra.mxu0 0
  %2753 = vmatprep.mubr.bf16.mxu0 0
  %2754 = vmatmul.mubr.bf16.gmra.mrb[0].mxu0 %v2049
  %v2755 = vpop.f32.mrb[0].mxu0
  %v2756 = vadd.f32 0.0, %v2755
  %v2757 = vpop.f32.mrb[0].mxu0
  %v2758 = vadd.f32 0.0, %v2757
  %v2759 = vpop.f32.mrb[0].mxu0
  %v2760 = vpop.f32.mrb[0].mxu0
  %2761 = vdwg.mxu0
  %2762 = vmatprep.subr.bf16.mxu0 0
  %2763 = vmatpush1.bf16.msra.mxu0 %v2675
  %2764 = vmatprep.subr.bf16.mxu0 0
  %2765 = vmatpush1.bf16.msra.mxu0 %v2678
  %2766 = vmatprep.subr.bf16.mxu0 0
  %2767 = vmatpush1.bf16.msra.mxu0 %v2681
  %2768 = vmatprep.subr.bf16.mxu0 0
  %2769 = vmatpush1.bf16.msra.mxu0 %v2684
  %2770 = vmatprep.subr.bf16.mxu0 0
  %2771 = vmatpush1.bf16.msra.mxu0 %v2687
  %2772 = vmatprep.subr.bf16.mxu0 0
  %2773 = vmatpush1.bf16.msra.mxu0 %v2690
  %2774 = vmatprep.subr.bf16.mxu0 0
  %2775 = vmatpush1.bf16.msra.mxu0 %v2693
  %2776 = vmatprep.subr.bf16.mxu0 0
  %2777 = vmatpush1.bf16.msra.mxu0 %v2696
  %2778 = vmatprep.subr.bf16.mxu0 0
  %2779 = vmatpush1.bf16.msra.mxu0 0
  %2780 = vmatprep.subr.bf16.mxu0 0
  %2781 = vmatpush1.bf16.msra.mxu0 0
  %2782 = vmatprep.subr.bf16.mxu0 0
  %2783 = vmatpush1.bf16.msra.mxu0 0
  %2784 = vmatprep.subr.bf16.mxu0 0
  %2785 = vmatpush1.bf16.msra.mxu0 0
  %2786 = vmatprep.subr.bf16.mxu0 0
  %2787 = vmatpush1.bf16.msra.mxu0 0
  %2788 = vmatprep.subr.bf16.mxu0 0
  %2789 = vmatpush1.bf16.msra.mxu0 0
  %2790 = vmatprep.subr.bf16.mxu0 0
  %2791 = vmatpush1.bf16.msra.mxu0 0
  %2792 = vmatprep.subr.bf16.mxu0 0
  %2793 = vmatpush1.bf16.msra.mxu0 0
  %2794 = vmatprep.mubr.bf16.mxu0 0
  %2795 = vmatmul.mubr.bf16.gmra.mrb[0].mxu0 %v2049
  %v2796 = vpop.f32.mrb[0].mxu0
  %v2797 = vadd.f32 0.0, %v2796
  %v2798 = vpop.f32.mrb[0].mxu0
  %v2799 = vpop.f32.mrb[0].mxu0
  %v2800 = vpop.f32.mrb[0].mxu0
  %2801 = vdwg.mxu0
  %v2802 = vadd.f32 %v2558, %v2756
  %v2803 = vxor.u32 %v2802, 2147483648
  %v2804 = vmul.f32 %v2803, 1.442695
  %v2805 = vpow.pop %v2804
  %v2806 = vadd.f32 %v2805, 1.0
  %v2807 = vrcp.pop %v2806
  %v2808 = vmul.f32 1.0, %v2807
  %v2809 = vadd.f32 %v2559, %v2758
  %v2810 = vxor.u32 %v2809, 2147483648
  %v2811 = vmul.f32 %v2810, 1.442695
  %v2812 = vpow.pop %v2811
  %v2813 = vadd.f32 %v2812, 1.0
  %v2814 = vrcp.pop %v2813
  %v2815 = vmul.f32 1.0, %v2814
  %v2816 = vadd.f32 %v2797, %v221
  %v2817 = vmul.f32 %v2808, %v2816
  %v2818 = vadd.f32 %v2560, %v2817
  %v2819 = vtanh.pop %v2818
  %v2820 = vsub.f32 1.0, %v2815
  %v2821 = vmul.f32 %v2820, %v2819
  %v2822 = vmul.f32 %v2815, %v2048
  %v2823 = vadd.f32 %v2821, %v2822
  %v2824 = vpack.c.bf16 %v2823, %v2823
  %v2825 = vld [vmem:[%s6] sm:$0xff]
  %v2826 = vld [vmem:[%s6 + $0x8] sm:$0xf]
  %v2827 = vld [vmem:[%s6 + $0xc] sm:$0xff]
  %v2828 = vld [vmem:[%s6 + $0x14] sm:$0xf]
  %v2829 = vld [vmem:[%s6 + $0x18] sm:$0xff]
  %v2830 = vld [vmem:[%s6 + $0x20] sm:$0xf]
  %v2831 = vld [vmem:[%s6 + $0x24] sm:$0xff]
  %v2832 = vld [vmem:[%s6 + $0x2c] sm:$0xf]
  %v2833 = vld [vmem:[%s6 + $0x30] sm:$0xff]
  %v2834 = vld [vmem:[%s6 + $0x38] sm:$0xf]
  %v2835 = vld [vmem:[%s6 + $0x3c] sm:$0xff]
  %v2836 = vld [vmem:[%s6 + $0x44] sm:$0xf]
  %v2837 = vld [vmem:[%s6 + $0x48] sm:$0xff]
  %v2838 = vld [vmem:[%s6 + $0x50] sm:$0xf]
  %v2839 = vld [vmem:[%s6 + $0x54] sm:$0xff]
  %v2840 = vld [vmem:[%s6 + $0x5c] sm:$0xf]
  %v2841 = vld [vmem:[%s6 + $0x60] sm:$0xff]
  %v2842 = vld [vmem:[%s6 + $0x68] sm:$0xf]
  %v2843 = vld [vmem:[%s6 + $0x6c] sm:$0xff]
  %v2844 = vld [vmem:[%s6 + $0x74] sm:$0xf]
  %v2845 = vld [vmem:[%s6 + $0x78] sm:$0xff]
  %v2846 = vld [vmem:[%s6 + $0x80] sm:$0xf]
  %v2847 = vld [vmem:[%s6 + $0x84] sm:$0xff]
  %v2848 = vld [vmem:[%s6 + $0x8c] sm:$0xf]
  %v2849 = vld [vmem:[%s6 + $0x90] sm:$0xff]
  %v2850 = vld [vmem:[%s6 + $0x98] sm:$0xf]
  %v2851 = vld [vmem:[%s6 + $0x9c] sm:$0xff]
  %v2852 = vld [vmem:[%s6 + $0xa4] sm:$0xf]
  %v2853 = vld [vmem:[%s6 + $0xa8] sm:$0xff]
  %v2854 = vld [vmem:[%s6 + $0xb0] sm:$0xf]
  %v2855 = vld [vmem:[%s6 + $0xb4] sm:$0xff]
  %v2856 = vld [vmem:[%s6 + $0xbc] sm:$0xf]
  %v2889 = vunpack.c.l.b16 %v2825
  %v2890 = vunpack.c.h.b16 %v2825
  %v2891 = vunpack.c.l.b16 %v2826
  %v2892 = vunpack.c.l.b16 %v2827
  %v2893 = vunpack.c.h.b16 %v2827
  %v2894 = vunpack.c.l.b16 %v2828
  %v2895 = vunpack.c.l.b16 %v2829
  %v2896 = vunpack.c.h.b16 %v2829
  %v2897 = vunpack.c.l.b16 %v2830
  %v2898 = vunpack.c.l.b16 %v2831
  %v2899 = vunpack.c.h.b16 %v2831
  %v2900 = vunpack.c.l.b16 %v2832
  %v2901 = vunpack.c.l.b16 %v2833
  %v2902 = vunpack.c.h.b16 %v2833
  %v2903 = vunpack.c.l.b16 %v2834
  %v2904 = vunpack.c.l.b16 %v2835
  %v2905 = vunpack.c.h.b16 %v2835
  %v2906 = vunpack.c.l.b16 %v2836
  %v2907 = vunpack.c.l.b16 %v2837
  %v2908 = vunpack.c.h.b16 %v2837
  %v2909 = vunpack.c.l.b16 %v2838
  %v2910 = vunpack.c.l.b16 %v2839
  %v2911 = vunpack.c.h.b16 %v2839
  %v2912 = vunpack.c.l.b16 %v2840
  %v2913 = vunpack.c.l.b16 %v2841
  %v2914 = vunpack.c.h.b16 %v2841
  %v2915 = vunpack.c.l.b16 %v2842
  %v2916 = vunpack.c.l.b16 %v2843
  %v2917 = vunpack.c.h.b16 %v2843
  %v2918 = vunpack.c.l.b16 %v2844
  %v2919 = vunpack.c.l.b16 %v2845
  %v2920 = vunpack.c.h.b16 %v2845
  %v2921 = vunpack.c.l.b16 %v2846
  %v2922 = vunpack.c.l.b16 %v2847
  %v2923 = vunpack.c.h.b16 %v2847
  %v2924 = vunpack.c.l.b16 %v2848
  %v2925 = vunpack.c.l.b16 %v2849
  %v2926 = vunpack.c.h.b16 %v2849
  %v2927 = vunpack.c.l.b16 %v2850
  %v2928 = vunpack.c.l.b16 %v2851
  %v2929 = vunpack.c.h.b16 %v2851
  %v2930 = vunpack.c.l.b16 %v2852
  %v2931 = vunpack.c.l.b16 %v2853
  %v2932 = vunpack.c.h.b16 %v2853
  %v2933 = vunpack.c.l.b16 %v2854
  %v2934 = vunpack.c.l.b16 %v2855
  %v2935 = vunpack.c.h.b16 %v2855
  %v2936 = vunpack.c.l.b16 %v2856
  %v2937 = vpack.c.b16 %v2892, %v2889
  %v2938 = vpack.c.b16 %v2893, %v2890
  %v2939 = vpack.c.b16 %v2894, %v2891
  %v2940 = vpack.c.b16 %v2898, %v2895
  %v2941 = vpack.c.b16 %v2899, %v2896
  %v2942 = vpack.c.b16 %v2900, %v2897
  %v2943 = vpack.c.b16 %v2904, %v2901
  %v2944 = vpack.c.b16 %v2905, %v2902
  %v2945 = vpack.c.b16 %v2906, %v2903
  %v2946 = vpack.c.b16 %v2910, %v2907
  %v2947 = vpack.c.b16 %v2911, %v2908
  %v2948 = vpack.c.b16 %v2912, %v2909
  %v2949 = vpack.c.b16 %v2916, %v2913
  %v2950 = vpack.c.b16 %v2917, %v2914
  %v2951 = vpack.c.b16 %v2918, %v2915
  %v2952 = vpack.c.b16 %v2922, %v2919
  %v2953 = vpack.c.b16 %v2923, %v2920
  %v2954 = vpack.c.b16 %v2924, %v2921
  %v2955 = vpack.c.b16 %v2928, %v2925
  %v2956 = vpack.c.b16 %v2929, %v2926
  %v2957 = vpack.c.b16 %v2930, %v2927
  %v2958 = vpack.c.b16 %v2934, %v2931
  %v2959 = vpack.c.b16 %v2935, %v2932
  %v2960 = vpack.c.b16 %v2936, %v2933
  %2985 = vmatprep.subr.bf16.mxu0 %v2938
  %2986 = vmatpush1.bf16.msra.mxu0 %v2937
  %2987 = vmatprep.subr.bf16.mxu0 %v2941
  %2988 = vmatpush1.bf16.msra.mxu0 %v2940
  %2989 = vmatprep.subr.bf16.mxu0 %v2944
  %2990 = vmatpush1.bf16.msra.mxu0 %v2943
  %2991 = vmatprep.subr.bf16.mxu0 %v2947
  %2992 = vmatpush1.bf16.msra.mxu0 %v2946
  %2993 = vmatprep.subr.bf16.mxu0 %v2950
  %2994 = vmatpush1.bf16.msra.mxu0 %v2949
  %2995 = vmatprep.subr.bf16.mxu0 %v2953
  %2996 = vmatpush1.bf16.msra.mxu0 %v2952
  %2997 = vmatprep.subr.bf16.mxu0 %v2956
  %2998 = vmatpush1.bf16.msra.mxu0 %v2955
  %2999 = vmatprep.subr.bf16.mxu0 %v2959
  %3000 = vmatpush1.bf16.msra.mxu0 %v2958
  %3001 = vmatprep.subr.bf16.mxu0 0
  %3002 = vmatpush1.bf16.msra.mxu0 0
  %3003 = vmatprep.subr.bf16.mxu0 0
  %3004 = vmatpush1.bf16.msra.mxu0 0
  %3005 = vmatprep.subr.bf16.mxu0 0
  %3006 = vmatpush1.bf16.msra.mxu0 0
  %3007 = vmatprep.subr.bf16.mxu0 0
  %3008 = vmatpush1.bf16.msra.mxu0 0
  %3009 = vmatprep.subr.bf16.mxu0 0
  %3010 = vmatpush1.bf16.msra.mxu0 0
  %3011 = vmatprep.subr.bf16.mxu0 0
  %3012 = vmatpush1.bf16.msra.mxu0 0
  %3013 = vmatprep.subr.bf16.mxu0 0
  %3014 = vmatpush1.bf16.msra.mxu0 0
  %3015 = vmatprep.subr.bf16.mxu0 0
  %3016 = vmatpush1.bf16.msra.mxu0 0
  %3017 = vmatprep.mubr.bf16.mxu0 0
  %3018 = vmatmul.mubr.bf16.gmra.mrb[0].mxu0 %v2824
  %v3019 = vpop.f32.mrb[0].mxu0
  %v3020 = vadd.f32 %v204, %v3019
  %v3021 = vpop.f32.mrb[0].mxu0
  %v3022 = vadd.f32 %v208, %v3021
  %v3023 = vpop.f32.mrb[0].mxu0
  %v3024 = vpop.f32.mrb[0].mxu0
  %3025 = vdwg.mxu0
  %3026 = vmatprep.subr.bf16.mxu0 0
  %3027 = vmatpush1.bf16.msra.mxu0 %v2939
  %3028 = vmatprep.subr.bf16.mxu0 0
  %3029 = vmatpush1.bf16.msra.mxu0 %v2942
  %3030 = vmatprep.subr.bf16.mxu0 0
  %3031 = vmatpush1.bf16.msra.mxu0 %v2945
  %3032 = vmatprep.subr.bf16.mxu0 0
  %3033 = vmatpush1.bf16.msra.mxu0 %v2948
  %3034 = vmatprep.subr.bf16.mxu0 0
  %3035 = vmatpush1.bf16.msra.mxu0 %v2951
  %3036 = vmatprep.subr.bf16.mxu0 0
  %3037 = vmatpush1.bf16.msra.mxu0 %v2954
  %3038 = vmatprep.subr.bf16.mxu0 0
  %3039 = vmatpush1.bf16.msra.mxu0 %v2957
  %3040 = vmatprep.subr.bf16.mxu0 0
  %3041 = vmatpush1.bf16.msra.mxu0 %v2960
  %3042 = vmatprep.subr.bf16.mxu0 0
  %3043 = vmatpush1.bf16.msra.mxu0 0
  %3044 = vmatprep.subr.bf16.mxu0 0
  %3045 = vmatpush1.bf16.msra.mxu0 0
  %3046 = vmatprep.subr.bf16.mxu0 0
  %3047 = vmatpush1.bf16.msra.mxu0 0
  %3048 = vmatprep.subr.bf16.mxu0 0
  %3049 = vmatpush1.bf16.msra.mxu0 0
  %3050 = vmatprep.subr.bf16.mxu0 0
  %3051 = vmatpush1.bf16.msra.mxu0 0
  %3052 = vmatprep.subr.bf16.mxu0 0
  %3053 = vmatpush1.bf16.msra.mxu0 0
  %3054 = vmatprep.subr.bf16.mxu0 0
  %3055 = vmatpush1.bf16.msra.mxu0 0
  %3056 = vmatprep.subr.bf16.mxu0 0
  %3057 = vmatpush1.bf16.msra.mxu0 0
  %3058 = vmatprep.mubr.bf16.mxu0 0
  %3059 = vmatmul.mubr.bf16.gmra.mrb[0].mxu0 %v2824
  %v3060 = vpop.f32.mrb[0].mxu0
  %v3061 = vadd.f32 %v212, %v3060
  %v3062 = vpop.f32.mrb[0].mxu0
  %v3063 = vpop.f32.mrb[0].mxu0
  %v3064 = vpop.f32.mrb[0].mxu0
  %3065 = vdwg.mxu0
  %v3066 = vpack.c.bf16 %v2554, %v2554
  %v3067 = vld [vmem:[%s7] sm:$0xff]
  %v3068 = vld [vmem:[%s7 + $0x8] sm:$0xf]
  %v3069 = vld [vmem:[%s7 + $0xc] sm:$0xff]
  %v3070 = vld [vmem:[%s7 + $0x14] sm:$0xf]
  %v3071 = vld [vmem:[%s7 + $0x18] sm:$0xff]
  %v3072 = vld [vmem:[%s7 + $0x20] sm:$0xf]
  %v3073 = vld [vmem:[%s7 + $0x24] sm:$0xff]
  %v3074 = vld [vmem:[%s7 + $0x2c] sm:$0xf]
  %v3075 = vld [vmem:[%s7 + $0x30] sm:$0xff]
  %v3076 = vld [vmem:[%s7 + $0x38] sm:$0xf]
  %v3077 = vld [vmem:[%s7 + $0x3c] sm:$0xff]
  %v3078 = vld [vmem:[%s7 + $0x44] sm:$0xf]
  %v3079 = vld [vmem:[%s7 + $0x48] sm:$0xff]
  %v3080 = vld [vmem:[%s7 + $0x50] sm:$0xf]
  %v3081 = vld [vmem:[%s7 + $0x54] sm:$0xff]
  %v3082 = vld [vmem:[%s7 + $0x5c] sm:$0xf]
  %v3083 = vld [vmem:[%s7 + $0x60] sm:$0xff]
  %v3084 = vld [vmem:[%s7 + $0x68] sm:$0xf]
  %v3085 = vld [vmem:[%s7 + $0x6c] sm:$0xff]
  %v3086 = vld [vmem:[%s7 + $0x74] sm:$0xf]
  %v3087 = vld [vmem:[%s7 + $0x78] sm:$0xff]
  %v3088 = vld [vmem:[%s7 + $0x80] sm:$0xf]
  %v3089 = vld [vmem:[%s7 + $0x84] sm:$0xff]
  %v3090 = vld [vmem:[%s7 + $0x8c] sm:$0xf]
  %v3091 = vld [vmem:[%s7 + $0x90] sm:$0xff]
  %v3092 = vld [vmem:[%s7 + $0x98] sm:$0xf]
  %v3093 = vld [vmem:[%s7 + $0x9c] sm:$0xff]
  %v3094 = vld [vmem:[%s7 + $0xa4] sm:$0xf]
  %v3095 = vld [vmem:[%s7 + $0xa8] sm:$0xff]
  %v3096 = vld [vmem:[%s7 + $0xb0] sm:$0xf]
  %v3097 = vld [vmem:[%s7 + $0xb4] sm:$0xff]
  %v3098 = vld [vmem:[%s7 + $0xbc] sm:$0xf]
  %v3131 = vunpack.c.l.b16 %v3067
  %v3132 = vunpack.c.h.b16 %v3067
  %v3133 = vunpack.c.l.b16 %v3068
  %v3134 = vunpack.c.l.b16 %v3069
  %v3135 = vunpack.c.h.b16 %v3069
  %v3136 = vunpack.c.l.b16 %v3070
  %v3137 = vunpack.c.l.b16 %v3071
  %v3138 = vunpack.c.h.b16 %v3071
  %v3139 = vunpack.c.l.b16 %v3072
  %v3140 = vunpack.c.l.b16 %v3073
  %v3141 = vunpack.c.h.b16 %v3073
  %v3142 = vunpack.c.l.b16 %v3074
  %v3143 = vunpack.c.l.b16 %v3075
  %v3144 = vunpack.c.h.b16 %v3075
  %v3145 = vunpack.c.l.b16 %v3076
  %v3146 = vunpack.c.l.b16 %v3077
  %v3147 = vunpack.c.h.b16 %v3077
  %v3148 = vunpack.c.l.b16 %v3078
  %v3149 = vunpack.c.l.b16 %v3079
  %v3150 = vunpack.c.h.b16 %v3079
  %v3151 = vunpack.c.l.b16 %v3080
  %v3152 = vunpack.c.l.b16 %v3081
  %v3153 = vunpack.c.h.b16 %v3081
  %v3154 = vunpack.c.l.b16 %v3082
  %v3155 = vunpack.c.l.b16 %v3083
  %v3156 = vunpack.c.h.b16 %v3083
  %v3157 = vunpack.c.l.b16 %v3084
  %v3158 = vunpack.c.l.b16 %v3085
  %v3159 = vunpack.c.h.b16 %v3085
  %v3160 = vunpack.c.l.b16 %v3086
  %v3161 = vunpack.c.l.b16 %v3087
  %v3162 = vunpack.c.h.b16 %v3087
  %v3163 = vunpack.c.l.b16 %v3088
  %v3164 = vunpack.c.l.b16 %v3089
  %v3165 = vunpack.c.h.b16 %v3089
  %v3166 = vunpack.c.l.b16 %v3090
  %v3167 = vunpack.c.l.b16 %v3091
  %v3168 = vunpack.c.h.b16 %v3091
  %v3169 = vunpack.c.l.b16 %v3092
  %v3170 = vunpack.c.l.b16 %v3093
  %v3171 = vunpack.c.h.b16 %v3093
  %v3172 = vunpack.c.l.b16 %v3094
  %v3173 = vunpack.c.l.b16 %v3095
  %v3174 = vunpack.c.h.b16 %v3095
  %v3175 = vunpack.c.l.b16 %v3096
  %v3176 = vunpack.c.l.b16 %v3097
  %v3177 = vunpack.c.h.b16 %v3097
  %v3178 = vunpack.c.l.b16 %v3098
  %v3179 = vpack.c.b16 %v3134, %v3131
  %v3180 = vpack.c.b16 %v3135, %v3132
  %v3181 = vpack.c.b16 %v3136, %v3133
  %v3182 = vpack.c.b16 %v3140, %v3137
  %v3183 = vpack.c.b16 %v3141, %v3138
  %v3184 = vpack.c.b16 %v3142, %v3139
  %v3185 = vpack.c.b16 %v3146, %v3143
  %v3186 = vpack.c.b16 %v3147, %v3144
  %v3187 = vpack.c.b16 %v3148, %v3145
  %v3188 = vpack.c.b16 %v3152, %v3149
  %v3189 = vpack.c.b16 %v3153, %v3150
  %v3190 = vpack.c.b16 %v3154, %v3151
  %v3191 = vpack.c.b16 %v3158, %v3155
  %v3192 = vpack.c.b16 %v3159, %v3156
  %v3193 = vpack.c.b16 %v3160, %v3157
  %v3194 = vpack.c.b16 %v3164, %v3161
  %v3195 = vpack.c.b16 %v3165, %v3162
  %v3196 = vpack.c.b16 %v3166, %v3163
  %v3197 = vpack.c.b16 %v3170, %v3167
  %v3198 = vpack.c.b16 %v3171, %v3168
  %v3199 = vpack.c.b16 %v3172, %v3169
  %v3200 = vpack.c.b16 %v3176, %v3173
  %v3201 = vpack.c.b16 %v3177, %v3174
  %v3202 = vpack.c.b16 %v3178, %v3175
  %3227 = vmatprep.subr.bf16.mxu0 %v3180
  %3228 = vmatpush1.bf16.msra.mxu0 %v3179
  %3229 = vmatprep.subr.bf16.mxu0 %v3183
  %3230 = vmatpush1.bf16.msra.mxu0 %v3182
  %3231 = vmatprep.subr.bf16.mxu0 %v3186
  %3232 = vmatpush1.bf16.msra.mxu0 %v3185
  %3233 = vmatprep.subr.bf16.mxu0 %v3189
  %3234 = vmatpush1.bf16.msra.mxu0 %v3188
  %3235 = vmatprep.subr.bf16.mxu0 %v3192
  %3236 = vmatpush1.bf16.msra.mxu0 %v3191
  %3237 = vmatprep.subr.bf16.mxu0 %v3195
  %3238 = vmatpush1.bf16.msra.mxu0 %v3194
  %3239 = vmatprep.subr.bf16.mxu0 %v3198
  %3240 = vmatpush1.bf16.msra.mxu0 %v3197
  %3241 = vmatprep.subr.bf16.mxu0 %v3201
  %3242 = vmatpush1.bf16.msra.mxu0 %v3200
  %3243 = vmatprep.subr.bf16.mxu0 0
  %3244 = vmatpush1.bf16.msra.mxu0 0
  %3245 = vmatprep.subr.bf16.mxu0 0
  %3246 = vmatpush1.bf16.msra.mxu0 0
  %3247 = vmatprep.subr.bf16.mxu0 0
  %3248 = vmatpush1.bf16.msra.mxu0 0
  %3249 = vmatprep.subr.bf16.mxu0 0
  %3250 = vmatpush1.bf16.msra.mxu0 0
  %3251 = vmatprep.subr.bf16.mxu0 0
  %3252 = vmatpush1.bf16.msra.mxu0 0
  %3253 = vmatprep.subr.bf16.mxu0 0
  %3254 = vmatpush1.bf16.msra.mxu0 0
  %3255 = vmatprep.subr.bf16.mxu0 0
  %3256 = vmatpush1.bf16.msra.mxu0 0
  %3257 = vmatprep.subr.bf16.mxu0 0
  %3258 = vmatpush1.bf16.msra.mxu0 0
  %3259 = vmatprep.mubr.bf16.mxu0 0
  %3260 = vmatmul.mubr.bf16.gmra.mrb[0].mxu0 %v3066
  %v3261 = vpop.f32.mrb[0].mxu0
  %v3262 = vadd.f32 0.0, %v3261
  %v3263 = vpop.f32.mrb[0].mxu0
  %v3264 = vadd.f32 0.0, %v3263
  %v3265 = vpop.f32.mrb[0].mxu0
  %v3266 = vpop.f32.mrb[0].mxu0
  %3267 = vdwg.mxu0
  %3268 = vmatprep.subr.bf16.mxu0 0
  %3269 = vmatpush1.bf16.msra.mxu0 %v3181
  %3270 = vmatprep.subr.bf16.mxu0 0
  %3271 = vmatpush1.bf16.msra.mxu0 %v3184
  %3272 = vmatprep.subr.bf16.mxu0 0
  %3273 = vmatpush1.bf16.msra.mxu0 %v3187
  %3274 = vmatprep.subr.bf16.mxu0 0
  %3275 = vmatpush1.bf16.msra.mxu0 %v3190
  %3276 = vmatprep.subr.bf16.mxu0 0
  %3277 = vmatpush1.bf16.msra.mxu0 %v3193
  %3278 = vmatprep.subr.bf16.mxu0 0
  %3279 = vmatpush1.bf16.msra.mxu0 %v3196
  %3280 = vmatprep.subr.bf16.mxu0 0
  %3281 = vmatpush1.bf16.msra.mxu0 %v3199
  %3282 = vmatprep.subr.bf16.mxu0 0
  %3283 = vmatpush1.bf16.msra.mxu0 %v3202
  %3284 = vmatprep.subr.bf16.mxu0 0
  %3285 = vmatpush1.bf16.msra.mxu0 0
  %3286 = vmatprep.subr.bf16.mxu0 0
  %3287 = vmatpush1.bf16.msra.mxu0 0
  %3288 = vmatprep.subr.bf16.mxu0 0
  %3289 = vmatpush1.bf16.msra.mxu0 0
  %3290 = vmatprep.subr.bf16.mxu0 0
  %3291 = vmatpush1.bf16.msra.mxu0 0
  %3292 = vmatprep.subr.bf16.mxu0 0
  %3293 = vmatpush1.bf16.msra.mxu0 0
  %3294 = vmatprep.subr.bf16.mxu0 0
  %3295 = vmatpush1.bf16.msra.mxu0 0
  %3296 = vmatprep.subr.bf16.mxu0 0
  %3297 = vmatpush1.bf16.msra.mxu0 0
  %3298 = vmatprep.subr.bf16.mxu0 0
  %3299 = vmatpush1.bf16.msra.mxu0 0
  %3300 = vmatprep.mubr.bf16.mxu0 0
  %3301 = vmatmul.mubr.bf16.gmra.mrb[0].mxu0 %v3066
  %v3302 = vpop.f32.mrb[0].mxu0
  %v3303 = vadd.f32 0.0, %v3302
  %v3304 = vpop.f32.mrb[0].mxu0
  %v3305 = vpop.f32.mrb[0].mxu0
  %v3306 = vpop.f32.mrb[0].mxu0
  %3307 = vdwg.mxu0
  %v3308 = vadd.f32 %v3020, %v3262
  %v3309 = vxor.u32 %v3308, 2147483648
  %v3310 = vmul.f32 %v3309, 1.442695
  %v3311 = vpow.pop %v3310
  %v3312 = vadd.f32 %v3311, 1.0
  %v3313 = vrcp.pop %v3312
  %v3314 = vmul.f32 1.0, %v3313
  %v3315 = vadd.f32 %v3022, %v3264
  %v3316 = vxor.u32 %v3315, 2147483648
  %v3317 = vmul.f32 %v3316, 1.442695
  %v3318 = vpow.pop %v3317
  %v3319 = vadd.f32 %v3318, 1.0
  %v3320 = vrcp.pop %v3319
  %v3321 = vmul.f32 1.0, %v3320
  %v3322 = vadd.f32 %v3303, %v228
  %v3323 = vmul.f32 %v3314, %v3322
  %v3324 = vadd.f32 %v3061, %v3323
  %v3325 = vtanh.pop %v3324
  %v3326 = vsub.f32 1.0, %v3321
  %v3327 = vmul.f32 %v3326, %v3325
  %v3328 = vmul.f32 %v3321, %v2554
  %v3329 = vadd.f32 %v3327, %v3328
  %s3330 = scalar_lea.vmem [#allocation3], 24
  %3331 = vst [vmem:[%s3330] sm:$0xff] %v3329
  %s3332 = scalar_lea.vmem [#allocation2], 96
  %v3333 = vld [vmem:[%s3332] sm:$0xff]
  %v3334 = vld [vmem:[%s3332 + $0x8] sm:$0xff]
  %v3335 = vld [vmem:[%s3332 + $0x10] sm:$0xff]
  %v3336 = vld [vmem:[%s3] sm:$0xff]
  %v3337 = vld [vmem:[%s3 + $0x8] sm:$0xf]
  %v3338 = vld [vmem:[%s3 + $0xc] sm:$0xff]
  %v3339 = vld [vmem:[%s3 + $0x14] sm:$0xf]
  %v3340 = vld [vmem:[%s3 + $0x18] sm:$0xff]
  %v3341 = vld [vmem:[%s3 + $0x20] sm:$0xf]
  %v3342 = vld [vmem:[%s3 + $0x24] sm:$0xff]
  %v3343 = vld [vmem:[%s3 + $0x2c] sm:$0xf]
  %v3344 = vld [vmem:[%s3 + $0x30] sm:$0xff]
  %v3345 = vld [vmem:[%s3 + $0x38] sm:$0xf]
  %v3346 = vld [vmem:[%s3 + $0x3c] sm:$0xff]
  %v3347 = vld [vmem:[%s3 + $0x44] sm:$0xf]
  %v3348 = vld [vmem:[%s3 + $0x48] sm:$0xff]
  %v3349 = vld [vmem:[%s3 + $0x50] sm:$0xf]
  %v3350 = vld [vmem:[%s3 + $0x54] sm:$0xff]
  %v3351 = vld [vmem:[%s3 + $0x5c] sm:$0xf]
  %v3352 = vld [vmem:[%s3 + $0x60] sm:$0xff]
  %v3353 = vld [vmem:[%s3 + $0x68] sm:$0xf]
  %v3354 = vld [vmem:[%s3 + $0x6c] sm:$0xff]
  %v3355 = vld [vmem:[%s3 + $0x74] sm:$0xf]
  %v3356 = vld [vmem:[%s3 + $0x78] sm:$0xff]
  %v3357 = vld [vmem:[%s3 + $0x80] sm:$0xf]
  %v3358 = vld [vmem:[%s3 + $0x84] sm:$0xff]
  %v3359 = vld [vmem:[%s3 + $0x8c] sm:$0xf]
  %v3360 = vld [vmem:[%s3 + $0x90] sm:$0xff]
  %v3361 = vld [vmem:[%s3 + $0x98] sm:$0xf]
  %v3362 = vld [vmem:[%s3 + $0x9c] sm:$0xff]
  %v3363 = vld [vmem:[%s3 + $0xa4] sm:$0xf]
  %v3364 = vld [vmem:[%s3 + $0xa8] sm:$0xff]
  %v3365 = vld [vmem:[%s3 + $0xb0] sm:$0xf]
  %v3366 = vld [vmem:[%s3 + $0xb4] sm:$0xff]
  %v3367 = vld [vmem:[%s3 + $0xbc] sm:$0xf]
  %v3400 = vunpack.c.l.b16 %v3336
  %v3401 = vunpack.c.h.b16 %v3336
  %v3402 = vunpack.c.l.b16 %v3337
  %v3403 = vunpack.c.l.b16 %v3338
  %v3404 = vunpack.c.h.b16 %v3338
  %v3405 = vunpack.c.l.b16 %v3339
  %v3406 = vunpack.c.l.b16 %v3340
  %v3407 = vunpack.c.h.b16 %v3340
  %v3408 = vunpack.c.l.b16 %v3341
  %v3409 = vunpack.c.l.b16 %v3342
  %v3410 = vunpack.c.h.b16 %v3342
  %v3411 = vunpack.c.l.b16 %v3343
  %v3412 = vunpack.c.l.b16 %v3344
  %v3413 = vunpack.c.h.b16 %v3344
  %v3414 = vunpack.c.l.b16 %v3345
  %v3415 = vunpack.c.l.b16 %v3346
  %v3416 = vunpack.c.h.b16 %v3346
  %v3417 = vunpack.c.l.b16 %v3347
  %v3418 = vunpack.c.l.b16 %v3348
  %v3419 = vunpack.c.h.b16 %v3348
  %v3420 = vunpack.c.l.b16 %v3349
  %v3421 = vunpack.c.l.b16 %v3350
  %v3422 = vunpack.c.h.b16 %v3350
  %v3423 = vunpack.c.l.b16 %v3351
  %v3424 = vunpack.c.l.b16 %v3352
  %v3425 = vunpack.c.h.b16 %v3352
  %v3426 = vunpack.c.l.b16 %v3353
  %v3427 = vunpack.c.l.b16 %v3354
  %v3428 = vunpack.c.h.b16 %v3354
  %v3429 = vunpack.c.l.b16 %v3355
  %v3430 = vunpack.c.l.b16 %v3356
  %v3431 = vunpack.c.h.b16 %v3356
  %v3432 = vunpack.c.l.b16 %v3357
  %v3433 = vunpack.c.l.b16 %v3358
  %v3434 = vunpack.c.h.b16 %v3358
  %v3435 = vunpack.c.l.b16 %v3359
  %v3436 = vunpack.c.l.b16 %v3360
  %v3437 = vunpack.c.h.b16 %v3360
  %v3438 = vunpack.c.l.b16 %v3361
  %v3439 = vunpack.c.l.b16 %v3362
  %v3440 = vunpack.c.h.b16 %v3362
  %v3441 = vunpack.c.l.b16 %v3363
  %v3442 = vunpack.c.l.b16 %v3364
  %v3443 = vunpack.c.h.b16 %v3364
  %v3444 = vunpack.c.l.b16 %v3365
  %v3445 = vunpack.c.l.b16 %v3366
  %v3446 = vunpack.c.h.b16 %v3366
  %v3447 = vunpack.c.l.b16 %v3367
  %v3448 = vpack.c.b16 %v3403, %v3400
  %v3449 = vpack.c.b16 %v3404, %v3401
  %v3450 = vpack.c.b16 %v3405, %v3402
  %v3451 = vpack.c.b16 %v3409, %v3406
  %v3452 = vpack.c.b16 %v3410, %v3407
  %v3453 = vpack.c.b16 %v3411, %v3408
  %v3454 = vpack.c.b16 %v3415, %v3412
  %v3455 = vpack.c.b16 %v3416, %v3413
  %v3456 = vpack.c.b16 %v3417, %v3414
  %v3457 = vpack.c.b16 %v3421, %v3418
  %v3458 = vpack.c.b16 %v3422, %v3419
  %v3459 = vpack.c.b16 %v3423, %v3420
  %v3460 = vpack.c.b16 %v3427, %v3424
  %v3461 = vpack.c.b16 %v3428, %v3425
  %v3462 = vpack.c.b16 %v3429, %v3426
  %v3463 = vpack.c.b16 %v3433, %v3430
  %v3464 = vpack.c.b16 %v3434, %v3431
  %v3465 = vpack.c.b16 %v3435, %v3432
  %v3466 = vpack.c.b16 %v3439, %v3436
  %v3467 = vpack.c.b16 %v3440, %v3437
  %v3468 = vpack.c.b16 %v3441, %v3438
  %v3469 = vpack.c.b16 %v3445, %v3442
  %v3470 = vpack.c.b16 %v3446, %v3443
  %v3471 = vpack.c.b16 %v3447, %v3444
  %3496 = vmatprep.subr.bf16.mxu0 %v3449
  %3497 = vmatpush1.bf16.msra.mxu0 %v3448
  %3498 = vmatprep.subr.bf16.mxu0 %v3452
  %3499 = vmatpush1.bf16.msra.mxu0 %v3451
  %3500 = vmatprep.subr.bf16.mxu0 %v3455
  %3501 = vmatpush1.bf16.msra.mxu0 %v3454
  %3502 = vmatprep.subr.bf16.mxu0 %v3458
  %3503 = vmatpush1.bf16.msra.mxu0 %v3457
  %3504 = vmatprep.subr.bf16.mxu0 %v3461
  %3505 = vmatpush1.bf16.msra.mxu0 %v3460
  %3506 = vmatprep.subr.bf16.mxu0 %v3464
  %3507 = vmatpush1.bf16.msra.mxu0 %v3463
  %3508 = vmatprep.subr.bf16.mxu0 %v3467
  %3509 = vmatpush1.bf16.msra.mxu0 %v3466
  %3510 = vmatprep.subr.bf16.mxu0 %v3470
  %3511 = vmatpush1.bf16.msra.mxu0 %v3469
  %3512 = vmatprep.subr.bf16.mxu0 0
  %3513 = vmatpush1.bf16.msra.mxu0 0
  %3514 = vmatprep.subr.bf16.mxu0 0
  %3515 = vmatpush1.bf16.msra.mxu0 0
  %3516 = vmatprep.subr.bf16.mxu0 0
  %3517 = vmatpush1.bf16.msra.mxu0 0
  %3518 = vmatprep.subr.bf16.mxu0 0
  %3519 = vmatpush1.bf16.msra.mxu0 0
  %3520 = vmatprep.subr.bf16.mxu0 0
  %3521 = vmatpush1.bf16.msra.mxu0 0
  %3522 = vmatprep.subr.bf16.mxu0 0
  %3523 = vmatpush1.bf16.msra.mxu0 0
  %3524 = vmatprep.subr.bf16.mxu0 0
  %3525 = vmatpush1.bf16.msra.mxu0 0
  %3526 = vmatprep.subr.bf16.mxu0 0
  %3527 = vmatpush1.bf16.msra.mxu0 0
  %3528 = vmatprep.mubr.bf16.mxu0 0
  %3529 = vmatmul.mubr.bf16.gmra.mrb[0].mxu0 %v2824
  %v3530 = vpop.f32.mrb[0].mxu0
  %v3531 = vadd.f32 0.0, %v3530
  %v3532 = vpop.f32.mrb[0].mxu0
  %v3533 = vadd.f32 0.0, %v3532
  %v3534 = vpop.f32.mrb[0].mxu0
  %v3535 = vpop.f32.mrb[0].mxu0
  %3536 = vdwg.mxu0
  %3537 = vmatprep.subr.bf16.mxu0 0
  %3538 = vmatpush1.bf16.msra.mxu0 %v3450
  %3539 = vmatprep.subr.bf16.mxu0 0
  %3540 = vmatpush1.bf16.msra.mxu0 %v3453
  %3541 = vmatprep.subr.bf16.mxu0 0
  %3542 = vmatpush1.bf16.msra.mxu0 %v3456
  %3543 = vmatprep.subr.bf16.mxu0 0
  %3544 = vmatpush1.bf16.msra.mxu0 %v3459
  %3545 = vmatprep.subr.bf16.mxu0 0
  %3546 = vmatpush1.bf16.msra.mxu0 %v3462
  %3547 = vmatprep.subr.bf16.mxu0 0
  %3548 = vmatpush1.bf16.msra.mxu0 %v3465
  %3549 = vmatprep.subr.bf16.mxu0 0
  %3550 = vmatpush1.bf16.msra.mxu0 %v3468
  %3551 = vmatprep.subr.bf16.mxu0 0
  %3552 = vmatpush1.bf16.msra.mxu0 %v3471
  %3553 = vmatprep.subr.bf16.mxu0 0
  %3554 = vmatpush1.bf16.msra.mxu0 0
  %3555 = vmatprep.subr.bf16.mxu0 0
  %3556 = vmatpush1.bf16.msra.mxu0 0
  %3557 = vmatprep.subr.bf16.mxu0 0
  %3558 = vmatpush1.bf16.msra.mxu0 0
  %3559 = vmatprep.subr.bf16.mxu0 0
  %3560 = vmatpush1.bf16.msra.mxu0 0
  %3561 = vmatprep.subr.bf16.mxu0 0
  %3562 = vmatpush1.bf16.msra.mxu0 0
  %3563 = vmatprep.subr.bf16.mxu0 0
  %3564 = vmatpush1.bf16.msra.mxu0 0
  %3565 = vmatprep.subr.bf16.mxu0 0
  %3566 = vmatpush1.bf16.msra.mxu0 0
  %3567 = vmatprep.subr.bf16.mxu0 0
  %3568 = vmatpush1.bf16.msra.mxu0 0
  %3569 = vmatprep.mubr.bf16.mxu0 0
  %3570 = vmatmul.mubr.bf16.gmra.mrb[0].mxu0 %v2824
  %v3571 = vpop.f32.mrb[0].mxu0
  %v3572 = vadd.f32 0.0, %v3571
  %v3573 = vpop.f32.mrb[0].mxu0
  %v3574 = vpop.f32.mrb[0].mxu0
  %v3575 = vpop.f32.mrb[0].mxu0
  %3576 = vdwg.mxu0
  %v3577 = vadd.f32 %v3333, %v3531
  %v3578 = vxor.u32 %v3577, 2147483648
  %v3579 = vmul.f32 %v3578, 1.442695
  %v3580 = vpow.pop %v3579
  %v3581 = vadd.f32 %v3580, 1.0
  %v3582 = vrcp.pop %v3581
  %v3583 = vmul.f32 1.0, %v3582
  %v3584 = vadd.f32 %v3334, %v3533
  %v3585 = vxor.u32 %v3584, 2147483648
  %v3586 = vmul.f32 %v3585, 1.442695
  %v3587 = vpow.pop %v3586
  %v3588 = vadd.f32 %v3587, 1.0
  %v3589 = vrcp.pop %v3588
  %v3590 = vmul.f32 1.0, %v3589
  %v3591 = vadd.f32 %v3572, %v221
  %v3592 = vmul.f32 %v3583, %v3591
  %v3593 = vadd.f32 %v3335, %v3592
  %v3594 = vtanh.pop %v3593
  %v3595 = vsub.f32 1.0, %v3590
  %v3596 = vmul.f32 %v3595, %v3594
  %v3597 = vmul.f32 %v3590, %v2823
  %v3598 = vadd.f32 %v3596, %v3597
  %v3599 = vpack.c.bf16 %v3598, %v3598
  %v3600 = vld [vmem:[%s6] sm:$0xff]
  %v3601 = vld [vmem:[%s6 + $0x8] sm:$0xf]
  %v3602 = vld [vmem:[%s6 + $0xc] sm:$0xff]
  %v3603 = vld [vmem:[%s6 + $0x14] sm:$0xf]
  %v3604 = vld [vmem:[%s6 + $0x18] sm:$0xff]
  %v3605 = vld [vmem:[%s6 + $0x20] sm:$0xf]
  %v3606 = vld [vmem:[%s6 + $0x24] sm:$0xff]
  %v3607 = vld [vmem:[%s6 + $0x2c] sm:$0xf]
  %v3608 = vld [vmem:[%s6 + $0x30] sm:$0xff]
  %v3609 = vld [vmem:[%s6 + $0x38] sm:$0xf]
  %v3610 = vld [vmem:[%s6 + $0x3c] sm:$0xff]
  %v3611 = vld [vmem:[%s6 + $0x44] sm:$0xf]
  %v3612 = vld [vmem:[%s6 + $0x48] sm:$0xff]
  %v3613 = vld [vmem:[%s6 + $0x50] sm:$0xf]
  %v3614 = vld [vmem:[%s6 + $0x54] sm:$0xff]
  %v3615 = vld [vmem:[%s6 + $0x5c] sm:$0xf]
  %v3616 = vld [vmem:[%s6 + $0x60] sm:$0xff]
  %v3617 = vld [vmem:[%s6 + $0x68] sm:$0xf]
  %v3618 = vld [vmem:[%s6 + $0x6c] sm:$0xff]
  %v3619 = vld [vmem:[%s6 + $0x74] sm:$0xf]
  %v3620 = vld [vmem:[%s6 + $0x78] sm:$0xff]
  %v3621 = vld [vmem:[%s6 + $0x80] sm:$0xf]
  %v3622 = vld [vmem:[%s6 + $0x84] sm:$0xff]
  %v3623 = vld [vmem:[%s6 + $0x8c] sm:$0xf]
  %v3624 = vld [vmem:[%s6 + $0x90] sm:$0xff]
  %v3625 = vld [vmem:[%s6 + $0x98] sm:$0xf]
  %v3626 = vld [vmem:[%s6 + $0x9c] sm:$0xff]
  %v3627 = vld [vmem:[%s6 + $0xa4] sm:$0xf]
  %v3628 = vld [vmem:[%s6 + $0xa8] sm:$0xff]
  %v3629 = vld [vmem:[%s6 + $0xb0] sm:$0xf]
  %v3630 = vld [vmem:[%s6 + $0xb4] sm:$0xff]
  %v3631 = vld [vmem:[%s6 + $0xbc] sm:$0xf]
  %v3664 = vunpack.c.l.b16 %v3600
  %v3665 = vunpack.c.h.b16 %v3600
  %v3666 = vunpack.c.l.b16 %v3601
  %v3667 = vunpack.c.l.b16 %v3602
  %v3668 = vunpack.c.h.b16 %v3602
  %v3669 = vunpack.c.l.b16 %v3603
  %v3670 = vunpack.c.l.b16 %v3604
  %v3671 = vunpack.c.h.b16 %v3604
  %v3672 = vunpack.c.l.b16 %v3605
  %v3673 = vunpack.c.l.b16 %v3606
  %v3674 = vunpack.c.h.b16 %v3606
  %v3675 = vunpack.c.l.b16 %v3607
  %v3676 = vunpack.c.l.b16 %v3608
  %v3677 = vunpack.c.h.b16 %v3608
  %v3678 = vunpack.c.l.b16 %v3609
  %v3679 = vunpack.c.l.b16 %v3610
  %v3680 = vunpack.c.h.b16 %v3610
  %v3681 = vunpack.c.l.b16 %v3611
  %v3682 = vunpack.c.l.b16 %v3612
  %v3683 = vunpack.c.h.b16 %v3612
  %v3684 = vunpack.c.l.b16 %v3613
  %v3685 = vunpack.c.l.b16 %v3614
  %v3686 = vunpack.c.h.b16 %v3614
  %v3687 = vunpack.c.l.b16 %v3615
  %v3688 = vunpack.c.l.b16 %v3616
  %v3689 = vunpack.c.h.b16 %v3616
  %v3690 = vunpack.c.l.b16 %v3617
  %v3691 = vunpack.c.l.b16 %v3618
  %v3692 = vunpack.c.h.b16 %v3618
  %v3693 = vunpack.c.l.b16 %v3619
  %v3694 = vunpack.c.l.b16 %v3620
  %v3695 = vunpack.c.h.b16 %v3620
  %v3696 = vunpack.c.l.b16 %v3621
  %v3697 = vunpack.c.l.b16 %v3622
  %v3698 = vunpack.c.h.b16 %v3622
  %v3699 = vunpack.c.l.b16 %v3623
  %v3700 = vunpack.c.l.b16 %v3624
  %v3701 = vunpack.c.h.b16 %v3624
  %v3702 = vunpack.c.l.b16 %v3625
  %v3703 = vunpack.c.l.b16 %v3626
  %v3704 = vunpack.c.h.b16 %v3626
  %v3705 = vunpack.c.l.b16 %v3627
  %v3706 = vunpack.c.l.b16 %v3628
  %v3707 = vunpack.c.h.b16 %v3628
  %v3708 = vunpack.c.l.b16 %v3629
  %v3709 = vunpack.c.l.b16 %v3630
  %v3710 = vunpack.c.h.b16 %v3630
  %v3711 = vunpack.c.l.b16 %v3631
  %v3712 = vpack.c.b16 %v3667, %v3664
  %v3713 = vpack.c.b16 %v3668, %v3665
  %v3714 = vpack.c.b16 %v3669, %v3666
  %v3715 = vpack.c.b16 %v3673, %v3670
  %v3716 = vpack.c.b16 %v3674, %v3671
  %v3717 = vpack.c.b16 %v3675, %v3672
  %v3718 = vpack.c.b16 %v3679, %v3676
  %v3719 = vpack.c.b16 %v3680, %v3677
  %v3720 = vpack.c.b16 %v3681, %v3678
  %v3721 = vpack.c.b16 %v3685, %v3682
  %v3722 = vpack.c.b16 %v3686, %v3683
  %v3723 = vpack.c.b16 %v3687, %v3684
  %v3724 = vpack.c.b16 %v3691, %v3688
  %v3725 = vpack.c.b16 %v3692, %v3689
  %v3726 = vpack.c.b16 %v3693, %v3690
  %v3727 = vpack.c.b16 %v3697, %v3694
  %v3728 = vpack.c.b16 %v3698, %v3695
  %v3729 = vpack.c.b16 %v3699, %v3696
  %v3730 = vpack.c.b16 %v3703, %v3700
  %v3731 = vpack.c.b16 %v3704, %v3701
  %v3732 = vpack.c.b16 %v3705, %v3702
  %v3733 = vpack.c.b16 %v3709, %v3706
  %v3734 = vpack.c.b16 %v3710, %v3707
  %v3735 = vpack.c.b16 %v3711, %v3708
  %3760 = vmatprep.subr.bf16.mxu0 %v3713
  %3761 = vmatpush1.bf16.msra.mxu0 %v3712
  %3762 = vmatprep.subr.bf16.mxu0 %v3716
  %3763 = vmatpush1.bf16.msra.mxu0 %v3715
  %3764 = vmatprep.subr.bf16.mxu0 %v3719
  %3765 = vmatpush1.bf16.msra.mxu0 %v3718
  %3766 = vmatprep.subr.bf16.mxu0 %v3722
  %3767 = vmatpush1.bf16.msra.mxu0 %v3721
  %3768 = vmatprep.subr.bf16.mxu0 %v3725
  %3769 = vmatpush1.bf16.msra.mxu0 %v3724
  %3770 = vmatprep.subr.bf16.mxu0 %v3728
  %3771 = vmatpush1.bf16.msra.mxu0 %v3727
  %3772 = vmatprep.subr.bf16.mxu0 %v3731
  %3773 = vmatpush1.bf16.msra.mxu0 %v3730
  %3774 = vmatprep.subr.bf16.mxu0 %v3734
  %3775 = vmatpush1.bf16.msra.mxu0 %v3733
  %3776 = vmatprep.subr.bf16.mxu0 0
  %3777 = vmatpush1.bf16.msra.mxu0 0
  %3778 = vmatprep.subr.bf16.mxu0 0
  %3779 = vmatpush1.bf16.msra.mxu0 0
  %3780 = vmatprep.subr.bf16.mxu0 0
  %3781 = vmatpush1.bf16.msra.mxu0 0
  %3782 = vmatprep.subr.bf16.mxu0 0
  %3783 = vmatpush1.bf16.msra.mxu0 0
  %3784 = vmatprep.subr.bf16.mxu0 0
  %3785 = vmatpush1.bf16.msra.mxu0 0
  %3786 = vmatprep.subr.bf16.mxu0 0
  %3787 = vmatpush1.bf16.msra.mxu0 0
  %3788 = vmatprep.subr.bf16.mxu0 0
  %3789 = vmatpush1.bf16.msra.mxu0 0
  %3790 = vmatprep.subr.bf16.mxu0 0
  %3791 = vmatpush1.bf16.msra.mxu0 0
  %3792 = vmatprep.mubr.bf16.mxu0 0
  %3793 = vmatmul.mubr.bf16.gmra.mrb[0].mxu0 %v3599
  %v3794 = vpop.f32.mrb[0].mxu0
  %v3795 = vadd.f32 %v204, %v3794
  %v3796 = vpop.f32.mrb[0].mxu0
  %v3797 = vadd.f32 %v208, %v3796
  %v3798 = vpop.f32.mrb[0].mxu0
  %v3799 = vpop.f32.mrb[0].mxu0
  %3800 = vdwg.mxu0
  %3801 = vmatprep.subr.bf16.mxu0 0
  %3802 = vmatpush1.bf16.msra.mxu0 %v3714
  %3803 = vmatprep.subr.bf16.mxu0 0
  %3804 = vmatpush1.bf16.msra.mxu0 %v3717
  %3805 = vmatprep.subr.bf16.mxu0 0
  %3806 = vmatpush1.bf16.msra.mxu0 %v3720
  %3807 = vmatprep.subr.bf16.mxu0 0
  %3808 = vmatpush1.bf16.msra.mxu0 %v3723
  %3809 = vmatprep.subr.bf16.mxu0 0
  %3810 = vmatpush1.bf16.msra.mxu0 %v3726
  %3811 = vmatprep.subr.bf16.mxu0 0
  %3812 = vmatpush1.bf16.msra.mxu0 %v3729
  %3813 = vmatprep.subr.bf16.mxu0 0
  %3814 = vmatpush1.bf16.msra.mxu0 %v3732
  %3815 = vmatprep.subr.bf16.mxu0 0
  %3816 = vmatpush1.bf16.msra.mxu0 %v3735
  %3817 = vmatprep.subr.bf16.mxu0 0
  %3818 = vmatpush1.bf16.msra.mxu0 0
  %3819 = vmatprep.subr.bf16.mxu0 0
  %3820 = vmatpush1.bf16.msra.mxu0 0
  %3821 = vmatprep.subr.bf16.mxu0 0
  %3822 = vmatpush1.bf16.msra.mxu0 0
  %3823 = vmatprep.subr.bf16.mxu0 0
  %3824 = vmatpush1.bf16.msra.mxu0 0
  %3825 = vmatprep.subr.bf16.mxu0 0
  %3826 = vmatpush1.bf16.msra.mxu0 0
  %3827 = vmatprep.subr.bf16.mxu0 0
  %3828 = vmatpush1.bf16.msra.mxu0 0
  %3829 = vmatprep.subr.bf16.mxu0 0
  %3830 = vmatpush1.bf16.msra.mxu0 0
  %3831 = vmatprep.subr.bf16.mxu0 0
  %3832 = vmatpush1.bf16.msra.mxu0 0
  %3833 = vmatprep.mubr.bf16.mxu0 0
  %3834 = vmatmul.mubr.bf16.gmra.mrb[0].mxu0 %v3599
  %v3835 = vpop.f32.mrb[0].mxu0
  %v3836 = vadd.f32 %v212, %v3835
  %v3837 = vpop.f32.mrb[0].mxu0
  %v3838 = vpop.f32.mrb[0].mxu0
  %v3839 = vpop.f32.mrb[0].mxu0
  %3840 = vdwg.mxu0
  %v3841 = vpack.c.bf16 %v3329, %v3329
  %v3842 = vld [vmem:[%s7] sm:$0xff]
  %v3843 = vld [vmem:[%s7 + $0x8] sm:$0xf]
  %v3844 = vld [vmem:[%s7 + $0xc] sm:$0xff]
  %v3845 = vld [vmem:[%s7 + $0x14] sm:$0xf]
  %v3846 = vld [vmem:[%s7 + $0x18] sm:$0xff]
  %v3847 = vld [vmem:[%s7 + $0x20] sm:$0xf]
  %v3848 = vld [vmem:[%s7 + $0x24] sm:$0xff]
  %v3849 = vld [vmem:[%s7 + $0x2c] sm:$0xf]
  %v3850 = vld [vmem:[%s7 + $0x30] sm:$0xff]
  %v3851 = vld [vmem:[%s7 + $0x38] sm:$0xf]
  %v3852 = vld [vmem:[%s7 + $0x3c] sm:$0xff]
  %v3853 = vld [vmem:[%s7 + $0x44] sm:$0xf]
  %v3854 = vld [vmem:[%s7 + $0x48] sm:$0xff]
  %v3855 = vld [vmem:[%s7 + $0x50] sm:$0xf]
  %v3856 = vld [vmem:[%s7 + $0x54] sm:$0xff]
  %v3857 = vld [vmem:[%s7 + $0x5c] sm:$0xf]
  %v3858 = vld [vmem:[%s7 + $0x60] sm:$0xff]
  %v3859 = vld [vmem:[%s7 + $0x68] sm:$0xf]
  %v3860 = vld [vmem:[%s7 + $0x6c] sm:$0xff]
  %v3861 = vld [vmem:[%s7 + $0x74] sm:$0xf]
  %v3862 = vld [vmem:[%s7 + $0x78] sm:$0xff]
  %v3863 = vld [vmem:[%s7 + $0x80] sm:$0xf]
  %v3864 = vld [vmem:[%s7 + $0x84] sm:$0xff]
  %v3865 = vld [vmem:[%s7 + $0x8c] sm:$0xf]
  %v3866 = vld [vmem:[%s7 + $0x90] sm:$0xff]
  %v3867 = vld [vmem:[%s7 + $0x98] sm:$0xf]
  %v3868 = vld [vmem:[%s7 + $0x9c] sm:$0xff]
  %v3869 = vld [vmem:[%s7 + $0xa4] sm:$0xf]
  %v3870 = vld [vmem:[%s7 + $0xa8] sm:$0xff]
  %v3871 = vld [vmem:[%s7 + $0xb0] sm:$0xf]
  %v3872 = vld [vmem:[%s7 + $0xb4] sm:$0xff]
  %v3873 = vld [vmem:[%s7 + $0xbc] sm:$0xf]
  %v3906 = vunpack.c.l.b16 %v3842
  %v3907 = vunpack.c.h.b16 %v3842
  %v3908 = vunpack.c.l.b16 %v3843
  %v3909 = vunpack.c.l.b16 %v3844
  %v3910 = vunpack.c.h.b16 %v3844
  %v3911 = vunpack.c.l.b16 %v3845
  %v3912 = vunpack.c.l.b16 %v3846
  %v3913 = vunpack.c.h.b16 %v3846
  %v3914 = vunpack.c.l.b16 %v3847
  %v3915 = vunpack.c.l.b16 %v3848
  %v3916 = vunpack.c.h.b16 %v3848
  %v3917 = vunpack.c.l.b16 %v3849
  %v3918 = vunpack.c.l.b16 %v3850
  %v3919 = vunpack.c.h.b16 %v3850
  %v3920 = vunpack.c.l.b16 %v3851
  %v3921 = vunpack.c.l.b16 %v3852
  %v3922 = vunpack.c.h.b16 %v3852
  %v3923 = vunpack.c.l.b16 %v3853
  %v3924 = vunpack.c.l.b16 %v3854
  %v3925 = vunpack.c.h.b16 %v3854
  %v3926 = vunpack.c.l.b16 %v3855
  %v3927 = vunpack.c.l.b16 %v3856
  %v3928 = vunpack.c.h.b16 %v3856
  %v3929 = vunpack.c.l.b16 %v3857
  %v3930 = vunpack.c.l.b16 %v3858
  %v3931 = vunpack.c.h.b16 %v3858
  %v3932 = vunpack.c.l.b16 %v3859
  %v3933 = vunpack.c.l.b16 %v3860
  %v3934 = vunpack.c.h.b16 %v3860
  %v3935 = vunpack.c.l.b16 %v3861
  %v3936 = vunpack.c.l.b16 %v3862
  %v3937 = vunpack.c.h.b16 %v3862
  %v3938 = vunpack.c.l.b16 %v3863
  %v3939 = vunpack.c.l.b16 %v3864
  %v3940 = vunpack.c.h.b16 %v3864
  %v3941 = vunpack.c.l.b16 %v3865
  %v3942 = vunpack.c.l.b16 %v3866
  %v3943 = vunpack.c.h.b16 %v3866
  %v3944 = vunpack.c.l.b16 %v3867
  %v3945 = vunpack.c.l.b16 %v3868
  %v3946 = vunpack.c.h.b16 %v3868
  %v3947 = vunpack.c.l.b16 %v3869
  %v3948 = vunpack.c.l.b16 %v3870
  %v3949 = vunpack.c.h.b16 %v3870
  %v3950 = vunpack.c.l.b16 %v3871
  %v3951 = vunpack.c.l.b16 %v3872
  %v3952 = vunpack.c.h.b16 %v3872
  %v3953 = vunpack.c.l.b16 %v3873
  %v3954 = vpack.c.b16 %v3909, %v3906
  %v3955 = vpack.c.b16 %v3910, %v3907
  %v3956 = vpack.c.b16 %v3911, %v3908
  %v3957 = vpack.c.b16 %v3915, %v3912
  %v3958 = vpack.c.b16 %v3916, %v3913
  %v3959 = vpack.c.b16 %v3917, %v3914
  %v3960 = vpack.c.b16 %v3921, %v3918
  %v3961 = vpack.c.b16 %v3922, %v3919
  %v3962 = vpack.c.b16 %v3923, %v3920
  %v3963 = vpack.c.b16 %v3927, %v3924
  %v3964 = vpack.c.b16 %v3928, %v3925
  %v3965 = vpack.c.b16 %v3929, %v3926
  %v3966 = vpack.c.b16 %v3933, %v3930
  %v3967 = vpack.c.b16 %v3934, %v3931
  %v3968 = vpack.c.b16 %v3935, %v3932
  %v3969 = vpack.c.b16 %v3939, %v3936
  %v3970 = vpack.c.b16 %v3940, %v3937
  %v3971 = vpack.c.b16 %v3941, %v3938
  %v3972 = vpack.c.b16 %v3945, %v3942
  %v3973 = vpack.c.b16 %v3946, %v3943
  %v3974 = vpack.c.b16 %v3947, %v3944
  %v3975 = vpack.c.b16 %v3951, %v3948
  %v3976 = vpack.c.b16 %v3952, %v3949
  %v3977 = vpack.c.b16 %v3953, %v3950
  %4002 = vmatprep.subr.bf16.mxu0 %v3955
  %4003 = vmatpush1.bf16.msra.mxu0 %v3954
  %4004 = vmatprep.subr.bf16.mxu0 %v3958
  %4005 = vmatpush1.bf16.msra.mxu0 %v3957
  %4006 = vmatprep.subr.bf16.mxu0 %v3961
  %4007 = vmatpush1.bf16.msra.mxu0 %v3960
  %4008 = vmatprep.subr.bf16.mxu0 %v3964
  %4009 = vmatpush1.bf16.msra.mxu0 %v3963
  %4010 = vmatprep.subr.bf16.mxu0 %v3967
  %4011 = vmatpush1.bf16.msra.mxu0 %v3966
  %4012 = vmatprep.subr.bf16.mxu0 %v3970
  %4013 = vmatpush1.bf16.msra.mxu0 %v3969
  %4014 = vmatprep.subr.bf16.mxu0 %v3973
  %4015 = vmatpush1.bf16.msra.mxu0 %v3972
  %4016 = vmatprep.subr.bf16.mxu0 %v3976
  %4017 = vmatpush1.bf16.msra.mxu0 %v3975
  %4018 = vmatprep.subr.bf16.mxu0 0
  %4019 = vmatpush1.bf16.msra.mxu0 0
  %4020 = vmatprep.subr.bf16.mxu0 0
  %4021 = vmatpush1.bf16.msra.mxu0 0
  %4022 = vmatprep.subr.bf16.mxu0 0
  %4023 = vmatpush1.bf16.msra.mxu0 0
  %4024 = vmatprep.subr.bf16.mxu0 0
  %4025 = vmatpush1.bf16.msra.mxu0 0
  %4026 = vmatprep.subr.bf16.mxu0 0
  %4027 = vmatpush1.bf16.msra.mxu0 0
  %4028 = vmatprep.subr.bf16.mxu0 0
  %4029 = vmatpush1.bf16.msra.mxu0 0
  %4030 = vmatprep.subr.bf16.mxu0 0
  %4031 = vmatpush1.bf16.msra.mxu0 0
  %4032 = vmatprep.subr.bf16.mxu0 0
  %4033 = vmatpush1.bf16.msra.mxu0 0
  %4034 = vmatprep.mubr.bf16.mxu0 0
  %4035 = vmatmul.mubr.bf16.gmra.mrb[0].mxu0 %v3841
  %v4036 = vpop.f32.mrb[0].mxu0
  %v4037 = vadd.f32 0.0, %v4036
  %v4038 = vpop.f32.mrb[0].mxu0
  %v4039 = vadd.f32 0.0, %v4038
  %v4040 = vpop.f32.mrb[0].mxu0
  %v4041 = vpop.f32.mrb[0].mxu0
  %4042 = vdwg.mxu0
  %4043 = vmatprep.subr.bf16.mxu0 0
  %4044 = vmatpush1.bf16.msra.mxu0 %v3956
  %4045 = vmatprep.subr.bf16.mxu0 0
  %4046 = vmatpush1.bf16.msra.mxu0 %v3959
  %4047 = vmatprep.subr.bf16.mxu0 0
  %4048 = vmatpush1.bf16.msra.mxu0 %v3962
  %4049 = vmatprep.subr.bf16.mxu0 0
  %4050 = vmatpush1.bf16.msra.mxu0 %v3965
  %4051 = vmatprep.subr.bf16.mxu0 0
  %4052 = vmatpush1.bf16.msra.mxu0 %v3968
  %4053 = vmatprep.subr.bf16.mxu0 0
  %4054 = vmatpush1.bf16.msra.mxu0 %v3971
  %4055 = vmatprep.subr.bf16.mxu0 0
  %4056 = vmatpush1.bf16.msra.mxu0 %v3974
  %4057 = vmatprep.subr.bf16.mxu0 0
  %4058 = vmatpush1.bf16.msra.mxu0 %v3977
  %4059 = vmatprep.subr.bf16.mxu0 0
  %4060 = vmatpush1.bf16.msra.mxu0 0
  %4061 = vmatprep.subr.bf16.mxu0 0
  %4062 = vmatpush1.bf16.msra.mxu0 0
  %4063 = vmatprep.subr.bf16.mxu0 0
  %4064 = vmatpush1.bf16.msra.mxu0 0
  %4065 = vmatprep.subr.bf16.mxu0 0
  %4066 = vmatpush1.bf16.msra.mxu0 0
  %4067 = vmatprep.subr.bf16.mxu0 0
  %4068 = vmatpush1.bf16.msra.mxu0 0
  %4069 = vmatprep.subr.bf16.mxu0 0
  %4070 = vmatpush1.bf16.msra.mxu0 0
  %4071 = vmatprep.subr.bf16.mxu0 0
  %4072 = vmatpush1.bf16.msra.mxu0 0
  %4073 = vmatprep.subr.bf16.mxu0 0
  %4074 = vmatpush1.bf16.msra.mxu0 0
  %4075 = vmatprep.mubr.bf16.mxu0 0
  %4076 = vmatmul.mubr.bf16.gmra.mrb[0].mxu0 %v3841
  %v4077 = vpop.f32.mrb[0].mxu0
  %v4078 = vadd.f32 0.0, %v4077
  %v4079 = vpop.f32.mrb[0].mxu0
  %v4080 = vpop.f32.mrb[0].mxu0
  %v4081 = vpop.f32.mrb[0].mxu0
  %4082 = vdwg.mxu0
  %v4083 = vadd.f32 %v3795, %v4037
  %v4084 = vxor.u32 %v4083, 2147483648
  %v4085 = vmul.f32 %v4084, 1.442695
  %v4086 = vpow.pop %v4085
  %v4087 = vadd.f32 %v4086, 1.0
  %v4088 = vrcp.pop %v4087
  %v4089 = vmul.f32 1.0, %v4088
  %v4090 = vadd.f32 %v3797, %v4039
  %v4091 = vxor.u32 %v4090, 2147483648
  %v4092 = vmul.f32 %v4091, 1.442695
  %v4093 = vpow.pop %v4092
  %v4094 = vadd.f32 %v4093, 1.0
  %v4095 = vrcp.pop %v4094
  %v4096 = vmul.f32 1.0, %v4095
  %v4097 = vadd.f32 %v4078, %v228
  %v4098 = vmul.f32 %v4089, %v4097
  %v4099 = vadd.f32 %v3836, %v4098
  %v4100 = vtanh.pop %v4099
  %v4101 = vsub.f32 1.0, %v4096
  %v4102 = vmul.f32 %v4101, %v4100
  %v4103 = vmul.f32 %v4096, %v3329
  %v4104 = vadd.f32 %v4102, %v4103
  %s4105 = scalar_lea.vmem [#allocation3], 32
  %4106 = vst [vmem:[%s4105] sm:$0xff] %v4104
  %s4107 = scalar_lea.vmem [#allocation2], 120
  %v4108 = vld [vmem:[%s4107] sm:$0xff]
  %v4109 = vld [vmem:[%s4107 + $0x8] sm:$0xff]
  %v4110 = vld [vmem:[%s4107 + $0x10] sm:$0xff]
  %v4111 = vld [vmem:[%s3] sm:$0xff]
  %v4112 = vld [vmem:[%s3 + $0x8] sm:$0xf]
  %v4113 = vld [vmem:[%s3 + $0xc] sm:$0xff]
  %v4114 = vld [vmem:[%s3 + $0x14] sm:$0xf]
  %v4115 = vld [vmem:[%s3 + $0x18] sm:$0xff]
  %v4116 = vld [vmem:[%s3 + $0x20] sm:$0xf]
  %v4117 = vld [vmem:[%s3 + $0x24] sm:$0xff]
  %v4118 = vld [vmem:[%s3 + $0x2c] sm:$0xf]
  %v4119 = vld [vmem:[%s3 + $0x30] sm:$0xff]
  %v4120 = vld [vmem:[%s3 + $0x38] sm:$0xf]
  %v4121 = vld [vmem:[%s3 + $0x3c] sm:$0xff]
  %v4122 = vld [vmem:[%s3 + $0x44] sm:$0xf]
  %v4123 = vld [vmem:[%s3 + $0x48] sm:$0xff]
  %v4124 = vld [vmem:[%s3 + $0x50] sm:$0xf]
  %v4125 = vld [vmem:[%s3 + $0x54] sm:$0xff]
  %v4126 = vld [vmem:[%s3 + $0x5c] sm:$0xf]
  %v4127 = vld [vmem:[%s3 + $0x60] sm:$0xff]
  %v4128 = vld [vmem:[%s3 + $0x68] sm:$0xf]
  %v4129 = vld [vmem:[%s3 + $0x6c] sm:$0xff]
  %v4130 = vld [vmem:[%s3 + $0x74] sm:$0xf]
  %v4131 = vld [vmem:[%s3 + $0x78] sm:$0xff]
  %v4132 = vld [vmem:[%s3 + $0x80] sm:$0xf]
  %v4133 = vld [vmem:[%s3 + $0x84] sm:$0xff]
  %v4134 = vld [vmem:[%s3 + $0x8c] sm:$0xf]
  %v4135 = vld [vmem:[%s3 + $0x90] sm:$0xff]
  %v4136 = vld [vmem:[%s3 + $0x98] sm:$0xf]
  %v4137 = vld [vmem:[%s3 + $0x9c] sm:$0xff]
  %v4138 = vld [vmem:[%s3 + $0xa4] sm:$0xf]
  %v4139 = vld [vmem:[%s3 + $0xa8] sm:$0xff]
  %v4140 = vld [vmem:[%s3 + $0xb0] sm:$0xf]
  %v4141 = vld [vmem:[%s3 + $0xb4] sm:$0xff]
  %v4142 = vld [vmem:[%s3 + $0xbc] sm:$0xf]
  %v4175 = vunpack.c.l.b16 %v4111
  %v4176 = vunpack.c.h.b16 %v4111
  %v4177 = vunpack.c.l.b16 %v4112
  %v4178 = vunpack.c.l.b16 %v4113
  %v4179 = vunpack.c.h.b16 %v4113
  %v4180 = vunpack.c.l.b16 %v4114
  %v4181 = vunpack.c.l.b16 %v4115
  %v4182 = vunpack.c.h.b16 %v4115
  %v4183 = vunpack.c.l.b16 %v4116
  %v4184 = vunpack.c.l.b16 %v4117
  %v4185 = vunpack.c.h.b16 %v4117
  %v4186 = vunpack.c.l.b16 %v4118
  %v4187 = vunpack.c.l.b16 %v4119
  %v4188 = vunpack.c.h.b16 %v4119
  %v4189 = vunpack.c.l.b16 %v4120
  %v4190 = vunpack.c.l.b16 %v4121
  %v4191 = vunpack.c.h.b16 %v4121
  %v4192 = vunpack.c.l.b16 %v4122
  %v4193 = vunpack.c.l.b16 %v4123
  %v4194 = vunpack.c.h.b16 %v4123
  %v4195 = vunpack.c.l.b16 %v4124
  %v4196 = vunpack.c.l.b16 %v4125
  %v4197 = vunpack.c.h.b16 %v4125
  %v4198 = vunpack.c.l.b16 %v4126
  %v4199 = vunpack.c.l.b16 %v4127
  %v4200 = vunpack.c.h.b16 %v4127
  %v4201 = vunpack.c.l.b16 %v4128
  %v4202 = vunpack.c.l.b16 %v4129
  %v4203 = vunpack.c.h.b16 %v4129
  %v4204 = vunpack.c.l.b16 %v4130
  %v4205 = vunpack.c.l.b16 %v4131
  %v4206 = vunpack.c.h.b16 %v4131
  %v4207 = vunpack.c.l.b16 %v4132
  %v4208 = vunpack.c.l.b16 %v4133
  %v4209 = vunpack.c.h.b16 %v4133
  %v4210 = vunpack.c.l.b16 %v4134
  %v4211 = vunpack.c.l.b16 %v4135
  %v4212 = vunpack.c.h.b16 %v4135
  %v4213 = vunpack.c.l.b16 %v4136
  %v4214 = vunpack.c.l.b16 %v4137
  %v4215 = vunpack.c.h.b16 %v4137
  %v4216 = vunpack.c.l.b16 %v4138
  %v4217 = vunpack.c.l.b16 %v4139
  %v4218 = vunpack.c.h.b16 %v4139
  %v4219 = vunpack.c.l.b16 %v4140
  %v4220 = vunpack.c.l.b16 %v4141
  %v4221 = vunpack.c.h.b16 %v4141
  %v4222 = vunpack.c.l.b16 %v4142
  %v4223 = vpack.c.b16 %v4178, %v4175
  %v4224 = vpack.c.b16 %v4179, %v4176
  %v4225 = vpack.c.b16 %v4180, %v4177
  %v4226 = vpack.c.b16 %v4184, %v4181
  %v4227 = vpack.c.b16 %v4185, %v4182
  %v4228 = vpack.c.b16 %v4186, %v4183
  %v4229 = vpack.c.b16 %v4190, %v4187
  %v4230 = vpack.c.b16 %v4191, %v4188
  %v4231 = vpack.c.b16 %v4192, %v4189
  %v4232 = vpack.c.b16 %v4196, %v4193
  %v4233 = vpack.c.b16 %v4197, %v4194
  %v4234 = vpack.c.b16 %v4198, %v4195
  %v4235 = vpack.c.b16 %v4202, %v4199
  %v4236 = vpack.c.b16 %v4203, %v4200
  %v4237 = vpack.c.b16 %v4204, %v4201
  %v4238 = vpack.c.b16 %v4208, %v4205
  %v4239 = vpack.c.b16 %v4209, %v4206
  %v4240 = vpack.c.b16 %v4210, %v4207
  %v4241 = vpack.c.b16 %v4214, %v4211
  %v4242 = vpack.c.b16 %v4215, %v4212
  %v4243 = vpack.c.b16 %v4216, %v4213
  %v4244 = vpack.c.b16 %v4220, %v4217
  %v4245 = vpack.c.b16 %v4221, %v4218
  %v4246 = vpack.c.b16 %v4222, %v4219
  %4271 = vmatprep.subr.bf16.mxu0 %v4224
  %4272 = vmatpush1.bf16.msra.mxu0 %v4223
  %4273 = vmatprep.subr.bf16.mxu0 %v4227
  %4274 = vmatpush1.bf16.msra.mxu0 %v4226
  %4275 = vmatprep.subr.bf16.mxu0 %v4230
  %4276 = vmatpush1.bf16.msra.mxu0 %v4229
  %4277 = vmatprep.subr.bf16.mxu0 %v4233
  %4278 = vmatpush1.bf16.msra.mxu0 %v4232
  %4279 = vmatprep.subr.bf16.mxu0 %v4236
  %4280 = vmatpush1.bf16.msra.mxu0 %v4235
  %4281 = vmatprep.subr.bf16.mxu0 %v4239
  %4282 = vmatpush1.bf16.msra.mxu0 %v4238
  %4283 = vmatprep.subr.bf16.mxu0 %v4242
  %4284 = vmatpush1.bf16.msra.mxu0 %v4241
  %4285 = vmatprep.subr.bf16.mxu0 %v4245
  %4286 = vmatpush1.bf16.msra.mxu0 %v4244
  %4287 = vmatprep.subr.bf16.mxu0 0
  %4288 = vmatpush1.bf16.msra.mxu0 0
  %4289 = vmatprep.subr.bf16.mxu0 0
  %4290 = vmatpush1.bf16.msra.mxu0 0
  %4291 = vmatprep.subr.bf16.mxu0 0
  %4292 = vmatpush1.bf16.msra.mxu0 0
  %4293 = vmatprep.subr.bf16.mxu0 0
  %4294 = vmatpush1.bf16.msra.mxu0 0
  %4295 = vmatprep.subr.bf16.mxu0 0
  %4296 = vmatpush1.bf16.msra.mxu0 0
  %4297 = vmatprep.subr.bf16.mxu0 0
  %4298 = vmatpush1.bf16.msra.mxu0 0
  %4299 = vmatprep.subr.bf16.mxu0 0
  %4300 = vmatpush1.bf16.msra.mxu0 0
  %4301 = vmatprep.subr.bf16.mxu0 0
  %4302 = vmatpush1.bf16.msra.mxu0 0
  %4303 = vmatprep.mubr.bf16.mxu0 0
  %4304 = vmatmul.mubr.bf16.gmra.mrb[0].mxu0 %v3599
  %v4305 = vpop.f32.mrb[0].mxu0
  %v4306 = vadd.f32 0.0, %v4305
  %v4307 = vpop.f32.mrb[0].mxu0
  %v4308 = vadd.f32 0.0, %v4307
  %v4309 = vpop.f32.mrb[0].mxu0
  %v4310 = vpop.f32.mrb[0].mxu0
  %4311 = vdwg.mxu0
  %4312 = vmatprep.subr.bf16.mxu0 0
  %4313 = vmatpush1.bf16.msra.mxu0 %v4225
  %4314 = vmatprep.subr.bf16.mxu0 0
  %4315 = vmatpush1.bf16.msra.mxu0 %v4228
  %4316 = vmatprep.subr.bf16.mxu0 0
  %4317 = vmatpush1.bf16.msra.mxu0 %v4231
  %4318 = vmatprep.subr.bf16.mxu0 0
  %4319 = vmatpush1.bf16.msra.mxu0 %v4234
  %4320 = vmatprep.subr.bf16.mxu0 0
  %4321 = vmatpush1.bf16.msra.mxu0 %v4237
  %4322 = vmatprep.subr.bf16.mxu0 0
  %4323 = vmatpush1.bf16.msra.mxu0 %v4240
  %4324 = vmatprep.subr.bf16.mxu0 0
  %4325 = vmatpush1.bf16.msra.mxu0 %v4243
  %4326 = vmatprep.subr.bf16.mxu0 0
  %4327 = vmatpush1.bf16.msra.mxu0 %v4246
  %4328 = vmatprep.subr.bf16.mxu0 0
  %4329 = vmatpush1.bf16.msra.mxu0 0
  %4330 = vmatprep.subr.bf16.mxu0 0
  %4331 = vmatpush1.bf16.msra.mxu0 0
  %4332 = vmatprep.subr.bf16.mxu0 0
  %4333 = vmatpush1.bf16.msra.mxu0 0
  %4334 = vmatprep.subr.bf16.mxu0 0
  %4335 = vmatpush1.bf16.msra.mxu0 0
  %4336 = vmatprep.subr.bf16.mxu0 0
  %4337 = vmatpush1.bf16.msra.mxu0 0
  %4338 = vmatprep.subr.bf16.mxu0 0
  %4339 = vmatpush1.bf16.msra.mxu0 0
  %4340 = vmatprep.subr.bf16.mxu0 0
  %4341 = vmatpush1.bf16.msra.mxu0 0
  %4342 = vmatprep.subr.bf16.mxu0 0
  %4343 = vmatpush1.bf16.msra.mxu0 0
  %4344 = vmatprep.mubr.bf16.mxu0 0
  %4345 = vmatmul.mubr.bf16.gmra.mrb[0].mxu0 %v3599
  %v4346 = vpop.f32.mrb[0].mxu0
  %v4347 = vadd.f32 0.0, %v4346
  %v4348 = vpop.f32.mrb[0].mxu0
  %v4349 = vpop.f32.mrb[0].mxu0
  %v4350 = vpop.f32.mrb[0].mxu0
  %4351 = vdwg.mxu0
  %v4352 = vadd.f32 %v4108, %v4306
  %v4353 = vxor.u32 %v4352, 2147483648
  %v4354 = vmul.f32 %v4353, 1.442695
  %v4355 = vpow.pop %v4354
  %v4356 = vadd.f32 %v4355, 1.0
  %v4357 = vrcp.pop %v4356
  %v4358 = vmul.f32 1.0, %v4357
  %v4359 = vadd.f32 %v4109, %v4308
  %v4360 = vxor.u32 %v4359, 2147483648
  %v4361 = vmul.f32 %v4360, 1.442695
  %v4362 = vpow.pop %v4361
  %v4363 = vadd.f32 %v4362, 1.0
  %v4364 = vrcp.pop %v4363
  %v4365 = vmul.f32 1.0, %v4364
  %v4366 = vadd.f32 %v4347, %v221
  %v4367 = vmul.f32 %v4358, %v4366
  %v4368 = vadd.f32 %v4110, %v4367
  %v4369 = vtanh.pop %v4368
  %v4370 = vsub.f32 1.0, %v4365
  %v4371 = vmul.f32 %v4370, %v4369
  %v4372 = vmul.f32 %v4365, %v3598
  %v4373 = vadd.f32 %v4371, %v4372
  %v4374 = vpack.c.bf16 %v4373, %v4373
  %v4375 = vld [vmem:[%s6] sm:$0xff]
  %v4376 = vld [vmem:[%s6 + $0x8] sm:$0xf]
  %v4377 = vld [vmem:[%s6 + $0xc] sm:$0xff]
  %v4378 = vld [vmem:[%s6 + $0x14] sm:$0xf]
  %v4379 = vld [vmem:[%s6 + $0x18] sm:$0xff]
  %v4380 = vld [vmem:[%s6 + $0x20] sm:$0xf]
  %v4381 = vld [vmem:[%s6 + $0x24] sm:$0xff]
  %v4382 = vld [vmem:[%s6 + $0x2c] sm:$0xf]
  %v4383 = vld [vmem:[%s6 + $0x30] sm:$0xff]
  %v4384 = vld [vmem:[%s6 + $0x38] sm:$0xf]
  %v4385 = vld [vmem:[%s6 + $0x3c] sm:$0xff]
  %v4386 = vld [vmem:[%s6 + $0x44] sm:$0xf]
  %v4387 = vld [vmem:[%s6 + $0x48] sm:$0xff]
  %v4388 = vld [vmem:[%s6 + $0x50] sm:$0xf]
  %v4389 = vld [vmem:[%s6 + $0x54] sm:$0xff]
  %v4390 = vld [vmem:[%s6 + $0x5c] sm:$0xf]
  %v4391 = vld [vmem:[%s6 + $0x60] sm:$0xff]
  %v4392 = vld [vmem:[%s6 + $0x68] sm:$0xf]
  %v4393 = vld [vmem:[%s6 + $0x6c] sm:$0xff]
  %v4394 = vld [vmem:[%s6 + $0x74] sm:$0xf]
  %v4395 = vld [vmem:[%s6 + $0x78] sm:$0xff]
  %v4396 = vld [vmem:[%s6 + $0x80] sm:$0xf]
  %v4397 = vld [vmem:[%s6 + $0x84] sm:$0xff]
  %v4398 = vld [vmem:[%s6 + $0x8c] sm:$0xf]
  %v4399 = vld [vmem:[%s6 + $0x90] sm:$0xff]
  %v4400 = vld [vmem:[%s6 + $0x98] sm:$0xf]
  %v4401 = vld [vmem:[%s6 + $0x9c] sm:$0xff]
  %v4402 = vld [vmem:[%s6 + $0xa4] sm:$0xf]
  %v4403 = vld [vmem:[%s6 + $0xa8] sm:$0xff]
  %v4404 = vld [vmem:[%s6 + $0xb0] sm:$0xf]
  %v4405 = vld [vmem:[%s6 + $0xb4] sm:$0xff]
  %v4406 = vld [vmem:[%s6 + $0xbc] sm:$0xf]
  %v4439 = vunpack.c.l.b16 %v4375
  %v4440 = vunpack.c.h.b16 %v4375
  %v4441 = vunpack.c.l.b16 %v4376
  %v4442 = vunpack.c.l.b16 %v4377
  %v4443 = vunpack.c.h.b16 %v4377
  %v4444 = vunpack.c.l.b16 %v4378
  %v4445 = vunpack.c.l.b16 %v4379
  %v4446 = vunpack.c.h.b16 %v4379
  %v4447 = vunpack.c.l.b16 %v4380
  %v4448 = vunpack.c.l.b16 %v4381
  %v4449 = vunpack.c.h.b16 %v4381
  %v4450 = vunpack.c.l.b16 %v4382
  %v4451 = vunpack.c.l.b16 %v4383
  %v4452 = vunpack.c.h.b16 %v4383
  %v4453 = vunpack.c.l.b16 %v4384
  %v4454 = vunpack.c.l.b16 %v4385
  %v4455 = vunpack.c.h.b16 %v4385
  %v4456 = vunpack.c.l.b16 %v4386
  %v4457 = vunpack.c.l.b16 %v4387
  %v4458 = vunpack.c.h.b16 %v4387
  %v4459 = vunpack.c.l.b16 %v4388
  %v4460 = vunpack.c.l.b16 %v4389
  %v4461 = vunpack.c.h.b16 %v4389
  %v4462 = vunpack.c.l.b16 %v4390
  %v4463 = vunpack.c.l.b16 %v4391
  %v4464 = vunpack.c.h.b16 %v4391
  %v4465 = vunpack.c.l.b16 %v4392
  %v4466 = vunpack.c.l.b16 %v4393
  %v4467 = vunpack.c.h.b16 %v4393
  %v4468 = vunpack.c.l.b16 %v4394
  %v4469 = vunpack.c.l.b16 %v4395
  %v4470 = vunpack.c.h.b16 %v4395
  %v4471 = vunpack.c.l.b16 %v4396
  %v4472 = vunpack.c.l.b16 %v4397
  %v4473 = vunpack.c.h.b16 %v4397
  %v4474 = vunpack.c.l.b16 %v4398
  %v4475 = vunpack.c.l.b16 %v4399
  %v4476 = vunpack.c.h.b16 %v4399
  %v4477 = vunpack.c.l.b16 %v4400
  %v4478 = vunpack.c.l.b16 %v4401
  %v4479 = vunpack.c.h.b16 %v4401
  %v4480 = vunpack.c.l.b16 %v4402
  %v4481 = vunpack.c.l.b16 %v4403
  %v4482 = vunpack.c.h.b16 %v4403
  %v4483 = vunpack.c.l.b16 %v4404
  %v4484 = vunpack.c.l.b16 %v4405
  %v4485 = vunpack.c.h.b16 %v4405
  %v4486 = vunpack.c.l.b16 %v4406
  %v4487 = vpack.c.b16 %v4442, %v4439
  %v4488 = vpack.c.b16 %v4443, %v4440
  %v4489 = vpack.c.b16 %v4444, %v4441
  %v4490 = vpack.c.b16 %v4448, %v4445
  %v4491 = vpack.c.b16 %v4449, %v4446
  %v4492 = vpack.c.b16 %v4450, %v4447
  %v4493 = vpack.c.b16 %v4454, %v4451
  %v4494 = vpack.c.b16 %v4455, %v4452
  %v4495 = vpack.c.b16 %v4456, %v4453
  %v4496 = vpack.c.b16 %v4460, %v4457
  %v4497 = vpack.c.b16 %v4461, %v4458
  %v4498 = vpack.c.b16 %v4462, %v4459
  %v4499 = vpack.c.b16 %v4466, %v4463
  %v4500 = vpack.c.b16 %v4467, %v4464
  %v4501 = vpack.c.b16 %v4468, %v4465
  %v4502 = vpack.c.b16 %v4472, %v4469
  %v4503 = vpack.c.b16 %v4473, %v4470
  %v4504 = vpack.c.b16 %v4474, %v4471
  %v4505 = vpack.c.b16 %v4478, %v4475
  %v4506 = vpack.c.b16 %v4479, %v4476
  %v4507 = vpack.c.b16 %v4480, %v4477
  %v4508 = vpack.c.b16 %v4484, %v4481
  %v4509 = vpack.c.b16 %v4485, %v4482
  %v4510 = vpack.c.b16 %v4486, %v4483
  %4535 = vmatprep.subr.bf16.mxu0 %v4488
  %4536 = vmatpush1.bf16.msra.mxu0 %v4487
  %4537 = vmatprep.subr.bf16.mxu0 %v4491
  %4538 = vmatpush1.bf16.msra.mxu0 %v4490
  %4539 = vmatprep.subr.bf16.mxu0 %v4494
  %4540 = vmatpush1.bf16.msra.mxu0 %v4493
  %4541 = vmatprep.subr.bf16.mxu0 %v4497
  %4542 = vmatpush1.bf16.msra.mxu0 %v4496
  %4543 = vmatprep.subr.bf16.mxu0 %v4500
  %4544 = vmatpush1.bf16.msra.mxu0 %v4499
  %4545 = vmatprep.subr.bf16.mxu0 %v4503
  %4546 = vmatpush1.bf16.msra.mxu0 %v4502
  %4547 = vmatprep.subr.bf16.mxu0 %v4506
  %4548 = vmatpush1.bf16.msra.mxu0 %v4505
  %4549 = vmatprep.subr.bf16.mxu0 %v4509
  %4550 = vmatpush1.bf16.msra.mxu0 %v4508
  %4551 = vmatprep.subr.bf16.mxu0 0
  %4552 = vmatpush1.bf16.msra.mxu0 0
  %4553 = vmatprep.subr.bf16.mxu0 0
  %4554 = vmatpush1.bf16.msra.mxu0 0
  %4555 = vmatprep.subr.bf16.mxu0 0
  %4556 = vmatpush1.bf16.msra.mxu0 0
  %4557 = vmatprep.subr.bf16.mxu0 0
  %4558 = vmatpush1.bf16.msra.mxu0 0
  %4559 = vmatprep.subr.bf16.mxu0 0
  %4560 = vmatpush1.bf16.msra.mxu0 0
  %4561 = vmatprep.subr.bf16.mxu0 0
  %4562 = vmatpush1.bf16.msra.mxu0 0
  %4563 = vmatprep.subr.bf16.mxu0 0
  %4564 = vmatpush1.bf16.msra.mxu0 0
  %4565 = vmatprep.subr.bf16.mxu0 0
  %4566 = vmatpush1.bf16.msra.mxu0 0
  %4567 = vmatprep.mubr.bf16.mxu0 0
  %4568 = vmatmul.mubr.bf16.gmra.mrb[0].mxu0 %v4374
  %v4569 = vpop.f32.mrb[0].mxu0
  %v4570 = vadd.f32 %v204, %v4569
  %v4571 = vpop.f32.mrb[0].mxu0
  %v4572 = vadd.f32 %v208, %v4571
  %v4573 = vpop.f32.mrb[0].mxu0
  %v4574 = vpop.f32.mrb[0].mxu0
  %4575 = vdwg.mxu0
  %4576 = vmatprep.subr.bf16.mxu0 0
  %4577 = vmatpush1.bf16.msra.mxu0 %v4489
  %4578 = vmatprep.subr.bf16.mxu0 0
  %4579 = vmatpush1.bf16.msra.mxu0 %v4492
  %4580 = vmatprep.subr.bf16.mxu0 0
  %4581 = vmatpush1.bf16.msra.mxu0 %v4495
  %4582 = vmatprep.subr.bf16.mxu0 0
  %4583 = vmatpush1.bf16.msra.mxu0 %v4498
  %4584 = vmatprep.subr.bf16.mxu0 0
  %4585 = vmatpush1.bf16.msra.mxu0 %v4501
  %4586 = vmatprep.subr.bf16.mxu0 0
  %4587 = vmatpush1.bf16.msra.mxu0 %v4504
  %4588 = vmatprep.subr.bf16.mxu0 0
  %4589 = vmatpush1.bf16.msra.mxu0 %v4507
  %4590 = vmatprep.subr.bf16.mxu0 0
  %4591 = vmatpush1.bf16.msra.mxu0 %v4510
  %4592 = vmatprep.subr.bf16.mxu0 0
  %4593 = vmatpush1.bf16.msra.mxu0 0
  %4594 = vmatprep.subr.bf16.mxu0 0
  %4595 = vmatpush1.bf16.msra.mxu0 0
  %4596 = vmatprep.subr.bf16.mxu0 0
  %4597 = vmatpush1.bf16.msra.mxu0 0
  %4598 = vmatprep.subr.bf16.mxu0 0
  %4599 = vmatpush1.bf16.msra.mxu0 0
  %4600 = vmatprep.subr.bf16.mxu0 0
  %4601 = vmatpush1.bf16.msra.mxu0 0
  %4602 = vmatprep.subr.bf16.mxu0 0
  %4603 = vmatpush1.bf16.msra.mxu0 0
  %4604 = vmatprep.subr.bf16.mxu0 0
  %4605 = vmatpush1.bf16.msra.mxu0 0
  %4606 = vmatprep.subr.bf16.mxu0 0
  %4607 = vmatpush1.bf16.msra.mxu0 0
  %4608 = vmatprep.mubr.bf16.mxu0 0
  %4609 = vmatmul.mubr.bf16.gmra.mrb[0].mxu0 %v4374
  %v4610 = vpop.f32.mrb[0].mxu0
  %v4611 = vadd.f32 %v212, %v4610
  %v4612 = vpop.f32.mrb[0].mxu0
  %v4613 = vpop.f32.mrb[0].mxu0
  %v4614 = vpop.f32.mrb[0].mxu0
  %4615 = vdwg.mxu0
  %v4616 = vpack.c.bf16 %v4104, %v4104
  %v4617 = vld [vmem:[%s7] sm:$0xff]
  %v4618 = vld [vmem:[%s7 + $0x8] sm:$0xf]
  %v4619 = vld [vmem:[%s7 + $0xc] sm:$0xff]
  %v4620 = vld [vmem:[%s7 + $0x14] sm:$0xf]
  %v4621 = vld [vmem:[%s7 + $0x18] sm:$0xff]
  %v4622 = vld [vmem:[%s7 + $0x20] sm:$0xf]
  %v4623 = vld [vmem:[%s7 + $0x24] sm:$0xff]
  %v4624 = vld [vmem:[%s7 + $0x2c] sm:$0xf]
  %v4625 = vld [vmem:[%s7 + $0x30] sm:$0xff]
  %v4626 = vld [vmem:[%s7 + $0x38] sm:$0xf]
  %v4627 = vld [vmem:[%s7 + $0x3c] sm:$0xff]
  %v4628 = vld [vmem:[%s7 + $0x44] sm:$0xf]
  %v4629 = vld [vmem:[%s7 + $0x48] sm:$0xff]
  %v4630 = vld [vmem:[%s7 + $0x50] sm:$0xf]
  %v4631 = vld [vmem:[%s7 + $0x54] sm:$0xff]
  %v4632 = vld [vmem:[%s7 + $0x5c] sm:$0xf]
  %v4633 = vld [vmem:[%s7 + $0x60] sm:$0xff]
  %v4634 = vld [vmem:[%s7 + $0x68] sm:$0xf]
  %v4635 = vld [vmem:[%s7 + $0x6c] sm:$0xff]
  %v4636 = vld [vmem:[%s7 + $0x74] sm:$0xf]
  %v4637 = vld [vmem:[%s7 + $0x78] sm:$0xff]
  %v4638 = vld [vmem:[%s7 + $0x80] sm:$0xf]
  %v4639 = vld [vmem:[%s7 + $0x84] sm:$0xff]
  %v4640 = vld [vmem:[%s7 + $0x8c] sm:$0xf]
  %v4641 = vld [vmem:[%s7 + $0x90] sm:$0xff]
  %v4642 = vld [vmem:[%s7 + $0x98] sm:$0xf]
  %v4643 = vld [vmem:[%s7 + $0x9c] sm:$0xff]
  %v4644 = vld [vmem:[%s7 + $0xa4] sm:$0xf]
  %v4645 = vld [vmem:[%s7 + $0xa8] sm:$0xff]
  %v4646 = vld [vmem:[%s7 + $0xb0] sm:$0xf]
  %v4647 = vld [vmem:[%s7 + $0xb4] sm:$0xff]
  %v4648 = vld [vmem:[%s7 + $0xbc] sm:$0xf]
  %v4681 = vunpack.c.l.b16 %v4617
  %v4682 = vunpack.c.h.b16 %v4617
  %v4683 = vunpack.c.l.b16 %v4618
  %v4684 = vunpack.c.l.b16 %v4619
  %v4685 = vunpack.c.h.b16 %v4619
  %v4686 = vunpack.c.l.b16 %v4620
  %v4687 = vunpack.c.l.b16 %v4621
  %v4688 = vunpack.c.h.b16 %v4621
  %v4689 = vunpack.c.l.b16 %v4622
  %v4690 = vunpack.c.l.b16 %v4623
  %v4691 = vunpack.c.h.b16 %v4623
  %v4692 = vunpack.c.l.b16 %v4624
  %v4693 = vunpack.c.l.b16 %v4625
  %v4694 = vunpack.c.h.b16 %v4625
  %v4695 = vunpack.c.l.b16 %v4626
  %v4696 = vunpack.c.l.b16 %v4627
  %v4697 = vunpack.c.h.b16 %v4627
  %v4698 = vunpack.c.l.b16 %v4628
  %v4699 = vunpack.c.l.b16 %v4629
  %v4700 = vunpack.c.h.b16 %v4629
  %v4701 = vunpack.c.l.b16 %v4630
  %v4702 = vunpack.c.l.b16 %v4631
  %v4703 = vunpack.c.h.b16 %v4631
  %v4704 = vunpack.c.l.b16 %v4632
  %v4705 = vunpack.c.l.b16 %v4633
  %v4706 = vunpack.c.h.b16 %v4633
  %v4707 = vunpack.c.l.b16 %v4634
  %v4708 = vunpack.c.l.b16 %v4635
  %v4709 = vunpack.c.h.b16 %v4635
  %v4710 = vunpack.c.l.b16 %v4636
  %v4711 = vunpack.c.l.b16 %v4637
  %v4712 = vunpack.c.h.b16 %v4637
  %v4713 = vunpack.c.l.b16 %v4638
  %v4714 = vunpack.c.l.b16 %v4639
  %v4715 = vunpack.c.h.b16 %v4639
  %v4716 = vunpack.c.l.b16 %v4640
  %v4717 = vunpack.c.l.b16 %v4641
  %v4718 = vunpack.c.h.b16 %v4641
  %v4719 = vunpack.c.l.b16 %v4642
  %v4720 = vunpack.c.l.b16 %v4643
  %v4721 = vunpack.c.h.b16 %v4643
  %v4722 = vunpack.c.l.b16 %v4644
  %v4723 = vunpack.c.l.b16 %v4645
  %v4724 = vunpack.c.h.b16 %v4645
  %v4725 = vunpack.c.l.b16 %v4646
  %v4726 = vunpack.c.l.b16 %v4647
  %v4727 = vunpack.c.h.b16 %v4647
  %v4728 = vunpack.c.l.b16 %v4648
  %v4729 = vpack.c.b16 %v4684, %v4681
  %v4730 = vpack.c.b16 %v4685, %v4682
  %v4731 = vpack.c.b16 %v4686, %v4683
  %v4732 = vpack.c.b16 %v4690, %v4687
  %v4733 = vpack.c.b16 %v4691, %v4688
  %v4734 = vpack.c.b16 %v4692, %v4689
  %v4735 = vpack.c.b16 %v4696, %v4693
  %v4736 = vpack.c.b16 %v4697, %v4694
  %v4737 = vpack.c.b16 %v4698, %v4695
  %v4738 = vpack.c.b16 %v4702, %v4699
  %v4739 = vpack.c.b16 %v4703, %v4700
  %v4740 = vpack.c.b16 %v4704, %v4701
  %v4741 = vpack.c.b16 %v4708, %v4705
  %v4742 = vpack.c.b16 %v4709, %v4706
  %v4743 = vpack.c.b16 %v4710, %v4707
  %v4744 = vpack.c.b16 %v4714, %v4711
  %v4745 = vpack.c.b16 %v4715, %v4712
  %v4746 = vpack.c.b16 %v4716, %v4713
  %v4747 = vpack.c.b16 %v4720, %v4717
  %v4748 = vpack.c.b16 %v4721, %v4718
  %v4749 = vpack.c.b16 %v4722, %v4719
  %v4750 = vpack.c.b16 %v4726, %v4723
  %v4751 = vpack.c.b16 %v4727, %v4724
  %v4752 = vpack.c.b16 %v4728, %v4725
  %4777 = vmatprep.subr.bf16.mxu0 %v4730
  %4778 = vmatpush1.bf16.msra.mxu0 %v4729
  %4779 = vmatprep.subr.bf16.mxu0 %v4733
  %4780 = vmatpush1.bf16.msra.mxu0 %v4732
  %4781 = vmatprep.subr.bf16.mxu0 %v4736
  %4782 = vmatpush1.bf16.msra.mxu0 %v4735
  %4783 = vmatprep.subr.bf16.mxu0 %v4739
  %4784 = vmatpush1.bf16.msra.mxu0 %v4738
  %4785 = vmatprep.subr.bf16.mxu0 %v4742
  %4786 = vmatpush1.bf16.msra.mxu0 %v4741
  %4787 = vmatprep.subr.bf16.mxu0 %v4745
  %4788 = vmatpush1.bf16.msra.mxu0 %v4744
  %4789 = vmatprep.subr.bf16.mxu0 %v4748
  %4790 = vmatpush1.bf16.msra.mxu0 %v4747
  %4791 = vmatprep.subr.bf16.mxu0 %v4751
  %4792 = vmatpush1.bf16.msra.mxu0 %v4750
  %4793 = vmatprep.subr.bf16.mxu0 0
  %4794 = vmatpush1.bf16.msra.mxu0 0
  %4795 = vmatprep.subr.bf16.mxu0 0
  %4796 = vmatpush1.bf16.msra.mxu0 0
  %4797 = vmatprep.subr.bf16.mxu0 0
  %4798 = vmatpush1.bf16.msra.mxu0 0
  %4799 = vmatprep.subr.bf16.mxu0 0
  %4800 = vmatpush1.bf16.msra.mxu0 0
  %4801 = vmatprep.subr.bf16.mxu0 0
  %4802 = vmatpush1.bf16.msra.mxu0 0
  %4803 = vmatprep.subr.bf16.mxu0 0
  %4804 = vmatpush1.bf16.msra.mxu0 0
  %4805 = vmatprep.subr.bf16.mxu0 0
  %4806 = vmatpush1.bf16.msra.mxu0 0
  %4807 = vmatprep.subr.bf16.mxu0 0
  %4808 = vmatpush1.bf16.msra.mxu0 0
  %4809 = vmatprep.mubr.bf16.mxu0 0
  %4810 = vmatmul.mubr.bf16.gmra.mrb[0].mxu0 %v4616
  %v4811 = vpop.f32.mrb[0].mxu0
  %v4812 = vadd.f32 0.0, %v4811
  %v4813 = vpop.f32.mrb[0].mxu0
  %v4814 = vadd.f32 0.0, %v4813
  %v4815 = vpop.f32.mrb[0].mxu0
  %v4816 = vpop.f32.mrb[0].mxu0
  %4817 = vdwg.mxu0
  %4818 = vmatprep.subr.bf16.mxu0 0
  %4819 = vmatpush1.bf16.msra.mxu0 %v4731
  %4820 = vmatprep.subr.bf16.mxu0 0
  %4821 = vmatpush1.bf16.msra.mxu0 %v4734
  %4822 = vmatprep.subr.bf16.mxu0 0
  %4823 = vmatpush1.bf16.msra.mxu0 %v4737
  %4824 = vmatprep.subr.bf16.mxu0 0
  %4825 = vmatpush1.bf16.msra.mxu0 %v4740
  %4826 = vmatprep.subr.bf16.mxu0 0
  %4827 = vmatpush1.bf16.msra.mxu0 %v4743
  %4828 = vmatprep.subr.bf16.mxu0 0
  %4829 = vmatpush1.bf16.msra.mxu0 %v4746
  %4830 = vmatprep.subr.bf16.mxu0 0
  %4831 = vmatpush1.bf16.msra.mxu0 %v4749
  %4832 = vmatprep.subr.bf16.mxu0 0
  %4833 = vmatpush1.bf16.msra.mxu0 %v4752
  %4834 = vmatprep.subr.bf16.mxu0 0
  %4835 = vmatpush1.bf16.msra.mxu0 0
  %4836 = vmatprep.subr.bf16.mxu0 0
  %4837 = vmatpush1.bf16.msra.mxu0 0
  %4838 = vmatprep.subr.bf16.mxu0 0
  %4839 = vmatpush1.bf16.msra.mxu0 0
  %4840 = vmatprep.subr.bf16.mxu0 0
  %4841 = vmatpush1.bf16.msra.mxu0 0
  %4842 = vmatprep.subr.bf16.mxu0 0
  %4843 = vmatpush1.bf16.msra.mxu0 0
  %4844 = vmatprep.subr.bf16.mxu0 0
  %4845 = vmatpush1.bf16.msra.mxu0 0
  %4846 = vmatprep.subr.bf16.mxu0 0
  %4847 = vmatpush1.bf16.msra.mxu0 0
  %4848 = vmatprep.subr.bf16.mxu0 0
  %4849 = vmatpush1.bf16.msra.mxu0 0
  %4850 = vmatprep.mubr.bf16.mxu0 0
  %4851 = vmatmul.mubr.bf16.gmra.mrb[0].mxu0 %v4616
  %v4852 = vpop.f32.mrb[0].mxu0
  %v4853 = vadd.f32 0.0, %v4852
  %v4854 = vpop.f32.mrb[0].mxu0
  %v4855 = vpop.f32.mrb[0].mxu0
  %v4856 = vpop.f32.mrb[0].mxu0
  %4857 = vdwg.mxu0
  %v4858 = vadd.f32 %v4570, %v4812
  %v4859 = vxor.u32 %v4858, 2147483648
  %v4860 = vmul.f32 %v4859, 1.442695
  %v4861 = vpow.pop %v4860
  %v4862 = vadd.f32 %v4861, 1.0
  %v4863 = vrcp.pop %v4862
  %v4864 = vmul.f32 1.0, %v4863
  %v4865 = vadd.f32 %v4572, %v4814
  %v4866 = vxor.u32 %v4865, 2147483648
  %v4867 = vmul.f32 %v4866, 1.442695
  %v4868 = vpow.pop %v4867
  %v4869 = vadd.f32 %v4868, 1.0
  %v4870 = vrcp.pop %v4869
  %v4871 = vmul.f32 1.0, %v4870
  %v4872 = vadd.f32 %v4853, %v228
  %v4873 = vmul.f32 %v4864, %v4872
  %v4874 = vadd.f32 %v4611, %v4873
  %v4875 = vtanh.pop %v4874
  %v4876 = vsub.f32 1.0, %v4871
  %v4877 = vmul.f32 %v4876, %v4875
  %v4878 = vmul.f32 %v4871, %v4104
  %v4879 = vadd.f32 %v4877, %v4878
  %s4880 = scalar_lea.vmem [#allocation3], 40
  %4881 = vst [vmem:[%s4880] sm:$0xff] %v4879
  %s4882 = scalar_lea.vmem [#allocation2], 144
  %v4883 = vld [vmem:[%s4882] sm:$0xff]
  %v4884 = vld [vmem:[%s4882 + $0x8] sm:$0xff]
  %v4885 = vld [vmem:[%s4882 + $0x10] sm:$0xff]
  %v4886 = vld [vmem:[%s3] sm:$0xff]
  %v4887 = vld [vmem:[%s3 + $0x8] sm:$0xf]
  %v4888 = vld [vmem:[%s3 + $0xc] sm:$0xff]
  %v4889 = vld [vmem:[%s3 + $0x14] sm:$0xf]
  %v4890 = vld [vmem:[%s3 + $0x18] sm:$0xff]
  %v4891 = vld [vmem:[%s3 + $0x20] sm:$0xf]
  %v4892 = vld [vmem:[%s3 + $0x24] sm:$0xff]
  %v4893 = vld [vmem:[%s3 + $0x2c] sm:$0xf]
  %v4894 = vld [vmem:[%s3 + $0x30] sm:$0xff]
  %v4895 = vld [vmem:[%s3 + $0x38] sm:$0xf]
  %v4896 = vld [vmem:[%s3 + $0x3c] sm:$0xff]
  %v4897 = vld [vmem:[%s3 + $0x44] sm:$0xf]
  %v4898 = vld [vmem:[%s3 + $0x48] sm:$0xff]
  %v4899 = vld [vmem:[%s3 + $0x50] sm:$0xf]
  %v4900 = vld [vmem:[%s3 + $0x54] sm:$0xff]
  %v4901 = vld [vmem:[%s3 + $0x5c] sm:$0xf]
  %v4902 = vld [vmem:[%s3 + $0x60] sm:$0xff]
  %v4903 = vld [vmem:[%s3 + $0x68] sm:$0xf]
  %v4904 = vld [vmem:[%s3 + $0x6c] sm:$0xff]
  %v4905 = vld [vmem:[%s3 + $0x74] sm:$0xf]
  %v4906 = vld [vmem:[%s3 + $0x78] sm:$0xff]
  %v4907 = vld [vmem:[%s3 + $0x80] sm:$0xf]
  %v4908 = vld [vmem:[%s3 + $0x84] sm:$0xff]
  %v4909 = vld [vmem:[%s3 + $0x8c] sm:$0xf]
  %v4910 = vld [vmem:[%s3 + $0x90] sm:$0xff]
  %v4911 = vld [vmem:[%s3 + $0x98] sm:$0xf]
  %v4912 = vld [vmem:[%s3 + $0x9c] sm:$0xff]
  %v4913 = vld [vmem:[%s3 + $0xa4] sm:$0xf]
  %v4914 = vld [vmem:[%s3 + $0xa8] sm:$0xff]
  %v4915 = vld [vmem:[%s3 + $0xb0] sm:$0xf]
  %v4916 = vld [vmem:[%s3 + $0xb4] sm:$0xff]
  %v4917 = vld [vmem:[%s3 + $0xbc] sm:$0xf]
  %v4950 = vunpack.c.l.b16 %v4886
  %v4951 = vunpack.c.h.b16 %v4886
  %v4952 = vunpack.c.l.b16 %v4887
  %v4953 = vunpack.c.l.b16 %v4888
  %v4954 = vunpack.c.h.b16 %v4888
  %v4955 = vunpack.c.l.b16 %v4889
  %v4956 = vunpack.c.l.b16 %v4890
  %v4957 = vunpack.c.h.b16 %v4890
  %v4958 = vunpack.c.l.b16 %v4891
  %v4959 = vunpack.c.l.b16 %v4892
  %v4960 = vunpack.c.h.b16 %v4892
  %v4961 = vunpack.c.l.b16 %v4893
  %v4962 = vunpack.c.l.b16 %v4894
  %v4963 = vunpack.c.h.b16 %v4894
  %v4964 = vunpack.c.l.b16 %v4895
  %v4965 = vunpack.c.l.b16 %v4896
  %v4966 = vunpack.c.h.b16 %v4896
  %v4967 = vunpack.c.l.b16 %v4897
  %v4968 = vunpack.c.l.b16 %v4898
  %v4969 = vunpack.c.h.b16 %v4898
  %v4970 = vunpack.c.l.b16 %v4899
  %v4971 = vunpack.c.l.b16 %v4900
  %v4972 = vunpack.c.h.b16 %v4900
  %v4973 = vunpack.c.l.b16 %v4901
  %v4974 = vunpack.c.l.b16 %v4902
  %v4975 = vunpack.c.h.b16 %v4902
  %v4976 = vunpack.c.l.b16 %v4903
  %v4977 = vunpack.c.l.b16 %v4904
  %v4978 = vunpack.c.h.b16 %v4904
  %v4979 = vunpack.c.l.b16 %v4905
  %v4980 = vunpack.c.l.b16 %v4906
  %v4981 = vunpack.c.h.b16 %v4906
  %v4982 = vunpack.c.l.b16 %v4907
  %v4983 = vunpack.c.l.b16 %v4908
  %v4984 = vunpack.c.h.b16 %v4908
  %v4985 = vunpack.c.l.b16 %v4909
  %v4986 = vunpack.c.l.b16 %v4910
  %v4987 = vunpack.c.h.b16 %v4910
  %v4988 = vunpack.c.l.b16 %v4911
  %v4989 = vunpack.c.l.b16 %v4912
  %v4990 = vunpack.c.h.b16 %v4912
  %v4991 = vunpack.c.l.b16 %v4913
  %v4992 = vunpack.c.l.b16 %v4914
  %v4993 = vunpack.c.h.b16 %v4914
  %v4994 = vunpack.c.l.b16 %v4915
  %v4995 = vunpack.c.l.b16 %v4916
  %v4996 = vunpack.c.h.b16 %v4916
  %v4997 = vunpack.c.l.b16 %v4917
  %v4998 = vpack.c.b16 %v4953, %v4950
  %v4999 = vpack.c.b16 %v4954, %v4951
  %v5000 = vpack.c.b16 %v4955, %v4952
  %v5001 = vpack.c.b16 %v4959, %v4956
  %v5002 = vpack.c.b16 %v4960, %v4957
  %v5003 = vpack.c.b16 %v4961, %v4958
  %v5004 = vpack.c.b16 %v4965, %v4962
  %v5005 = vpack.c.b16 %v4966, %v4963
  %v5006 = vpack.c.b16 %v4967, %v4964
  %v5007 = vpack.c.b16 %v4971, %v4968
  %v5008 = vpack.c.b16 %v4972, %v4969
  %v5009 = vpack.c.b16 %v4973, %v4970
  %v5010 = vpack.c.b16 %v4977, %v4974
  %v5011 = vpack.c.b16 %v4978, %v4975
  %v5012 = vpack.c.b16 %v4979, %v4976
  %v5013 = vpack.c.b16 %v4983, %v4980
  %v5014 = vpack.c.b16 %v4984, %v4981
  %v5015 = vpack.c.b16 %v4985, %v4982
  %v5016 = vpack.c.b16 %v4989, %v4986
  %v5017 = vpack.c.b16 %v4990, %v4987
  %v5018 = vpack.c.b16 %v4991, %v4988
  %v5019 = vpack.c.b16 %v4995, %v4992
  %v5020 = vpack.c.b16 %v4996, %v4993
  %v5021 = vpack.c.b16 %v4997, %v4994
  %5046 = vmatprep.subr.bf16.mxu0 %v4999
  %5047 = vmatpush1.bf16.msra.mxu0 %v4998
  %5048 = vmatprep.subr.bf16.mxu0 %v5002
  %5049 = vmatpush1.bf16.msra.mxu0 %v5001
  %5050 = vmatprep.subr.bf16.mxu0 %v5005
  %5051 = vmatpush1.bf16.msra.mxu0 %v5004
  %5052 = vmatprep.subr.bf16.mxu0 %v5008
  %5053 = vmatpush1.bf16.msra.mxu0 %v5007
  %5054 = vmatprep.subr.bf16.mxu0 %v5011
  %5055 = vmatpush1.bf16.msra.mxu0 %v5010
  %5056 = vmatprep.subr.bf16.mxu0 %v5014
  %5057 = vmatpush1.bf16.msra.mxu0 %v5013
  %5058 = vmatprep.subr.bf16.mxu0 %v5017
  %5059 = vmatpush1.bf16.msra.mxu0 %v5016
  %5060 = vmatprep.subr.bf16.mxu0 %v5020
  %5061 = vmatpush1.bf16.msra.mxu0 %v5019
  %5062 = vmatprep.subr.bf16.mxu0 0
  %5063 = vmatpush1.bf16.msra.mxu0 0
  %5064 = vmatprep.subr.bf16.mxu0 0
  %5065 = vmatpush1.bf16.msra.mxu0 0
  %5066 = vmatprep.subr.bf16.mxu0 0
  %5067 = vmatpush1.bf16.msra.mxu0 0
  %5068 = vmatprep.subr.bf16.mxu0 0
  %5069 = vmatpush1.bf16.msra.mxu0 0
  %5070 = vmatprep.subr.bf16.mxu0 0
  %5071 = vmatpush1.bf16.msra.mxu0 0
  %5072 = vmatprep.subr.bf16.mxu0 0
  %5073 = vmatpush1.bf16.msra.mxu0 0
  %5074 = vmatprep.subr.bf16.mxu0 0
  %5075 = vmatpush1.bf16.msra.mxu0 0
  %5076 = vmatprep.subr.bf16.mxu0 0
  %5077 = vmatpush1.bf16.msra.mxu0 0
  %5078 = vmatprep.mubr.bf16.mxu0 0
  %5079 = vmatmul.mubr.bf16.gmra.mrb[0].mxu0 %v4374
  %v5080 = vpop.f32.mrb[0].mxu0
  %v5081 = vadd.f32 0.0, %v5080
  %v5082 = vpop.f32.mrb[0].mxu0
  %v5083 = vadd.f32 0.0, %v5082
  %v5084 = vpop.f32.mrb[0].mxu0
  %v5085 = vpop.f32.mrb[0].mxu0
  %5086 = vdwg.mxu0
  %5087 = vmatprep.subr.bf16.mxu0 0
  %5088 = vmatpush1.bf16.msra.mxu0 %v5000
  %5089 = vmatprep.subr.bf16.mxu0 0
  %5090 = vmatpush1.bf16.msra.mxu0 %v5003
  %5091 = vmatprep.subr.bf16.mxu0 0
  %5092 = vmatpush1.bf16.msra.mxu0 %v5006
  %5093 = vmatprep.subr.bf16.mxu0 0
  %5094 = vmatpush1.bf16.msra.mxu0 %v5009
  %5095 = vmatprep.subr.bf16.mxu0 0
  %5096 = vmatpush1.bf16.msra.mxu0 %v5012
  %5097 = vmatprep.subr.bf16.mxu0 0
  %5098 = vmatpush1.bf16.msra.mxu0 %v5015
  %5099 = vmatprep.subr.bf16.mxu0 0
  %5100 = vmatpush1.bf16.msra.mxu0 %v5018
  %5101 = vmatprep.subr.bf16.mxu0 0
  %5102 = vmatpush1.bf16.msra.mxu0 %v5021
  %5103 = vmatprep.subr.bf16.mxu0 0
  %5104 = vmatpush1.bf16.msra.mxu0 0
  %5105 = vmatprep.subr.bf16.mxu0 0
  %5106 = vmatpush1.bf16.msra.mxu0 0
  %5107 = vmatprep.subr.bf16.mxu0 0
  %5108 = vmatpush1.bf16.msra.mxu0 0
  %5109 = vmatprep.subr.bf16.mxu0 0
  %5110 = vmatpush1.bf16.msra.mxu0 0
  %5111 = vmatprep.subr.bf16.mxu0 0
  %5112 = vmatpush1.bf16.msra.mxu0 0
  %5113 = vmatprep.subr.bf16.mxu0 0
  %5114 = vmatpush1.bf16.msra.mxu0 0
  %5115 = vmatprep.subr.bf16.mxu0 0
  %5116 = vmatpush1.bf16.msra.mxu0 0
  %5117 = vmatprep.subr.bf16.mxu0 0
  %5118 = vmatpush1.bf16.msra.mxu0 0
  %5119 = vmatprep.mubr.bf16.mxu0 0
  %5120 = vmatmul.mubr.bf16.gmra.mrb[0].mxu0 %v4374
  %v5121 = vpop.f32.mrb[0].mxu0
  %v5122 = vadd.f32 0.0, %v5121
  %v5123 = vpop.f32.mrb[0].mxu0
  %v5124 = vpop.f32.mrb[0].mxu0
  %v5125 = vpop.f32.mrb[0].mxu0
  %5126 = vdwg.mxu0
  %v5127 = vadd.f32 %v4883, %v5081
  %v5128 = vxor.u32 %v5127, 2147483648
  %v5129 = vmul.f32 %v5128, 1.442695
  %v5130 = vpow.pop %v5129
  %v5131 = vadd.f32 %v5130, 1.0
  %v5132 = vrcp.pop %v5131
  %v5133 = vmul.f32 1.0, %v5132
  %v5134 = vadd.f32 %v4884, %v5083
  %v5135 = vxor.u32 %v5134, 2147483648
  %v5136 = vmul.f32 %v5135, 1.442695
  %v5137 = vpow.pop %v5136
  %v5138 = vadd.f32 %v5137, 1.0
  %v5139 = vrcp.pop %v5138
  %v5140 = vmul.f32 1.0, %v5139
  %v5141 = vadd.f32 %v5122, %v221
  %v5142 = vmul.f32 %v5133, %v5141
  %v5143 = vadd.f32 %v4885, %v5142
  %v5144 = vtanh.pop %v5143
  %v5145 = vsub.f32 1.0, %v5140
  %v5146 = vmul.f32 %v5145, %v5144
  %v5147 = vmul.f32 %v5140, %v4373
  %v5148 = vadd.f32 %v5146, %v5147
  %v5149 = vpack.c.bf16 %v5148, %v5148
  %v5150 = vld [vmem:[%s6] sm:$0xff]
  %v5151 = vld [vmem:[%s6 + $0x8] sm:$0xf]
  %v5152 = vld [vmem:[%s6 + $0xc] sm:$0xff]
  %v5153 = vld [vmem:[%s6 + $0x14] sm:$0xf]
  %v5154 = vld [vmem:[%s6 + $0x18] sm:$0xff]
  %v5155 = vld [vmem:[%s6 + $0x20] sm:$0xf]
  %v5156 = vld [vmem:[%s6 + $0x24] sm:$0xff]
  %v5157 = vld [vmem:[%s6 + $0x2c] sm:$0xf]
  %v5158 = vld [vmem:[%s6 + $0x30] sm:$0xff]
  %v5159 = vld [vmem:[%s6 + $0x38] sm:$0xf]
  %v5160 = vld [vmem:[%s6 + $0x3c] sm:$0xff]
  %v5161 = vld [vmem:[%s6 + $0x44] sm:$0xf]
  %v5162 = vld [vmem:[%s6 + $0x48] sm:$0xff]
  %v5163 = vld [vmem:[%s6 + $0x50] sm:$0xf]
  %v5164 = vld [vmem:[%s6 + $0x54] sm:$0xff]
  %v5165 = vld [vmem:[%s6 + $0x5c] sm:$0xf]
  %v5166 = vld [vmem:[%s6 + $0x60] sm:$0xff]
  %v5167 = vld [vmem:[%s6 + $0x68] sm:$0xf]
  %v5168 = vld [vmem:[%s6 + $0x6c] sm:$0xff]
  %v5169 = vld [vmem:[%s6 + $0x74] sm:$0xf]
  %v5170 = vld [vmem:[%s6 + $0x78] sm:$0xff]
  %v5171 = vld [vmem:[%s6 + $0x80] sm:$0xf]
  %v5172 = vld [vmem:[%s6 + $0x84] sm:$0xff]
  %v5173 = vld [vmem:[%s6 + $0x8c] sm:$0xf]
  %v5174 = vld [vmem:[%s6 + $0x90] sm:$0xff]
  %v5175 = vld [vmem:[%s6 + $0x98] sm:$0xf]
  %v5176 = vld [vmem:[%s6 + $0x9c] sm:$0xff]
  %v5177 = vld [vmem:[%s6 + $0xa4] sm:$0xf]
  %v5178 = vld [vmem:[%s6 + $0xa8] sm:$0xff]
  %v5179 = vld [vmem:[%s6 + $0xb0] sm:$0xf]
  %v5180 = vld [vmem:[%s6 + $0xb4] sm:$0xff]
  %v5181 = vld [vmem:[%s6 + $0xbc] sm:$0xf]
  %v5214 = vunpack.c.l.b16 %v5150
  %v5215 = vunpack.c.h.b16 %v5150
  %v5216 = vunpack.c.l.b16 %v5151
  %v5217 = vunpack.c.l.b16 %v5152
  %v5218 = vunpack.c.h.b16 %v5152
  %v5219 = vunpack.c.l.b16 %v5153
  %v5220 = vunpack.c.l.b16 %v5154
  %v5221 = vunpack.c.h.b16 %v5154
  %v5222 = vunpack.c.l.b16 %v5155
  %v5223 = vunpack.c.l.b16 %v5156
  %v5224 = vunpack.c.h.b16 %v5156
  %v5225 = vunpack.c.l.b16 %v5157
  %v5226 = vunpack.c.l.b16 %v5158
  %v5227 = vunpack.c.h.b16 %v5158
  %v5228 = vunpack.c.l.b16 %v5159
  %v5229 = vunpack.c.l.b16 %v5160
  %v5230 = vunpack.c.h.b16 %v5160
  %v5231 = vunpack.c.l.b16 %v5161
  %v5232 = vunpack.c.l.b16 %v5162
  %v5233 = vunpack.c.h.b16 %v5162
  %v5234 = vunpack.c.l.b16 %v5163
  %v5235 = vunpack.c.l.b16 %v5164
  %v5236 = vunpack.c.h.b16 %v5164
  %v5237 = vunpack.c.l.b16 %v5165
  %v5238 = vunpack.c.l.b16 %v5166
  %v5239 = vunpack.c.h.b16 %v5166
  %v5240 = vunpack.c.l.b16 %v5167
  %v5241 = vunpack.c.l.b16 %v5168
  %v5242 = vunpack.c.h.b16 %v5168
  %v5243 = vunpack.c.l.b16 %v5169
  %v5244 = vunpack.c.l.b16 %v5170
  %v5245 = vunpack.c.h.b16 %v5170
  %v5246 = vunpack.c.l.b16 %v5171
  %v5247 = vunpack.c.l.b16 %v5172
  %v5248 = vunpack.c.h.b16 %v5172
  %v5249 = vunpack.c.l.b16 %v5173
  %v5250 = vunpack.c.l.b16 %v5174
  %v5251 = vunpack.c.h.b16 %v5174
  %v5252 = vunpack.c.l.b16 %v5175
  %v5253 = vunpack.c.l.b16 %v5176
  %v5254 = vunpack.c.h.b16 %v5176
  %v5255 = vunpack.c.l.b16 %v5177
  %v5256 = vunpack.c.l.b16 %v5178
  %v5257 = vunpack.c.h.b16 %v5178
  %v5258 = vunpack.c.l.b16 %v5179
  %v5259 = vunpack.c.l.b16 %v5180
  %v5260 = vunpack.c.h.b16 %v5180
  %v5261 = vunpack.c.l.b16 %v5181
  %v5262 = vpack.c.b16 %v5217, %v5214
  %v5263 = vpack.c.b16 %v5218, %v5215
  %v5264 = vpack.c.b16 %v5219, %v5216
  %v5265 = vpack.c.b16 %v5223, %v5220
  %v5266 = vpack.c.b16 %v5224, %v5221
  %v5267 = vpack.c.b16 %v5225, %v5222
  %v5268 = vpack.c.b16 %v5229, %v5226
  %v5269 = vpack.c.b16 %v5230, %v5227
  %v5270 = vpack.c.b16 %v5231, %v5228
  %v5271 = vpack.c.b16 %v5235, %v5232
  %v5272 = vpack.c.b16 %v5236, %v5233
  %v5273 = vpack.c.b16 %v5237, %v5234
  %v5274 = vpack.c.b16 %v5241, %v5238
  %v5275 = vpack.c.b16 %v5242, %v5239
  %v5276 = vpack.c.b16 %v5243, %v5240
  %v5277 = vpack.c.b16 %v5247, %v5244
  %v5278 = vpack.c.b16 %v5248, %v5245
  %v5279 = vpack.c.b16 %v5249, %v5246
  %v5280 = vpack.c.b16 %v5253, %v5250
  %v5281 = vpack.c.b16 %v5254, %v5251
  %v5282 = vpack.c.b16 %v5255, %v5252
  %v5283 = vpack.c.b16 %v5259, %v5256
  %v5284 = vpack.c.b16 %v5260, %v5257
  %v5285 = vpack.c.b16 %v5261, %v5258
  %5310 = vmatprep.subr.bf16.mxu0 %v5263
  %5311 = vmatpush1.bf16.msra.mxu0 %v5262
  %5312 = vmatprep.subr.bf16.mxu0 %v5266
  %5313 = vmatpush1.bf16.msra.mxu0 %v5265
  %5314 = vmatprep.subr.bf16.mxu0 %v5269
  %5315 = vmatpush1.bf16.msra.mxu0 %v5268
  %5316 = vmatprep.subr.bf16.mxu0 %v5272
  %5317 = vmatpush1.bf16.msra.mxu0 %v5271
  %5318 = vmatprep.subr.bf16.mxu0 %v5275
  %5319 = vmatpush1.bf16.msra.mxu0 %v5274
  %5320 = vmatprep.subr.bf16.mxu0 %v5278
  %5321 = vmatpush1.bf16.msra.mxu0 %v5277
  %5322 = vmatprep.subr.bf16.mxu0 %v5281
  %5323 = vmatpush1.bf16.msra.mxu0 %v5280
  %5324 = vmatprep.subr.bf16.mxu0 %v5284
  %5325 = vmatpush1.bf16.msra.mxu0 %v5283
  %5326 = vmatprep.subr.bf16.mxu0 0
  %5327 = vmatpush1.bf16.msra.mxu0 0
  %5328 = vmatprep.subr.bf16.mxu0 0
  %5329 = vmatpush1.bf16.msra.mxu0 0
  %5330 = vmatprep.subr.bf16.mxu0 0
  %5331 = vmatpush1.bf16.msra.mxu0 0
  %5332 = vmatprep.subr.bf16.mxu0 0
  %5333 = vmatpush1.bf16.msra.mxu0 0
  %5334 = vmatprep.subr.bf16.mxu0 0
  %5335 = vmatpush1.bf16.msra.mxu0 0
  %5336 = vmatprep.subr.bf16.mxu0 0
  %5337 = vmatpush1.bf16.msra.mxu0 0
  %5338 = vmatprep.subr.bf16.mxu0 0
  %5339 = vmatpush1.bf16.msra.mxu0 0
  %5340 = vmatprep.subr.bf16.mxu0 0
  %5341 = vmatpush1.bf16.msra.mxu0 0
  %5342 = vmatprep.mubr.bf16.mxu0 0
  %5343 = vmatmul.mubr.bf16.gmra.mrb[0].mxu0 %v5149
  %v5344 = vpop.f32.mrb[0].mxu0
  %v5345 = vadd.f32 %v204, %v5344
  %v5346 = vpop.f32.mrb[0].mxu0
  %v5347 = vadd.f32 %v208, %v5346
  %v5348 = vpop.f32.mrb[0].mxu0
  %v5349 = vpop.f32.mrb[0].mxu0
  %5350 = vdwg.mxu0
  %5351 = vmatprep.subr.bf16.mxu0 0
  %5352 = vmatpush1.bf16.msra.mxu0 %v5264
  %5353 = vmatprep.subr.bf16.mxu0 0
  %5354 = vmatpush1.bf16.msra.mxu0 %v5267
  %5355 = vmatprep.subr.bf16.mxu0 0
  %5356 = vmatpush1.bf16.msra.mxu0 %v5270
  %5357 = vmatprep.subr.bf16.mxu0 0
  %5358 = vmatpush1.bf16.msra.mxu0 %v5273
  %5359 = vmatprep.subr.bf16.mxu0 0
  %5360 = vmatpush1.bf16.msra.mxu0 %v5276
  %5361 = vmatprep.subr.bf16.mxu0 0
  %5362 = vmatpush1.bf16.msra.mxu0 %v5279
  %5363 = vmatprep.subr.bf16.mxu0 0
  %5364 = vmatpush1.bf16.msra.mxu0 %v5282
  %5365 = vmatprep.subr.bf16.mxu0 0
  %5366 = vmatpush1.bf16.msra.mxu0 %v5285
  %5367 = vmatprep.subr.bf16.mxu0 0
  %5368 = vmatpush1.bf16.msra.mxu0 0
  %5369 = vmatprep.subr.bf16.mxu0 0
  %5370 = vmatpush1.bf16.msra.mxu0 0
  %5371 = vmatprep.subr.bf16.mxu0 0
  %5372 = vmatpush1.bf16.msra.mxu0 0
  %5373 = vmatprep.subr.bf16.mxu0 0
  %5374 = vmatpush1.bf16.msra.mxu0 0
  %5375 = vmatprep.subr.bf16.mxu0 0
  %5376 = vmatpush1.bf16.msra.mxu0 0
  %5377 = vmatprep.subr.bf16.mxu0 0
  %5378 = vmatpush1.bf16.msra.mxu0 0
  %5379 = vmatprep.subr.bf16.mxu0 0
  %5380 = vmatpush1.bf16.msra.mxu0 0
  %5381 = vmatprep.subr.bf16.mxu0 0
  %5382 = vmatpush1.bf16.msra.mxu0 0
  %5383 = vmatprep.mubr.bf16.mxu0 0
  %5384 = vmatmul.mubr.bf16.gmra.mrb[0].mxu0 %v5149
  %v5385 = vpop.f32.mrb[0].mxu0
  %v5386 = vadd.f32 %v212, %v5385
  %v5387 = vpop.f32.mrb[0].mxu0
  %v5388 = vpop.f32.mrb[0].mxu0
  %v5389 = vpop.f32.mrb[0].mxu0
  %5390 = vdwg.mxu0
  %v5391 = vpack.c.bf16 %v4879, %v4879
  %v5392 = vld [vmem:[%s7] sm:$0xff]
  %v5393 = vld [vmem:[%s7 + $0x8] sm:$0xf]
  %v5394 = vld [vmem:[%s7 + $0xc] sm:$0xff]
  %v5395 = vld [vmem:[%s7 + $0x14] sm:$0xf]
  %v5396 = vld [vmem:[%s7 + $0x18] sm:$0xff]
  %v5397 = vld [vmem:[%s7 + $0x20] sm:$0xf]
  %v5398 = vld [vmem:[%s7 + $0x24] sm:$0xff]
  %v5399 = vld [vmem:[%s7 + $0x2c] sm:$0xf]
  %v5400 = vld [vmem:[%s7 + $0x30] sm:$0xff]
  %v5401 = vld [vmem:[%s7 + $0x38] sm:$0xf]
  %v5402 = vld [vmem:[%s7 + $0x3c] sm:$0xff]
  %v5403 = vld [vmem:[%s7 + $0x44] sm:$0xf]
  %v5404 = vld [vmem:[%s7 + $0x48] sm:$0xff]
  %v5405 = vld [vmem:[%s7 + $0x50] sm:$0xf]
  %v5406 = vld [vmem:[%s7 + $0x54] sm:$0xff]
  %v5407 = vld [vmem:[%s7 + $0x5c] sm:$0xf]
  %v5408 = vld [vmem:[%s7 + $0x60] sm:$0xff]
  %v5409 = vld [vmem:[%s7 + $0x68] sm:$0xf]
  %v5410 = vld [vmem:[%s7 + $0x6c] sm:$0xff]
  %v5411 = vld [vmem:[%s7 + $0x74] sm:$0xf]
  %v5412 = vld [vmem:[%s7 + $0x78] sm:$0xff]
  %v5413 = vld [vmem:[%s7 + $0x80] sm:$0xf]
  %v5414 = vld [vmem:[%s7 + $0x84] sm:$0xff]
  %v5415 = vld [vmem:[%s7 + $0x8c] sm:$0xf]
  %v5416 = vld [vmem:[%s7 + $0x90] sm:$0xff]
  %v5417 = vld [vmem:[%s7 + $0x98] sm:$0xf]
  %v5418 = vld [vmem:[%s7 + $0x9c] sm:$0xff]
  %v5419 = vld [vmem:[%s7 + $0xa4] sm:$0xf]
  %v5420 = vld [vmem:[%s7 + $0xa8] sm:$0xff]
  %v5421 = vld [vmem:[%s7 + $0xb0] sm:$0xf]
  %v5422 = vld [vmem:[%s7 + $0xb4] sm:$0xff]
  %v5423 = vld [vmem:[%s7 + $0xbc] sm:$0xf]
  %v5456 = vunpack.c.l.b16 %v5392
  %v5457 = vunpack.c.h.b16 %v5392
  %v5458 = vunpack.c.l.b16 %v5393
  %v5459 = vunpack.c.l.b16 %v5394
  %v5460 = vunpack.c.h.b16 %v5394
  %v5461 = vunpack.c.l.b16 %v5395
  %v5462 = vunpack.c.l.b16 %v5396
  %v5463 = vunpack.c.h.b16 %v5396
  %v5464 = vunpack.c.l.b16 %v5397
  %v5465 = vunpack.c.l.b16 %v5398
  %v5466 = vunpack.c.h.b16 %v5398
  %v5467 = vunpack.c.l.b16 %v5399
  %v5468 = vunpack.c.l.b16 %v5400
  %v5469 = vunpack.c.h.b16 %v5400
  %v5470 = vunpack.c.l.b16 %v5401
  %v5471 = vunpack.c.l.b16 %v5402
  %v5472 = vunpack.c.h.b16 %v5402
  %v5473 = vunpack.c.l.b16 %v5403
  %v5474 = vunpack.c.l.b16 %v5404
  %v5475 = vunpack.c.h.b16 %v5404
  %v5476 = vunpack.c.l.b16 %v5405
  %v5477 = vunpack.c.l.b16 %v5406
  %v5478 = vunpack.c.h.b16 %v5406
  %v5479 = vunpack.c.l.b16 %v5407
  %v5480 = vunpack.c.l.b16 %v5408
  %v5481 = vunpack.c.h.b16 %v5408
  %v5482 = vunpack.c.l.b16 %v5409
  %v5483 = vunpack.c.l.b16 %v5410
  %v5484 = vunpack.c.h.b16 %v5410
  %v5485 = vunpack.c.l.b16 %v5411
  %v5486 = vunpack.c.l.b16 %v5412
  %v5487 = vunpack.c.h.b16 %v5412
  %v5488 = vunpack.c.l.b16 %v5413
  %v5489 = vunpack.c.l.b16 %v5414
  %v5490 = vunpack.c.h.b16 %v5414
  %v5491 = vunpack.c.l.b16 %v5415
  %v5492 = vunpack.c.l.b16 %v5416
  %v5493 = vunpack.c.h.b16 %v5416
  %v5494 = vunpack.c.l.b16 %v5417
  %v5495 = vunpack.c.l.b16 %v5418
  %v5496 = vunpack.c.h.b16 %v5418
  %v5497 = vunpack.c.l.b16 %v5419
  %v5498 = vunpack.c.l.b16 %v5420
  %v5499 = vunpack.c.h.b16 %v5420
  %v5500 = vunpack.c.l.b16 %v5421
  %v5501 = vunpack.c.l.b16 %v5422
  %v5502 = vunpack.c.h.b16 %v5422
  %v5503 = vunpack.c.l.b16 %v5423
  %v5504 = vpack.c.b16 %v5459, %v5456
  %v5505 = vpack.c.b16 %v5460, %v5457
  %v5506 = vpack.c.b16 %v5461, %v5458
  %v5507 = vpack.c.b16 %v5465, %v5462
  %v5508 = vpack.c.b16 %v5466, %v5463
  %v5509 = vpack.c.b16 %v5467, %v5464
  %v5510 = vpack.c.b16 %v5471, %v5468
  %v5511 = vpack.c.b16 %v5472, %v5469
  %v5512 = vpack.c.b16 %v5473, %v5470
  %v5513 = vpack.c.b16 %v5477, %v5474
  %v5514 = vpack.c.b16 %v5478, %v5475
  %v5515 = vpack.c.b16 %v5479, %v5476
  %v5516 = vpack.c.b16 %v5483, %v5480
  %v5517 = vpack.c.b16 %v5484, %v5481
  %v5518 = vpack.c.b16 %v5485, %v5482
  %v5519 = vpack.c.b16 %v5489, %v5486
  %v5520 = vpack.c.b16 %v5490, %v5487
  %v5521 = vpack.c.b16 %v5491, %v5488
  %v5522 = vpack.c.b16 %v5495, %v5492
  %v5523 = vpack.c.b16 %v5496, %v5493
  %v5524 = vpack.c.b16 %v5497, %v5494
  %v5525 = vpack.c.b16 %v5501, %v5498
  %v5526 = vpack.c.b16 %v5502, %v5499
  %v5527 = vpack.c.b16 %v5503, %v5500
  %5552 = vmatprep.subr.bf16.mxu0 %v5505
  %5553 = vmatpush1.bf16.msra.mxu0 %v5504
  %5554 = vmatprep.subr.bf16.mxu0 %v5508
  %5555 = vmatpush1.bf16.msra.mxu0 %v5507
  %5556 = vmatprep.subr.bf16.mxu0 %v5511
  %5557 = vmatpush1.bf16.msra.mxu0 %v5510
  %5558 = vmatprep.subr.bf16.mxu0 %v5514
  %5559 = vmatpush1.bf16.msra.mxu0 %v5513
  %5560 = vmatprep.subr.bf16.mxu0 %v5517
  %5561 = vmatpush1.bf16.msra.mxu0 %v5516
  %5562 = vmatprep.subr.bf16.mxu0 %v5520
  %5563 = vmatpush1.bf16.msra.mxu0 %v5519
  %5564 = vmatprep.subr.bf16.mxu0 %v5523
  %5565 = vmatpush1.bf16.msra.mxu0 %v5522
  %5566 = vmatprep.subr.bf16.mxu0 %v5526
  %5567 = vmatpush1.bf16.msra.mxu0 %v5525
  %5568 = vmatprep.subr.bf16.mxu0 0
  %5569 = vmatpush1.bf16.msra.mxu0 0
  %5570 = vmatprep.subr.bf16.mxu0 0
  %5571 = vmatpush1.bf16.msra.mxu0 0
  %5572 = vmatprep.subr.bf16.mxu0 0
  %5573 = vmatpush1.bf16.msra.mxu0 0
  %5574 = vmatprep.subr.bf16.mxu0 0
  %5575 = vmatpush1.bf16.msra.mxu0 0
  %5576 = vmatprep.subr.bf16.mxu0 0
  %5577 = vmatpush1.bf16.msra.mxu0 0
  %5578 = vmatprep.subr.bf16.mxu0 0
  %5579 = vmatpush1.bf16.msra.mxu0 0
  %5580 = vmatprep.subr.bf16.mxu0 0
  %5581 = vmatpush1.bf16.msra.mxu0 0
  %5582 = vmatprep.subr.bf16.mxu0 0
  %5583 = vmatpush1.bf16.msra.mxu0 0
  %5584 = vmatprep.mubr.bf16.mxu0 0
  %5585 = vmatmul.mubr.bf16.gmra.mrb[0].mxu0 %v5391
  %v5586 = vpop.f32.mrb[0].mxu0
  %v5587 = vadd.f32 0.0, %v5586
  %v5588 = vpop.f32.mrb[0].mxu0
  %v5589 = vadd.f32 0.0, %v5588
  %v5590 = vpop.f32.mrb[0].mxu0
  %v5591 = vpop.f32.mrb[0].mxu0
  %5592 = vdwg.mxu0
  %5593 = vmatprep.subr.bf16.mxu0 0
  %5594 = vmatpush1.bf16.msra.mxu0 %v5506
  %5595 = vmatprep.subr.bf16.mxu0 0
  %5596 = vmatpush1.bf16.msra.mxu0 %v5509
  %5597 = vmatprep.subr.bf16.mxu0 0
  %5598 = vmatpush1.bf16.msra.mxu0 %v5512
  %5599 = vmatprep.subr.bf16.mxu0 0
  %5600 = vmatpush1.bf16.msra.mxu0 %v5515
  %5601 = vmatprep.subr.bf16.mxu0 0
  %5602 = vmatpush1.bf16.msra.mxu0 %v5518
  %5603 = vmatprep.subr.bf16.mxu0 0
  %5604 = vmatpush1.bf16.msra.mxu0 %v5521
  %5605 = vmatprep.subr.bf16.mxu0 0
  %5606 = vmatpush1.bf16.msra.mxu0 %v5524
  %5607 = vmatprep.subr.bf16.mxu0 0
  %5608 = vmatpush1.bf16.msra.mxu0 %v5527
  %5609 = vmatprep.subr.bf16.mxu0 0
  %5610 = vmatpush1.bf16.msra.mxu0 0
  %5611 = vmatprep.subr.bf16.mxu0 0
  %5612 = vmatpush1.bf16.msra.mxu0 0
  %5613 = vmatprep.subr.bf16.mxu0 0
  %5614 = vmatpush1.bf16.msra.mxu0 0
  %5615 = vmatprep.subr.bf16.mxu0 0
  %5616 = vmatpush1.bf16.msra.mxu0 0
  %5617 = vmatprep.subr.bf16.mxu0 0
  %5618 = vmatpush1.bf16.msra.mxu0 0
  %5619 = vmatprep.subr.bf16.mxu0 0
  %5620 = vmatpush1.bf16.msra.mxu0 0
  %5621 = vmatprep.subr.bf16.mxu0 0
  %5622 = vmatpush1.bf16.msra.mxu0 0
  %5623 = vmatprep.subr.bf16.mxu0 0
  %5624 = vmatpush1.bf16.msra.mxu0 0
  %5625 = vmatprep.mubr.bf16.mxu0 0
  %5626 = vmatmul.mubr.bf16.gmra.mrb[0].mxu0 %v5391
  %v5627 = vpop.f32.mrb[0].mxu0
  %v5628 = vadd.f32 0.0, %v5627
  %v5629 = vpop.f32.mrb[0].mxu0
  %v5630 = vpop.f32.mrb[0].mxu0
  %v5631 = vpop.f32.mrb[0].mxu0
  %5632 = vdwg.mxu0
  %v5633 = vadd.f32 %v5345, %v5587
  %v5634 = vxor.u32 %v5633, 2147483648
  %v5635 = vmul.f32 %v5634, 1.442695
  %v5636 = vpow.pop %v5635
  %v5637 = vadd.f32 %v5636, 1.0
  %v5638 = vrcp.pop %v5637
  %v5639 = vmul.f32 1.0, %v5638
  %v5640 = vadd.f32 %v5347, %v5589
  %v5641 = vxor.u32 %v5640, 2147483648
  %v5642 = vmul.f32 %v5641, 1.442695
  %v5643 = vpow.pop %v5642
  %v5644 = vadd.f32 %v5643, 1.0
  %v5645 = vrcp.pop %v5644
  %v5646 = vmul.f32 1.0, %v5645
  %v5647 = vadd.f32 %v5628, %v228
  %v5648 = vmul.f32 %v5639, %v5647
  %v5649 = vadd.f32 %v5386, %v5648
  %v5650 = vtanh.pop %v5649
  %v5651 = vsub.f32 1.0, %v5646
  %v5652 = vmul.f32 %v5651, %v5650
  %v5653 = vmul.f32 %v5646, %v4879
  %v5654 = vadd.f32 %v5652, %v5653
  %s5655 = scalar_lea.vmem [#allocation3], 48
  %5656 = vst [vmem:[%s5655] sm:$0xff] %v5654
  %s5657 = scalar_lea.vmem [#allocation2], 168
  %v5658 = vld [vmem:[%s5657] sm:$0xff]
  %v5659 = vld [vmem:[%s5657 + $0x8] sm:$0xff]
  %v5660 = vld [vmem:[%s5657 + $0x10] sm:$0xff]
  %v5661 = vld [vmem:[%s3] sm:$0xff]
  %v5662 = vld [vmem:[%s3 + $0x8] sm:$0xf]
  %v5663 = vld [vmem:[%s3 + $0xc] sm:$0xff]
  %v5664 = vld [vmem:[%s3 + $0x14] sm:$0xf]
  %v5665 = vld [vmem:[%s3 + $0x18] sm:$0xff]
  %v5666 = vld [vmem:[%s3 + $0x20] sm:$0xf]
  %v5667 = vld [vmem:[%s3 + $0x24] sm:$0xff]
  %v5668 = vld [vmem:[%s3 + $0x2c] sm:$0xf]
  %v5669 = vld [vmem:[%s3 + $0x30] sm:$0xff]
  %v5670 = vld [vmem:[%s3 + $0x38] sm:$0xf]
  %v5671 = vld [vmem:[%s3 + $0x3c] sm:$0xff]
  %v5672 = vld [vmem:[%s3 + $0x44] sm:$0xf]
  %v5673 = vld [vmem:[%s3 + $0x48] sm:$0xff]
  %v5674 = vld [vmem:[%s3 + $0x50] sm:$0xf]
  %v5675 = vld [vmem:[%s3 + $0x54] sm:$0xff]
  %v5676 = vld [vmem:[%s3 + $0x5c] sm:$0xf]
  %v5677 = vld [vmem:[%s3 + $0x60] sm:$0xff]
  %v5678 = vld [vmem:[%s3 + $0x68] sm:$0xf]
  %v5679 = vld [vmem:[%s3 + $0x6c] sm:$0xff]
  %v5680 = vld [vmem:[%s3 + $0x74] sm:$0xf]
  %v5681 = vld [vmem:[%s3 + $0x78] sm:$0xff]
  %v5682 = vld [vmem:[%s3 + $0x80] sm:$0xf]
  %v5683 = vld [vmem:[%s3 + $0x84] sm:$0xff]
  %v5684 = vld [vmem:[%s3 + $0x8c] sm:$0xf]
  %v5685 = vld [vmem:[%s3 + $0x90] sm:$0xff]
  %v5686 = vld [vmem:[%s3 + $0x98] sm:$0xf]
  %v5687 = vld [vmem:[%s3 + $0x9c] sm:$0xff]
  %v5688 = vld [vmem:[%s3 + $0xa4] sm:$0xf]
  %v5689 = vld [vmem:[%s3 + $0xa8] sm:$0xff]
  %v5690 = vld [vmem:[%s3 + $0xb0] sm:$0xf]
  %v5691 = vld [vmem:[%s3 + $0xb4] sm:$0xff]
  %v5692 = vld [vmem:[%s3 + $0xbc] sm:$0xf]
  %v5725 = vunpack.c.l.b16 %v5661
  %v5726 = vunpack.c.h.b16 %v5661
  %v5727 = vunpack.c.l.b16 %v5662
  %v5728 = vunpack.c.l.b16 %v5663
  %v5729 = vunpack.c.h.b16 %v5663
  %v5730 = vunpack.c.l.b16 %v5664
  %v5731 = vunpack.c.l.b16 %v5665
  %v5732 = vunpack.c.h.b16 %v5665
  %v5733 = vunpack.c.l.b16 %v5666
  %v5734 = vunpack.c.l.b16 %v5667
  %v5735 = vunpack.c.h.b16 %v5667
  %v5736 = vunpack.c.l.b16 %v5668
  %v5737 = vunpack.c.l.b16 %v5669
  %v5738 = vunpack.c.h.b16 %v5669
  %v5739 = vunpack.c.l.b16 %v5670
  %v5740 = vunpack.c.l.b16 %v5671
  %v5741 = vunpack.c.h.b16 %v5671
  %v5742 = vunpack.c.l.b16 %v5672
  %v5743 = vunpack.c.l.b16 %v5673
  %v5744 = vunpack.c.h.b16 %v5673
  %v5745 = vunpack.c.l.b16 %v5674
  %v5746 = vunpack.c.l.b16 %v5675
  %v5747 = vunpack.c.h.b16 %v5675
  %v5748 = vunpack.c.l.b16 %v5676
  %v5749 = vunpack.c.l.b16 %v5677
  %v5750 = vunpack.c.h.b16 %v5677
  %v5751 = vunpack.c.l.b16 %v5678
  %v5752 = vunpack.c.l.b16 %v5679
  %v5753 = vunpack.c.h.b16 %v5679
  %v5754 = vunpack.c.l.b16 %v5680
  %v5755 = vunpack.c.l.b16 %v5681
  %v5756 = vunpack.c.h.b16 %v5681
  %v5757 = vunpack.c.l.b16 %v5682
  %v5758 = vunpack.c.l.b16 %v5683
  %v5759 = vunpack.c.h.b16 %v5683
  %v5760 = vunpack.c.l.b16 %v5684
  %v5761 = vunpack.c.l.b16 %v5685
  %v5762 = vunpack.c.h.b16 %v5685
  %v5763 = vunpack.c.l.b16 %v5686
  %v5764 = vunpack.c.l.b16 %v5687
  %v5765 = vunpack.c.h.b16 %v5687
  %v5766 = vunpack.c.l.b16 %v5688
  %v5767 = vunpack.c.l.b16 %v5689
  %v5768 = vunpack.c.h.b16 %v5689
  %v5769 = vunpack.c.l.b16 %v5690
  %v5770 = vunpack.c.l.b16 %v5691
  %v5771 = vunpack.c.h.b16 %v5691
  %v5772 = vunpack.c.l.b16 %v5692
  %v5773 = vpack.c.b16 %v5728, %v5725
  %v5774 = vpack.c.b16 %v5729, %v5726
  %v5775 = vpack.c.b16 %v5730, %v5727
  %v5776 = vpack.c.b16 %v5734, %v5731
  %v5777 = vpack.c.b16 %v5735, %v5732
  %v5778 = vpack.c.b16 %v5736, %v5733
  %v5779 = vpack.c.b16 %v5740, %v5737
  %v5780 = vpack.c.b16 %v5741, %v5738
  %v5781 = vpack.c.b16 %v5742, %v5739
  %v5782 = vpack.c.b16 %v5746, %v5743
  %v5783 = vpack.c.b16 %v5747, %v5744
  %v5784 = vpack.c.b16 %v5748, %v5745
  %v5785 = vpack.c.b16 %v5752, %v5749
  %v5786 = vpack.c.b16 %v5753, %v5750
  %v5787 = vpack.c.b16 %v5754, %v5751
  %v5788 = vpack.c.b16 %v5758, %v5755
  %v5789 = vpack.c.b16 %v5759, %v5756
  %v5790 = vpack.c.b16 %v5760, %v5757
  %v5791 = vpack.c.b16 %v5764, %v5761
  %v5792 = vpack.c.b16 %v5765, %v5762
  %v5793 = vpack.c.b16 %v5766, %v5763
  %v5794 = vpack.c.b16 %v5770, %v5767
  %v5795 = vpack.c.b16 %v5771, %v5768
  %v5796 = vpack.c.b16 %v5772, %v5769
  %5821 = vmatprep.subr.bf16.mxu0 %v5774
  %5822 = vmatpush1.bf16.msra.mxu0 %v5773
  %5823 = vmatprep.subr.bf16.mxu0 %v5777
  %5824 = vmatpush1.bf16.msra.mxu0 %v5776
  %5825 = vmatprep.subr.bf16.mxu0 %v5780
  %5826 = vmatpush1.bf16.msra.mxu0 %v5779
  %5827 = vmatprep.subr.bf16.mxu0 %v5783
  %5828 = vmatpush1.bf16.msra.mxu0 %v5782
  %5829 = vmatprep.subr.bf16.mxu0 %v5786
  %5830 = vmatpush1.bf16.msra.mxu0 %v5785
  %5831 = vmatprep.subr.bf16.mxu0 %v5789
  %5832 = vmatpush1.bf16.msra.mxu0 %v5788
  %5833 = vmatprep.subr.bf16.mxu0 %v5792
  %5834 = vmatpush1.bf16.msra.mxu0 %v5791
  %5835 = vmatprep.subr.bf16.mxu0 %v5795
  %5836 = vmatpush1.bf16.msra.mxu0 %v5794
  %5837 = vmatprep.subr.bf16.mxu0 0
  %5838 = vmatpush1.bf16.msra.mxu0 0
  %5839 = vmatprep.subr.bf16.mxu0 0
  %5840 = vmatpush1.bf16.msra.mxu0 0
  %5841 = vmatprep.subr.bf16.mxu0 0
  %5842 = vmatpush1.bf16.msra.mxu0 0
  %5843 = vmatprep.subr.bf16.mxu0 0
  %5844 = vmatpush1.bf16.msra.mxu0 0
  %5845 = vmatprep.subr.bf16.mxu0 0
  %5846 = vmatpush1.bf16.msra.mxu0 0
  %5847 = vmatprep.subr.bf16.mxu0 0
  %5848 = vmatpush1.bf16.msra.mxu0 0
  %5849 = vmatprep.subr.bf16.mxu0 0
  %5850 = vmatpush1.bf16.msra.mxu0 0
  %5851 = vmatprep.subr.bf16.mxu0 0
  %5852 = vmatpush1.bf16.msra.mxu0 0
  %5853 = vmatprep.mubr.bf16.mxu0 0
  %5854 = vmatmul.mubr.bf16.gmra.mrb[0].mxu0 %v5149
  %v5855 = vpop.f32.mrb[0].mxu0
  %v5856 = vadd.f32 0.0, %v5855
  %v5857 = vpop.f32.mrb[0].mxu0
  %v5858 = vadd.f32 0.0, %v5857
  %v5859 = vpop.f32.mrb[0].mxu0
  %v5860 = vpop.f32.mrb[0].mxu0
  %5861 = vdwg.mxu0
  %5862 = vmatprep.subr.bf16.mxu0 0
  %5863 = vmatpush1.bf16.msra.mxu0 %v5775
  %5864 = vmatprep.subr.bf16.mxu0 0
  %5865 = vmatpush1.bf16.msra.mxu0 %v5778
  %5866 = vmatprep.subr.bf16.mxu0 0
  %5867 = vmatpush1.bf16.msra.mxu0 %v5781
  %5868 = vmatprep.subr.bf16.mxu0 0
  %5869 = vmatpush1.bf16.msra.mxu0 %v5784
  %5870 = vmatprep.subr.bf16.mxu0 0
  %5871 = vmatpush1.bf16.msra.mxu0 %v5787
  %5872 = vmatprep.subr.bf16.mxu0 0
  %5873 = vmatpush1.bf16.msra.mxu0 %v5790
  %5874 = vmatprep.subr.bf16.mxu0 0
  %5875 = vmatpush1.bf16.msra.mxu0 %v5793
  %5876 = vmatprep.subr.bf16.mxu0 0
  %5877 = vmatpush1.bf16.msra.mxu0 %v5796
  %5878 = vmatprep.subr.bf16.mxu0 0
  %5879 = vmatpush1.bf16.msra.mxu0 0
  %5880 = vmatprep.subr.bf16.mxu0 0
  %5881 = vmatpush1.bf16.msra.mxu0 0
  %5882 = vmatprep.subr.bf16.mxu0 0
  %5883 = vmatpush1.bf16.msra.mxu0 0
  %5884 = vmatprep.subr.bf16.mxu0 0
  %5885 = vmatpush1.bf16.msra.mxu0 0
  %5886 = vmatprep.subr.bf16.mxu0 0
  %5887 = vmatpush1.bf16.msra.mxu0 0
  %5888 = vmatprep.subr.bf16.mxu0 0
  %5889 = vmatpush1.bf16.msra.mxu0 0
  %5890 = vmatprep.subr.bf16.mxu0 0
  %5891 = vmatpush1.bf16.msra.mxu0 0
  %5892 = vmatprep.subr.bf16.mxu0 0
  %5893 = vmatpush1.bf16.msra.mxu0 0
  %5894 = vmatprep.mubr.bf16.mxu0 0
  %5895 = vmatmul.mubr.bf16.gmra.mrb[0].mxu0 %v5149
  %v5896 = vpop.f32.mrb[0].mxu0
  %v5897 = vadd.f32 0.0, %v5896
  %v5898 = vpop.f32.mrb[0].mxu0
  %v5899 = vpop.f32.mrb[0].mxu0
  %v5900 = vpop.f32.mrb[0].mxu0
  %5901 = vdwg.mxu0
  %v5902 = vadd.f32 %v5658, %v5856
  %v5903 = vxor.u32 %v5902, 2147483648
  %v5904 = vmul.f32 %v5903, 1.442695
  %v5905 = vpow.pop %v5904
  %v5906 = vadd.f32 %v5905, 1.0
  %v5907 = vrcp.pop %v5906
  %v5908 = vmul.f32 1.0, %v5907
  %v5909 = vadd.f32 %v5659, %v5858
  %v5910 = vxor.u32 %v5909, 2147483648
  %v5911 = vmul.f32 %v5910, 1.442695
  %v5912 = vpow.pop %v5911
  %v5913 = vadd.f32 %v5912, 1.0
  %v5914 = vrcp.pop %v5913
  %v5915 = vmul.f32 1.0, %v5914
  %v5916 = vadd.f32 %v5897, %v221
  %v5917 = vmul.f32 %v5908, %v5916
  %v5918 = vadd.f32 %v5660, %v5917
  %v5919 = vtanh.pop %v5918
  %v5920 = vsub.f32 1.0, %v5915
  %v5921 = vmul.f32 %v5920, %v5919
  %v5922 = vmul.f32 %v5915, %v5148
  %v5923 = vadd.f32 %v5921, %v5922
  %v5924 = vpack.c.bf16 %v5923, %v5923
  %v5925 = vld [vmem:[%s6] sm:$0xff]
  %v5926 = vld [vmem:[%s6 + $0x8] sm:$0xf]
  %v5927 = vld [vmem:[%s6 + $0xc] sm:$0xff]
  %v5928 = vld [vmem:[%s6 + $0x14] sm:$0xf]
  %v5929 = vld [vmem:[%s6 + $0x18] sm:$0xff]
  %v5930 = vld [vmem:[%s6 + $0x20] sm:$0xf]
  %v5931 = vld [vmem:[%s6 + $0x24] sm:$0xff]
  %v5932 = vld [vmem:[%s6 + $0x2c] sm:$0xf]
  %v5933 = vld [vmem:[%s6 + $0x30] sm:$0xff]
  %v5934 = vld [vmem:[%s6 + $0x38] sm:$0xf]
  %v5935 = vld [vmem:[%s6 + $0x3c] sm:$0xff]
  %v5936 = vld [vmem:[%s6 + $0x44] sm:$0xf]
  %v5937 = vld [vmem:[%s6 + $0x48] sm:$0xff]
  %v5938 = vld [vmem:[%s6 + $0x50] sm:$0xf]
  %v5939 = vld [vmem:[%s6 + $0x54] sm:$0xff]
  %v5940 = vld [vmem:[%s6 + $0x5c] sm:$0xf]
  %v5941 = vld [vmem:[%s6 + $0x60] sm:$0xff]
  %v5942 = vld [vmem:[%s6 + $0x68] sm:$0xf]
  %v5943 = vld [vmem:[%s6 + $0x6c] sm:$0xff]
  %v5944 = vld [vmem:[%s6 + $0x74] sm:$0xf]
  %v5945 = vld [vmem:[%s6 + $0x78] sm:$0xff]
  %v5946 = vld [vmem:[%s6 + $0x80] sm:$0xf]
  %v5947 = vld [vmem:[%s6 + $0x84] sm:$0xff]
  %v5948 = vld [vmem:[%s6 + $0x8c] sm:$0xf]
  %v5949 = vld [vmem:[%s6 + $0x90] sm:$0xff]
  %v5950 = vld [vmem:[%s6 + $0x98] sm:$0xf]
  %v5951 = vld [vmem:[%s6 + $0x9c] sm:$0xff]
  %v5952 = vld [vmem:[%s6 + $0xa4] sm:$0xf]
  %v5953 = vld [vmem:[%s6 + $0xa8] sm:$0xff]
  %v5954 = vld [vmem:[%s6 + $0xb0] sm:$0xf]
  %v5955 = vld [vmem:[%s6 + $0xb4] sm:$0xff]
  %v5956 = vld [vmem:[%s6 + $0xbc] sm:$0xf]
  %v5989 = vunpack.c.l.b16 %v5925
  %v5990 = vunpack.c.h.b16 %v5925
  %v5991 = vunpack.c.l.b16 %v5926
  %v5992 = vunpack.c.l.b16 %v5927
  %v5993 = vunpack.c.h.b16 %v5927
  %v5994 = vunpack.c.l.b16 %v5928
  %v5995 = vunpack.c.l.b16 %v5929
  %v5996 = vunpack.c.h.b16 %v5929
  %v5997 = vunpack.c.l.b16 %v5930
  %v5998 = vunpack.c.l.b16 %v5931
  %v5999 = vunpack.c.h.b16 %v5931
  %v6000 = vunpack.c.l.b16 %v5932
  %v6001 = vunpack.c.l.b16 %v5933
  %v6002 = vunpack.c.h.b16 %v5933
  %v6003 = vunpack.c.l.b16 %v5934
  %v6004 = vunpack.c.l.b16 %v5935
  %v6005 = vunpack.c.h.b16 %v5935
  %v6006 = vunpack.c.l.b16 %v5936
  %v6007 = vunpack.c.l.b16 %v5937
  %v6008 = vunpack.c.h.b16 %v5937
  %v6009 = vunpack.c.l.b16 %v5938
  %v6010 = vunpack.c.l.b16 %v5939
  %v6011 = vunpack.c.h.b16 %v5939
  %v6012 = vunpack.c.l.b16 %v5940
  %v6013 = vunpack.c.l.b16 %v5941
  %v6014 = vunpack.c.h.b16 %v5941
  %v6015 = vunpack.c.l.b16 %v5942
  %v6016 = vunpack.c.l.b16 %v5943
  %v6017 = vunpack.c.h.b16 %v5943
  %v6018 = vunpack.c.l.b16 %v5944
  %v6019 = vunpack.c.l.b16 %v5945
  %v6020 = vunpack.c.h.b16 %v5945
  %v6021 = vunpack.c.l.b16 %v5946
  %v6022 = vunpack.c.l.b16 %v5947
  %v6023 = vunpack.c.h.b16 %v5947
  %v6024 = vunpack.c.l.b16 %v5948
  %v6025 = vunpack.c.l.b16 %v5949
  %v6026 = vunpack.c.h.b16 %v5949
  %v6027 = vunpack.c.l.b16 %v5950
  %v6028 = vunpack.c.l.b16 %v5951
  %v6029 = vunpack.c.h.b16 %v5951
  %v6030 = vunpack.c.l.b16 %v5952
  %v6031 = vunpack.c.l.b16 %v5953
  %v6032 = vunpack.c.h.b16 %v5953
  %v6033 = vunpack.c.l.b16 %v5954
  %v6034 = vunpack.c.l.b16 %v5955
  %v6035 = vunpack.c.h.b16 %v5955
  %v6036 = vunpack.c.l.b16 %v5956
  %v6037 = vpack.c.b16 %v5992, %v5989
  %v6038 = vpack.c.b16 %v5993, %v5990
  %v6039 = vpack.c.b16 %v5994, %v5991
  %v6040 = vpack.c.b16 %v5998, %v5995
  %v6041 = vpack.c.b16 %v5999, %v5996
  %v6042 = vpack.c.b16 %v6000, %v5997
  %v6043 = vpack.c.b16 %v6004, %v6001
  %v6044 = vpack.c.b16 %v6005, %v6002
  %v6045 = vpack.c.b16 %v6006, %v6003
  %v6046 = vpack.c.b16 %v6010, %v6007
  %v6047 = vpack.c.b16 %v6011, %v6008
  %v6048 = vpack.c.b16 %v6012, %v6009
  %v6049 = vpack.c.b16 %v6016, %v6013
  %v6050 = vpack.c.b16 %v6017, %v6014
  %v6051 = vpack.c.b16 %v6018, %v6015
  %v6052 = vpack.c.b16 %v6022, %v6019
  %v6053 = vpack.c.b16 %v6023, %v6020
  %v6054 = vpack.c.b16 %v6024, %v6021
  %v6055 = vpack.c.b16 %v6028, %v6025
  %v6056 = vpack.c.b16 %v6029, %v6026
  %v6057 = vpack.c.b16 %v6030, %v6027
  %v6058 = vpack.c.b16 %v6034, %v6031
  %v6059 = vpack.c.b16 %v6035, %v6032
  %v6060 = vpack.c.b16 %v6036, %v6033
  %6085 = vmatprep.subr.bf16.mxu0 %v6038
  %6086 = vmatpush1.bf16.msra.mxu0 %v6037
  %6087 = vmatprep.subr.bf16.mxu0 %v6041
  %6088 = vmatpush1.bf16.msra.mxu0 %v6040
  %6089 = vmatprep.subr.bf16.mxu0 %v6044
  %6090 = vmatpush1.bf16.msra.mxu0 %v6043
  %6091 = vmatprep.subr.bf16.mxu0 %v6047
  %6092 = vmatpush1.bf16.msra.mxu0 %v6046
  %6093 = vmatprep.subr.bf16.mxu0 %v6050
  %6094 = vmatpush1.bf16.msra.mxu0 %v6049
  %6095 = vmatprep.subr.bf16.mxu0 %v6053
  %6096 = vmatpush1.bf16.msra.mxu0 %v6052
  %6097 = vmatprep.subr.bf16.mxu0 %v6056
  %6098 = vmatpush1.bf16.msra.mxu0 %v6055
  %6099 = vmatprep.subr.bf16.mxu0 %v6059
  %6100 = vmatpush1.bf16.msra.mxu0 %v6058
  %6101 = vmatprep.subr.bf16.mxu0 0
  %6102 = vmatpush1.bf16.msra.mxu0 0
  %6103 = vmatprep.subr.bf16.mxu0 0
  %6104 = vmatpush1.bf16.msra.mxu0 0
  %6105 = vmatprep.subr.bf16.mxu0 0
  %6106 = vmatpush1.bf16.msra.mxu0 0
  %6107 = vmatprep.subr.bf16.mxu0 0
  %6108 = vmatpush1.bf16.msra.mxu0 0
  %6109 = vmatprep.subr.bf16.mxu0 0
  %6110 = vmatpush1.bf16.msra.mxu0 0
  %6111 = vmatprep.subr.bf16.mxu0 0
  %6112 = vmatpush1.bf16.msra.mxu0 0
  %6113 = vmatprep.subr.bf16.mxu0 0
  %6114 = vmatpush1.bf16.msra.mxu0 0
  %6115 = vmatprep.subr.bf16.mxu0 0
  %6116 = vmatpush1.bf16.msra.mxu0 0
  %6117 = vmatprep.mubr.bf16.mxu0 0
  %6118 = vmatmul.mubr.bf16.gmra.mrb[0].mxu0 %v5924
  %v6119 = vpop.f32.mrb[0].mxu0
  %v6120 = vadd.f32 %v204, %v6119
  %v6121 = vpop.f32.mrb[0].mxu0
  %v6122 = vadd.f32 %v208, %v6121
  %v6123 = vpop.f32.mrb[0].mxu0
  %v6124 = vpop.f32.mrb[0].mxu0
  %6125 = vdwg.mxu0
  %6126 = vmatprep.subr.bf16.mxu0 0
  %6127 = vmatpush1.bf16.msra.mxu0 %v6039
  %6128 = vmatprep.subr.bf16.mxu0 0
  %6129 = vmatpush1.bf16.msra.mxu0 %v6042
  %6130 = vmatprep.subr.bf16.mxu0 0
  %6131 = vmatpush1.bf16.msra.mxu0 %v6045
  %6132 = vmatprep.subr.bf16.mxu0 0
  %6133 = vmatpush1.bf16.msra.mxu0 %v6048
  %6134 = vmatprep.subr.bf16.mxu0 0
  %6135 = vmatpush1.bf16.msra.mxu0 %v6051
  %6136 = vmatprep.subr.bf16.mxu0 0
  %6137 = vmatpush1.bf16.msra.mxu0 %v6054
  %6138 = vmatprep.subr.bf16.mxu0 0
  %6139 = vmatpush1.bf16.msra.mxu0 %v6057
  %6140 = vmatprep.subr.bf16.mxu0 0
  %6141 = vmatpush1.bf16.msra.mxu0 %v6060
  %6142 = vmatprep.subr.bf16.mxu0 0
  %6143 = vmatpush1.bf16.msra.mxu0 0
  %6144 = vmatprep.subr.bf16.mxu0 0
  %6145 = vmatpush1.bf16.msra.mxu0 0
  %6146 = vmatprep.subr.bf16.mxu0 0
  %6147 = vmatpush1.bf16.msra.mxu0 0
  %6148 = vmatprep.subr.bf16.mxu0 0
  %6149 = vmatpush1.bf16.msra.mxu0 0
  %6150 = vmatprep.subr.bf16.mxu0 0
  %6151 = vmatpush1.bf16.msra.mxu0 0
  %6152 = vmatprep.subr.bf16.mxu0 0
  %6153 = vmatpush1.bf16.msra.mxu0 0
  %6154 = vmatprep.subr.bf16.mxu0 0
  %6155 = vmatpush1.bf16.msra.mxu0 0
  %6156 = vmatprep.subr.bf16.mxu0 0
  %6157 = vmatpush1.bf16.msra.mxu0 0
  %6158 = vmatprep.mubr.bf16.mxu0 0
  %6159 = vmatmul.mubr.bf16.gmra.mrb[0].mxu0 %v5924
  %v6160 = vpop.f32.mrb[0].mxu0
  %v6161 = vadd.f32 %v212, %v6160
  %v6162 = vpop.f32.mrb[0].mxu0
  %v6163 = vpop.f32.mrb[0].mxu0
  %v6164 = vpop.f32.mrb[0].mxu0
  %6165 = vdwg.mxu0
  %v6166 = vpack.c.bf16 %v5654, %v5654
  %v6167 = vld [vmem:[%s7] sm:$0xff]
  %v6168 = vld [vmem:[%s7 + $0x8] sm:$0xf]
  %v6169 = vld [vmem:[%s7 + $0xc] sm:$0xff]
  %v6170 = vld [vmem:[%s7 + $0x14] sm:$0xf]
  %v6171 = vld [vmem:[%s7 + $0x18] sm:$0xff]
  %v6172 = vld [vmem:[%s7 + $0x20] sm:$0xf]
  %v6173 = vld [vmem:[%s7 + $0x24] sm:$0xff]
  %v6174 = vld [vmem:[%s7 + $0x2c] sm:$0xf]
  %v6175 = vld [vmem:[%s7 + $0x30] sm:$0xff]
  %v6176 = vld [vmem:[%s7 + $0x38] sm:$0xf]
  %v6177 = vld [vmem:[%s7 + $0x3c] sm:$0xff]
  %v6178 = vld [vmem:[%s7 + $0x44] sm:$0xf]
  %v6179 = vld [vmem:[%s7 + $0x48] sm:$0xff]
  %v6180 = vld [vmem:[%s7 + $0x50] sm:$0xf]
  %v6181 = vld [vmem:[%s7 + $0x54] sm:$0xff]
  %v6182 = vld [vmem:[%s7 + $0x5c] sm:$0xf]
  %v6183 = vld [vmem:[%s7 + $0x60] sm:$0xff]
  %v6184 = vld [vmem:[%s7 + $0x68] sm:$0xf]
  %v6185 = vld [vmem:[%s7 + $0x6c] sm:$0xff]
  %v6186 = vld [vmem:[%s7 + $0x74] sm:$0xf]
  %v6187 = vld [vmem:[%s7 + $0x78] sm:$0xff]
  %v6188 = vld [vmem:[%s7 + $0x80] sm:$0xf]
  %v6189 = vld [vmem:[%s7 + $0x84] sm:$0xff]
  %v6190 = vld [vmem:[%s7 + $0x8c] sm:$0xf]
  %v6191 = vld [vmem:[%s7 + $0x90] sm:$0xff]
  %v6192 = vld [vmem:[%s7 + $0x98] sm:$0xf]
  %v6193 = vld [vmem:[%s7 + $0x9c] sm:$0xff]
  %v6194 = vld [vmem:[%s7 + $0xa4] sm:$0xf]
  %v6195 = vld [vmem:[%s7 + $0xa8] sm:$0xff]
  %v6196 = vld [vmem:[%s7 + $0xb0] sm:$0xf]
  %v6197 = vld [vmem:[%s7 + $0xb4] sm:$0xff]
  %v6198 = vld [vmem:[%s7 + $0xbc] sm:$0xf]
  %v6231 = vunpack.c.l.b16 %v6167
  %v6232 = vunpack.c.h.b16 %v6167
  %v6233 = vunpack.c.l.b16 %v6168
  %v6234 = vunpack.c.l.b16 %v6169
  %v6235 = vunpack.c.h.b16 %v6169
  %v6236 = vunpack.c.l.b16 %v6170
  %v6237 = vunpack.c.l.b16 %v6171
  %v6238 = vunpack.c.h.b16 %v6171
  %v6239 = vunpack.c.l.b16 %v6172
  %v6240 = vunpack.c.l.b16 %v6173
  %v6241 = vunpack.c.h.b16 %v6173
  %v6242 = vunpack.c.l.b16 %v6174
  %v6243 = vunpack.c.l.b16 %v6175
  %v6244 = vunpack.c.h.b16 %v6175
  %v6245 = vunpack.c.l.b16 %v6176
  %v6246 = vunpack.c.l.b16 %v6177
  %v6247 = vunpack.c.h.b16 %v6177
  %v6248 = vunpack.c.l.b16 %v6178
  %v6249 = vunpack.c.l.b16 %v6179
  %v6250 = vunpack.c.h.b16 %v6179
  %v6251 = vunpack.c.l.b16 %v6180
  %v6252 = vunpack.c.l.b16 %v6181
  %v6253 = vunpack.c.h.b16 %v6181
  %v6254 = vunpack.c.l.b16 %v6182
  %v6255 = vunpack.c.l.b16 %v6183
  %v6256 = vunpack.c.h.b16 %v6183
  %v6257 = vunpack.c.l.b16 %v6184
  %v6258 = vunpack.c.l.b16 %v6185
  %v6259 = vunpack.c.h.b16 %v6185
  %v6260 = vunpack.c.l.b16 %v6186
  %v6261 = vunpack.c.l.b16 %v6187
  %v6262 = vunpack.c.h.b16 %v6187
  %v6263 = vunpack.c.l.b16 %v6188
  %v6264 = vunpack.c.l.b16 %v6189
  %v6265 = vunpack.c.h.b16 %v6189
  %v6266 = vunpack.c.l.b16 %v6190
  %v6267 = vunpack.c.l.b16 %v6191
  %v6268 = vunpack.c.h.b16 %v6191
  %v6269 = vunpack.c.l.b16 %v6192
  %v6270 = vunpack.c.l.b16 %v6193
  %v6271 = vunpack.c.h.b16 %v6193
  %v6272 = vunpack.c.l.b16 %v6194
  %v6273 = vunpack.c.l.b16 %v6195
  %v6274 = vunpack.c.h.b16 %v6195
  %v6275 = vunpack.c.l.b16 %v6196
  %v6276 = vunpack.c.l.b16 %v6197
  %v6277 = vunpack.c.h.b16 %v6197
  %v6278 = vunpack.c.l.b16 %v6198
  %v6279 = vpack.c.b16 %v6234, %v6231
  %v6280 = vpack.c.b16 %v6235, %v6232
  %v6281 = vpack.c.b16 %v6236, %v6233
  %v6282 = vpack.c.b16 %v6240, %v6237
  %v6283 = vpack.c.b16 %v6241, %v6238
  %v6284 = vpack.c.b16 %v6242, %v6239
  %v6285 = vpack.c.b16 %v6246, %v6243
  %v6286 = vpack.c.b16 %v6247, %v6244
  %v6287 = vpack.c.b16 %v6248, %v6245
  %v6288 = vpack.c.b16 %v6252, %v6249
  %v6289 = vpack.c.b16 %v6253, %v6250
  %v6290 = vpack.c.b16 %v6254, %v6251
  %v6291 = vpack.c.b16 %v6258, %v6255
  %v6292 = vpack.c.b16 %v6259, %v6256
  %v6293 = vpack.c.b16 %v6260, %v6257
  %v6294 = vpack.c.b16 %v6264, %v6261
  %v6295 = vpack.c.b16 %v6265, %v6262
  %v6296 = vpack.c.b16 %v6266, %v6263
  %v6297 = vpack.c.b16 %v6270, %v6267
  %v6298 = vpack.c.b16 %v6271, %v6268
  %v6299 = vpack.c.b16 %v6272, %v6269
  %v6300 = vpack.c.b16 %v6276, %v6273
  %v6301 = vpack.c.b16 %v6277, %v6274
  %v6302 = vpack.c.b16 %v6278, %v6275
  %6327 = vmatprep.subr.bf16.mxu0 %v6280
  %6328 = vmatpush1.bf16.msra.mxu0 %v6279
  %6329 = vmatprep.subr.bf16.mxu0 %v6283
  %6330 = vmatpush1.bf16.msra.mxu0 %v6282
  %6331 = vmatprep.subr.bf16.mxu0 %v6286
  %6332 = vmatpush1.bf16.msra.mxu0 %v6285
  %6333 = vmatprep.subr.bf16.mxu0 %v6289
  %6334 = vmatpush1.bf16.msra.mxu0 %v6288
  %6335 = vmatprep.subr.bf16.mxu0 %v6292
  %6336 = vmatpush1.bf16.msra.mxu0 %v6291
  %6337 = vmatprep.subr.bf16.mxu0 %v6295
  %6338 = vmatpush1.bf16.msra.mxu0 %v6294
  %6339 = vmatprep.subr.bf16.mxu0 %v6298
  %6340 = vmatpush1.bf16.msra.mxu0 %v6297
  %6341 = vmatprep.subr.bf16.mxu0 %v6301
  %6342 = vmatpush1.bf16.msra.mxu0 %v6300
  %6343 = vmatprep.subr.bf16.mxu0 0
  %6344 = vmatpush1.bf16.msra.mxu0 0
  %6345 = vmatprep.subr.bf16.mxu0 0
  %6346 = vmatpush1.bf16.msra.mxu0 0
  %6347 = vmatprep.subr.bf16.mxu0 0
  %6348 = vmatpush1.bf16.msra.mxu0 0
  %6349 = vmatprep.subr.bf16.mxu0 0
  %6350 = vmatpush1.bf16.msra.mxu0 0
  %6351 = vmatprep.subr.bf16.mxu0 0
  %6352 = vmatpush1.bf16.msra.mxu0 0
  %6353 = vmatprep.subr.bf16.mxu0 0
  %6354 = vmatpush1.bf16.msra.mxu0 0
  %6355 = vmatprep.subr.bf16.mxu0 0
  %6356 = vmatpush1.bf16.msra.mxu0 0
  %6357 = vmatprep.subr.bf16.mxu0 0
  %6358 = vmatpush1.bf16.msra.mxu0 0
  %6359 = vmatprep.mubr.bf16.mxu0 0
  %6360 = vmatmul.mubr.bf16.gmra.mrb[0].mxu0 %v6166
  %v6361 = vpop.f32.mrb[0].mxu0
  %v6362 = vadd.f32 0.0, %v6361
  %v6363 = vpop.f32.mrb[0].mxu0
  %v6364 = vadd.f32 0.0, %v6363
  %v6365 = vpop.f32.mrb[0].mxu0
  %v6366 = vpop.f32.mrb[0].mxu0
  %6367 = vdwg.mxu0
  %6368 = vmatprep.subr.bf16.mxu0 0
  %6369 = vmatpush1.bf16.msra.mxu0 %v6281
  %6370 = vmatprep.subr.bf16.mxu0 0
  %6371 = vmatpush1.bf16.msra.mxu0 %v6284
  %6372 = vmatprep.subr.bf16.mxu0 0
  %6373 = vmatpush1.bf16.msra.mxu0 %v6287
  %6374 = vmatprep.subr.bf16.mxu0 0
  %6375 = vmatpush1.bf16.msra.mxu0 %v6290
  %6376 = vmatprep.subr.bf16.mxu0 0
  %6377 = vmatpush1.bf16.msra.mxu0 %v6293
  %6378 = vmatprep.subr.bf16.mxu0 0
  %6379 = vmatpush1.bf16.msra.mxu0 %v6296
  %6380 = vmatprep.subr.bf16.mxu0 0
  %6381 = vmatpush1.bf16.msra.mxu0 %v6299
  %6382 = vmatprep.subr.bf16.mxu0 0
  %6383 = vmatpush1.bf16.msra.mxu0 %v6302
  %6384 = vmatprep.subr.bf16.mxu0 0
  %6385 = vmatpush1.bf16.msra.mxu0 0
  %6386 = vmatprep.subr.bf16.mxu0 0
  %6387 = vmatpush1.bf16.msra.mxu0 0
  %6388 = vmatprep.subr.bf16.mxu0 0
  %6389 = vmatpush1.bf16.msra.mxu0 0
  %6390 = vmatprep.subr.bf16.mxu0 0
  %6391 = vmatpush1.bf16.msra.mxu0 0
  %6392 = vmatprep.subr.bf16.mxu0 0
  %6393 = vmatpush1.bf16.msra.mxu0 0
  %6394 = vmatprep.subr.bf16.mxu0 0
  %6395 = vmatpush1.bf16.msra.mxu0 0
  %6396 = vmatprep.subr.bf16.mxu0 0
  %6397 = vmatpush1.bf16.msra.mxu0 0
  %6398 = vmatprep.subr.bf16.mxu0 0
  %6399 = vmatpush1.bf16.msra.mxu0 0
  %6400 = vmatprep.mubr.bf16.mxu0 0
  %6401 = vmatmul.mubr.bf16.gmra.mrb[0].mxu0 %v6166
  %v6402 = vpop.f32.mrb[0].mxu0
  %v6403 = vadd.f32 0.0, %v6402
  %v6404 = vpop.f32.mrb[0].mxu0
  %v6405 = vpop.f32.mrb[0].mxu0
  %v6406 = vpop.f32.mrb[0].mxu0
  %6407 = vdwg.mxu0
  %v6408 = vadd.f32 %v6120, %v6362
  %v6409 = vxor.u32 %v6408, 2147483648
  %v6410 = vmul.f32 %v6409, 1.442695
  %v6411 = vpow.pop %v6410
  %v6412 = vadd.f32 %v6411, 1.0
  %v6413 = vrcp.pop %v6412
  %v6414 = vmul.f32 1.0, %v6413
  %v6415 = vadd.f32 %v6122, %v6364
  %v6416 = vxor.u32 %v6415, 2147483648
  %v6417 = vmul.f32 %v6416, 1.442695
  %v6418 = vpow.pop %v6417
  %v6419 = vadd.f32 %v6418, 1.0
  %v6420 = vrcp.pop %v6419
  %v6421 = vmul.f32 1.0, %v6420
  %v6422 = vadd.f32 %v6403, %v228
  %v6423 = vmul.f32 %v6414, %v6422
  %v6424 = vadd.f32 %v6161, %v6423
  %v6425 = vtanh.pop %v6424
  %v6426 = vsub.f32 1.0, %v6421
  %v6427 = vmul.f32 %v6426, %v6425
  %v6428 = vmul.f32 %v6421, %v5654
  %v6429 = vadd.f32 %v6427, %v6428
  %s6430 = scalar_lea.vmem [#allocation3], 56
  %6431 = vst [vmem:[%s6430] sm:$0xff] %v6429
  %6432 = vst [vmem:[%s13] sm:$0xff] %v5923
  %s6433 = scalar_lea.vmem %s13, 8
  %6434 = vst [vmem:[%s6433] sm:$0xff] %v6429
  %v6435 = vld [vmem:[#allocation3] sm:$0xff]
  %v6436 = vld [vmem:[#allocation3 + $0x8] sm:$0xff]
  %v6437 = vld [vmem:[#allocation3 + $0x10] sm:$0xff]
  %v6438 = vld [vmem:[#allocation3 + $0x18] sm:$0xff]
  %v6439 = vld [vmem:[#allocation3 + $0x20] sm:$0xff]
  %v6440 = vld [vmem:[#allocation3 + $0x28] sm:$0xff]
  %v6441 = vld [vmem:[#allocation3 + $0x30] sm:$0xff]
  %v6442 = vld [vmem:[#allocation3 + $0x38] sm:$0xff]
  %v6443 = vld [vmem:[%s10] sm:$0x1]
  %v6445 = vlaneseq
  %v6446 = vshrl.u32 %v6445, 7
  %v6447 = vsub.s32 0, %v6446
  %v6448 = vrot.slane %v6443, %v6447
  %v6450 = vmul.f32 %v6435, %v6448
  %v6451 = vmul.f32 %v6436, %v6448
  %v6452 = vmul.f32 %v6437, %v6448
  %v6453 = vmul.f32 %v6438, %v6448
  %v6454 = vmul.f32 %v6439, %v6448
  %v6455 = vmul.f32 %v6440, %v6448
  %v6456 = vmul.f32 %v6441, %v6448
  %v6457 = vmul.f32 %v6442, %v6448
  %6458 = vadd.xlane.f32.xlu0 %v6450
  %v6459 = vpop.xlane.xlu0 %6458
  %6460 = vadd.xlane.f32.xlu0 %v6451
  %v6461 = vpop.xlane.xlu0 %6460
  %6462 = vadd.xlane.f32.xlu0 %v6452
  %v6463 = vpop.xlane.xlu0 %6462
  %6464 = vadd.xlane.f32.xlu0 %v6453
  %v6465 = vpop.xlane.xlu0 %6464
  %6466 = vadd.xlane.f32.xlu0 %v6454
  %v6467 = vpop.xlane.xlu0 %6466
  %6468 = vadd.xlane.f32.xlu0 %v6455
  %v6469 = vpop.xlane.xlu0 %6468
  %6470 = vadd.xlane.f32.xlu0 %v6456
  %v6471 = vpop.xlane.xlu0 %6470
  %6472 = vadd.xlane.f32.xlu0 %v6457
  %v6473 = vpop.xlane.xlu0 %6472
  %s6474 = sld [smem:[#allocation4]]
  %v6475 = vstv %s6474
  %v6476 = vadd.f32 %v6459, %v6475
  %v6477 = vadd.f32 %v6461, %v6475
  %v6478 = vadd.f32 %v6463, %v6475
  %v6479 = vadd.f32 %v6465, %v6475
  %v6480 = vadd.f32 %v6467, %v6475
  %v6481 = vadd.f32 %v6469, %v6475
  %v6482 = vadd.f32 %v6471, %v6475
  %v6483 = vadd.f32 %v6473, %v6475
  %v6492 = vlaneseq
  %v6493 = vand.u32 %v6492, 127
  %v6494 = vlaneseq
  %v6495 = vshrl.u32 %v6494, 7
  %v6496 = vsub.s32 %v6493, %v6495
  %v6497 = vrot.slane %v6476, %v6496
  %v6498 = vlaneseq
  %v6499 = vshrl.u32 %v6498, 7
  %v6500 = vsub.s32 %v6493, %v6499
  %v6501 = vrot.slane %v6477, %v6500
  %v6502 = vlaneseq
  %v6503 = vshrl.u32 %v6502, 7
  %v6504 = vsub.s32 %v6493, %v6503
  %v6505 = vrot.slane %v6478, %v6504
  %v6506 = vlaneseq
  %v6507 = vshrl.u32 %v6506, 7
  %v6508 = vsub.s32 %v6493, %v6507
  %v6509 = vrot.slane %v6479, %v6508
  %v6510 = vlaneseq
  %v6511 = vshrl.u32 %v6510, 7
  %v6512 = vsub.s32 %v6493, %v6511
  %v6513 = vrot.slane %v6480, %v6512
  %v6514 = vlaneseq
  %v6515 = vshrl.u32 %v6514, 7
  %v6516 = vsub.s32 %v6493, %v6515
  %v6517 = vrot.slane %v6481, %v6516
  %v6518 = vlaneseq
  %v6519 = vshrl.u32 %v6518, 7
  %v6520 = vsub.s32 %v6493, %v6519
  %v6521 = vrot.slane %v6482, %v6520
  %v6522 = vlaneseq
  %v6523 = vshrl.u32 %v6522, 7
  %v6524 = vsub.s32 %v6493, %v6523
  %v6525 = vrot.slane %v6483, %v6524
  %vm6526 = vcmask 1041409
  %v6527 = vsel %vm6526, %v6501, %v6497
  %vm6528 = vcmask 1042434
  %v6529 = vsel %vm6528, %v6505, %v6527
  %vm6530 = vcmask 1043459
  %v6531 = vsel %vm6530, %v6509, %v6529
  %vm6532 = vcmask 1044484
  %v6533 = vsel %vm6532, %v6513, %v6531
  %vm6534 = vcmask 1045509
  %v6535 = vsel %vm6534, %v6517, %v6533
  %vm6536 = vcmask 1046534
  %v6537 = vsel %vm6536, %v6521, %v6535
  %vm6538 = vcmask 1047559
  %v6539 = vsel %vm6538, %v6525, %v6537
  %vm6541 = vcmask 64512
  %6542 = vst.msk [vmem:[%s12] sm:$0xff] %vm6541, %v6539
  // Predicated region
  $region50: #{rnn_forward.1} parent=0 // pred_check
    _
  $region51: #{rnn_forward.1} parent=0 // pred_check_branch
    %6544 = sbr.rel (0) target = $region53
  $region52: #{rnn_forward.1} parent=0 // pred_region
    _
  $region53: #{rnn_forward.1} parent=0 // pred_fallthru
    _
  // Predicated region
  $region54: #{rnn_forward.1} parent=0 // pred_check
    _
  $region55: #{rnn_forward.1} parent=0 // pred_check_branch
    %6546 = sbr.rel (0) target = $region57
  $region56: #{rnn_forward.1} parent=0 // pred_region
    _
  $region57: #{rnn_forward.1} parent=0 // pred_fallthru
    _
  // Predicated region
  $region58: #{rnn_forward.1} parent=0 // pred_check
    _
  $region59: #{rnn_forward.1} parent=0 // pred_check_branch
    %6548 = sbr.rel (0) target = $region61
  $region60: #{rnn_forward.1} parent=0 // pred_region
    _
  $region61: #{rnn_forward.1} parent=0 // pred_fallthru
    _
  // Predicated region
  $region62: #{rnn_forward.1} parent=0 // pred_check
    _
  $region63: #{rnn_forward.1} parent=0 // pred_check_branch
    %6550 = sbr.rel (0) target = $region65
  $region64: #{rnn_forward.1} parent=0 // pred_region
    _
  $region65: #{rnn_forward.1} parent=0 // pred_fallthru
    _

</llo_original>
